<compile_context>
chip_gen: v5e
topology: v5e:2x2
jax: 0.10.0
libtpu: 0.0.40
codegen_flags: <defaults>
</compile_context>

<pallas_src>
import functools

import numpy as np
import jax
import jax.numpy as jnp
from jax import lax
from jax.experimental import pallas as pl
from jax.experimental.pallas import tpu as pltpu


# ---------------------------------------------------------------------------
# Kernel 1: conv3d (k=3, s=1, p=1) on the zero-padded, (y,z)-flattened layout
# ---------------------------------------------------------------------------
def _conv3d_kernel(w_ref, b_ref, m_ref, a0_ref, a1_ref, a2_ref, o_ref, col_ref,
                   *, X, Y, Z, cin, cout, act):
    Zf = Z + 2
    F = (Y + 2) * Zf
    w0 = Zf + 1                  # first output column with a fully in-range stencil
    Lc = F - 2 * Zf - 2          # columns computed per x-plane (covers all valid ones)

    xp = pl.program_id(1)
    interior = jnp.logical_and(xp >= 1, xp <= X)

    @pl.when(interior)
    def _():
        slabs = (a0_ref[...], a1_ref[...], a2_ref[...])   # (cin, F) bf16, planes x-1..x+1
        # Assemble the (K = 27*cin, Lc) tap tile in VMEM from shifted lane slices
        # (in-kernel im2col: no HBM materialization, no reshapes).
        for kd in range(3):
            a = slabs[kd]
            for kh in range(3):
                for kw in range(3):
                    t = (kd * 3 + kh) * 3 + kw
                    s = w0 + (kh - 1) * Zf + (kw - 1)     # static lane offset, in-bounds
                    col_ref[t * cin:(t + 1) * cin, :] = a[:, s:s + Lc]
        # One MXU matmul per x-plane: (cout, K) x (K, Lc), f32 accumulation.
        y = jnp.dot(w_ref[...], col_ref[...], preferred_element_type=jnp.float32)
        y = y + b_ref[...]
        if act == "relu":
            y = jnp.maximum(y, 0.0)
        # Zero the y/z padding ring so the next layer can use it as conv padding.
        y = y * m_ref[:, w0:w0 + Lc]
        o_ref[:, 0:w0] = jnp.zeros((cout, w0), o_ref.dtype)
        o_ref[:, w0:w0 + Lc] = y.astype(o_ref.dtype)
        o_ref[:, w0 + Lc:F] = jnp.zeros((cout, Zf + 1), o_ref.dtype)

    @pl.when(jnp.logical_not(interior))
    def _():
        # padded x-planes of the output stay all-zero
        o_ref[...] = jnp.zeros_like(o_ref)


def conv3d_padded_flat(act_pf, w, b, *, X, Y, Z, act=None):
    """3D conv (3x3x3, stride 1, zero pad 1), PyTorch Conv3d semantics.

    act_pf: (N, Xp, C, F) bf16 zero-padded flat layout (Xp=X+2, F=(Y+2)*(Z+2)).
            Only the first w.shape[1] channels are read (lets the decoder read
            the mu half of the fused stats tensor in place).
    w:      (Cout, Cin, 3, 3, 3) float32;  b: (Cout,) float32
    returns (N, Xp, Cout, F) bf16 in the same layout (padding ring = zeros).
    """
    N, Xp, C, F = act_pf.shape
    cout, cin = w.shape[0], w.shape[1]
    Yp, Zf = Y + 2, Z + 2
    assert Xp == X + 2 and F == Yp * Zf and C >= cin
    K = 27 * cin
    Lc = F - 2 * Zf - 2

    act_pf = act_pf.astype(jnp.bfloat16)
    # weights in (cout, kd, kh, kw, cin) order to match the col-scratch rows
    Wm = jnp.transpose(w, (0, 2, 3, 4, 1)).reshape(cout, K).astype(jnp.bfloat16)
    bm = b.reshape(cout, 1).astype(jnp.float32)
    # interior-column mask (1 inside the valid (y,z) region, 0 on the pad ring)
    ypi = jnp.arange(Yp)
    zpi = jnp.arange(Zf)
    m2 = ((ypi >= 1) & (ypi <= Y))[:, None] & ((zpi >= 1) & (zpi <= Z))[None, :]
    mask = m2.reshape(1, F).astype(jnp.float32)

    kernel = functools.partial(_conv3d_kernel, X=X, Y=Y, Z=Z,
                               cin=cin, cout=cout, act=act)

    def slab_spec(kd):
        # halo along x via three offset BlockSpecs (clip only matters for the
        # pad x-planes, whose output is forced to zero anyway)
        return pl.BlockSpec(
            (None, None, cin, F),
            lambda n, x, _kd=kd: (n, jnp.clip(x - 1 + _kd, 0, Xp - 1), 0, 0))

    return pl.pallas_call(
        kernel,
        out_shape=jax.ShapeDtypeStruct((N, Xp, cout, F), jnp.bfloat16),
        grid=(N, Xp),
        in_specs=[
            pl.BlockSpec((cout, K), lambda n, x: (0, 0)),   # weights (resident)
            pl.BlockSpec((cout, 1), lambda n, x: (0, 0)),   # bias    (resident)
            pl.BlockSpec((1, F), lambda n, x: (0, 0)),      # mask    (resident)
            slab_spec(0), slab_spec(1), slab_spec(2),       # x-1, x, x+1 slabs
        ],
        out_specs=pl.BlockSpec((None, None, cout, F), lambda n, x: (n, x, 0, 0)),
        scratch_shapes=[pltpu.VMEM((K, Lc), jnp.bfloat16)],
        compiler_params=pltpu.CompilerParams(
            dimension_semantics=("parallel", "parallel")),
    )(Wm, bm, mask, act_pf, act_pf, act_pf)


# ---------------------------------------------------------------------------
# Kernel 2: HHD_3D  --  V = curl(Phi) + grad(H), one whole volume per step
# ---------------------------------------------------------------------------
def _hhd_kernel(p_ref, v_ref, *, X, Y, Z, dx, dy, dz):
    Zp = Z + 2
    Fp = (Y + 2) * Zp
    w0 = Zp + 1
    Lh = Fp - 2 * Zp - 2

    p = p_ref[...]                                   # (4, X+2, Fp) f32
    ctr = p[:, 1:-1, :]                              # (4, X, Fp)
    ddx = (p[:, 2:, :] - p[:, :-2, :]) * (0.5 / dx)  # central diff along x
    ddx = ddx[:, :, w0:w0 + Lh]
    ddy = (ctr[:, :, w0 + Zp:w0 + Zp + Lh]
           - ctr[:, :, w0 - Zp:w0 - Zp + Lh]) * (0.5 / dy)
    ddz = (ctr[:, :, w0 + 1:w0 + 1 + Lh]
           - ctr[:, :, w0 - 1:w0 - 1 + Lh]) * (0.5 / dz)

    # TODO(synk): HHD_3D source not provided; synthesized as V = curl(Phi)+grad(H)
    # with Phi = channels 0..2, H = channel 3.
    v_ref[0] = ddy[2] - ddz[1] + ddx[3]   # Vx
    v_ref[1] = ddz[0] - ddx[2] + ddy[3]   # Vy
    v_ref[2] = ddx[1] - ddy[0] + ddz[3]   # Vz


def _extrap_pad1(f, axis):
    # linear-extrapolation pad of width 1 so a central difference at the padded
    # boundary reproduces np.gradient's first-order one-sided edge difference.
    n = f.shape[axis]
    f0 = lax.index_in_dim(f, 0, axis, keepdims=True)
    f1 = lax.index_in_dim(f, 1, axis, keepdims=True)
    fl = lax.index_in_dim(f, n - 1, axis, keepdims=True)
    fl1 = lax.index_in_dim(f, n - 2, axis, keepdims=True)
    return jnp.concatenate([2.0 * f0 - f1, f, 2.0 * fl - fl1], axis=axis)


def hhd_3d_from_padded_flat(dec_pf, *, X, Y, Z, data_spacing):
    """dec_pf: (N, Xp, 4, F) bf16 decoder output in padded-flat layout.
    Returns V: (N, 3, X, Y, Z) float32."""
    N = dec_pf.shape[0]
    Yp, Zf = Y + 2, Z + 2
    # extract the interior, go channel-major f32, extrapolation-pad for gradients
    dec = dec_pf.reshape(N, X + 2, 4, Yp, Zf)[:, 1:X + 1, :, 1:Y + 1, 1:Z + 1]
    dec = jnp.transpose(dec, (0, 2, 1, 3, 4)).astype(jnp.float32)   # (N,4,X,Y,Z)
    P = dec
    for ax in (2, 3, 4):
        P = _extrap_pad1(P, ax)                                     # (N,4,X+2,Y+2,Z+2)
    Zp = Z + 2
    Fp = (Y + 2) * Zp
    Pf = P.reshape(N, 4, X + 2, Fp)
    Lh = Y * Zp - 2

    kernel = functools.partial(_hhd_kernel, X=X, Y=Y, Z=Z,
                               dx=float(data_spacing[0]),
                               dy=float(data_spacing[1]),
                               dz=float(data_spacing[2]))
    # Whole-volume block per batch element: each input element read exactly once,
    # lane-dense (Lh-wide) output stores.  For very large volumes (>= ~128^3) this
    # block should be x-chunked to stay inside v7x's scoped VMEM.
    Vw = pl.pallas_call(
        kernel,
        out_shape=jax.ShapeDtypeStruct((N, 3, X, Lh), jnp.float32),
        grid=(N,),
        in_specs=[pl.BlockSpec((None, 4, X + 2, Fp), lambda n: (n, 0, 0, 0))],
        out_specs=pl.BlockSpec((None, 3, X, Lh), lambda n: (n, 0, 0, 0)),
        compiler_params=pltpu.CompilerParams(dimension_semantics=("parallel",)),
    )(Pf)

    # window column y*Zp + z holds V at (y, z); fold back and drop the z pad cols
    V = jnp.pad(Vw, ((0, 0), (0, 0), (0, 0), (0, 2)))
    V = V.reshape(N, 3, X, Y, Zp)[..., :Z]
    return V


# ---------------------------------------------------------------------------
# Synthetic VAE3D net (get_net replacement) and module forward
# ---------------------------------------------------------------------------
# TODO(synk): the actual VAE3D_2Levels / VAE3D_32_Shallow / VAE3D_a definitions
# are not provided; this is a minimal conv-VAE stand-in with the same interface.
def init_params(key, in_channels=2, hidden=16, out_channels=4):
    ks = jax.random.split(key, 4)

    def conv_init(k, cout, cin):
        kw_, kb_ = jax.random.split(k)
        scale = 1.0 / jnp.sqrt(cin * 27.0)
        w = jax.random.normal(kw_, (cout, cin, 3, 3, 3), jnp.float32) * scale
        b = jax.random.normal(kb_, (cout,), jnp.float32) * 0.01
        return w, b

    return {
        "enc": conv_init(ks[0], hidden, in_channels),
        "mu": conv_init(ks[1], hidden, hidden),
        "logvar": conv_init(ks[2], hidden, hidden),
        "dec": conv_init(ks[3], out_channels, hidden),
    }


def vae3d_hhdv_forward(params, x, data_spacing=(1.0, 1.0, 1.0)):
    """Mirror of VAE3D_HHDV.forward: x is NCDHW, returns [stack([Vx,Vy,Vz],1)]."""
    N, Cin, X, Y, Z = x.shape

    # Single cheap wrapper pass: zero-pad, fold (y,z) onto lanes, cast to bf16.
    xp = jnp.pad(x, ((0, 0), (0, 0), (1, 1), (1, 1), (1, 1)))
    xp = jnp.transpose(xp, (0, 2, 1, 3, 4)).reshape(
        N, X + 2, Cin, (Y + 2) * (Z + 2)).astype(jnp.bfloat16)

    conv = functools.partial(conv3d_padded_flat, X=X, Y=Y, Z=Z)
    h = conv(xp, *params["enc"], act="relu")

    # mu and logvar convs fused into one pallas_call (Cout = 2*hidden)
    w_cat = jnp.concatenate([params["mu"][0], params["logvar"][0]], axis=0)
    b_cat = jnp.concatenate([params["mu"][1], params["logvar"][1]], axis=0)
    stats = conv(h, w_cat, b_cat)

    # TODO(synk): reparameterization noise omitted (z = mu) and the original
    # SepActivate channel-group activation is unknown (identity).
    # The decoder reads the first `hidden` channels of `stats` (= mu) in place.
    out_pf = conv(stats, *params["dec"])

    V = hhd_3d_from_padded_flat(out_pf, X=X, Y=Y, Z=Z, data_spacing=data_spacing)
    return [V]


# ---------------------------------------------------------------------------
# Pure-JAX reference (same bf16 storage between layers) for validation
# ---------------------------------------------------------------------------
def _reference_forward(params, x, data_spacing=(1.0, 1.0, 1.0)):
    f32 = jnp.float32

    def conv(hv, w, b, act=None):
        y = lax.conv_general_dilated(
            hv.astype(jnp.bfloat16), w.astype(jnp.bfloat16),
            window_strides=(1, 1, 1), padding=((1, 1), (1, 1), (1, 1)),
            dimension_numbers=("NCDHW", "OIDHW", "NCDHW"),
            preferred_element_type=f32)
        y = y + b.reshape(1, -1, 1, 1, 1)
        if act == "relu":
            y = jnp.maximum(y, 0.0)
        return y.astype(jnp.bfloat16).astype(f32)   # bf16 storage, like the kernels

    h = conv(x.astype(f32), *params["enc"], act="relu")
    w_cat = jnp.concatenate([params["mu"][0], params["logvar"][0]], axis=0)
    b_cat = jnp.concatenate([params["mu"][1], params["logvar"][1]], axis=0)
    stats = conv(h, w_cat, b_cat)
    hidden = params["mu"][0].shape[0]
    out = conv(stats[:, :hidden], *params["dec"])

    P = out
    for ax in (2, 3, 4):
        P = _extrap_pad1(P, ax)
    dxs, dys, dzs = [float(v) for v in data_spacing]
    ddx = (P[:, :, 2:, 1:-1, 1:-1] - P[:, :, :-2, 1:-1, 1:-1]) * (0.5 / dxs)
    ddy = (P[:, :, 1:-1, 2:, 1:-1] - P[:, :, 1:-1, :-2, 1:-1]) * (0.5 / dys)
    ddz = (P[:, :, 1:-1, 1:-1, 2:] - P[:, :, 1:-1, 1:-1, :-2]) * (0.5 / dzs)
    Vx = ddy[:, 2] - ddz[:, 1] + ddx[:, 3]
    Vy = ddz[:, 0] - ddx[:, 2] + ddy[:, 3]
    Vz = ddx[:, 1] - ddy[:, 0] + ddz[:, 3]
    return [jnp.stack([Vx, Vy, Vz], axis=1)]


# ---------------------------------------------------------------------------
if __name__ == "__main__":
    key = jax.random.PRNGKey(0)
    kp, kx = jax.random.split(key)

    # small shapes: batch=2, in_channels=2, hidden=16, spatial 16x16x16
    params = init_params(kp, in_channels=2, hidden=16, out_channels=4)
    x = jax.random.normal(kx, (2, 2, 16, 16, 16), jnp.float32)
    spacing = (1.0, 1.0, 1.0)

    fwd = jax.jit(functools.partial(vae3d_hhdv_forward, data_spacing=spacing))
    Vs = jax.block_until_ready(fwd(params, x))

    V = Vs[0]
    assert V.shape == (2, 3, 16, 16, 16), V.shape
    assert bool(jnp.all(jnp.isfinite(V)))

    # validate against a pure-JAX reference (same bf16 layer storage)
    V_ref = _reference_forward(params, x, spacing)[0]
    np.testing.assert_allclose(np.asarray(V), np.asarray(V_ref),
                               rtol=1e-1, atol=1e-1)

    print("KERNEL_OK")
</pallas_src>

<mosaic_0001>
module attributes {stable_mosaic.version = 11 : i64} {
  func.func @_conv3d_kernel(%arg0: i32, %arg1: i32, %arg2: memref<16x54xbf16, #tpu.memory_space<vmem>>, %arg3: memref<16x1xf32, #tpu.memory_space<vmem>>, %arg4: memref<1x324xf32, #tpu.memory_space<vmem>>, %arg5: memref<1x1x2x324xbf16, #tpu.memory_space<vmem>>, %arg6: memref<1x1x2x324xbf16, #tpu.memory_space<vmem>>, %arg7: memref<1x1x2x324xbf16, #tpu.memory_space<vmem>>, %arg8: memref<1x1x16x324xbf16, #tpu.memory_space<vmem>>, %arg9: memref<54x286xbf16, #tpu.memory_space<vmem>>) attributes {dimension_semantics = [#tpu.dimension_semantics<parallel>, #tpu.dimension_semantics<parallel>], iteration_bounds = array<i64: 2, 18>, scalar_prefetch = 0 : i64, scratch_operands = 1 : i64, tpu.core_type = #tpu.core_type<tc>, window_params = [{pipeline_mode = #tpu.pipeline_mode<synchronous>, transform_indices = @transform_0, window_bounds = array<i64: 16, 54>}, {pipeline_mode = #tpu.pipeline_mode<synchronous>, transform_indices = @transform_1, window_bounds = array<i64: 16, 1>}, {pipeline_mode = #tpu.pipeline_mode<synchronous>, transform_indices = @transform_2, window_bounds = array<i64: 1, 324>}, {transform_indices = @transform_3, window_bounds = array<i64: 1, 1, 2, 324>}, {transform_indices = @transform_4, window_bounds = array<i64: 1, 1, 2, 324>}, {transform_indices = @transform_5, window_bounds = array<i64: 1, 1, 2, 324>}, {transform_indices = @transform_6, window_bounds = array<i64: 1, 1, 16, 324>}]} {
    %c1_i32 = arith.constant 1 : i32
    %0 = arith.cmpi sge, %arg1, %c1_i32 : i32
    %c16_i32 = arith.constant 16 : i32
    %1 = arith.cmpi sle, %arg1, %c16_i32 : i32
    %2 = arith.andi %0, %1 : i1
    %3 = arith.extui %2 : i1 to i32
    %c0_i32 = arith.constant 0 : i32
    %4 = arith.cmpi ne, %3, %c0_i32 : i32
    scf.if %4 {
      %c0 = arith.constant 0 : index
      %c0_1 = arith.constant 0 : index
      %c0_2 = arith.constant 0 : index
      %c0_3 = arith.constant 0 : index
      %8 = vector.load %arg5[%c0, %c0_1, %c0_2, %c0_3] : memref<1x1x2x324xbf16, #tpu.memory_space<vmem>>, vector<1x1x2x324xbf16>
      %9 = vector.shape_cast %8 : vector<1x1x2x324xbf16> to vector<2x324xbf16>
      %c0_4 = arith.constant 0 : index
      %c0_5 = arith.constant 0 : index
      %c0_6 = arith.constant 0 : index
      %c0_7 = arith.constant 0 : index
      %10 = vector.load %arg6[%c0_4, %c0_5, %c0_6, %c0_7] : memref<1x1x2x324xbf16, #tpu.memory_space<vmem>>, vector<1x1x2x324xbf16>
      %11 = vector.shape_cast %10 : vector<1x1x2x324xbf16> to vector<2x324xbf16>
      %c0_8 = arith.constant 0 : index
      %c0_9 = arith.constant 0 : index
      %c0_10 = arith.constant 0 : index
      %c0_11 = arith.constant 0 : index
      %12 = vector.load %arg7[%c0_8, %c0_9, %c0_10, %c0_11] : memref<1x1x2x324xbf16, #tpu.memory_space<vmem>>, vector<1x1x2x324xbf16>
      %13 = vector.shape_cast %12 : vector<1x1x2x324xbf16> to vector<2x324xbf16>
      %14 = vector.extract_strided_slice %9 {offsets = [0, 0], sizes = [2, 286], strides = [1, 1]} : vector<2x324xbf16> to vector<2x286xbf16>
      %c0_12 = arith.constant 0 : index
      %c0_13 = arith.constant 0 : index
      %15 = vector.load %arg9[%c0_12, %c0_13] : memref<54x286xbf16, #tpu.memory_space<vmem>>, vector<2x286xbf16>
      tpu.vector_store %arg9[%c0_12, %c0_13], %14 {strides = array<i32>} : memref<54x286xbf16, #tpu.memory_space<vmem>>, vector<2x286xbf16>,
      %16 = vector.extract_strided_slice %9 {offsets = [0, 1], sizes = [2, 286], strides = [1, 1]} : vector<2x324xbf16> to vector<2x286xbf16>
      %c2 = arith.constant 2 : index
      %c0_14 = arith.constant 0 : index
      %17 = vector.load %arg9[%c2, %c0_14] : memref<54x286xbf16, #tpu.memory_space<vmem>>, vector<2x286xbf16>
      tpu.vector_store %arg9[%c2, %c0_14], %16 {strides = array<i32>} : memref<54x286xbf16, #tpu.memory_space<vmem>>, vector<2x286xbf16>,
      %18 = vector.extract_strided_slice %9 {offsets = [0, 2], sizes = [2, 286], strides = [1, 1]} : vector<2x324xbf16> to vector<2x286xbf16>
      %c4 = arith.constant 4 : index
      %c0_15 = arith.constant 0 : index
      %19 = vector.load %arg9[%c4, %c0_15] : memref<54x286xbf16, #tpu.memory_space<vmem>>, vector<2x286xbf16>
      tpu.vector_store %arg9[%c4, %c0_15], %18 {strides = array<i32>} : memref<54x286xbf16, #tpu.memory_space<vmem>>, vector<2x286xbf16>,
      %20 = vector.extract_strided_slice %9 {offsets = [0, 18], sizes = [2, 286], strides = [1, 1]} : vector<2x324xbf16> to vector<2x286xbf16>
      %c6 = arith.constant 6 : index
      %c0_16 = arith.constant 0 : index
      %21 = vector.load %arg9[%c6, %c0_16] : memref<54x286xbf16, #tpu.memory_space<vmem>>, vector<2x286xbf16>
      tpu.vector_store %arg9[%c6, %c0_16], %20 {strides = array<i32>} : memref<54x286xbf16, #tpu.memory_space<vmem>>, vector<2x286xbf16>,
      %22 = vector.extract_strided_slice %9 {offsets = [0, 19], sizes = [2, 286], strides = [1, 1]} : vector<2x324xbf16> to vector<2x286xbf16>
      %c8 = arith.constant 8 : index
      %c0_17 = arith.constant 0 : index
      %23 = vector.load %arg9[%c8, %c0_17] : memref<54x286xbf16, #tpu.memory_space<vmem>>, vector<2x286xbf16>
      tpu.vector_store %arg9[%c8, %c0_17], %22 {strides = array<i32>} : memref<54x286xbf16, #tpu.memory_space<vmem>>, vector<2x286xbf16>,
      %24 = vector.extract_strided_slice %9 {offsets = [0, 20], sizes = [2, 286], strides = [1, 1]} : vector<2x324xbf16> to vector<2x286xbf16>
      %c10 = arith.constant 10 : index
      %c0_18 = arith.constant 0 : index
      %25 = vector.load %arg9[%c10, %c0_18] : memref<54x286xbf16, #tpu.memory_space<vmem>>, vector<2x286xbf16>
      tpu.vector_store %arg9[%c10, %c0_18], %24 {strides = array<i32>} : memref<54x286xbf16, #tpu.memory_space<vmem>>, vector<2x286xbf16>,
      %26 = vector.extract_strided_slice %9 {offsets = [0, 36], sizes = [2, 286], strides = [1, 1]} : vector<2x324xbf16> to vector<2x286xbf16>
      %c12 = arith.constant 12 : index
      %c0_19 = arith.constant 0 : index
      %27 = vector.load %arg9[%c12, %c0_19] : memref<54x286xbf16, #tpu.memory_space<vmem>>, vector<2x286xbf16>
      tpu.vector_store %arg9[%c12, %c0_19], %26 {strides = array<i32>} : memref<54x286xbf16, #tpu.memory_space<vmem>>, vector<2x286xbf16>,
      %28 = vector.extract_strided_slice %9 {offsets = [0, 37], sizes = [2, 286], strides = [1, 1]} : vector<2x324xbf16> to vector<2x286xbf16>
      %c14 = arith.constant 14 : index
      %c0_20 = arith.constant 0 : index
      %29 = vector.load %arg9[%c14, %c0_20] : memref<54x286xbf16, #tpu.memory_space<vmem>>, vector<2x286xbf16>
      tpu.vector_store %arg9[%c14, %c0_20], %28 {strides = array<i32>} : memref<54x286xbf16, #tpu.memory_space<vmem>>, vector<2x286xbf16>,
      %30 = vector.extract_strided_slice %9 {offsets = [0, 38], sizes = [2, 286], strides = [1, 1]} : vector<2x324xbf16> to vector<2x286xbf16>
      %c16 = arith.constant 16 : index
      %c0_21 = arith.constant 0 : index
      %31 = vector.load %arg9[%c16, %c0_21] : memref<54x286xbf16, #tpu.memory_space<vmem>>, vector<2x286xbf16>
      tpu.vector_store %arg9[%c16, %c0_21], %30 {strides = array<i32>} : memref<54x286xbf16, #tpu.memory_space<vmem>>, vector<2x286xbf16>,
      %32 = vector.extract_strided_slice %11 {offsets = [0, 0], sizes = [2, 286], strides = [1, 1]} : vector<2x324xbf16> to vector<2x286xbf16>
      %c18 = arith.constant 18 : index
      %c0_22 = arith.constant 0 : index
      %33 = vector.load %arg9[%c18, %c0_22] : memref<54x286xbf16, #tpu.memory_space<vmem>>, vector<2x286xbf16>
      tpu.vector_store %arg9[%c18, %c0_22], %32 {strides = array<i32>} : memref<54x286xbf16, #tpu.memory_space<vmem>>, vector<2x286xbf16>,
      %34 = vector.extract_strided_slice %11 {offsets = [0, 1], sizes = [2, 286], strides = [1, 1]} : vector<2x324xbf16> to vector<2x286xbf16>
      %c20 = arith.constant 20 : index
      %c0_23 = arith.constant 0 : index
      %35 = vector.load %arg9[%c20, %c0_23] : memref<54x286xbf16, #tpu.memory_space<vmem>>, vector<2x286xbf16>
      tpu.vector_store %arg9[%c20, %c0_23], %34 {strides = array<i32>} : memref<54x286xbf16, #tpu.memory_space<vmem>>, vector<2x286xbf16>,
      %36 = vector.extract_strided_slice %11 {offsets = [0, 2], sizes = [2, 286], strides = [1, 1]} : vector<2x324xbf16> to vector<2x286xbf16>
      %c22 = arith.constant 22 : index
      %c0_24 = arith.constant 0 : index
      %37 = vector.load %arg9[%c22, %c0_24] : memref<54x286xbf16, #tpu.memory_space<vmem>>, vector<2x286xbf16>
      tpu.vector_store %arg9[%c22, %c0_24], %36 {strides = array<i32>} : memref<54x286xbf16, #tpu.memory_space<vmem>>, vector<2x286xbf16>,
      %38 = vector.extract_strided_slice %11 {offsets = [0, 18], sizes = [2, 286], strides = [1, 1]} : vector<2x324xbf16> to vector<2x286xbf16>
      %c24 = arith.constant 24 : index
      %c0_25 = arith.constant 0 : index
      %39 = vector.load %arg9[%c24, %c0_25] : memref<54x286xbf16, #tpu.memory_space<vmem>>, vector<2x286xbf16>
      tpu.vector_store %arg9[%c24, %c0_25], %38 {strides = array<i32>} : memref<54x286xbf16, #tpu.memory_space<vmem>>, vector<2x286xbf16>,
      %40 = vector.extract_strided_slice %11 {offsets = [0, 19], sizes = [2, 286], strides = [1, 1]} : vector<2x324xbf16> to vector<2x286xbf16>
      %c26 = arith.constant 26 : index
      %c0_26 = arith.constant 0 : index
      %41 = vector.load %arg9[%c26, %c0_26] : memref<54x286xbf16, #tpu.memory_space<vmem>>, vector<2x286xbf16>
      tpu.vector_store %arg9[%c26, %c0_26], %40 {strides = array<i32>} : memref<54x286xbf16, #tpu.memory_space<vmem>>, vector<2x286xbf16>,
      %42 = vector.extract_strided_slice %11 {offsets = [0, 20], sizes = [2, 286], strides = [1, 1]} : vector<2x324xbf16> to vector<2x286xbf16>
      %c28 = arith.constant 28 : index
      %c0_27 = arith.constant 0 : index
      %43 = vector.load %arg9[%c28, %c0_27] : memref<54x286xbf16, #tpu.memory_space<vmem>>, vector<2x286xbf16>
      tpu.vector_store %arg9[%c28, %c0_27], %42 {strides = array<i32>} : memref<54x286xbf16, #tpu.memory_space<vmem>>, vector<2x286xbf16>,
      %44 = vector.extract_strided_slice %11 {offsets = [0, 36], sizes = [2, 286], strides = [1, 1]} : vector<2x324xbf16> to vector<2x286xbf16>
      %c30 = arith.constant 30 : index
      %c0_28 = arith.constant 0 : index
      %45 = vector.load %arg9[%c30, %c0_28] : memref<54x286xbf16, #tpu.memory_space<vmem>>, vector<2x286xbf16>
      tpu.vector_store %arg9[%c30, %c0_28], %44 {strides = array<i32>} : memref<54x286xbf16, #tpu.memory_space<vmem>>, vector<2x286xbf16>,
      %46 = vector.extract_strided_slice %11 {offsets = [0, 37], sizes = [2, 286], strides = [1, 1]} : vector<2x324xbf16> to vector<2x286xbf16>
      %c32 = arith.constant 32 : index
      %c0_29 = arith.constant 0 : index
      %47 = vector.load %arg9[%c32, %c0_29] : memref<54x286xbf16, #tpu.memory_space<vmem>>, vector<2x286xbf16>
      tpu.vector_store %arg9[%c32, %c0_29], %46 {strides = array<i32>} : memref<54x286xbf16, #tpu.memory_space<vmem>>, vector<2x286xbf16>,
      %48 = vector.extract_strided_slice %11 {offsets = [0, 38], sizes = [2, 286], strides = [1, 1]} : vector<2x324xbf16> to vector<2x286xbf16>
      %c34 = arith.constant 34 : index
      %c0_30 = arith.constant 0 : index
      %49 = vector.load %arg9[%c34, %c0_30] : memref<54x286xbf16, #tpu.memory_space<vmem>>, vector<2x286xbf16>
      tpu.vector_store %arg9[%c34, %c0_30], %48 {strides = array<i32>} : memref<54x286xbf16, #tpu.memory_space<vmem>>, vector<2x286xbf16>,
      %50 = vector.extract_strided_slice %13 {offsets = [0, 0], sizes = [2, 286], strides = [1, 1]} : vector<2x324xbf16> to vector<2x286xbf16>
      %c36 = arith.constant 36 : index
      %c0_31 = arith.constant 0 : index
      %51 = vector.load %arg9[%c36, %c0_31] : memref<54x286xbf16, #tpu.memory_space<vmem>>, vector<2x286xbf16>
      tpu.vector_store %arg9[%c36, %c0_31], %50 {strides = array<i32>} : memref<54x286xbf16, #tpu.memory_space<vmem>>, vector<2x286xbf16>,
      %52 = vector.extract_strided_slice %13 {offsets = [0, 1], sizes = [2, 286], strides = [1, 1]} : vector<2x324xbf16> to vector<2x286xbf16>
      %c38 = arith.constant 38 : index
      %c0_32 = arith.constant 0 : index
      %53 = vector.load %arg9[%c38, %c0_32] : memref<54x286xbf16, #tpu.memory_space<vmem>>, vector<2x286xbf16>
      tpu.vector_store %arg9[%c38, %c0_32], %52 {strides = array<i32>} : memref<54x286xbf16, #tpu.memory_space<vmem>>, vector<2x286xbf16>,
      %54 = vector.extract_strided_slice %13 {offsets = [0, 2], sizes = [2, 286], strides = [1, 1]} : vector<2x324xbf16> to vector<2x286xbf16>
      %c40 = arith.constant 40 : index
      %c0_33 = arith.constant 0 : index
      %55 = vector.load %arg9[%c40, %c0_33] : memref<54x286xbf16, #tpu.memory_space<vmem>>, vector<2x286xbf16>
      tpu.vector_store %arg9[%c40, %c0_33], %54 {strides = array<i32>} : memref<54x286xbf16, #tpu.memory_space<vmem>>, vector<2x286xbf16>,
      %56 = vector.extract_strided_slice %13 {offsets = [0, 18], sizes = [2, 286], strides = [1, 1]} : vector<2x324xbf16> to vector<2x286xbf16>
      %c42 = arith.constant 42 : index
      %c0_34 = arith.constant 0 : index
      %57 = vector.load %arg9[%c42, %c0_34] : memref<54x286xbf16, #tpu.memory_space<vmem>>, vector<2x286xbf16>
      tpu.vector_store %arg9[%c42, %c0_34], %56 {strides = array<i32>} : memref<54x286xbf16, #tpu.memory_space<vmem>>, vector<2x286xbf16>,
      %58 = vector.extract_strided_slice %13 {offsets = [0, 19], sizes = [2, 286], strides = [1, 1]} : vector<2x324xbf16> to vector<2x286xbf16>
      %c44 = arith.constant 44 : index
      %c0_35 = arith.constant 0 : index
      %59 = vector.load %arg9[%c44, %c0_35] : memref<54x286xbf16, #tpu.memory_space<vmem>>, vector<2x286xbf16>
      tpu.vector_store %arg9[%c44, %c0_35], %58 {strides = array<i32>} : memref<54x286xbf16, #tpu.memory_space<vmem>>, vector<2x286xbf16>,
      %60 = vector.extract_strided_slice %13 {offsets = [0, 20], sizes = [2, 286], strides = [1, 1]} : vector<2x324xbf16> to vector<2x286xbf16>
      %c46 = arith.constant 46 : index
      %c0_36 = arith.constant 0 : index
      %61 = vector.load %arg9[%c46, %c0_36] : memref<54x286xbf16, #tpu.memory_space<vmem>>, vector<2x286xbf16>
      tpu.vector_store %arg9[%c46, %c0_36], %60 {strides = array<i32>} : memref<54x286xbf16, #tpu.memory_space<vmem>>, vector<2x286xbf16>,
      %62 = vector.extract_strided_slice %13 {offsets = [0, 36], sizes = [2, 286], strides = [1, 1]} : vector<2x324xbf16> to vector<2x286xbf16>
      %c48 = arith.constant 48 : index
      %c0_37 = arith.constant 0 : index
      %63 = vector.load %arg9[%c48, %c0_37] : memref<54x286xbf16, #tpu.memory_space<vmem>>, vector<2x286xbf16>
      tpu.vector_store %arg9[%c48, %c0_37], %62 {strides = array<i32>} : memref<54x286xbf16, #tpu.memory_space<vmem>>, vector<2x286xbf16>,
      %64 = vector.extract_strided_slice %13 {offsets = [0, 37], sizes = [2, 286], strides = [1, 1]} : vector<2x324xbf16> to vector<2x286xbf16>
      %c50 = arith.constant 50 : index
      %c0_38 = arith.constant 0 : index
      %65 = vector.load %arg9[%c50, %c0_38] : memref<54x286xbf16, #tpu.memory_space<vmem>>, vector<2x286xbf16>
      tpu.vector_store %arg9[%c50, %c0_38], %64 {strides = array<i32>} : memref<54x286xbf16, #tpu.memory_space<vmem>>, vector<2x286xbf16>,
      %66 = vector.extract_strided_slice %13 {offsets = [0, 38], sizes = [2, 286], strides = [1, 1]} : vector<2x324xbf16> to vector<2x286xbf16>
      %c52 = arith.constant 52 : index
      %c0_39 = arith.constant 0 : index
      %67 = vector.load %arg9[%c52, %c0_39] : memref<54x286xbf16, #tpu.memory_space<vmem>>, vector<2x286xbf16>
      tpu.vector_store %arg9[%c52, %c0_39], %66 {strides = array<i32>} : memref<54x286xbf16, #tpu.memory_space<vmem>>, vector<2x286xbf16>,
      %c0_40 = arith.constant 0 : index
      %c0_41 = arith.constant 0 : index
      %68 = vector.load %arg2[%c0_40, %c0_41] : memref<16x54xbf16, #tpu.memory_space<vmem>>, vector<16x54xbf16>
      %c0_42 = arith.constant 0 : index
      %c0_43 = arith.constant 0 : index
      %69 = vector.load %arg9[%c0_42, %c0_43] : memref<54x286xbf16, #tpu.memory_space<vmem>>, vector<54x286xbf16>
      %cst = arith.constant dense<0.000000e+00> : vector<16x286xf32>
      %70 = tpu.matmul %68, %69, %cst {dimension_numbers = #tpu.dot_dimension_numbers<[1], [0], [0], [1], [0, 0, 1, 1], [], []>} : vector<16x54xbf16>, vector<54x286xbf16>, vector<16x286xf32> -> vector<16x286xf32>
      %c0_44 = arith.constant 0 : index
      %c0_45 = arith.constant 0 : index
      %71 = vector.load %arg3[%c0_44, %c0_45] : memref<16x1xf32, #tpu.memory_space<vmem>>, vector<16x1xf32>
      %72 = vector.broadcast %71 : vector<16x1xf32> to vector<16x286xf32>
      %73 = arith.addf %70, %72 : vector<16x286xf32>
      %cst_46 = arith.constant 0.000000e+00 : f32
      %74 = vector.broadcast %cst_46 : f32 to vector<16x286xf32>
      %75 = arith.maximumf %73, %74 : vector<16x286xf32>
      %c0_47 = arith.constant 0 : index
      %c19 = arith.constant 19 : index
      %76 = vector.load %arg4[%c0_47, %c19] : memref<1x324xf32, #tpu.memory_space<vmem>>, vector<1x286xf32>
      %77 = vector.broadcast %76 : vector<1x286xf32> to vector<16x286xf32>
      %78 = arith.mulf %75, %77 : vector<16x286xf32>
      %cst_48 = arith.constant 0.000000e+00 : bf16
      %79 = vector.broadcast %cst_48 : bf16 to vector<16x19xbf16>
      %c0_49 = arith.constant 0 : index
      %c0_50 = arith.constant 0 : index
      %c0_51 = arith.constant 0 : index
      %c0_52 = arith.constant 0 : index
      %80 = vector.load %arg8[%c0_49, %c0_50, %c0_51, %c0_52] : memref<1x1x16x324xbf16, #tpu.memory_space<vmem>>, vector<1x1x16x19xbf16>
      %81 = vector.shape_cast %80 : vector<1x1x16x19xbf16> to vector<16x19xbf16>
      %82 = vector.shape_cast %79 : vector<16x19xbf16> to vector<1x1x16x19xbf16>
      tpu.vector_store %arg8[%c0_49, %c0_50, %c0_51, %c0_52], %82 {strides = array<i32>} : memref<1x1x16x324xbf16, #tpu.memory_space<vmem>>, vector<1x1x16x19xbf16>,
      %83 = arith.truncf %78 : vector<16x286xf32> to vector<16x286xbf16>
      %c0_53 = arith.constant 0 : index
      %c0_54 = arith.constant 0 : index
      %c0_55 = arith.constant 0 : index
      %c19_56 = arith.constant 19 : index
      %84 = vector.load %arg8[%c0_53, %c0_54, %c0_55, %c19_56] : memref<1x1x16x324xbf16, #tpu.memory_space<vmem>>, vector<1x1x16x286xbf16>
      %85 = vector.shape_cast %84 : vector<1x1x16x286xbf16> to vector<16x286xbf16>
      %86 = vector.shape_cast %83 : vector<16x286xbf16> to vector<1x1x16x286xbf16>
      tpu.vector_store %arg8[%c0_53, %c0_54, %c0_55, %c19_56], %86 {strides = array<i32>} : memref<1x1x16x324xbf16, #tpu.memory_space<vmem>>, vector<1x1x16x286xbf16>,
      %cst_57 = arith.constant 0.000000e+00 : bf16
      %87 = vector.broadcast %cst_57 : bf16 to vector<16x19xbf16>
      %c0_58 = arith.constant 0 : index
      %c0_59 = arith.constant 0 : index
      %c0_60 = arith.constant 0 : index
      %c305 = arith.constant 305 : index
      %88 = vector.load %arg8[%c0_58, %c0_59, %c0_60, %c305] : memref<1x1x16x324xbf16, #tpu.memory_space<vmem>>, vector<1x1x16x19xbf16>
      %89 = vector.shape_cast %88 : vector<1x1x16x19xbf16> to vector<16x19xbf16>
      %90 = vector.shape_cast %87 : vector<16x19xbf16> to vector<1x1x16x19xbf16>
      tpu.vector_store %arg8[%c0_58, %c0_59, %c0_60, %c305], %90 {strides = array<i32>} : memref<1x1x16x324xbf16, #tpu.memory_space<vmem>>, vector<1x1x16x19xbf16>,
    } else {
    }
    %true = arith.constant true
    %5 = arith.xori %2, %true : i1
    %6 = arith.extui %5 : i1 to i32
    %c0_i32_0 = arith.constant 0 : i32
    %7 = arith.cmpi ne, %6, %c0_i32_0 : i32
    scf.if %7 {
      %cst = arith.constant 0.000000e+00 : bf16
      %8 = vector.broadcast %cst : bf16 to vector<16x324xbf16>
      %c0 = arith.constant 0 : index
      %c0_1 = arith.constant 0 : index
      %c0_2 = arith.constant 0 : index
      %c0_3 = arith.constant 0 : index
      %9 = vector.load %arg8[%c0, %c0_1, %c0_2, %c0_3] : memref<1x1x16x324xbf16, #tpu.memory_space<vmem>>, vector<1x1x16x324xbf16>
      %10 = vector.shape_cast %9 : vector<1x1x16x324xbf16> to vector<16x324xbf16>
      %11 = vector.shape_cast %8 : vector<16x324xbf16> to vector<1x1x16x324xbf16>
      tpu.vector_store %arg8[%c0, %c0_1, %c0_2, %c0_3], %11 {strides = array<i32>} : memref<1x1x16x324xbf16, #tpu.memory_space<vmem>>, vector<1x1x16x324xbf16>,
    } else {
    }
    return
  }
  func.func @transform_0(%arg0: i32, %arg1: i32) -> (i32, i32) {
    %c0_i32 = arith.constant 0 : i32
    %c0_i32_0 = arith.constant 0 : i32
    %c0_i32_1 = arith.constant 0 : i32
    return %c0_i32, %c0_i32_0 : i32, i32
  }
  func.func @transform_1(%arg0: i32, %arg1: i32) -> (i32, i32) {
    %c0_i32 = arith.constant 0 : i32
    %c0_i32_0 = arith.constant 0 : i32
    %c0_i32_1 = arith.constant 0 : i32
    return %c0_i32, %c0_i32_0 : i32, i32
  }
  func.func @transform_2(%arg0: i32, %arg1: i32) -> (i32, i32) {
    %c0_i32 = arith.constant 0 : i32
    %c0_i32_0 = arith.constant 0 : i32
    %c0_i32_1 = arith.constant 0 : i32
    return %c0_i32, %c0_i32_0 : i32, i32
  }
  func.func @transform_3(%arg0: i32, %arg1: i32) -> (i32, i32, i32, i32) {
    %c1_i32 = arith.constant 1 : i32
    %0 = arith.subi %arg1, %c1_i32 : i32
    %c0_i32 = arith.constant 0 : i32
    %1 = arith.addi %0, %c0_i32 : i32
    %c0_i32_0 = arith.constant 0 : i32
    %c17_i32 = arith.constant 17 : i32
    %2 = arith.maxsi %c0_i32_0, %1 : i32
    %3 = arith.minsi %c17_i32, %2 : i32
    %c0_i32_1 = arith.constant 0 : i32
    %c0_i32_2 = arith.constant 0 : i32
    %c0_i32_3 = arith.constant 0 : i32
    return %arg0, %3, %c0_i32_1, %c0_i32_2 : i32, i32, i32, i32
  }
  func.func @transform_4(%arg0: i32, %arg1: i32) -> (i32, i32, i32, i32) {
    %c1_i32 = arith.constant 1 : i32
    %0 = arith.subi %arg1, %c1_i32 : i32
    %c1_i32_0 = arith.constant 1 : i32
    %1 = arith.addi %0, %c1_i32_0 : i32
    %c0_i32 = arith.constant 0 : i32
    %c17_i32 = arith.constant 17 : i32
    %2 = arith.maxsi %c0_i32, %1 : i32
    %3 = arith.minsi %c17_i32, %2 : i32
    %c0_i32_1 = arith.constant 0 : i32
    %c0_i32_2 = arith.constant 0 : i32
    %c0_i32_3 = arith.constant 0 : i32
    return %arg0, %3, %c0_i32_1, %c0_i32_2 : i32, i32, i32, i32
  }
  func.func @transform_5(%arg0: i32, %arg1: i32) -> (i32, i32, i32, i32) {
    %c1_i32 = arith.constant 1 : i32
    %0 = arith.subi %arg1, %c1_i32 : i32
    %c2_i32 = arith.constant 2 : i32
    %1 = arith.addi %0, %c2_i32 : i32
    %c0_i32 = arith.constant 0 : i32
    %c17_i32 = arith.constant 17 : i32
    %2 = arith.maxsi %c0_i32, %1 : i32
    %3 = arith.minsi %c17_i32, %2 : i32
    %c0_i32_0 = arith.constant 0 : i32
    %c0_i32_1 = arith.constant 0 : i32
    %c0_i32_2 = arith.constant 0 : i32
    return %arg0, %3, %c0_i32_0, %c0_i32_1 : i32, i32, i32, i32
  }
  func.func @transform_6(%arg0: i32, %arg1: i32) -> (i32, i32, i32, i32) {
    %c0_i32 = arith.constant 0 : i32
    %c0_i32_0 = arith.constant 0 : i32
    %c0_i32_1 = arith.constant 0 : i32
    return %arg0, %arg1, %c0_i32, %c0_i32_0 : i32, i32, i32, i32
  }
}

module attributes {stable_mosaic.version = 11 : i64} {
  func.func @_conv3d_kernel(%arg0: i32, %arg1: i32, %arg2: memref<32x432xbf16, #tpu.memory_space<vmem>>, %arg3: memref<32x1xf32, #tpu.memory_space<vmem>>, %arg4: memref<1x324xf32, #tpu.memory_space<vmem>>, %arg5: memref<1x1x16x324xbf16, #tpu.memory_space<vmem>>, %arg6: memref<1x1x16x324xbf16, #tpu.memory_space<vmem>>, %arg7: memref<1x1x16x324xbf16, #tpu.memory_space<vmem>>, %arg8: memref<1x1x32x324xbf16, #tpu.memory_space<vmem>>, %arg9: memref<432x286xbf16, #tpu.memory_space<vmem>>) attributes {dimension_semantics = [#tpu.dimension_semantics<parallel>, #tpu.dimension_semantics<parallel>], iteration_bounds = array<i64: 2, 18>, scalar_prefetch = 0 : i64, scratch_operands = 1 : i64, tpu.core_type = #tpu.core_type<tc>, window_params = [{pipeline_mode = #tpu.pipeline_mode<synchronous>, transform_indices = @transform_0, window_bounds = array<i64: 32, 432>}, {pipeline_mode = #tpu.pipeline_mode<synchronous>, transform_indices = @transform_1, window_bounds = array<i64: 32, 1>}, {pipeline_mode = #tpu.pipeline_mode<synchronous>, transform_indices = @transform_2, window_bounds = array<i64: 1, 324>}, {transform_indices = @transform_3, window_bounds = array<i64: 1, 1, 16, 324>}, {transform_indices = @transform_4, window_bounds = array<i64: 1, 1, 16, 324>}, {transform_indices = @transform_5, window_bounds = array<i64: 1, 1, 16, 324>}, {transform_indices = @transform_6, window_bounds = array<i64: 1, 1, 32, 324>}]} {
    %c1_i32 = arith.constant 1 : i32
    %0 = arith.cmpi sge, %arg1, %c1_i32 : i32
    %c16_i32 = arith.constant 16 : i32
    %1 = arith.cmpi sle, %arg1, %c16_i32 : i32
    %2 = arith.andi %0, %1 : i1
    %3 = arith.extui %2 : i1 to i32
    %c0_i32 = arith.constant 0 : i32
    %4 = arith.cmpi ne, %3, %c0_i32 : i32
    scf.if %4 {
      %c0 = arith.constant 0 : index
      %c0_1 = arith.constant 0 : index
      %c0_2 = arith.constant 0 : index
      %c0_3 = arith.constant 0 : index
      %8 = vector.load %arg5[%c0, %c0_1, %c0_2, %c0_3] : memref<1x1x16x324xbf16, #tpu.memory_space<vmem>>, vector<1x1x16x324xbf16>
      %9 = vector.shape_cast %8 : vector<1x1x16x324xbf16> to vector<16x324xbf16>
      %c0_4 = arith.constant 0 : index
      %c0_5 = arith.constant 0 : index
      %c0_6 = arith.constant 0 : index
      %c0_7 = arith.constant 0 : index
      %10 = vector.load %arg6[%c0_4, %c0_5, %c0_6, %c0_7] : memref<1x1x16x324xbf16, #tpu.memory_space<vmem>>, vector<1x1x16x324xbf16>
      %11 = vector.shape_cast %10 : vector<1x1x16x324xbf16> to vector<16x324xbf16>
      %c0_8 = arith.constant 0 : index
      %c0_9 = arith.constant 0 : index
      %c0_10 = arith.constant 0 : index
      %c0_11 = arith.constant 0 : index
      %12 = vector.load %arg7[%c0_8, %c0_9, %c0_10, %c0_11] : memref<1x1x16x324xbf16, #tpu.memory_space<vmem>>, vector<1x1x16x324xbf16>
      %13 = vector.shape_cast %12 : vector<1x1x16x324xbf16> to vector<16x324xbf16>
      %14 = vector.extract_strided_slice %9 {offsets = [0, 0], sizes = [16, 286], strides = [1, 1]} : vector<16x324xbf16> to vector<16x286xbf16>
      %c0_12 = arith.constant 0 : index
      %c0_13 = arith.constant 0 : index
      %15 = vector.load %arg9[%c0_12, %c0_13] : memref<432x286xbf16, #tpu.memory_space<vmem>>, vector<16x286xbf16>
      tpu.vector_store %arg9[%c0_12, %c0_13], %14 {strides = array<i32>} : memref<432x286xbf16, #tpu.memory_space<vmem>>, vector<16x286xbf16>,
      %16 = vector.extract_strided_slice %9 {offsets = [0, 1], sizes = [16, 286], strides = [1, 1]} : vector<16x324xbf16> to vector<16x286xbf16>
      %c16 = arith.constant 16 : index
      %c0_14 = arith.constant 0 : index
      %17 = vector.load %arg9[%c16, %c0_14] : memref<432x286xbf16, #tpu.memory_space<vmem>>, vector<16x286xbf16>
      tpu.vector_store %arg9[%c16, %c0_14], %16 {strides = array<i32>} : memref<432x286xbf16, #tpu.memory_space<vmem>>, vector<16x286xbf16>,
      %18 = vector.extract_strided_slice %9 {offsets = [0, 2], sizes = [16, 286], strides = [1, 1]} : vector<16x324xbf16> to vector<16x286xbf16>
      %c32 = arith.constant 32 : index
      %c0_15 = arith.constant 0 : index
      %19 = vector.load %arg9[%c32, %c0_15] : memref<432x286xbf16, #tpu.memory_space<vmem>>, vector<16x286xbf16>
      tpu.vector_store %arg9[%c32, %c0_15], %18 {strides = array<i32>} : memref<432x286xbf16, #tpu.memory_space<vmem>>, vector<16x286xbf16>,
      %20 = vector.extract_strided_slice %9 {offsets = [0, 18], sizes = [16, 286], strides = [1, 1]} : vector<16x324xbf16> to vector<16x286xbf16>
      %c48 = arith.constant 48 : index
      %c0_16 = arith.constant 0 : index
      %21 = vector.load %arg9[%c48, %c0_16] : memref<432x286xbf16, #tpu.memory_space<vmem>>, vector<16x286xbf16>
      tpu.vector_store %arg9[%c48, %c0_16], %20 {strides = array<i32>} : memref<432x286xbf16, #tpu.memory_space<vmem>>, vector<16x286xbf16>,
      %22 = vector.extract_strided_slice %9 {offsets = [0, 19], sizes = [16, 286], strides = [1, 1]} : vector<16x324xbf16> to vector<16x286xbf16>
      %c64 = arith.constant 64 : index
      %c0_17 = arith.constant 0 : index
      %23 = vector.load %arg9[%c64, %c0_17] : memref<432x286xbf16, #tpu.memory_space<vmem>>, vector<16x286xbf16>
      tpu.vector_store %arg9[%c64, %c0_17], %22 {strides = array<i32>} : memref<432x286xbf16, #tpu.memory_space<vmem>>, vector<16x286xbf16>,
      %24 = vector.extract_strided_slice %9 {offsets = [0, 20], sizes = [16, 286], strides = [1, 1]} : vector<16x324xbf16> to vector<16x286xbf16>
      %c80 = arith.constant 80 : index
      %c0_18 = arith.constant 0 : index
      %25 = vector.load %arg9[%c80, %c0_18] : memref<432x286xbf16, #tpu.memory_space<vmem>>, vector<16x286xbf16>
      tpu.vector_store %arg9[%c80, %c0_18], %24 {strides = array<i32>} : memref<432x286xbf16, #tpu.memory_space<vmem>>, vector<16x286xbf16>,
      %26 = vector.extract_strided_slice %9 {offsets = [0, 36], sizes = [16, 286], strides = [1, 1]} : vector<16x324xbf16> to vector<16x286xbf16>
      %c96 = arith.constant 96 : index
      %c0_19 = arith.constant 0 : index
      %27 = vector.load %arg9[%c96, %c0_19] : memref<432x286xbf16, #tpu.memory_space<vmem>>, vector<16x286xbf16>
      tpu.vector_store %arg9[%c96, %c0_19], %26 {strides = array<i32>} : memref<432x286xbf16, #tpu.memory_space<vmem>>, vector<16x286xbf16>,
      %28 = vector.extract_strided_slice %9 {offsets = [0, 37], sizes = [16, 286], strides = [1, 1]} : vector<16x324xbf16> to vector<16x286xbf16>
      %c112 = arith.constant 112 : index
      %c0_20 = arith.constant 0 : index
      %29 = vector.load %arg9[%c112, %c0_20] : memref<432x286xbf16, #tpu.memory_space<vmem>>, vector<16x286xbf16>
      tpu.vector_store %arg9[%c112, %c0_20], %28 {strides = array<i32>} : memref<432x286xbf16, #tpu.memory_space<vmem>>, vector<16x286xbf16>,
      %30 = vector.extract_strided_slice %9 {offsets = [0, 38], sizes = [16, 286], strides = [1, 1]} : vector<16x324xbf16> to vector<16x286xbf16>
      %c128 = arith.constant 128 : index
      %c0_21 = arith.constant 0 : index
      %31 = vector.load %arg9[%c128, %c0_21] : memref<432x286xbf16, #tpu.memory_space<vmem>>, vector<16x286xbf16>
      tpu.vector_store %arg9[%c128, %c0_21], %30 {strides = array<i32>} : memref<432x286xbf16, #tpu.memory_space<vmem>>, vector<16x286xbf16>,
      %32 = vector.extract_strided_slice %11 {offsets = [0, 0], sizes = [16, 286], strides = [1, 1]} : vector<16x324xbf16> to vector<16x286xbf16>
      %c144 = arith.constant 144 : index
      %c0_22 = arith.constant 0 : index
      %33 = vector.load %arg9[%c144, %c0_22] : memref<432x286xbf16, #tpu.memory_space<vmem>>, vector<16x286xbf16>
      tpu.vector_store %arg9[%c144, %c0_22], %32 {strides = array<i32>} : memref<432x286xbf16, #tpu.memory_space<vmem>>, vector<16x286xbf16>,
      %34 = vector.extract_strided_slice %11 {offsets = [0, 1], sizes = [16, 286], strides = [1, 1]} : vector<16x324xbf16> to vector<16x286xbf16>
      %c160 = arith.constant 160 : index
      %c0_23 = arith.constant 0 : index
      %35 = vector.load %arg9[%c160, %c0_23] : memref<432x286xbf16, #tpu.memory_space<vmem>>, vector<16x286xbf16>
      tpu.vector_store %arg9[%c160, %c0_23], %34 {strides = array<i32>} : memref<432x286xbf16, #tpu.memory_space<vmem>>, vector<16x286xbf16>,
      %36 = vector.extract_strided_slice %11 {offsets = [0, 2], sizes = [16, 286], strides = [1, 1]} : vector<16x324xbf16> to vector<16x286xbf16>
      %c176 = arith.constant 176 : index
      %c0_24 = arith.constant 0 : index
      %37 = vector.load %arg9[%c176, %c0_24] : memref<432x286xbf16, #tpu.memory_space<vmem>>, vector<16x286xbf16>
      tpu.vector_store %arg9[%c176, %c0_24], %36 {strides = array<i32>} : memref<432x286xbf16, #tpu.memory_space<vmem>>, vector<16x286xbf16>,
      %38 = vector.extract_strided_slice %11 {offsets = [0, 18], sizes = [16, 286], strides = [1, 1]} : vector<16x324xbf16> to vector<16x286xbf16>
      %c192 = arith.constant 192 : index
      %c0_25 = arith.constant 0 : index
      %39 = vector.load %arg9[%c192, %c0_25] : memref<432x286xbf16, #tpu.memory_space<vmem>>, vector<16x286xbf16>
      tpu.vector_store %arg9[%c192, %c0_25], %38 {strides = array<i32>} : memref<432x286xbf16, #tpu.memory_space<vmem>>, vector<16x286xbf16>,
      %40 = vector.extract_strided_slice %11 {offsets = [0, 19], sizes = [16, 286], strides = [1, 1]} : vector<16x324xbf16> to vector<16x286xbf16>
      %c208 = arith.constant 208 : index
      %c0_26 = arith.constant 0 : index
      %41 = vector.load %arg9[%c208, %c0_26] : memref<432x286xbf16, #tpu.memory_space<vmem>>, vector<16x286xbf16>
      tpu.vector_store %arg9[%c208, %c0_26], %40 {strides = array<i32>} : memref<432x286xbf16, #tpu.memory_space<vmem>>, vector<16x286xbf16>,
      %42 = vector.extract_strided_slice %11 {offsets = [0, 20], sizes = [16, 286], strides = [1, 1]} : vector<16x324xbf16> to vector<16x286xbf16>
      %c224 = arith.constant 224 : index
      %c0_27 = arith.constant 0 : index
      %43 = vector.load %arg9[%c224, %c0_27] : memref<432x286xbf16, #tpu.memory_space<vmem>>, vector<16x286xbf16>
      tpu.vector_store %arg9[%c224, %c0_27], %42 {strides = array<i32>} : memref<432x286xbf16, #tpu.memory_space<vmem>>, vector<16x286xbf16>,
      %44 = vector.extract_strided_slice %11 {offsets = [0, 36], sizes = [16, 286], strides = [1, 1]} : vector<16x324xbf16> to vector<16x286xbf16>
      %c240 = arith.constant 240 : index
      %c0_28 = arith.constant 0 : index
      %45 = vector.load %arg9[%c240, %c0_28] : memref<432x286xbf16, #tpu.memory_space<vmem>>, vector<16x286xbf16>
      tpu.vector_store %arg9[%c240, %c0_28], %44 {strides = array<i32>} : memref<432x286xbf16, #tpu.memory_space<vmem>>, vector<16x286xbf16>,
      %46 = vector.extract_strided_slice %11 {offsets = [0, 37], sizes = [16, 286], strides = [1, 1]} : vector<16x324xbf16> to vector<16x286xbf16>
      %c256 = arith.constant 256 : index
      %c0_29 = arith.constant 0 : index
      %47 = vector.load %arg9[%c256, %c0_29] : memref<432x286xbf16, #tpu.memory_space<vmem>>, vector<16x286xbf16>
      tpu.vector_store %arg9[%c256, %c0_29], %46 {strides = array<i32>} : memref<432x286xbf16, #tpu.memory_space<vmem>>, vector<16x286xbf16>,
      %48 = vector.extract_strided_slice %11 {offsets = [0, 38], sizes = [16, 286], strides = [1, 1]} : vector<16x324xbf16> to vector<16x286xbf16>
      %c272 = arith.constant 272 : index
      %c0_30 = arith.constant 0 : index
      %49 = vector.load %arg9[%c272, %c0_30] : memref<432x286xbf16, #tpu.memory_space<vmem>>, vector<16x286xbf16>
      tpu.vector_store %arg9[%c272, %c0_30], %48 {strides = array<i32>} : memref<432x286xbf16, #tpu.memory_space<vmem>>, vector<16x286xbf16>,
      %50 = vector.extract_strided_slice %13 {offsets = [0, 0], sizes = [16, 286], strides = [1, 1]} : vector<16x324xbf16> to vector<16x286xbf16>
      %c288 = arith.constant 288 : index
      %c0_31 = arith.constant 0 : index
      %51 = vector.load %arg9[%c288, %c0_31] : memref<432x286xbf16, #tpu.memory_space<vmem>>, vector<16x286xbf16>
      tpu.vector_store %arg9[%c288, %c0_31], %50 {strides = array<i32>} : memref<432x286xbf16, #tpu.memory_space<vmem>>, vector<16x286xbf16>,
      %52 = vector.extract_strided_slice %13 {offsets = [0, 1], sizes = [16, 286], strides = [1, 1]} : vector<16x324xbf16> to vector<16x286xbf16>
      %c304 = arith.constant 304 : index
      %c0_32 = arith.constant 0 : index
      %53 = vector.load %arg9[%c304, %c0_32] : memref<432x286xbf16, #tpu.memory_space<vmem>>, vector<16x286xbf16>
      tpu.vector_store %arg9[%c304, %c0_32], %52 {strides = array<i32>} : memref<432x286xbf16, #tpu.memory_space<vmem>>, vector<16x286xbf16>,
      %54 = vector.extract_strided_slice %13 {offsets = [0, 2], sizes = [16, 286], strides = [1, 1]} : vector<16x324xbf16> to vector<16x286xbf16>
      %c320 = arith.constant 320 : index
      %c0_33 = arith.constant 0 : index
      %55 = vector.load %arg9[%c320, %c0_33] : memref<432x286xbf16, #tpu.memory_space<vmem>>, vector<16x286xbf16>
      tpu.vector_store %arg9[%c320, %c0_33], %54 {strides = array<i32>} : memref<432x286xbf16, #tpu.memory_space<vmem>>, vector<16x286xbf16>,
      %56 = vector.extract_strided_slice %13 {offsets = [0, 18], sizes = [16, 286], strides = [1, 1]} : vector<16x324xbf16> to vector<16x286xbf16>
      %c336 = arith.constant 336 : index
      %c0_34 = arith.constant 0 : index
      %57 = vector.load %arg9[%c336, %c0_34] : memref<432x286xbf16, #tpu.memory_space<vmem>>, vector<16x286xbf16>
      tpu.vector_store %arg9[%c336, %c0_34], %56 {strides = array<i32>} : memref<432x286xbf16, #tpu.memory_space<vmem>>, vector<16x286xbf16>,
      %58 = vector.extract_strided_slice %13 {offsets = [0, 19], sizes = [16, 286], strides = [1, 1]} : vector<16x324xbf16> to vector<16x286xbf16>
      %c352 = arith.constant 352 : index
      %c0_35 = arith.constant 0 : index
      %59 = vector.load %arg9[%c352, %c0_35] : memref<432x286xbf16, #tpu.memory_space<vmem>>, vector<16x286xbf16>
      tpu.vector_store %arg9[%c352, %c0_35], %58 {strides = array<i32>} : memref<432x286xbf16, #tpu.memory_space<vmem>>, vector<16x286xbf16>,
      %60 = vector.extract_strided_slice %13 {offsets = [0, 20], sizes = [16, 286], strides = [1, 1]} : vector<16x324xbf16> to vector<16x286xbf16>
      %c368 = arith.constant 368 : index
      %c0_36 = arith.constant 0 : index
      %61 = vector.load %arg9[%c368, %c0_36] : memref<432x286xbf16, #tpu.memory_space<vmem>>, vector<16x286xbf16>
      tpu.vector_store %arg9[%c368, %c0_36], %60 {strides = array<i32>} : memref<432x286xbf16, #tpu.memory_space<vmem>>, vector<16x286xbf16>,
      %62 = vector.extract_strided_slice %13 {offsets = [0, 36], sizes = [16, 286], strides = [1, 1]} : vector<16x324xbf16> to vector<16x286xbf16>
      %c384 = arith.constant 384 : index
      %c0_37 = arith.constant 0 : index
      %63 = vector.load %arg9[%c384, %c0_37] : memref<432x286xbf16, #tpu.memory_space<vmem>>, vector<16x286xbf16>
      tpu.vector_store %arg9[%c384, %c0_37], %62 {strides = array<i32>} : memref<432x286xbf16, #tpu.memory_space<vmem>>, vector<16x286xbf16>,
      %64 = vector.extract_strided_slice %13 {offsets = [0, 37], sizes = [16, 286], strides = [1, 1]} : vector<16x324xbf16> to vector<16x286xbf16>
      %c400 = arith.constant 400 : index
      %c0_38 = arith.constant 0 : index
      %65 = vector.load %arg9[%c400, %c0_38] : memref<432x286xbf16, #tpu.memory_space<vmem>>, vector<16x286xbf16>
      tpu.vector_store %arg9[%c400, %c0_38], %64 {strides = array<i32>} : memref<432x286xbf16, #tpu.memory_space<vmem>>, vector<16x286xbf16>,
      %66 = vector.extract_strided_slice %13 {offsets = [0, 38], sizes = [16, 286], strides = [1, 1]} : vector<16x324xbf16> to vector<16x286xbf16>
      %c416 = arith.constant 416 : index
      %c0_39 = arith.constant 0 : index
      %67 = vector.load %arg9[%c416, %c0_39] : memref<432x286xbf16, #tpu.memory_space<vmem>>, vector<16x286xbf16>
      tpu.vector_store %arg9[%c416, %c0_39], %66 {strides = array<i32>} : memref<432x286xbf16, #tpu.memory_space<vmem>>, vector<16x286xbf16>,
      %c0_40 = arith.constant 0 : index
      %c0_41 = arith.constant 0 : index
      %68 = vector.load %arg2[%c0_40, %c0_41] : memref<32x432xbf16, #tpu.memory_space<vmem>>, vector<32x432xbf16>
      %c0_42 = arith.constant 0 : index
      %c0_43 = arith.constant 0 : index
      %69 = vector.load %arg9[%c0_42, %c0_43] : memref<432x286xbf16, #tpu.memory_space<vmem>>, vector<432x286xbf16>
      %cst = arith.constant dense<0.000000e+00> : vector<32x286xf32>
      %70 = tpu.matmul %68, %69, %cst {dimension_numbers = #tpu.dot_dimension_numbers<[1], [0], [0], [1], [0, 0, 1, 1], [], []>} : vector<32x432xbf16>, vector<432x286xbf16>, vector<32x286xf32> -> vector<32x286xf32>
      %c0_44 = arith.constant 0 : index
      %c0_45 = arith.constant 0 : index
      %71 = vector.load %arg3[%c0_44, %c0_45] : memref<32x1xf32, #tpu.memory_space<vmem>>, vector<32x1xf32>
      %72 = vector.broadcast %71 : vector<32x1xf32> to vector<32x286xf32>
      %73 = arith.addf %70, %72 : vector<32x286xf32>
      %c0_46 = arith.constant 0 : index
      %c19 = arith.constant 19 : index
      %74 = vector.load %arg4[%c0_46, %c19] : memref<1x324xf32, #tpu.memory_space<vmem>>, vector<1x286xf32>
      %75 = vector.broadcast %74 : vector<1x286xf32> to vector<32x286xf32>
      %76 = arith.mulf %73, %75 : vector<32x286xf32>
      %cst_47 = arith.constant 0.000000e+00 : bf16
      %77 = vector.broadcast %cst_47 : bf16 to vector<32x19xbf16>
      %c0_48 = arith.constant 0 : index
      %c0_49 = arith.constant 0 : index
      %c0_50 = arith.constant 0 : index
      %c0_51 = arith.constant 0 : index
      %78 = vector.load %arg8[%c0_48, %c0_49, %c0_50, %c0_51] : memref<1x1x32x324xbf16, #tpu.memory_space<vmem>>, vector<1x1x32x19xbf16>
      %79 = vector.shape_cast %78 : vector<1x1x32x19xbf16> to vector<32x19xbf16>
      %80 = vector.shape_cast %77 : vector<32x19xbf16> to vector<1x1x32x19xbf16>
      tpu.vector_store %arg8[%c0_48, %c0_49, %c0_50, %c0_51], %80 {strides = array<i32>} : memref<1x1x32x324xbf16, #tpu.memory_space<vmem>>, vector<1x1x32x19xbf16>,
      %81 = arith.truncf %76 : vector<32x286xf32> to vector<32x286xbf16>
      %c0_52 = arith.constant 0 : index
      %c0_53 = arith.constant 0 : index
      %c0_54 = arith.constant 0 : index
      %c19_55 = arith.constant 19 : index
      %82 = vector.load %arg8[%c0_52, %c0_53, %c0_54, %c19_55] : memref<1x1x32x324xbf16, #tpu.memory_space<vmem>>, vector<1x1x32x286xbf16>
      %83 = vector.shape_cast %82 : vector<1x1x32x286xbf16> to vector<32x286xbf16>
      %84 = vector.shape_cast %81 : vector<32x286xbf16> to vector<1x1x32x286xbf16>
      tpu.vector_store %arg8[%c0_52, %c0_53, %c0_54, %c19_55], %84 {strides = array<i32>} : memref<1x1x32x324xbf16, #tpu.memory_space<vmem>>, vector<1x1x32x286xbf16>,
      %cst_56 = arith.constant 0.000000e+00 : bf16
      %85 = vector.broadcast %cst_56 : bf16 to vector<32x19xbf16>
      %c0_57 = arith.constant 0 : index
      %c0_58 = arith.constant 0 : index
      %c0_59 = arith.constant 0 : index
      %c305 = arith.constant 305 : index
      %86 = vector.load %arg8[%c0_57, %c0_58, %c0_59, %c305] : memref<1x1x32x324xbf16, #tpu.memory_space<vmem>>, vector<1x1x32x19xbf16>
      %87 = vector.shape_cast %86 : vector<1x1x32x19xbf16> to vector<32x19xbf16>
      %88 = vector.shape_cast %85 : vector<32x19xbf16> to vector<1x1x32x19xbf16>
      tpu.vector_store %arg8[%c0_57, %c0_58, %c0_59, %c305], %88 {strides = array<i32>} : memref<1x1x32x324xbf16, #tpu.memory_space<vmem>>, vector<1x1x32x19xbf16>,
    } else {
    }
    %true = arith.constant true
    %5 = arith.xori %2, %true : i1
    %6 = arith.extui %5 : i1 to i32
    %c0_i32_0 = arith.constant 0 : i32
    %7 = arith.cmpi ne, %6, %c0_i32_0 : i32
    scf.if %7 {
      %cst = arith.constant 0.000000e+00 : bf16
      %8 = vector.broadcast %cst : bf16 to vector<32x324xbf16>
      %c0 = arith.constant 0 : index
      %c0_1 = arith.constant 0 : index
      %c0_2 = arith.constant 0 : index
      %c0_3 = arith.constant 0 : index
      %9 = vector.load %arg8[%c0, %c0_1, %c0_2, %c0_3] : memref<1x1x32x324xbf16, #tpu.memory_space<vmem>>, vector<1x1x32x324xbf16>
      %10 = vector.shape_cast %9 : vector<1x1x32x324xbf16> to vector<32x324xbf16>
      %11 = vector.shape_cast %8 : vector<32x324xbf16> to vector<1x1x32x324xbf16>
      tpu.vector_store %arg8[%c0, %c0_1, %c0_2, %c0_3], %11 {strides = array<i32>} : memref<1x1x32x324xbf16, #tpu.memory_space<vmem>>, vector<1x1x32x324xbf16>,
    } else {
    }
    return
  }
  func.func @transform_0(%arg0: i32, %arg1: i32) -> (i32, i32) {
    %c0_i32 = arith.constant 0 : i32
    %c0_i32_0 = arith.constant 0 : i32
    %c0_i32_1 = arith.constant 0 : i32
    return %c0_i32, %c0_i32_0 : i32, i32
  }
  func.func @transform_1(%arg0: i32, %arg1: i32) -> (i32, i32) {
    %c0_i32 = arith.constant 0 : i32
    %c0_i32_0 = arith.constant 0 : i32
    %c0_i32_1 = arith.constant 0 : i32
    return %c0_i32, %c0_i32_0 : i32, i32
  }
  func.func @transform_2(%arg0: i32, %arg1: i32) -> (i32, i32) {
    %c0_i32 = arith.constant 0 : i32
    %c0_i32_0 = arith.constant 0 : i32
    %c0_i32_1 = arith.constant 0 : i32
    return %c0_i32, %c0_i32_0 : i32, i32
  }
  func.func @transform_3(%arg0: i32, %arg1: i32) -> (i32, i32, i32, i32) {
    %c1_i32 = arith.constant 1 : i32
    %0 = arith.subi %arg1, %c1_i32 : i32
    %c0_i32 = arith.constant 0 : i32
    %1 = arith.addi %0, %c0_i32 : i32
    %c0_i32_0 = arith.constant 0 : i32
    %c17_i32 = arith.constant 17 : i32
    %2 = arith.maxsi %c0_i32_0, %1 : i32
    %3 = arith.minsi %c17_i32, %2 : i32
    %c0_i32_1 = arith.constant 0 : i32
    %c0_i32_2 = arith.constant 0 : i32
    %c0_i32_3 = arith.constant 0 : i32
    return %arg0, %3, %c0_i32_1, %c0_i32_2 : i32, i32, i32, i32
  }
  func.func @transform_4(%arg0: i32, %arg1: i32) -> (i32, i32, i32, i32) {
    %c1_i32 = arith.constant 1 : i32
    %0 = arith.subi %arg1, %c1_i32 : i32
    %c1_i32_0 = arith.constant 1 : i32
    %1 = arith.addi %0, %c1_i32_0 : i32
    %c0_i32 = arith.constant 0 : i32
    %c17_i32 = arith.constant 17 : i32
    %2 = arith.maxsi %c0_i32, %1 : i32
    %3 = arith.minsi %c17_i32, %2 : i32
    %c0_i32_1 = arith.constant 0 : i32
    %c0_i32_2 = arith.constant 0 : i32
    %c0_i32_3 = arith.constant 0 : i32
    return %arg0, %3, %c0_i32_1, %c0_i32_2 : i32, i32, i32, i32
  }
  func.func @transform_5(%arg0: i32, %arg1: i32) -> (i32, i32, i32, i32) {
    %c1_i32 = arith.constant 1 : i32
    %0 = arith.subi %arg1, %c1_i32 : i32
    %c2_i32 = arith.constant 2 : i32
    %1 = arith.addi %0, %c2_i32 : i32
    %c0_i32 = arith.constant 0 : i32
    %c17_i32 = arith.constant 17 : i32
    %2 = arith.maxsi %c0_i32, %1 : i32
    %3 = arith.minsi %c17_i32, %2 : i32
    %c0_i32_0 = arith.constant 0 : i32
    %c0_i32_1 = arith.constant 0 : i32
    %c0_i32_2 = arith.constant 0 : i32
    return %arg0, %3, %c0_i32_0, %c0_i32_1 : i32, i32, i32, i32
  }
  func.func @transform_6(%arg0: i32, %arg1: i32) -> (i32, i32, i32, i32) {
    %c0_i32 = arith.constant 0 : i32
    %c0_i32_0 = arith.constant 0 : i32
    %c0_i32_1 = arith.constant 0 : i32
    return %arg0, %arg1, %c0_i32, %c0_i32_0 : i32, i32, i32, i32
  }
}

module attributes {stable_mosaic.version = 11 : i64} {
  func.func @_conv3d_kernel(%arg0: i32, %arg1: i32, %arg2: memref<4x432xbf16, #tpu.memory_space<vmem>>, %arg3: memref<4x1xf32, #tpu.memory_space<vmem>>, %arg4: memref<1x324xf32, #tpu.memory_space<vmem>>, %arg5: memref<1x1x16x324xbf16, #tpu.memory_space<vmem>>, %arg6: memref<1x1x16x324xbf16, #tpu.memory_space<vmem>>, %arg7: memref<1x1x16x324xbf16, #tpu.memory_space<vmem>>, %arg8: memref<1x1x4x324xbf16, #tpu.memory_space<vmem>>, %arg9: memref<432x286xbf16, #tpu.memory_space<vmem>>) attributes {dimension_semantics = [#tpu.dimension_semantics<parallel>, #tpu.dimension_semantics<parallel>], iteration_bounds = array<i64: 2, 18>, scalar_prefetch = 0 : i64, scratch_operands = 1 : i64, tpu.core_type = #tpu.core_type<tc>, window_params = [{pipeline_mode = #tpu.pipeline_mode<synchronous>, transform_indices = @transform_0, window_bounds = array<i64: 4, 432>}, {pipeline_mode = #tpu.pipeline_mode<synchronous>, transform_indices = @transform_1, window_bounds = array<i64: 4, 1>}, {pipeline_mode = #tpu.pipeline_mode<synchronous>, transform_indices = @transform_2, window_bounds = array<i64: 1, 324>}, {transform_indices = @transform_3, window_bounds = array<i64: 1, 1, 16, 324>}, {transform_indices = @transform_4, window_bounds = array<i64: 1, 1, 16, 324>}, {transform_indices = @transform_5, window_bounds = array<i64: 1, 1, 16, 324>}, {transform_indices = @transform_6, window_bounds = array<i64: 1, 1, 4, 324>}]} {
    %c1_i32 = arith.constant 1 : i32
    %0 = arith.cmpi sge, %arg1, %c1_i32 : i32
    %c16_i32 = arith.constant 16 : i32
    %1 = arith.cmpi sle, %arg1, %c16_i32 : i32
    %2 = arith.andi %0, %1 : i1
    %3 = arith.extui %2 : i1 to i32
    %c0_i32 = arith.constant 0 : i32
    %4 = arith.cmpi ne, %3, %c0_i32 : i32
    scf.if %4 {
      %c0 = arith.constant 0 : index
      %c0_1 = arith.constant 0 : index
      %c0_2 = arith.constant 0 : index
      %c0_3 = arith.constant 0 : index
      %8 = vector.load %arg5[%c0, %c0_1, %c0_2, %c0_3] : memref<1x1x16x324xbf16, #tpu.memory_space<vmem>>, vector<1x1x16x324xbf16>
      %9 = vector.shape_cast %8 : vector<1x1x16x324xbf16> to vector<16x324xbf16>
      %c0_4 = arith.constant 0 : index
      %c0_5 = arith.constant 0 : index
      %c0_6 = arith.constant 0 : index
      %c0_7 = arith.constant 0 : index
      %10 = vector.load %arg6[%c0_4, %c0_5, %c0_6, %c0_7] : memref<1x1x16x324xbf16, #tpu.memory_space<vmem>>, vector<1x1x16x324xbf16>
      %11 = vector.shape_cast %10 : vector<1x1x16x324xbf16> to vector<16x324xbf16>
      %c0_8 = arith.constant 0 : index
      %c0_9 = arith.constant 0 : index
      %c0_10 = arith.constant 0 : index
      %c0_11 = arith.constant 0 : index
      %12 = vector.load %arg7[%c0_8, %c0_9, %c0_10, %c0_11] : memref<1x1x16x324xbf16, #tpu.memory_space<vmem>>, vector<1x1x16x324xbf16>
      %13 = vector.shape_cast %12 : vector<1x1x16x324xbf16> to vector<16x324xbf16>
      %14 = vector.extract_strided_slice %9 {offsets = [0, 0], sizes = [16, 286], strides = [1, 1]} : vector<16x324xbf16> to vector<16x286xbf16>
      %c0_12 = arith.constant 0 : index
      %c0_13 = arith.constant 0 : index
      %15 = vector.load %arg9[%c0_12, %c0_13] : memref<432x286xbf16, #tpu.memory_space<vmem>>, vector<16x286xbf16>
      tpu.vector_store %arg9[%c0_12, %c0_13], %14 {strides = array<i32>} : memref<432x286xbf16, #tpu.memory_space<vmem>>, vector<16x286xbf16>,
      %16 = vector.extract_strided_slice %9 {offsets = [0, 1], sizes = [16, 286], strides = [1, 1]} : vector<16x324xbf16> to vector<16x286xbf16>
      %c16 = arith.constant 16 : index
      %c0_14 = arith.constant 0 : index
      %17 = vector.load %arg9[%c16, %c0_14] : memref<432x286xbf16, #tpu.memory_space<vmem>>, vector<16x286xbf16>
      tpu.vector_store %arg9[%c16, %c0_14], %16 {strides = array<i32>} : memref<432x286xbf16, #tpu.memory_space<vmem>>, vector<16x286xbf16>,
      %18 = vector.extract_strided_slice %9 {offsets = [0, 2], sizes = [16, 286], strides = [1, 1]} : vector<16x324xbf16> to vector<16x286xbf16>
      %c32 = arith.constant 32 : index
      %c0_15 = arith.constant 0 : index
      %19 = vector.load %arg9[%c32, %c0_15] : memref<432x286xbf16, #tpu.memory_space<vmem>>, vector<16x286xbf16>
      tpu.vector_store %arg9[%c32, %c0_15], %18 {strides = array<i32>} : memref<432x286xbf16, #tpu.memory_space<vmem>>, vector<16x286xbf16>,
      %20 = vector.extract_strided_slice %9 {offsets = [0, 18], sizes = [16, 286], strides = [1, 1]} : vector<16x324xbf16> to vector<16x286xbf16>
      %c48 = arith.constant 48 : index
      %c0_16 = arith.constant 0 : index
      %21 = vector.load %arg9[%c48, %c0_16] : memref<432x286xbf16, #tpu.memory_space<vmem>>, vector<16x286xbf16>
      tpu.vector_store %arg9[%c48, %c0_16], %20 {strides = array<i32>} : memref<432x286xbf16, #tpu.memory_space<vmem>>, vector<16x286xbf16>,
      %22 = vector.extract_strided_slice %9 {offsets = [0, 19], sizes = [16, 286], strides = [1, 1]} : vector<16x324xbf16> to vector<16x286xbf16>
      %c64 = arith.constant 64 : index
      %c0_17 = arith.constant 0 : index
      %23 = vector.load %arg9[%c64, %c0_17] : memref<432x286xbf16, #tpu.memory_space<vmem>>, vector<16x286xbf16>
      tpu.vector_store %arg9[%c64, %c0_17], %22 {strides = array<i32>} : memref<432x286xbf16, #tpu.memory_space<vmem>>, vector<16x286xbf16>,
      %24 = vector.extract_strided_slice %9 {offsets = [0, 20], sizes = [16, 286], strides = [1, 1]} : vector<16x324xbf16> to vector<16x286xbf16>
      %c80 = arith.constant 80 : index
      %c0_18 = arith.constant 0 : index
      %25 = vector.load %arg9[%c80, %c0_18] : memref<432x286xbf16, #tpu.memory_space<vmem>>, vector<16x286xbf16>
      tpu.vector_store %arg9[%c80, %c0_18], %24 {strides = array<i32>} : memref<432x286xbf16, #tpu.memory_space<vmem>>, vector<16x286xbf16>,
      %26 = vector.extract_strided_slice %9 {offsets = [0, 36], sizes = [16, 286], strides = [1, 1]} : vector<16x324xbf16> to vector<16x286xbf16>
      %c96 = arith.constant 96 : index
      %c0_19 = arith.constant 0 : index
      %27 = vector.load %arg9[%c96, %c0_19] : memref<432x286xbf16, #tpu.memory_space<vmem>>, vector<16x286xbf16>
      tpu.vector_store %arg9[%c96, %c0_19], %26 {strides = array<i32>} : memref<432x286xbf16, #tpu.memory_space<vmem>>, vector<16x286xbf16>,
      %28 = vector.extract_strided_slice %9 {offsets = [0, 37], sizes = [16, 286], strides = [1, 1]} : vector<16x324xbf16> to vector<16x286xbf16>
      %c112 = arith.constant 112 : index
      %c0_20 = arith.constant 0 : index
      %29 = vector.load %arg9[%c112, %c0_20] : memref<432x286xbf16, #tpu.memory_space<vmem>>, vector<16x286xbf16>
      tpu.vector_store %arg9[%c112, %c0_20], %28 {strides = array<i32>} : memref<432x286xbf16, #tpu.memory_space<vmem>>, vector<16x286xbf16>,
      %30 = vector.extract_strided_slice %9 {offsets = [0, 38], sizes = [16, 286], strides = [1, 1]} : vector<16x324xbf16> to vector<16x286xbf16>
      %c128 = arith.constant 128 : index
      %c0_21 = arith.constant 0 : index
      %31 = vector.load %arg9[%c128, %c0_21] : memref<432x286xbf16, #tpu.memory_space<vmem>>, vector<16x286xbf16>
      tpu.vector_store %arg9[%c128, %c0_21], %30 {strides = array<i32>} : memref<432x286xbf16, #tpu.memory_space<vmem>>, vector<16x286xbf16>,
      %32 = vector.extract_strided_slice %11 {offsets = [0, 0], sizes = [16, 286], strides = [1, 1]} : vector<16x324xbf16> to vector<16x286xbf16>
      %c144 = arith.constant 144 : index
      %c0_22 = arith.constant 0 : index
      %33 = vector.load %arg9[%c144, %c0_22] : memref<432x286xbf16, #tpu.memory_space<vmem>>, vector<16x286xbf16>
      tpu.vector_store %arg9[%c144, %c0_22], %32 {strides = array<i32>} : memref<432x286xbf16, #tpu.memory_space<vmem>>, vector<16x286xbf16>,
      %34 = vector.extract_strided_slice %11 {offsets = [0, 1], sizes = [16, 286], strides = [1, 1]} : vector<16x324xbf16> to vector<16x286xbf16>
      %c160 = arith.constant 160 : index
      %c0_23 = arith.constant 0 : index
      %35 = vector.load %arg9[%c160, %c0_23] : memref<432x286xbf16, #tpu.memory_space<vmem>>, vector<16x286xbf16>
      tpu.vector_store %arg9[%c160, %c0_23], %34 {strides = array<i32>} : memref<432x286xbf16, #tpu.memory_space<vmem>>, vector<16x286xbf16>,
      %36 = vector.extract_strided_slice %11 {offsets = [0, 2], sizes = [16, 286], strides = [1, 1]} : vector<16x324xbf16> to vector<16x286xbf16>
      %c176 = arith.constant 176 : index
      %c0_24 = arith.constant 0 : index
      %37 = vector.load %arg9[%c176, %c0_24] : memref<432x286xbf16, #tpu.memory_space<vmem>>, vector<16x286xbf16>
      tpu.vector_store %arg9[%c176, %c0_24], %36 {strides = array<i32>} : memref<432x286xbf16, #tpu.memory_space<vmem>>, vector<16x286xbf16>,
      %38 = vector.extract_strided_slice %11 {offsets = [0, 18], sizes = [16, 286], strides = [1, 1]} : vector<16x324xbf16> to vector<16x286xbf16>
      %c192 = arith.constant 192 : index
      %c0_25 = arith.constant 0 : index
      %39 = vector.load %arg9[%c192, %c0_25] : memref<432x286xbf16, #tpu.memory_space<vmem>>, vector<16x286xbf16>
      tpu.vector_store %arg9[%c192, %c0_25], %38 {strides = array<i32>} : memref<432x286xbf16, #tpu.memory_space<vmem>>, vector<16x286xbf16>,
      %40 = vector.extract_strided_slice %11 {offsets = [0, 19], sizes = [16, 286], strides = [1, 1]} : vector<16x324xbf16> to vector<16x286xbf16>
      %c208 = arith.constant 208 : index
      %c0_26 = arith.constant 0 : index
      %41 = vector.load %arg9[%c208, %c0_26] : memref<432x286xbf16, #tpu.memory_space<vmem>>, vector<16x286xbf16>
      tpu.vector_store %arg9[%c208, %c0_26], %40 {strides = array<i32>} : memref<432x286xbf16, #tpu.memory_space<vmem>>, vector<16x286xbf16>,
      %42 = vector.extract_strided_slice %11 {offsets = [0, 20], sizes = [16, 286], strides = [1, 1]} : vector<16x324xbf16> to vector<16x286xbf16>
      %c224 = arith.constant 224 : index
      %c0_27 = arith.constant 0 : index
      %43 = vector.load %arg9[%c224, %c0_27] : memref<432x286xbf16, #tpu.memory_space<vmem>>, vector<16x286xbf16>
      tpu.vector_store %arg9[%c224, %c0_27], %42 {strides = array<i32>} : memref<432x286xbf16, #tpu.memory_space<vmem>>, vector<16x286xbf16>,
      %44 = vector.extract_strided_slice %11 {offsets = [0, 36], sizes = [16, 286], strides = [1, 1]} : vector<16x324xbf16> to vector<16x286xbf16>
      %c240 = arith.constant 240 : index
      %c0_28 = arith.constant 0 : index
      %45 = vector.load %arg9[%c240, %c0_28] : memref<432x286xbf16, #tpu.memory_space<vmem>>, vector<16x286xbf16>
      tpu.vector_store %arg9[%c240, %c0_28], %44 {strides = array<i32>} : memref<432x286xbf16, #tpu.memory_space<vmem>>, vector<16x286xbf16>,
      %46 = vector.extract_strided_slice %11 {offsets = [0, 37], sizes = [16, 286], strides = [1, 1]} : vector<16x324xbf16> to vector<16x286xbf16>
      %c256 = arith.constant 256 : index
      %c0_29 = arith.constant 0 : index
      %47 = vector.load %arg9[%c256, %c0_29] : memref<432x286xbf16, #tpu.memory_space<vmem>>, vector<16x286xbf16>
      tpu.vector_store %arg9[%c256, %c0_29], %46 {strides = array<i32>} : memref<432x286xbf16, #tpu.memory_space<vmem>>, vector<16x286xbf16>,
      %48 = vector.extract_strided_slice %11 {offsets = [0, 38], sizes = [16, 286], strides = [1, 1]} : vector<16x324xbf16> to vector<16x286xbf16>
      %c272 = arith.constant 272 : index
      %c0_30 = arith.constant 0 : index
      %49 = vector.load %arg9[%c272, %c0_30] : memref<432x286xbf16, #tpu.memory_space<vmem>>, vector<16x286xbf16>
      tpu.vector_store %arg9[%c272, %c0_30], %48 {strides = array<i32>} : memref<432x286xbf16, #tpu.memory_space<vmem>>, vector<16x286xbf16>,
      %50 = vector.extract_strided_slice %13 {offsets = [0, 0], sizes = [16, 286], strides = [1, 1]} : vector<16x324xbf16> to vector<16x286xbf16>
      %c288 = arith.constant 288 : index
      %c0_31 = arith.constant 0 : index
      %51 = vector.load %arg9[%c288, %c0_31] : memref<432x286xbf16, #tpu.memory_space<vmem>>, vector<16x286xbf16>
      tpu.vector_store %arg9[%c288, %c0_31], %50 {strides = array<i32>} : memref<432x286xbf16, #tpu.memory_space<vmem>>, vector<16x286xbf16>,
      %52 = vector.extract_strided_slice %13 {offsets = [0, 1], sizes = [16, 286], strides = [1, 1]} : vector<16x324xbf16> to vector<16x286xbf16>
      %c304 = arith.constant 304 : index
      %c0_32 = arith.constant 0 : index
      %53 = vector.load %arg9[%c304, %c0_32] : memref<432x286xbf16, #tpu.memory_space<vmem>>, vector<16x286xbf16>
      tpu.vector_store %arg9[%c304, %c0_32], %52 {strides = array<i32>} : memref<432x286xbf16, #tpu.memory_space<vmem>>, vector<16x286xbf16>,
      %54 = vector.extract_strided_slice %13 {offsets = [0, 2], sizes = [16, 286], strides = [1, 1]} : vector<16x324xbf16> to vector<16x286xbf16>
      %c320 = arith.constant 320 : index
      %c0_33 = arith.constant 0 : index
      %55 = vector.load %arg9[%c320, %c0_33] : memref<432x286xbf16, #tpu.memory_space<vmem>>, vector<16x286xbf16>
      tpu.vector_store %arg9[%c320, %c0_33], %54 {strides = array<i32>} : memref<432x286xbf16, #tpu.memory_space<vmem>>, vector<16x286xbf16>,
      %56 = vector.extract_strided_slice %13 {offsets = [0, 18], sizes = [16, 286], strides = [1, 1]} : vector<16x324xbf16> to vector<16x286xbf16>
      %c336 = arith.constant 336 : index
      %c0_34 = arith.constant 0 : index
      %57 = vector.load %arg9[%c336, %c0_34] : memref<432x286xbf16, #tpu.memory_space<vmem>>, vector<16x286xbf16>
      tpu.vector_store %arg9[%c336, %c0_34], %56 {strides = array<i32>} : memref<432x286xbf16, #tpu.memory_space<vmem>>, vector<16x286xbf16>,
      %58 = vector.extract_strided_slice %13 {offsets = [0, 19], sizes = [16, 286], strides = [1, 1]} : vector<16x324xbf16> to vector<16x286xbf16>
      %c352 = arith.constant 352 : index
      %c0_35 = arith.constant 0 : index
      %59 = vector.load %arg9[%c352, %c0_35] : memref<432x286xbf16, #tpu.memory_space<vmem>>, vector<16x286xbf16>
      tpu.vector_store %arg9[%c352, %c0_35], %58 {strides = array<i32>} : memref<432x286xbf16, #tpu.memory_space<vmem>>, vector<16x286xbf16>,
      %60 = vector.extract_strided_slice %13 {offsets = [0, 20], sizes = [16, 286], strides = [1, 1]} : vector<16x324xbf16> to vector<16x286xbf16>
      %c368 = arith.constant 368 : index
      %c0_36 = arith.constant 0 : index
      %61 = vector.load %arg9[%c368, %c0_36] : memref<432x286xbf16, #tpu.memory_space<vmem>>, vector<16x286xbf16>
      tpu.vector_store %arg9[%c368, %c0_36], %60 {strides = array<i32>} : memref<432x286xbf16, #tpu.memory_space<vmem>>, vector<16x286xbf16>,
      %62 = vector.extract_strided_slice %13 {offsets = [0, 36], sizes = [16, 286], strides = [1, 1]} : vector<16x324xbf16> to vector<16x286xbf16>
      %c384 = arith.constant 384 : index
      %c0_37 = arith.constant 0 : index
      %63 = vector.load %arg9[%c384, %c0_37] : memref<432x286xbf16, #tpu.memory_space<vmem>>, vector<16x286xbf16>
      tpu.vector_store %arg9[%c384, %c0_37], %62 {strides = array<i32>} : memref<432x286xbf16, #tpu.memory_space<vmem>>, vector<16x286xbf16>,
      %64 = vector.extract_strided_slice %13 {offsets = [0, 37], sizes = [16, 286], strides = [1, 1]} : vector<16x324xbf16> to vector<16x286xbf16>
      %c400 = arith.constant 400 : index
      %c0_38 = arith.constant 0 : index
      %65 = vector.load %arg9[%c400, %c0_38] : memref<432x286xbf16, #tpu.memory_space<vmem>>, vector<16x286xbf16>
      tpu.vector_store %arg9[%c400, %c0_38], %64 {strides = array<i32>} : memref<432x286xbf16, #tpu.memory_space<vmem>>, vector<16x286xbf16>,
      %66 = vector.extract_strided_slice %13 {offsets = [0, 38], sizes = [16, 286], strides = [1, 1]} : vector<16x324xbf16> to vector<16x286xbf16>
      %c416 = arith.constant 416 : index
      %c0_39 = arith.constant 0 : index
      %67 = vector.load %arg9[%c416, %c0_39] : memref<432x286xbf16, #tpu.memory_space<vmem>>, vector<16x286xbf16>
      tpu.vector_store %arg9[%c416, %c0_39], %66 {strides = array<i32>} : memref<432x286xbf16, #tpu.memory_space<vmem>>, vector<16x286xbf16>,
      %c0_40 = arith.constant 0 : index
      %c0_41 = arith.constant 0 : index
      %68 = vector.load %arg2[%c0_40, %c0_41] : memref<4x432xbf16, #tpu.memory_space<vmem>>, vector<4x432xbf16>
      %c0_42 = arith.constant 0 : index
      %c0_43 = arith.constant 0 : index
      %69 = vector.load %arg9[%c0_42, %c0_43] : memref<432x286xbf16, #tpu.memory_space<vmem>>, vector<432x286xbf16>
      %cst = arith.constant dense<0.000000e+00> : vector<4x286xf32>
      %70 = tpu.matmul %68, %69, %cst {dimension_numbers = #tpu.dot_dimension_numbers<[1], [0], [0], [1], [0, 0, 1, 1], [], []>} : vector<4x432xbf16>, vector<432x286xbf16>, vector<4x286xf32> -> vector<4x286xf32>
      %c0_44 = arith.constant 0 : index
      %c0_45 = arith.constant 0 : index
      %71 = vector.load %arg3[%c0_44, %c0_45] : memref<4x1xf32, #tpu.memory_space<vmem>>, vector<4x1xf32>
      %72 = vector.broadcast %71 : vector<4x1xf32> to vector<4x286xf32>
      %73 = arith.addf %70, %72 : vector<4x286xf32>
      %c0_46 = arith.constant 0 : index
      %c19 = arith.constant 19 : index
      %74 = vector.load %arg4[%c0_46, %c19] : memref<1x324xf32, #tpu.memory_space<vmem>>, vector<1x286xf32>
      %75 = vector.broadcast %74 : vector<1x286xf32> to vector<4x286xf32>
      %76 = arith.mulf %73, %75 : vector<4x286xf32>
      %cst_47 = arith.constant 0.000000e+00 : bf16
      %77 = vector.broadcast %cst_47 : bf16 to vector<4x19xbf16>
      %c0_48 = arith.constant 0 : index
      %c0_49 = arith.constant 0 : index
      %c0_50 = arith.constant 0 : index
      %c0_51 = arith.constant 0 : index
      %78 = vector.load %arg8[%c0_48, %c0_49, %c0_50, %c0_51] : memref<1x1x4x324xbf16, #tpu.memory_space<vmem>>, vector<1x1x4x19xbf16>
      %79 = vector.shape_cast %78 : vector<1x1x4x19xbf16> to vector<4x19xbf16>
      %80 = vector.shape_cast %77 : vector<4x19xbf16> to vector<1x1x4x19xbf16>
      tpu.vector_store %arg8[%c0_48, %c0_49, %c0_50, %c0_51], %80 {strides = array<i32>} : memref<1x1x4x324xbf16, #tpu.memory_space<vmem>>, vector<1x1x4x19xbf16>,
      %81 = arith.truncf %76 : vector<4x286xf32> to vector<4x286xbf16>
      %c0_52 = arith.constant 0 : index
      %c0_53 = arith.constant 0 : index
      %c0_54 = arith.constant 0 : index
      %c19_55 = arith.constant 19 : index
      %82 = vector.load %arg8[%c0_52, %c0_53, %c0_54, %c19_55] : memref<1x1x4x324xbf16, #tpu.memory_space<vmem>>, vector<1x1x4x286xbf16>
      %83 = vector.shape_cast %82 : vector<1x1x4x286xbf16> to vector<4x286xbf16>
      %84 = vector.shape_cast %81 : vector<4x286xbf16> to vector<1x1x4x286xbf16>
      tpu.vector_store %arg8[%c0_52, %c0_53, %c0_54, %c19_55], %84 {strides = array<i32>} : memref<1x1x4x324xbf16, #tpu.memory_space<vmem>>, vector<1x1x4x286xbf16>,
      %cst_56 = arith.constant 0.000000e+00 : bf16
      %85 = vector.broadcast %cst_56 : bf16 to vector<4x19xbf16>
      %c0_57 = arith.constant 0 : index
      %c0_58 = arith.constant 0 : index
      %c0_59 = arith.constant 0 : index
      %c305 = arith.constant 305 : index
      %86 = vector.load %arg8[%c0_57, %c0_58, %c0_59, %c305] : memref<1x1x4x324xbf16, #tpu.memory_space<vmem>>, vector<1x1x4x19xbf16>
      %87 = vector.shape_cast %86 : vector<1x1x4x19xbf16> to vector<4x19xbf16>
      %88 = vector.shape_cast %85 : vector<4x19xbf16> to vector<1x1x4x19xbf16>
      tpu.vector_store %arg8[%c0_57, %c0_58, %c0_59, %c305], %88 {strides = array<i32>} : memref<1x1x4x324xbf16, #tpu.memory_space<vmem>>, vector<1x1x4x19xbf16>,
    } else {
    }
    %true = arith.constant true
    %5 = arith.xori %2, %true : i1
    %6 = arith.extui %5 : i1 to i32
    %c0_i32_0 = arith.constant 0 : i32
    %7 = arith.cmpi ne, %6, %c0_i32_0 : i32
    scf.if %7 {
      %cst = arith.constant 0.000000e+00 : bf16
      %8 = vector.broadcast %cst : bf16 to vector<4x324xbf16>
      %c0 = arith.constant 0 : index
      %c0_1 = arith.constant 0 : index
      %c0_2 = arith.constant 0 : index
      %c0_3 = arith.constant 0 : index
      %9 = vector.load %arg8[%c0, %c0_1, %c0_2, %c0_3] : memref<1x1x4x324xbf16, #tpu.memory_space<vmem>>, vector<1x1x4x324xbf16>
      %10 = vector.shape_cast %9 : vector<1x1x4x324xbf16> to vector<4x324xbf16>
      %11 = vector.shape_cast %8 : vector<4x324xbf16> to vector<1x1x4x324xbf16>
      tpu.vector_store %arg8[%c0, %c0_1, %c0_2, %c0_3], %11 {strides = array<i32>} : memref<1x1x4x324xbf16, #tpu.memory_space<vmem>>, vector<1x1x4x324xbf16>,
    } else {
    }
    return
  }
  func.func @transform_0(%arg0: i32, %arg1: i32) -> (i32, i32) {
    %c0_i32 = arith.constant 0 : i32
    %c0_i32_0 = arith.constant 0 : i32
    %c0_i32_1 = arith.constant 0 : i32
    return %c0_i32, %c0_i32_0 : i32, i32
  }
  func.func @transform_1(%arg0: i32, %arg1: i32) -> (i32, i32) {
    %c0_i32 = arith.constant 0 : i32
    %c0_i32_0 = arith.constant 0 : i32
    %c0_i32_1 = arith.constant 0 : i32
    return %c0_i32, %c0_i32_0 : i32, i32
  }
  func.func @transform_2(%arg0: i32, %arg1: i32) -> (i32, i32) {
    %c0_i32 = arith.constant 0 : i32
    %c0_i32_0 = arith.constant 0 : i32
    %c0_i32_1 = arith.constant 0 : i32
    return %c0_i32, %c0_i32_0 : i32, i32
  }
  func.func @transform_3(%arg0: i32, %arg1: i32) -> (i32, i32, i32, i32) {
    %c1_i32 = arith.constant 1 : i32
    %0 = arith.subi %arg1, %c1_i32 : i32
    %c0_i32 = arith.constant 0 : i32
    %1 = arith.addi %0, %c0_i32 : i32
    %c0_i32_0 = arith.constant 0 : i32
    %c17_i32 = arith.constant 17 : i32
    %2 = arith.maxsi %c0_i32_0, %1 : i32
    %3 = arith.minsi %c17_i32, %2 : i32
    %c0_i32_1 = arith.constant 0 : i32
    %c0_i32_2 = arith.constant 0 : i32
    %c0_i32_3 = arith.constant 0 : i32
    return %arg0, %3, %c0_i32_1, %c0_i32_2 : i32, i32, i32, i32
  }
  func.func @transform_4(%arg0: i32, %arg1: i32) -> (i32, i32, i32, i32) {
    %c1_i32 = arith.constant 1 : i32
    %0 = arith.subi %arg1, %c1_i32 : i32
    %c1_i32_0 = arith.constant 1 : i32
    %1 = arith.addi %0, %c1_i32_0 : i32
    %c0_i32 = arith.constant 0 : i32
    %c17_i32 = arith.constant 17 : i32
    %2 = arith.maxsi %c0_i32, %1 : i32
    %3 = arith.minsi %c17_i32, %2 : i32
    %c0_i32_1 = arith.constant 0 : i32
    %c0_i32_2 = arith.constant 0 : i32
    %c0_i32_3 = arith.constant 0 : i32
    return %arg0, %3, %c0_i32_1, %c0_i32_2 : i32, i32, i32, i32
  }
  func.func @transform_5(%arg0: i32, %arg1: i32) -> (i32, i32, i32, i32) {
    %c1_i32 = arith.constant 1 : i32
    %0 = arith.subi %arg1, %c1_i32 : i32
    %c2_i32 = arith.constant 2 : i32
    %1 = arith.addi %0, %c2_i32 : i32
    %c0_i32 = arith.constant 0 : i32
    %c17_i32 = arith.constant 17 : i32
    %2 = arith.maxsi %c0_i32, %1 : i32
    %3 = arith.minsi %c17_i32, %2 : i32
    %c0_i32_0 = arith.constant 0 : i32
    %c0_i32_1 = arith.constant 0 : i32
    %c0_i32_2 = arith.constant 0 : i32
    return %arg0, %3, %c0_i32_0, %c0_i32_1 : i32, i32, i32, i32
  }
  func.func @transform_6(%arg0: i32, %arg1: i32) -> (i32, i32, i32, i32) {
    %c0_i32 = arith.constant 0 : i32
    %c0_i32_0 = arith.constant 0 : i32
    %c0_i32_1 = arith.constant 0 : i32
    return %arg0, %arg1, %c0_i32, %c0_i32_0 : i32, i32, i32, i32
  }
}

module attributes {stable_mosaic.version = 11 : i64} {
  func.func @_hhd_kernel(%arg0: i32, %arg1: memref<1x4x18x324xf32, #tpu.memory_space<vmem>>, %arg2: memref<1x3x16x286xf32, #tpu.memory_space<vmem>>) attributes {dimension_semantics = [#tpu.dimension_semantics<parallel>], iteration_bounds = array<i64: 2>, scalar_prefetch = 0 : i64, scratch_operands = 0 : i64, tpu.core_type = #tpu.core_type<tc>, window_params = [{transform_indices = @transform_0, window_bounds = array<i64: 1, 4, 18, 324>}, {transform_indices = @transform_1, window_bounds = array<i64: 1, 3, 16, 286>}]} {
    %c0 = arith.constant 0 : index
    %c0_0 = arith.constant 0 : index
    %c0_1 = arith.constant 0 : index
    %c0_2 = arith.constant 0 : index
    %0 = vector.load %arg1[%c0, %c0_0, %c0_1, %c0_2] : memref<1x4x18x324xf32, #tpu.memory_space<vmem>>, vector<1x4x18x324xf32>
    %1 = vector.shape_cast %0 : vector<1x4x18x324xf32> to vector<4x18x324xf32>
    %2 = vector.extract_strided_slice %1 {offsets = [0, 1, 0], sizes = [4, 16, 324], strides = [1, 1, 1]} : vector<4x18x324xf32> to vector<4x16x324xf32>
    %3 = vector.extract_strided_slice %1 {offsets = [0, 2, 0], sizes = [4, 16, 324], strides = [1, 1, 1]} : vector<4x18x324xf32> to vector<4x16x324xf32>
    %4 = vector.extract_strided_slice %1 {offsets = [0, 0, 0], sizes = [4, 16, 324], strides = [1, 1, 1]} : vector<4x18x324xf32> to vector<4x16x324xf32>
    %5 = arith.subf %3, %4 : vector<4x16x324xf32>
    %cst = arith.constant 5.000000e-01 : f32
    %6 = vector.broadcast %cst : f32 to vector<4x16x324xf32>
    %7 = arith.mulf %5, %6 : vector<4x16x324xf32>
    %8 = vector.extract_strided_slice %7 {offsets = [0, 0, 19], sizes = [4, 16, 286], strides = [1, 1, 1]} : vector<4x16x324xf32> to vector<4x16x286xf32>
    %9 = vector.extract_strided_slice %2 {offsets = [0, 0, 37], sizes = [4, 16, 286], strides = [1, 1, 1]} : vector<4x16x324xf32> to vector<4x16x286xf32>
    %10 = vector.extract_strided_slice %2 {offsets = [0, 0, 1], sizes = [4, 16, 286], strides = [1, 1, 1]} : vector<4x16x324xf32> to vector<4x16x286xf32>
    %11 = arith.subf %9, %10 : vector<4x16x286xf32>
    %cst_3 = arith.constant 5.000000e-01 : f32
    %12 = vector.broadcast %cst_3 : f32 to vector<4x16x286xf32>
    %13 = arith.mulf %11, %12 : vector<4x16x286xf32>
    %14 = vector.extract_strided_slice %2 {offsets = [0, 0, 20], sizes = [4, 16, 286], strides = [1, 1, 1]} : vector<4x16x324xf32> to vector<4x16x286xf32>
    %15 = vector.extract_strided_slice %2 {offsets = [0, 0, 18], sizes = [4, 16, 286], strides = [1, 1, 1]} : vector<4x16x324xf32> to vector<4x16x286xf32>
    %16 = arith.subf %14, %15 : vector<4x16x286xf32>
    %cst_4 = arith.constant 5.000000e-01 : f32
    %17 = vector.broadcast %cst_4 : f32 to vector<4x16x286xf32>
    %18 = arith.mulf %16, %17 : vector<4x16x286xf32>
    %19 = vector.extract_strided_slice %13 {offsets = [2, 0, 0], sizes = [1, 16, 286], strides = [1, 1, 1]} : vector<4x16x286xf32> to vector<1x16x286xf32>
    %20 = vector.shape_cast %19 : vector<1x16x286xf32> to vector<16x286xf32>
    %21 = vector.extract_strided_slice %18 {offsets = [1, 0, 0], sizes = [1, 16, 286], strides = [1, 1, 1]} : vector<4x16x286xf32> to vector<1x16x286xf32>
    %22 = vector.shape_cast %21 : vector<1x16x286xf32> to vector<16x286xf32>
    %23 = arith.subf %20, %22 : vector<16x286xf32>
    %24 = vector.extract_strided_slice %8 {offsets = [3, 0, 0], sizes = [1, 16, 286], strides = [1, 1, 1]} : vector<4x16x286xf32> to vector<1x16x286xf32>
    %25 = vector.shape_cast %24 : vector<1x16x286xf32> to vector<16x286xf32>
    %26 = arith.addf %23, %25 : vector<16x286xf32>
    %c0_5 = arith.constant 0 : index
    %c0_6 = arith.constant 0 : index
    %c0_7 = arith.constant 0 : index
    %c0_8 = arith.constant 0 : index
    %27 = vector.load %arg2[%c0_5, %c0_6, %c0_7, %c0_8] : memref<1x3x16x286xf32, #tpu.memory_space<vmem>>, vector<1x1x16x286xf32>
    %28 = vector.shape_cast %27 : vector<1x1x16x286xf32> to vector<16x286xf32>
    %29 = vector.shape_cast %26 : vector<16x286xf32> to vector<1x1x16x286xf32>
    tpu.vector_store %arg2[%c0_5, %c0_6, %c0_7, %c0_8], %29 {strides = array<i32>} : memref<1x3x16x286xf32, #tpu.memory_space<vmem>>, vector<1x1x16x286xf32>,
    %30 = vector.extract_strided_slice %18 {offsets = [0, 0, 0], sizes = [1, 16, 286], strides = [1, 1, 1]} : vector<4x16x286xf32> to vector<1x16x286xf32>
    %31 = vector.shape_cast %30 : vector<1x16x286xf32> to vector<16x286xf32>
    %32 = vector.extract_strided_slice %8 {offsets = [2, 0, 0], sizes = [1, 16, 286], strides = [1, 1, 1]} : vector<4x16x286xf32> to vector<1x16x286xf32>
    %33 = vector.shape_cast %32 : vector<1x16x286xf32> to vector<16x286xf32>
    %34 = arith.subf %31, %33 : vector<16x286xf32>
    %35 = vector.extract_strided_slice %13 {offsets = [3, 0, 0], sizes = [1, 16, 286], strides = [1, 1, 1]} : vector<4x16x286xf32> to vector<1x16x286xf32>
    %36 = vector.shape_cast %35 : vector<1x16x286xf32> to vector<16x286xf32>
    %37 = arith.addf %34, %36 : vector<16x286xf32>
    %c0_9 = arith.constant 0 : index
    %c1 = arith.constant 1 : index
    %c0_10 = arith.constant 0 : index
    %c0_11 = arith.constant 0 : index
    %38 = vector.load %arg2[%c0_9, %c1, %c0_10, %c0_11] : memref<1x3x16x286xf32, #tpu.memory_space<vmem>>, vector<1x1x16x286xf32>
    %39 = vector.shape_cast %38 : vector<1x1x16x286xf32> to vector<16x286xf32>
    %40 = vector.shape_cast %37 : vector<16x286xf32> to vector<1x1x16x286xf32>
    tpu.vector_store %arg2[%c0_9, %c1, %c0_10, %c0_11], %40 {strides = array<i32>} : memref<1x3x16x286xf32, #tpu.memory_space<vmem>>, vector<1x1x16x286xf32>,
    %41 = vector.extract_strided_slice %8 {offsets = [1, 0, 0], sizes = [1, 16, 286], strides = [1, 1, 1]} : vector<4x16x286xf32> to vector<1x16x286xf32>
    %42 = vector.shape_cast %41 : vector<1x16x286xf32> to vector<16x286xf32>
    %43 = vector.extract_strided_slice %13 {offsets = [0, 0, 0], sizes = [1, 16, 286], strides = [1, 1, 1]} : vector<4x16x286xf32> to vector<1x16x286xf32>
    %44 = vector.shape_cast %43 : vector<1x16x286xf32> to vector<16x286xf32>
    %45 = arith.subf %42, %44 : vector<16x286xf32>
    %46 = vector.extract_strided_slice %18 {offsets = [3, 0, 0], sizes = [1, 16, 286], strides = [1, 1, 1]} : vector<4x16x286xf32> to vector<1x16x286xf32>
    %47 = vector.shape_cast %46 : vector<1x16x286xf32> to vector<16x286xf32>
    %48 = arith.addf %45, %47 : vector<16x286xf32>
    %c0_12 = arith.constant 0 : index
    %c2 = arith.constant 2 : index
    %c0_13 = arith.constant 0 : index
    %c0_14 = arith.constant 0 : index
    %49 = vector.load %arg2[%c0_12, %c2, %c0_13, %c0_14] : memref<1x3x16x286xf32, #tpu.memory_space<vmem>>, vector<1x1x16x286xf32>
    %50 = vector.shape_cast %49 : vector<1x1x16x286xf32> to vector<16x286xf32>
    %51 = vector.shape_cast %48 : vector<16x286xf32> to vector<1x1x16x286xf32>
    tpu.vector_store %arg2[%c0_12, %c2, %c0_13, %c0_14], %51 {strides = array<i32>} : memref<1x3x16x286xf32, #tpu.memory_space<vmem>>, vector<1x1x16x286xf32>,
    return
  }
  func.func @transform_0(%arg0: i32) -> (i32, i32, i32, i32) {
    %c0_i32 = arith.constant 0 : i32
    %c0_i32_0 = arith.constant 0 : i32
    %c0_i32_1 = arith.constant 0 : i32
    %c0_i32_2 = arith.constant 0 : i32
    return %arg0, %c0_i32, %c0_i32_0, %c0_i32_1 : i32, i32, i32, i32
  }
  func.func @transform_1(%arg0: i32) -> (i32, i32, i32, i32) {
    %c0_i32 = arith.constant 0 : i32
    %c0_i32_0 = arith.constant 0 : i32
    %c0_i32_1 = arith.constant 0 : i32
    %c0_i32_2 = arith.constant 0 : i32
    return %arg0, %c0_i32, %c0_i32_0, %c0_i32_1 : i32, i32, i32, i32
  }
}

</mosaic_0001>

<llo_original>
// kernel: vae3d_hhdv_forward.4
$region0: #{vae3d_hhdv_forward.4}
  #allocation0 [shape = 'u32[]', space=smem, size = 0x4, offset = 0x4, fixed_abs, tag = 'smem constant byte address 0x4 - core index']
  #allocation1 [shape = 'u32[72,128]{1,0:T(1,128)}', space=vmem, size = 0x9000, scoped, tag = 'internal scratch']
  #allocation2 [shape = 'bf16[54,286]{1,0:T(8,128)(2,1)}', space=vmem, size = 0xa800, scoped, tag = 'scratch operand']
  %s0 = inlined_call_operand.vmem [shape: bf16[16,54], index: 0, kind: input, shape index: {}]
  %s1 = inlined_call_operand.vmem [shape: f32[16,1], index: 1, kind: input, shape index: {}]
  %s2 = inlined_call_operand.vmem [shape: f32[1,324], index: 2, kind: input, shape index: {}]
  %s3 = inlined_call_operand.vmem [shape: bf16[2,18,2,324], index: 3, kind: input, shape index: {}, may-alias: {3,4,5}]
  %s4 = inlined_call_operand.vmem [shape: bf16[2,18,2,324], index: 4, kind: input, shape index: {}, may-alias: {3,4,5}]
  %s5 = inlined_call_operand.vmem [shape: bf16[2,18,2,324], index: 5, kind: input, shape index: {}, may-alias: {3,4,5}]
  %s6 = inlined_call_operand.vmem [shape: bf16[2,18,16,324], index: 6, kind: output, shape index: {}]
  %s7 = sld [smem:[#allocation0]]
  $region65: #{vae3d_hhdv_forward.4} parent=0
    _
  %s9 = ssub.s32 1, %s7
  %s10 = scalar_select 0, %s9, %s7
  loop: start=0, step=1, limit=38
  $region2: #{vae3d_hhdv_forward.4} parent=0 // loop_pre_header
    _
  $region3: #{vae3d_hhdv_forward.4} parent=0 // loop_header
    %s12 = sphi 0, %s16
    %p13 = scmp.ge.s32.totalorder %s12, 38
    %s19 = sphi 0, %s31
    %s20 = sphi 0, %s27
    %s21 = sphi 0, %s19
    %s22 = sphi 0, %s20
    %s23 = sphi 0, %s21
    %s24 = sphi 0, %s22
    %s32 = sphi 0, %s32
    %s34 = sphi 0, %s32
    %s35 = sphi 0, %s34
    %s49 = sphi 0, %s35
    %s53 = sphi 0, %s53
    %s55 = sphi 0, %s53
    %s56 = sphi 0, %s55
    %s70 = sphi 0, %s56
    %s74 = sphi 0, %s74
    %s76 = sphi 0, %s74
    %s77 = sphi 0, %s76
    %s91 = sphi 0, %s77
    %s109 = sphi 0, %s111
    %s112 = sphi 0, %s109
    %s113 = sphi 0, %s112
    %s129 = sphi 0, %s113
    %s145 = sphi 0, %s147
    %s148 = sphi 0, %s145
    %s149 = sphi 0, %s148
    %s165 = sphi 0, %s149
    %s183 = sphi 0, %s185
    %s186 = sphi 0, %s183
    %s187 = sphi 0, %s186
    %s203 = sphi 0, %s187
    %s211 = sphi 0, %s213
    %s214 = sphi 0, %s211
    %s215 = sphi 0, %s214
    %s231 = sphi 0, %s215
  $region4: #{vae3d_hhdv_forward.4} parent=0 // loop_header_branch
    %15 = sbr.rel (%p13) target = $region8
  $region5: #{vae3d_hhdv_forward.4} parent=0 // loop_body
    %s17 = ssub.s32 %s12, 1
    %s18 = ssub.s32 %s12, 2
    %s25 = sadd.s32 1, %s20
    %p26 = scmp.ge.s32.totalorder %s25, 18
    %s27 = scalar_select %p26, 0, %s25
    %s28 = sadd.s32 1, %s19
    %s29 = scalar_select %p26, %s28, %s19
    %p30 = scmp.ge.s32.totalorder %s29, 2
    %s31 = scalar_select %p30, 0, %s29
    %s33 = sadd.s32 %s32, 1
    %p36 = scmp.eq.s32.totalorder %s12, 35
    %p37 = scmp.ne.s32.totalorder %s32, %s34
    %p38 = scmp.eq.s32.totalorder %s12, 0
    %p39 = por %p37, %p38
    %p40 = scmp.ne.s32.totalorder %s32, %s34
    %p41 = scmp.eq.s32.totalorder %s17, 35
    %p42 = por %p40, %p41
    %p43 = scmp.ne.s32.totalorder %s34, %s35
    %p44 = scmp.eq.s32.totalorder %s17, 0
    %p45 = por %p43, %p44
    %p46 = scmp.ne.s32.totalorder %s34, %s35
    %p47 = scmp.eq.s32.totalorder %s18, 35
    %p48 = por %p46, %p47
    %p50 = scmp.ne.s32.totalorder %s35, %s49
    %p51 = scmp.eq.s32.totalorder %s18, 0
    %p52 = por %p50, %p51
    %s54 = sadd.s32 %s53, 1
    %p57 = scmp.eq.s32.totalorder %s12, 35
    %p58 = scmp.ne.s32.totalorder %s53, %s55
    %p59 = scmp.eq.s32.totalorder %s12, 0
    %p60 = por %p58, %p59
    %p61 = scmp.ne.s32.totalorder %s53, %s55
    %p62 = scmp.eq.s32.totalorder %s17, 35
    %p63 = por %p61, %p62
    %p64 = scmp.ne.s32.totalorder %s55, %s56
    %p65 = scmp.eq.s32.totalorder %s17, 0
    %p66 = por %p64, %p65
    %p67 = scmp.ne.s32.totalorder %s55, %s56
    %p68 = scmp.eq.s32.totalorder %s18, 35
    %p69 = por %p67, %p68
    %p71 = scmp.ne.s32.totalorder %s56, %s70
    %p72 = scmp.eq.s32.totalorder %s18, 0
    %p73 = por %p71, %p72
    %s75 = sadd.s32 %s74, 1
    %p78 = scmp.eq.s32.totalorder %s12, 35
    %p79 = scmp.ne.s32.totalorder %s74, %s76
    %p80 = scmp.eq.s32.totalorder %s12, 0
    %p81 = por %p79, %p80
    %p82 = scmp.ne.s32.totalorder %s74, %s76
    %p83 = scmp.eq.s32.totalorder %s17, 35
    %p84 = por %p82, %p83
    %p85 = scmp.ne.s32.totalorder %s76, %s77
    %p86 = scmp.eq.s32.totalorder %s17, 0
    %p87 = por %p85, %p86
    %p88 = scmp.ne.s32.totalorder %s76, %s77
    %p89 = scmp.eq.s32.totalorder %s18, 35
    %p90 = por %p88, %p89
    %p92 = scmp.ne.s32.totalorder %s77, %s91
    %p93 = scmp.eq.s32.totalorder %s18, 0
    %p94 = por %p92, %p93
    %s95 = ssub.s32 %s20, 1
    %p96 = scmp.gt.s32.totalorder %s95, 0
    %s97 = scalar_select %p96, %s95, 0
    %p98 = scmp.lt.s32.totalorder %s97, 17
    %s99 = scalar_select %p98, %s97, 17
    %s100 = ssub.s32 %s27, 1
    %p101 = scmp.gt.s32.totalorder %s100, 0
    %s102 = scalar_select %p101, %s100, 0
    %p103 = scmp.lt.s32.totalorder %s102, 17
    %s104 = scalar_select %p103, %s102, 17
    %s105 = ssub.s32 %s19, %s31
    %s106 = ssub.s32 %s99, %s104
    %s107 = sor.u32 %s105, %s106
    %p108 = scmp.eq.s32.totalorder %s107, 0
    %s110 = sadd.s32 %s109, 1
    %s111 = scalar_select %p108, %s109, %s110
    %p114 = pneg %p108
    %p115 = scmp.eq.s32.totalorder %s12, 35
    %p116 = por %p114, %p115
    %p117 = scmp.ne.s32.totalorder %s109, %s112
    %p118 = scmp.eq.s32.totalorder %s12, 0
    %p119 = por %p117, %p118
    %p120 = scmp.ne.s32.totalorder %s109, %s112
    %p121 = scmp.eq.s32.totalorder %s17, 35
    %p122 = por %p120, %p121
    %p123 = scmp.ne.s32.totalorder %s112, %s113
    %p124 = scmp.eq.s32.totalorder %s17, 0
    %p125 = por %p123, %p124
    %p126 = scmp.ne.s32.totalorder %s112, %s113
    %p127 = scmp.eq.s32.totalorder %s18, 35
    %p128 = por %p126, %p127
    %p130 = scmp.ne.s32.totalorder %s113, %s129
    %p131 = scmp.eq.s32.totalorder %s18, 0
    %p132 = por %p130, %p131
    %p133 = scmp.gt.s32.totalorder %s20, 0
    %s134 = scalar_select %p133, %s20, 0
    %p135 = scmp.lt.s32.totalorder %s134, 17
    %s136 = scalar_select %p135, %s134, 17
    %p137 = scmp.gt.s32.totalorder %s27, 0
    %s138 = scalar_select %p137, %s27, 0
    %p139 = scmp.lt.s32.totalorder %s138, 17
    %s140 = scalar_select %p139, %s138, 17
    %s141 = ssub.s32 %s19, %s31
    %s142 = ssub.s32 %s136, %s140
    %s143 = sor.u32 %s141, %s142
    %p144 = scmp.eq.s32.totalorder %s143, 0
    %s146 = sadd.s32 %s145, 1
    %s147 = scalar_select %p144, %s145, %s146
    %p150 = pneg %p144
    %p151 = scmp.eq.s32.totalorder %s12, 35
    %p152 = por %p150, %p151
    %p153 = scmp.ne.s32.totalorder %s145, %s148
    %p154 = scmp.eq.s32.totalorder %s12, 0
    %p155 = por %p153, %p154
    %p156 = scmp.ne.s32.totalorder %s145, %s148
    %p157 = scmp.eq.s32.totalorder %s17, 35
    %p158 = por %p156, %p157
    %p159 = scmp.ne.s32.totalorder %s148, %s149
    %p160 = scmp.eq.s32.totalorder %s17, 0
    %p161 = por %p159, %p160
    %p162 = scmp.ne.s32.totalorder %s148, %s149
    %p163 = scmp.eq.s32.totalorder %s18, 35
    %p164 = por %p162, %p163
    %p166 = scmp.ne.s32.totalorder %s149, %s165
    %p167 = scmp.eq.s32.totalorder %s18, 0
    %p168 = por %p166, %p167
    %s169 = sadd.s32 %s20, 1
    %p170 = scmp.gt.s32.totalorder %s169, 0
    %s171 = scalar_select %p170, %s169, 0
    %p172 = scmp.lt.s32.totalorder %s171, 17
    %s173 = scalar_select %p172, %s171, 17
    %s174 = sadd.s32 %s27, 1
    %p175 = scmp.gt.s32.totalorder %s174, 0
    %s176 = scalar_select %p175, %s174, 0
    %p177 = scmp.lt.s32.totalorder %s176, 17
    %s178 = scalar_select %p177, %s176, 17
    %s179 = ssub.s32 %s19, %s31
    %s180 = ssub.s32 %s173, %s178
    %s181 = sor.u32 %s179, %s180
    %p182 = scmp.eq.s32.totalorder %s181, 0
    %s184 = sadd.s32 %s183, 1
    %s185 = scalar_select %p182, %s183, %s184
    %p188 = pneg %p182
    %p189 = scmp.eq.s32.totalorder %s12, 35
    %p190 = por %p188, %p189
    %p191 = scmp.ne.s32.totalorder %s183, %s186
    %p192 = scmp.eq.s32.totalorder %s12, 0
    %p193 = por %p191, %p192
    %p194 = scmp.ne.s32.totalorder %s183, %s186
    %p195 = scmp.eq.s32.totalorder %s17, 35
    %p196 = por %p194, %p195
    %p197 = scmp.ne.s32.totalorder %s186, %s187
    %p198 = scmp.eq.s32.totalorder %s17, 0
    %p199 = por %p197, %p198
    %p200 = scmp.ne.s32.totalorder %s186, %s187
    %p201 = scmp.eq.s32.totalorder %s18, 35
    %p202 = por %p200, %p201
    %p204 = scmp.ne.s32.totalorder %s187, %s203
    %p205 = scmp.eq.s32.totalorder %s18, 0
    %p206 = por %p204, %p205
    %s207 = ssub.s32 %s19, %s31
    %s208 = ssub.s32 %s20, %s27
    %s209 = sor.u32 %s207, %s208
    %p210 = scmp.eq.s32.totalorder %s209, 0
    %s212 = sadd.s32 %s211, 1
    %s213 = scalar_select %p210, %s211, %s212
    %p216 = pneg %p210
    %p217 = scmp.eq.s32.totalorder %s12, 35
    %p218 = por %p216, %p217
    %p219 = scmp.ne.s32.totalorder %s211, %s214
    %p220 = scmp.eq.s32.totalorder %s12, 0
    %p221 = por %p219, %p220
    %p222 = scmp.ne.s32.totalorder %s211, %s214
    %p223 = scmp.eq.s32.totalorder %s17, 35
    %p224 = por %p222, %p223
    %p225 = scmp.ne.s32.totalorder %s214, %s215
    %p226 = scmp.eq.s32.totalorder %s17, 0
    %p227 = por %p225, %p226
    %p228 = scmp.ne.s32.totalorder %s214, %s215
    %p229 = scmp.eq.s32.totalorder %s18, 35
    %p230 = por %p228, %p229
    %p232 = scmp.ne.s32.totalorder %s215, %s231
    %p233 = scmp.eq.s32.totalorder %s18, 0
    %p234 = por %p232, %p233
    %p235 = scmp.le.s32.totalorder 1, %s12
    %p236 = scmp.lt.s32.totalorder %s12, 37
    %p237 = pnand %p235, %p236
    %p238 = pneg %p237
    // Predicated region
    $region9: #{vae3d_hhdv_forward.4} parent=5 // pred_check
      _
    $region10: #{vae3d_hhdv_forward.4} parent=5 // pred_check_branch
      %240 = sbr.rel (%p237) target = $region12
    $region11: #{vae3d_hhdv_forward.4} parent=5 // pred_region
      %s241 = ssub.s32 %s12, 1
      // Predicated region
      $region13: #{vae3d_hhdv_forward.4} parent=11 // pred_check
        %p242 = pneg %p45
      $region14: #{vae3d_hhdv_forward.4} parent=11 // pred_check_branch
        %244 = sbr.rel (%p242) target = $region16
      $region15: #{vae3d_hhdv_forward.4} parent=11 // pred_region
        _
      $region16: #{vae3d_hhdv_forward.4} parent=11 // pred_fallthru
        _
      // Predicated region
      $region17: #{vae3d_hhdv_forward.4} parent=11 // pred_check
        %p245 = pneg %p66
      $region18: #{vae3d_hhdv_forward.4} parent=11 // pred_check_branch
        %247 = sbr.rel (%p245) target = $region20
      $region19: #{vae3d_hhdv_forward.4} parent=11 // pred_region
        _
      $region20: #{vae3d_hhdv_forward.4} parent=11 // pred_fallthru
        _
      // Predicated region
      $region21: #{vae3d_hhdv_forward.4} parent=11 // pred_check
        %p248 = pneg %p87
      $region22: #{vae3d_hhdv_forward.4} parent=11 // pred_check_branch
        %250 = sbr.rel (%p248) target = $region24
      $region23: #{vae3d_hhdv_forward.4} parent=11 // pred_region
        _
      $region24: #{vae3d_hhdv_forward.4} parent=11 // pred_fallthru
        _
    $region12: #{vae3d_hhdv_forward.4} parent=5 // pred_fallthru
      _
    %p251 = scmp.lt.s32.totalorder %s12, 36
    // Predicated region
    $region25: #{vae3d_hhdv_forward.4} parent=5 // pred_check
      %p252 = pneg %p251
    $region26: #{vae3d_hhdv_forward.4} parent=5 // pred_check_branch
      %254 = sbr.rel (%p252) target = $region28
    $region27: #{vae3d_hhdv_forward.4} parent=5 // pred_region
      // Predicated region
      $region29: #{vae3d_hhdv_forward.4} parent=27 // pred_check
        %p255 = pneg %p119
      $region30: #{vae3d_hhdv_forward.4} parent=27 // pred_check_branch
        %257 = sbr.rel (%p255) target = $region32
      $region31: #{vae3d_hhdv_forward.4} parent=27 // pred_region
        %s258 = ssub.s32 %s20, 1
        %p259 = scmp.gt.s32.totalorder %s258, 0
        %s260 = scalar_select %p259, %s258, 0
        %p261 = scmp.lt.s32.totalorder %s260, 17
        %s262 = scalar_select %p261, %s260, 17
        %p263 = scmp.lt.s32.totalorder %s19, 1
        %s264 = scalar_select %p263, %s19, 1
        %p265 = scmp.lt.s32.totalorder %s262, 17
        %s266 = scalar_select %p265, %s262, 17
        %s267 = smul.addr %s266, 3
        %s268 = smul.addr %s264, 54
        %s269 = sadd.s32 %s267, %s268
        %s270 = scalar_lea.vmem %s3, %s269
        %s271 = ssub.s32 %s20, 1
        %p272 = scmp.gt.s32.totalorder %s271, 0
        %s273 = scalar_select %p272, %s271, 0
        %p274 = scmp.lt.s32.totalorder %s273, 17
        %s275 = scalar_select %p274, %s273, 17
      $region32: #{vae3d_hhdv_forward.4} parent=27 // pred_fallthru
        _
      // Predicated region
      $region33: #{vae3d_hhdv_forward.4} parent=27 // pred_check
        %p276 = pneg %p155
      $region34: #{vae3d_hhdv_forward.4} parent=27 // pred_check_branch
        %278 = sbr.rel (%p276) target = $region36
      $region35: #{vae3d_hhdv_forward.4} parent=27 // pred_region
        %p279 = scmp.gt.s32.totalorder %s20, 0
        %s280 = scalar_select %p279, %s20, 0
        %p281 = scmp.lt.s32.totalorder %s280, 17
        %s282 = scalar_select %p281, %s280, 17
        %p283 = scmp.lt.s32.totalorder %s19, 1
        %s284 = scalar_select %p283, %s19, 1
        %p285 = scmp.lt.s32.totalorder %s282, 17
        %s286 = scalar_select %p285, %s282, 17
        %s287 = smul.addr %s286, 3
        %s288 = smul.addr %s284, 54
        %s289 = sadd.s32 %s287, %s288
        %s290 = scalar_lea.vmem %s4, %s289
        %p291 = scmp.gt.s32.totalorder %s20, 0
        %s292 = scalar_select %p291, %s20, 0
        %p293 = scmp.lt.s32.totalorder %s292, 17
        %s294 = scalar_select %p293, %s292, 17
      $region36: #{vae3d_hhdv_forward.4} parent=27 // pred_fallthru
        _
      // Predicated region
      $region37: #{vae3d_hhdv_forward.4} parent=27 // pred_check
        %p295 = pneg %p193
      $region38: #{vae3d_hhdv_forward.4} parent=27 // pred_check_branch
        %297 = sbr.rel (%p295) target = $region40
      $region39: #{vae3d_hhdv_forward.4} parent=27 // pred_region
        %s298 = sadd.s32 %s20, 1
        %p299 = scmp.gt.s32.totalorder %s298, 0
        %s300 = scalar_select %p299, %s298, 0
        %p301 = scmp.lt.s32.totalorder %s300, 17
        %s302 = scalar_select %p301, %s300, 17
        %p303 = scmp.lt.s32.totalorder %s19, 1
        %s304 = scalar_select %p303, %s19, 1
        %p305 = scmp.lt.s32.totalorder %s302, 17
        %s306 = scalar_select %p305, %s302, 17
        %s307 = smul.addr %s306, 3
        %s308 = smul.addr %s304, 54
        %s309 = sadd.s32 %s307, %s308
        %s310 = scalar_lea.vmem %s5, %s309
        %s311 = sadd.s32 %s20, 1
        %p312 = scmp.gt.s32.totalorder %s311, 0
        %s313 = scalar_select %p312, %s311, 0
        %p314 = scmp.lt.s32.totalorder %s313, 17
        %s315 = scalar_select %p314, %s313, 17
      $region40: #{vae3d_hhdv_forward.4} parent=27 // pred_fallthru
        _
    $region28: #{vae3d_hhdv_forward.4} parent=5 // pred_fallthru
      _
    %p316 = scmp.le.s32.totalorder 1, %s12
    %p317 = scmp.lt.s32.totalorder %s12, 37
    %p318 = pnand %p316, %p317
    %p319 = pneg %p318
    // Predicated region
    $region41: #{vae3d_hhdv_forward.4} parent=5 // pred_check
      _
    $region42: #{vae3d_hhdv_forward.4} parent=5 // pred_check_branch
      %321 = sbr.rel (%p318) target = $region44
    $region43: #{vae3d_hhdv_forward.4} parent=5 // pred_region
      %s322 = ssub.s32 %s12, 1
      %p323 = pneg %p45
      %p324 = pneg %p42
      %p325 = pneg %p66
      %p326 = pneg %p63
      %p327 = pneg %p87
      %p328 = pneg %p84
      %s329 = ssub.s32 %s22, 1
      %p330 = scmp.gt.s32.totalorder %s329, 0
      %s331 = scalar_select %p330, %s329, 0
      %p332 = scmp.lt.s32.totalorder %s331, 17
      %s333 = scalar_select %p332, %s331, 17
      %p334 = scmp.lt.s32.totalorder %s21, 1
      %s335 = scalar_select %p334, %s21, 1
      %p336 = scmp.lt.s32.totalorder %s333, 17
      %s337 = scalar_select %p336, %s333, 17
      %s338 = smul.addr %s337, 3
      %s339 = smul.addr %s335, 54
      %s340 = sadd.s32 %s338, %s339
      %s341 = scalar_lea.vmem %s3, %s340
      %p342 = pneg %p125
      %p343 = pneg %p122
      %p344 = scmp.gt.s32.totalorder %s22, 0
      %s345 = scalar_select %p344, %s22, 0
      %p346 = scmp.lt.s32.totalorder %s345, 17
      %s347 = scalar_select %p346, %s345, 17
      %p348 = scmp.lt.s32.totalorder %s21, 1
      %s349 = scalar_select %p348, %s21, 1
      %p350 = scmp.lt.s32.totalorder %s347, 17
      %s351 = scalar_select %p350, %s347, 17
      %s352 = smul.addr %s351, 3
      %s353 = smul.addr %s349, 54
      %s354 = sadd.s32 %s352, %s353
      %s355 = scalar_lea.vmem %s4, %s354
      %p356 = pneg %p161
      %p357 = pneg %p158
      %s358 = sadd.s32 %s22, 1
      %p359 = scmp.gt.s32.totalorder %s358, 0
      %s360 = scalar_select %p359, %s358, 0
      %p361 = scmp.lt.s32.totalorder %s360, 17
      %s362 = scalar_select %p361, %s360, 17
      %p363 = scmp.lt.s32.totalorder %s21, 1
      %s364 = scalar_select %p363, %s21, 1
      %p365 = scmp.lt.s32.totalorder %s362, 17
      %s366 = scalar_select %p365, %s362, 17
      %s367 = smul.addr %s366, 3
      %s368 = smul.addr %s364, 54
      %s369 = sadd.s32 %s367, %s368
      %s370 = scalar_lea.vmem %s5, %s369
      %p371 = pneg %p199
      %p372 = pneg %p196
      %p373 = pneg %p227
      %p374 = pneg %p224
      %p375 = scmp.lt.s32.totalorder %s21, 1
      %s376 = scalar_select %p375, %s21, 1
      %p377 = scmp.lt.s32.totalorder %s22, 17
      %s378 = scalar_select %p377, %s22, 17
      %s379 = smul.addr %s378, 6
      %s380 = smul.addr %s376, 108
      %s381 = sadd.s32 %s379, %s380
      %s382 = smul.addr %s381, 4
      %s383 = scalar_lea.vmem %s6, %s382
      %s384 = ssub.s32 %s22, 1
      %p385 = scmp.gt.s32.totalorder %s384, 0
      %s386 = scalar_select %p385, %s384, 0
      %p387 = scmp.lt.s32.totalorder %s386, 17
      %s388 = scalar_select %p387, %s386, 17
      %p389 = scmp.lt.s32.totalorder %s21, 1
      %s390 = scalar_select %p389, %s21, 1
      %p391 = scmp.lt.s32.totalorder %s388, 17
      %s392 = scalar_select %p391, %s388, 17
      %s393 = smul.addr %s392, 3
      %s394 = smul.addr %s390, 54
      %s395 = sadd.s32 %s393, %s394
      %s396 = scalar_lea.vmem %s3, %s395
      %s397 = ssub.s32 %s22, 1
      %p398 = scmp.gt.s32.totalorder %s397, 0
      %s399 = scalar_select %p398, %s397, 0
      %p400 = scmp.lt.s32.totalorder %s399, 17
      %s401 = scalar_select %p400, %s399, 17
      %p402 = scmp.gt.s32.totalorder %s22, 0
      %s403 = scalar_select %p402, %s22, 0
      %p404 = scmp.lt.s32.totalorder %s403, 17
      %s405 = scalar_select %p404, %s403, 17
      %p406 = scmp.lt.s32.totalorder %s21, 1
      %s407 = scalar_select %p406, %s21, 1
      %p408 = scmp.lt.s32.totalorder %s405, 17
      %s409 = scalar_select %p408, %s405, 17
      %s410 = smul.addr %s409, 3
      %s411 = smul.addr %s407, 54
      %s412 = sadd.s32 %s410, %s411
      %s413 = scalar_lea.vmem %s4, %s412
      %p414 = scmp.gt.s32.totalorder %s22, 0
      %s415 = scalar_select %p414, %s22, 0
      %p416 = scmp.lt.s32.totalorder %s415, 17
      %s417 = scalar_select %p416, %s415, 17
      %s418 = sadd.s32 %s22, 1
      %p419 = scmp.gt.s32.totalorder %s418, 0
      %s420 = scalar_select %p419, %s418, 0
      %p421 = scmp.lt.s32.totalorder %s420, 17
      %s422 = scalar_select %p421, %s420, 17
      %p423 = scmp.lt.s32.totalorder %s21, 1
      %s424 = scalar_select %p423, %s21, 1
      %p425 = scmp.lt.s32.totalorder %s422, 17
      %s426 = scalar_select %p425, %s422, 17
      %s427 = smul.addr %s426, 3
      %s428 = smul.addr %s424, 54
      %s429 = sadd.s32 %s427, %s428
      %s430 = scalar_lea.vmem %s5, %s429
      %s431 = sadd.s32 %s22, 1
      %p432 = scmp.gt.s32.totalorder %s431, 0
      %s433 = scalar_select %p432, %s431, 0
      %p434 = scmp.lt.s32.totalorder %s433, 17
      %s435 = scalar_select %p434, %s433, 17
      %p436 = scmp.lt.s32.totalorder %s21, 1
      %s437 = scalar_select %p436, %s21, 1
      %p438 = scmp.lt.s32.totalorder %s22, 17
      %s439 = scalar_select %p438, %s22, 17
      %s440 = smul.addr %s439, 6
      %s441 = smul.addr %s437, 108
      %s442 = sadd.s32 %s440, %s441
      %s443 = smul.addr %s442, 4
      %s444 = scalar_lea.vmem %s6, %s443
      %p446 = scmp.ge.s32.totalorder %s22, 1
      %p447 = scmp.le.s32.totalorder %s22, 16
      %p448 = pnand %p446, %p447
      %p449 = pneg %p448
      // Predicated region
      $region45: #{vae3d_hhdv_forward.4} parent=43 // pred_check
        _
      $region46: #{vae3d_hhdv_forward.4} parent=43 // pred_check_branch
        %451 = sbr.rel (%p448) target = $region48
      $region47: #{vae3d_hhdv_forward.4} parent=43 // pred_region
        %v452 = vld [vmem:[%s396] sm:$0x7]
        %v453 = vld [vmem:[%s413] sm:$0x7]
        %v454 = vld [vmem:[%s430] sm:$0x7]
        %456 = vst [vmem:[#allocation1] ss:$4 sm:$0xff] %v452
        %v457 = vld [vmem:[#allocation1] sm:$0xff]
        %v458 = vld [vmem:[#allocation1 + $0x8] sm:$0xff]
        %461 = vst [vmem:[#allocation2] sm:$0x11] %v457
        %vm462 = vcmask 237568
        %463 = vst.msk [vmem:[#allocation2 + $0x8] sm:$0x1] %vm462, %v458
        %s464 = scalar_lea.vmem [#allocation1], 1
        %465 = vst [vmem:[%s464] ss:$4 sm:$0xff] %v452
        %v466 = vld [vmem:[#allocation1] sm:$0xff]
        %v468 = vld [vmem:[#allocation1 + $0x8] sm:$0xff]
        %470 = vrot.lane.b32.xlu0 %v466, 127
        %v471 = vpop.permute.xlu0 %470
        %472 = vrot.lane.b32.xlu0 %v468, 127
        %v473 = vpop.permute.xlu0 %472
        %v474 = vrot.slane %v471, 4
        %v475 = vrot.slane %v473, 4
        %vm476 = vcmask 1043456
        %v477 = vsel %vm476, %v474, %v475
        %vm478 = vcmask 1039360
        %v479 = vsel %vm478, %v471, %v477
        %482 = vst [vmem:[#allocation2] sm:$0x22] %v479
        %vm483 = vcmask 238593
        %484 = vst.msk [vmem:[#allocation2 + $0x8] sm:$0x2] %vm483, %v473
        %s485 = scalar_lea.vmem [#allocation1], 2
        %486 = vst [vmem:[%s485] ss:$4 sm:$0xff] %v452
        %v487 = vld [vmem:[#allocation1] sm:$0xff]
        %v489 = vld [vmem:[#allocation1 + $0x8] sm:$0xff]
        %491 = vrot.lane.b32.xlu0 %v487, 126
        %v492 = vpop.permute.xlu0 %491
        %493 = vrot.lane.b32.xlu0 %v489, 126
        %v494 = vpop.permute.xlu0 %493
        %v495 = vrot.slane %v492, 4
        %v496 = vrot.slane %v494, 4
        %v497 = vsel %vm476, %v495, %v496
        %vm498 = vcmask 1031168
        %v499 = vsel %vm498, %v492, %v497
        %502 = vst [vmem:[#allocation2] sm:$0x44] %v499
        %vm503 = vcmask 239618
        %504 = vst.msk [vmem:[#allocation2 + $0x8] sm:$0x4] %vm503, %v494
        %s505 = scalar_lea.vmem [#allocation1], 3
        %506 = vst [vmem:[%s505] ss:$4 sm:$0xff] %v452
        %v507 = vld [vmem:[#allocation1] sm:$0xff]
        %v509 = vld [vmem:[#allocation1 + $0x8] sm:$0xff]
        %511 = vrot.lane.b32.xlu0 %v507, 110
        %v512 = vpop.permute.xlu0 %511
        %513 = vrot.lane.b32.xlu0 %v509, 110
        %v514 = vpop.permute.xlu0 %513
        %v515 = vrot.slane %v512, 4
        %v516 = vrot.slane %v514, 4
        %v517 = vsel %vm476, %v515, %v516
        %vm518 = vcmask 900096
        %v519 = vsel %vm518, %v512, %v517
        %522 = vst [vmem:[#allocation2] sm:$0x88] %v519
        %vm523 = vcmask 240643
        %524 = vst.msk [vmem:[#allocation2 + $0x8] sm:$0x8] %vm523, %v514
        %525 = vst [vmem:[#allocation1] ss:$4 sm:$0xff] %v452
        %v526 = vld [vmem:[#allocation1] sm:$0xff]
        %v528 = vld [vmem:[#allocation1 + $0x8] sm:$0xff]
        %530 = vrot.lane.b32.xlu0 %v526, 109
        %v531 = vpop.permute.xlu0 %530
        %532 = vrot.lane.b32.xlu0 %v528, 109
        %v533 = vpop.permute.xlu0 %532
        %v534 = vrot.slane %v531, 4
        %v535 = vrot.slane %v533, 4
        %v536 = vsel %vm476, %v534, %v535
        %vm537 = vcmask 891904
        %v538 = vsel %vm537, %v531, %v536
        %541 = vst [vmem:[#allocation2 + $0xc] sm:$0x11] %v538
        %542 = vst.msk [vmem:[#allocation2 + $0x14] sm:$0x1] %vm462, %v533
        %s543 = scalar_lea.vmem [#allocation1], 1
        %544 = vst [vmem:[%s543] ss:$4 sm:$0xff] %v452
        %v545 = vld [vmem:[#allocation1] sm:$0xff]
        %v547 = vld [vmem:[#allocation1 + $0x8] sm:$0xff]
        %549 = vrot.lane.b32.xlu0 %v545, 108
        %v550 = vpop.permute.xlu0 %549
        %551 = vrot.lane.b32.xlu0 %v547, 108
        %v552 = vpop.permute.xlu0 %551
        %v553 = vrot.slane %v550, 4
        %v554 = vrot.slane %v552, 4
        %v555 = vsel %vm476, %v553, %v554
        %vm556 = vcmask 883712
        %v557 = vsel %vm556, %v550, %v555
        %560 = vst [vmem:[#allocation2 + $0xc] sm:$0x22] %v557
        %561 = vst.msk [vmem:[#allocation2 + $0x14] sm:$0x2] %vm483, %v552
        %s562 = scalar_lea.vmem [#allocation1], 2
        %563 = vst [vmem:[%s562] ss:$4 sm:$0xff] %v452
        %v564 = vld [vmem:[#allocation1] sm:$0xff]
        %v566 = vld [vmem:[#allocation1 + $0x8] sm:$0xff]
        %568 = vrot.lane.b32.xlu0 %v564, 92
        %v569 = vpop.permute.xlu0 %568
        %570 = vrot.lane.b32.xlu0 %v566, 92
        %v571 = vpop.permute.xlu0 %570
        %v572 = vrot.slane %v569, 4
        %v573 = vrot.slane %v571, 4
        %v574 = vsel %vm476, %v572, %v573
        %vm575 = vcmask 752640
        %v576 = vsel %vm575, %v569, %v574
        %579 = vst [vmem:[#allocation2 + $0xc] sm:$0x44] %v576
        %580 = vst.msk [vmem:[#allocation2 + $0x14] sm:$0x4] %vm503, %v571
        %s581 = scalar_lea.vmem [#allocation1], 3
        %582 = vst [vmem:[%s581] ss:$4 sm:$0xff] %v452
        %v583 = vld [vmem:[#allocation1] sm:$0xff]
        %v585 = vld [vmem:[#allocation1 + $0x8] sm:$0xff]
        %587 = vrot.lane.b32.xlu0 %v583, 91
        %v588 = vpop.permute.xlu0 %587
        %589 = vrot.lane.b32.xlu0 %v585, 91
        %v590 = vpop.permute.xlu0 %589
        %v591 = vrot.slane %v588, 4
        %v592 = vrot.slane %v590, 4
        %v593 = vsel %vm476, %v591, %v592
        %vm594 = vcmask 744448
        %v595 = vsel %vm594, %v588, %v593
        %598 = vst [vmem:[#allocation2 + $0xc] sm:$0x88] %v595
        %599 = vst.msk [vmem:[#allocation2 + $0x14] sm:$0x8] %vm523, %v590
        %600 = vst [vmem:[#allocation1] ss:$4 sm:$0xff] %v452
        %v601 = vld [vmem:[#allocation1] sm:$0xff]
        %v603 = vld [vmem:[#allocation1 + $0x8] sm:$0xff]
        %605 = vrot.lane.b32.xlu0 %v601, 90
        %v606 = vpop.permute.xlu0 %605
        %607 = vrot.lane.b32.xlu0 %v603, 90
        %v608 = vpop.permute.xlu0 %607
        %v609 = vrot.slane %v606, 4
        %v610 = vrot.slane %v608, 4
        %v611 = vsel %vm476, %v609, %v610
        %vm612 = vcmask 736256
        %v613 = vsel %vm612, %v606, %v611
        %616 = vst [vmem:[#allocation2 + $0x18] sm:$0x11] %v613
        %617 = vst.msk [vmem:[#allocation2 + $0x20] sm:$0x1] %vm462, %v608
        %s619 = scalar_lea.vmem [#allocation1], 1
        %620 = vst [vmem:[%s619] ss:$4 sm:$0xff] %v453
        %v621 = vld [vmem:[#allocation1] sm:$0xff]
        %v622 = vld [vmem:[#allocation1 + $0x8] sm:$0xff]
        %625 = vst [vmem:[#allocation2 + $0x18] sm:$0x22] %v621
        %626 = vst.msk [vmem:[#allocation2 + $0x20] sm:$0x2] %vm483, %v622
        %s627 = scalar_lea.vmem [#allocation1], 2
        %628 = vst [vmem:[%s627] ss:$4 sm:$0xff] %v453
        %v629 = vld [vmem:[#allocation1] sm:$0xff]
        %v631 = vld [vmem:[#allocation1 + $0x8] sm:$0xff]
        %633 = vrot.lane.b32.xlu0 %v629, 127
        %v634 = vpop.permute.xlu0 %633
        %635 = vrot.lane.b32.xlu0 %v631, 127
        %v636 = vpop.permute.xlu0 %635
        %v637 = vrot.slane %v634, 4
        %v638 = vrot.slane %v636, 4
        %v639 = vsel %vm476, %v637, %v638
        %v640 = vsel %vm478, %v634, %v639
        %643 = vst [vmem:[#allocation2 + $0x18] sm:$0x44] %v640
        %644 = vst.msk [vmem:[#allocation2 + $0x20] sm:$0x4] %vm503, %v636
        %s645 = scalar_lea.vmem [#allocation1], 3
        %646 = vst [vmem:[%s645] ss:$4 sm:$0xff] %v453
        %v647 = vld [vmem:[#allocation1] sm:$0xff]
        %v649 = vld [vmem:[#allocation1 + $0x8] sm:$0xff]
        %651 = vrot.lane.b32.xlu0 %v647, 126
        %v652 = vpop.permute.xlu0 %651
        %653 = vrot.lane.b32.xlu0 %v649, 126
        %v654 = vpop.permute.xlu0 %653
        %v655 = vrot.slane %v652, 4
        %v656 = vrot.slane %v654, 4
        %v657 = vsel %vm476, %v655, %v656
        %v658 = vsel %vm498, %v652, %v657
        %661 = vst [vmem:[#allocation2 + $0x18] sm:$0x88] %v658
        %662 = vst.msk [vmem:[#allocation2 + $0x20] sm:$0x8] %vm523, %v654
        %663 = vst [vmem:[#allocation1] ss:$4 sm:$0xff] %v453
        %v664 = vld [vmem:[#allocation1] sm:$0xff]
        %v666 = vld [vmem:[#allocation1 + $0x8] sm:$0xff]
        %668 = vrot.lane.b32.xlu0 %v664, 110
        %v669 = vpop.permute.xlu0 %668
        %670 = vrot.lane.b32.xlu0 %v666, 110
        %v671 = vpop.permute.xlu0 %670
        %v672 = vrot.slane %v669, 4
        %v673 = vrot.slane %v671, 4
        %v674 = vsel %vm476, %v672, %v673
        %v675 = vsel %vm518, %v669, %v674
        %678 = vst [vmem:[#allocation2 + $0x24] sm:$0x11] %v675
        %679 = vst.msk [vmem:[#allocation2 + $0x2c] sm:$0x1] %vm462, %v671
        %s680 = scalar_lea.vmem [#allocation1], 1
        %681 = vst [vmem:[%s680] ss:$4 sm:$0xff] %v453
        %v682 = vld [vmem:[#allocation1] sm:$0xff]
        %v684 = vld [vmem:[#allocation1 + $0x8] sm:$0xff]
        %686 = vrot.lane.b32.xlu0 %v682, 109
        %v687 = vpop.permute.xlu0 %686
        %688 = vrot.lane.b32.xlu0 %v684, 109
        %v689 = vpop.permute.xlu0 %688
        %v690 = vrot.slane %v687, 4
        %v691 = vrot.slane %v689, 4
        %v692 = vsel %vm476, %v690, %v691
        %v693 = vsel %vm537, %v687, %v692
        %696 = vst [vmem:[#allocation2 + $0x24] sm:$0x22] %v693
        %697 = vst.msk [vmem:[#allocation2 + $0x2c] sm:$0x2] %vm483, %v689
        %s698 = scalar_lea.vmem [#allocation1], 2
        %699 = vst [vmem:[%s698] ss:$4 sm:$0xff] %v453
        %v700 = vld [vmem:[#allocation1] sm:$0xff]
        %v702 = vld [vmem:[#allocation1 + $0x8] sm:$0xff]
        %704 = vrot.lane.b32.xlu0 %v700, 108
        %v705 = vpop.permute.xlu0 %704
        %706 = vrot.lane.b32.xlu0 %v702, 108
        %v707 = vpop.permute.xlu0 %706
        %v708 = vrot.slane %v705, 4
        %v709 = vrot.slane %v707, 4
        %v710 = vsel %vm476, %v708, %v709
        %v711 = vsel %vm556, %v705, %v710
        %714 = vst [vmem:[#allocation2 + $0x24] sm:$0x44] %v711
        %715 = vst.msk [vmem:[#allocation2 + $0x2c] sm:$0x4] %vm503, %v707
        %s716 = scalar_lea.vmem [#allocation1], 3
        %717 = vst [vmem:[%s716] ss:$4 sm:$0xff] %v453
        %v718 = vld [vmem:[#allocation1] sm:$0xff]
        %v720 = vld [vmem:[#allocation1 + $0x8] sm:$0xff]
        %722 = vrot.lane.b32.xlu0 %v718, 92
        %v723 = vpop.permute.xlu0 %722
        %724 = vrot.lane.b32.xlu0 %v720, 92
        %v725 = vpop.permute.xlu0 %724
        %v726 = vrot.slane %v723, 4
        %v727 = vrot.slane %v725, 4
        %v728 = vsel %vm476, %v726, %v727
        %v729 = vsel %vm575, %v723, %v728
        %732 = vst [vmem:[#allocation2 + $0x24] sm:$0x88] %v729
        %733 = vst.msk [vmem:[#allocation2 + $0x2c] sm:$0x8] %vm523, %v725
        %734 = vst [vmem:[#allocation1] ss:$4 sm:$0xff] %v453
        %v735 = vld [vmem:[#allocation1] sm:$0xff]
        %v737 = vld [vmem:[#allocation1 + $0x8] sm:$0xff]
        %739 = vrot.lane.b32.xlu0 %v735, 91
        %v740 = vpop.permute.xlu0 %739
        %741 = vrot.lane.b32.xlu0 %v737, 91
        %v742 = vpop.permute.xlu0 %741
        %v743 = vrot.slane %v740, 4
        %v744 = vrot.slane %v742, 4
        %v745 = vsel %vm476, %v743, %v744
        %v746 = vsel %vm594, %v740, %v745
        %749 = vst [vmem:[#allocation2 + $0x30] sm:$0x11] %v746
        %750 = vst.msk [vmem:[#allocation2 + $0x38] sm:$0x1] %vm462, %v742
        %s751 = scalar_lea.vmem [#allocation1], 1
        %752 = vst [vmem:[%s751] ss:$4 sm:$0xff] %v453
        %v753 = vld [vmem:[#allocation1] sm:$0xff]
        %v755 = vld [vmem:[#allocation1 + $0x8] sm:$0xff]
        %757 = vrot.lane.b32.xlu0 %v753, 90
        %v758 = vpop.permute.xlu0 %757
        %759 = vrot.lane.b32.xlu0 %v755, 90
        %v760 = vpop.permute.xlu0 %759
        %v761 = vrot.slane %v758, 4
        %v762 = vrot.slane %v760, 4
        %v763 = vsel %vm476, %v761, %v762
        %v764 = vsel %vm612, %v758, %v763
        %767 = vst [vmem:[#allocation2 + $0x30] sm:$0x22] %v764
        %768 = vst.msk [vmem:[#allocation2 + $0x38] sm:$0x2] %vm483, %v760
        %s770 = scalar_lea.vmem [#allocation1], 2
        %771 = vst [vmem:[%s770] ss:$4 sm:$0xff] %v454
        %v772 = vld [vmem:[#allocation1] sm:$0xff]
        %v773 = vld [vmem:[#allocation1 + $0x8] sm:$0xff]
        %776 = vst [vmem:[#allocation2 + $0x30] sm:$0x44] %v772
        %777 = vst.msk [vmem:[#allocation2 + $0x38] sm:$0x4] %vm503, %v773
        %s778 = scalar_lea.vmem [#allocation1], 3
        %779 = vst [vmem:[%s778] ss:$4 sm:$0xff] %v454
        %v780 = vld [vmem:[#allocation1] sm:$0xff]
        %v782 = vld [vmem:[#allocation1 + $0x8] sm:$0xff]
        %784 = vrot.lane.b32.xlu0 %v780, 127
        %v785 = vpop.permute.xlu0 %784
        %786 = vrot.lane.b32.xlu0 %v782, 127
        %v787 = vpop.permute.xlu0 %786
        %v788 = vrot.slane %v785, 4
        %v789 = vrot.slane %v787, 4
        %v790 = vsel %vm476, %v788, %v789
        %v791 = vsel %vm478, %v785, %v790
        %794 = vst [vmem:[#allocation2 + $0x30] sm:$0x88] %v791
        %795 = vst.msk [vmem:[#allocation2 + $0x38] sm:$0x8] %vm523, %v787
        %796 = vst [vmem:[#allocation1] ss:$4 sm:$0xff] %v454
        %v797 = vld [vmem:[#allocation1] sm:$0xff]
        %v799 = vld [vmem:[#allocation1 + $0x8] sm:$0xff]
        %801 = vrot.lane.b32.xlu0 %v797, 126
        %v802 = vpop.permute.xlu0 %801
        %803 = vrot.lane.b32.xlu0 %v799, 126
        %v804 = vpop.permute.xlu0 %803
        %v805 = vrot.slane %v802, 4
        %v806 = vrot.slane %v804, 4
        %v807 = vsel %vm476, %v805, %v806
        %v808 = vsel %vm498, %v802, %v807
        %811 = vst [vmem:[#allocation2 + $0x3c] sm:$0x11] %v808
        %812 = vst.msk [vmem:[#allocation2 + $0x44] sm:$0x1] %vm462, %v804
        %s813 = scalar_lea.vmem [#allocation1], 1
        %814 = vst [vmem:[%s813] ss:$4 sm:$0xff] %v454
        %v815 = vld [vmem:[#allocation1] sm:$0xff]
        %v817 = vld [vmem:[#allocation1 + $0x8] sm:$0xff]
        %819 = vrot.lane.b32.xlu0 %v815, 110
        %v820 = vpop.permute.xlu0 %819
        %821 = vrot.lane.b32.xlu0 %v817, 110
        %v822 = vpop.permute.xlu0 %821
        %v823 = vrot.slane %v820, 4
        %v824 = vrot.slane %v822, 4
        %v825 = vsel %vm476, %v823, %v824
        %v826 = vsel %vm518, %v820, %v825
        %829 = vst [vmem:[#allocation2 + $0x3c] sm:$0x22] %v826
        %830 = vst.msk [vmem:[#allocation2 + $0x44] sm:$0x2] %vm483, %v822
        %s831 = scalar_lea.vmem [#allocation1], 2
        %832 = vst [vmem:[%s831] ss:$4 sm:$0xff] %v454
        %v833 = vld [vmem:[#allocation1] sm:$0xff]
        %v835 = vld [vmem:[#allocation1 + $0x8] sm:$0xff]
        %837 = vrot.lane.b32.xlu0 %v833, 109
        %v838 = vpop.permute.xlu0 %837
        %839 = vrot.lane.b32.xlu0 %v835, 109
        %v840 = vpop.permute.xlu0 %839
        %v841 = vrot.slane %v838, 4
        %v842 = vrot.slane %v840, 4
        %v843 = vsel %vm476, %v841, %v842
        %v844 = vsel %vm537, %v838, %v843
        %847 = vst [vmem:[#allocation2 + $0x3c] sm:$0x44] %v844
        %848 = vst.msk [vmem:[#allocation2 + $0x44] sm:$0x4] %vm503, %v840
        %s849 = scalar_lea.vmem [#allocation1], 3
        %850 = vst [vmem:[%s849] ss:$4 sm:$0xff] %v454
        %v851 = vld [vmem:[#allocation1] sm:$0xff]
        %v853 = vld [vmem:[#allocation1 + $0x8] sm:$0xff]
        %855 = vrot.lane.b32.xlu0 %v851, 108
        %v856 = vpop.permute.xlu0 %855
        %857 = vrot.lane.b32.xlu0 %v853, 108
        %v858 = vpop.permute.xlu0 %857
        %v859 = vrot.slane %v856, 4
        %v860 = vrot.slane %v858, 4
        %v861 = vsel %vm476, %v859, %v860
        %v862 = vsel %vm556, %v856, %v861
        %865 = vst [vmem:[#allocation2 + $0x3c] sm:$0x88] %v862
        %866 = vst.msk [vmem:[#allocation2 + $0x44] sm:$0x8] %vm523, %v858
        %867 = vst [vmem:[#allocation1] ss:$4 sm:$0xff] %v454
        %v868 = vld [vmem:[#allocation1] sm:$0xff]
        %v870 = vld [vmem:[#allocation1 + $0x8] sm:$0xff]
        %872 = vrot.lane.b32.xlu0 %v868, 92
        %v873 = vpop.permute.xlu0 %872
        %874 = vrot.lane.b32.xlu0 %v870, 92
        %v875 = vpop.permute.xlu0 %874
        %v876 = vrot.slane %v873, 4
        %v877 = vrot.slane %v875, 4
        %v878 = vsel %vm476, %v876, %v877
        %v879 = vsel %vm575, %v873, %v878
        %882 = vst [vmem:[#allocation2 + $0x48] sm:$0x11] %v879
        %883 = vst.msk [vmem:[#allocation2 + $0x50] sm:$0x1] %vm462, %v875
        %s884 = scalar_lea.vmem [#allocation1], 1
        %885 = vst [vmem:[%s884] ss:$4 sm:$0xff] %v454
        %v886 = vld [vmem:[#allocation1] sm:$0xff]
        %v888 = vld [vmem:[#allocation1 + $0x8] sm:$0xff]
        %890 = vrot.lane.b32.xlu0 %v886, 91
        %v891 = vpop.permute.xlu0 %890
        %892 = vrot.lane.b32.xlu0 %v888, 91
        %v893 = vpop.permute.xlu0 %892
        %v894 = vrot.slane %v891, 4
        %v895 = vrot.slane %v893, 4
        %v896 = vsel %vm476, %v894, %v895
        %v897 = vsel %vm594, %v891, %v896
        %900 = vst [vmem:[#allocation2 + $0x48] sm:$0x22] %v897
        %901 = vst.msk [vmem:[#allocation2 + $0x50] sm:$0x2] %vm483, %v893
        %s902 = scalar_lea.vmem [#allocation1], 2
        %903 = vst [vmem:[%s902] ss:$4 sm:$0xff] %v454
        %v904 = vld [vmem:[#allocation1] sm:$0xff]
        %v906 = vld [vmem:[#allocation1 + $0x8] sm:$0xff]
        %908 = vrot.lane.b32.xlu0 %v904, 90
        %v909 = vpop.permute.xlu0 %908
        %910 = vrot.lane.b32.xlu0 %v906, 90
        %v911 = vpop.permute.xlu0 %910
        %v912 = vrot.slane %v909, 4
        %v913 = vrot.slane %v911, 4
        %v914 = vsel %vm476, %v912, %v913
        %v915 = vsel %vm612, %v909, %v914
        %918 = vst [vmem:[#allocation2 + $0x48] sm:$0x44] %v915
        %919 = vst.msk [vmem:[#allocation2 + $0x50] sm:$0x4] %vm503, %v911
        %v920 = vld [vmem:[%s0] sm:$0xf]
        %v921 = vld [vmem:[%s0 + $0x4] sm:$0xf]
        %v922 = vld [vmem:[#allocation2] sm:$0xff]
        %v923 = vld [vmem:[#allocation2 + $0x8] sm:$0xf]
        %v924 = vld [vmem:[#allocation2 + $0xc] sm:$0xff]
        %v925 = vld [vmem:[#allocation2 + $0x14] sm:$0xf]
        %v926 = vld [vmem:[#allocation2 + $0x18] sm:$0xff]
        %v927 = vld [vmem:[#allocation2 + $0x20] sm:$0xf]
        %v928 = vld [vmem:[#allocation2 + $0x24] sm:$0xff]
        %v929 = vld [vmem:[#allocation2 + $0x2c] sm:$0xf]
        %v930 = vld [vmem:[#allocation2 + $0x30] sm:$0xff]
        %v931 = vld [vmem:[#allocation2 + $0x38] sm:$0xf]
        %v932 = vld [vmem:[#allocation2 + $0x3c] sm:$0xff]
        %v933 = vld [vmem:[#allocation2 + $0x44] sm:$0xf]
        %v934 = vld [vmem:[#allocation2 + $0x48] sm:$0x77]
        %v935 = vld [vmem:[#allocation2 + $0x50] sm:$0x7]
        %v936 = vld [vmem:[%s1] sm:$0xff]
        %v937 = vld [vmem:[%s1 + $0x8] sm:$0xff]
        %939 = vset.pattern.permute.xlu0 0
        %940 = vperm.xlu0 %939, %v936
        %v941 = vpop.permute.xlu0 %940
        %944 = vset.pattern.permute.xlu0 0
        %945 = vperm.xlu0 %944, %v937
        %v946 = vpop.permute.xlu0 %945
        %v950 = vunpack.c.l.b16 %v920
        %v951 = vunpack.c.l.b16 %v921
        %v952 = vpack.c.b16 %v951, %v950
        %v967 = vunpack.c.l.b16 %v922
        %v968 = vunpack.c.h.b16 %v922
        %v969 = vunpack.c.l.b16 %v923
        %v970 = vunpack.c.l.b16 %v924
        %v971 = vunpack.c.h.b16 %v924
        %v972 = vunpack.c.l.b16 %v925
        %v973 = vunpack.c.l.b16 %v926
        %v974 = vunpack.c.h.b16 %v926
        %v975 = vunpack.c.l.b16 %v927
        %v976 = vunpack.c.l.b16 %v928
        %v977 = vunpack.c.h.b16 %v928
        %v978 = vunpack.c.l.b16 %v929
        %v979 = vunpack.c.l.b16 %v930
        %v980 = vunpack.c.h.b16 %v930
        %v981 = vunpack.c.l.b16 %v931
        %v982 = vunpack.c.l.b16 %v932
        %v983 = vunpack.c.h.b16 %v932
        %v984 = vunpack.c.l.b16 %v933
        %v985 = vunpack.c.l.b16 %v934
        %v986 = vunpack.c.h.b16 %v934
        %v987 = vunpack.c.l.b16 %v935
        %v988 = vpack.c.b16 %v970, %v967
        %v989 = vpack.c.b16 %v971, %v968
        %v990 = vpack.c.b16 %v972, %v969
        %v991 = vpack.c.b16 %v976, %v973
        %v992 = vpack.c.b16 %v977, %v974
        %v993 = vpack.c.b16 %v978, %v975
        %v994 = vpack.c.b16 %v982, %v979
        %v995 = vpack.c.b16 %v983, %v980
        %v996 = vpack.c.b16 %v984, %v981
        %v997 = vpack.c.b16 %v985, %v985
        %v998 = vpack.c.b16 %v986, %v986
        %v999 = vpack.c.b16 %v987, %v987
        %vm1009 = vcmask 441344
        %v1011 = vsel %vm1009, %v952, 0
        %vm1013 = vcmask 1042432
        %v1015 = vsel %vm1013, %v997, 0
        %v1018 = vsel %vm1013, %v998, 0
        %v1021 = vsel %vm1013, %v999, 0
        %1023 = vmatpush.bf16.msra.mxu0 0
        %1024 = vmatpush.bf16.msra.mxu0 0
        %1025 = vmatpush.bf16.msra.mxu0 0
        %1026 = vmatpush.bf16.msra.mxu0 0
        %1027 = vmatpush.bf16.msra.mxu0 %v1015
        %1028 = vmatpush.bf16.msra.mxu0 %v994
        %1029 = vmatpush.bf16.msra.mxu0 %v991
        %1030 = vmatpush.bf16.msra.mxu0 %v988
        %1031 = vmatmul.bf16.gmra.mxu0 %v1011
        %v1032 = vpop.f32.mrf.mxu0
        %v1033 = vadd.f32 %v941, %v1032
        %v1034 = vpop.f32.mrf.mxu0
        %v1035 = vadd.f32 %v946, %v1034
        %1036 = vdwg.mxu0
        %1037 = vmatpush.bf16.msra.mxu0 0
        %1038 = vmatpush.bf16.msra.mxu0 0
        %1039 = vmatpush.bf16.msra.mxu0 0
        %1040 = vmatpush.bf16.msra.mxu0 0
        %1041 = vmatpush.bf16.msra.mxu0 %v1018
        %1042 = vmatpush.bf16.msra.mxu0 %v995
        %1043 = vmatpush.bf16.msra.mxu0 %v992
        %1044 = vmatpush.bf16.msra.mxu0 %v989
        %1045 = vmatmul.bf16.gmra.mxu0 %v1011
        %v1046 = vpop.f32.mrf.mxu0
        %v1047 = vadd.f32 %v941, %v1046
        %v1048 = vpop.f32.mrf.mxu0
        %v1049 = vadd.f32 %v946, %v1048
        %1050 = vdwg.mxu0
        %1051 = vmatpush.bf16.msra.mxu0 0
        %1052 = vmatpush.bf16.msra.mxu0 0
        %1053 = vmatpush.bf16.msra.mxu0 0
        %1054 = vmatpush.bf16.msra.mxu0 0
        %1055 = vmatpush.bf16.msra.mxu0 %v1021
        %1056 = vmatpush.bf16.msra.mxu0 %v996
        %1057 = vmatpush.bf16.msra.mxu0 %v993
        %1058 = vmatpush.bf16.msra.mxu0 %v990
        %1059 = vmatmul.bf16.gmra.mxu0 %v1011
        %v1060 = vpop.f32.mrf.mxu0
        %v1061 = vadd.f32 %v941, %v1060
        %v1062 = vpop.f32.mrf.mxu0
        %v1063 = vadd.f32 %v946, %v1062
        %1064 = vdwg.mxu0
        %v1065 = vmax.f32 %v1033, 0.0
        %v1066 = vmax.f32 %v1047, 0.0
        %v1067 = vmax.f32 %v1061, 0.0
        %v1068 = vmax.f32 %v1035, 0.0
        %v1069 = vmax.f32 %v1049, 0.0
        %v1070 = vmax.f32 %v1063, 0.0
        %v1071 = vld [vmem:[%s2] sm:$0x7]
        %v1073 = vperm.slane %v1071, 0
        %v1074 = vperm.slane %v1071, 1
        %v1075 = vperm.slane %v1071, 2
        %1076 = vrot.lane.b32.xlu0 %v1073, 109
        %v1077 = vpop.permute.xlu0 %1076
        %1078 = vrot.lane.b32.xlu0 %v1074, 109
        %v1079 = vpop.permute.xlu0 %1078
        %1080 = vrot.lane.b32.xlu0 %v1075, 109
        %v1081 = vpop.permute.xlu0 %1080
        %vm1082 = vcmask 891904
        %v1083 = vsel %vm1082, %v1077, %v1079
        %v1084 = vsel %vm1082, %v1079, %v1081
        %v1088 = vmul.f32 %v1065, %v1083
        %v1089 = vmul.f32 %v1066, %v1084
        %v1090 = vmul.f32 %v1067, %v1081
        %v1091 = vmul.f32 %v1068, %v1083
        %v1092 = vmul.f32 %v1069, %v1084
        %v1093 = vmul.f32 %v1070, %v1081
        %vm1094 = vcmask 150528
        %1095 = vst.msk [vmem:[%s444] sm:$0xf] %vm1094, 0
        %1096 = vst.msk [vmem:[%s444 + $0xc] sm:$0xf] %vm1094, 0
        %v1097 = vpack.c.bf16 %v1089, %v1088
        %v1098 = vpack.c.bf16 %v1090, %v1090
        %v1099 = vpack.c.bf16 %v1092, %v1091
        %v1100 = vpack.c.bf16 %v1093, %v1093
        %1105 = vrot.lane.b32.xlu0 %v1097, 19
        %v1106 = vpop.permute.xlu0 %1105
        %1107 = vrot.lane.b32.xlu0 %v1098, 19
        %v1108 = vpop.permute.xlu0 %1107
        %1109 = vrot.lane.b32.xlu0 %v1099, 19
        %v1110 = vpop.permute.xlu0 %1109
        %1111 = vrot.lane.b32.xlu0 %v1100, 19
        %v1112 = vpop.permute.xlu0 %1111
        %v1113 = vrot.slane %v1106, 4
        %v1114 = vrot.slane %v1110, 4
        %vm1115 = vcmask 154624
        %v1116 = vsel %vm1115, %v1113, %v1106
        %v1117 = vsel %vm1115, %v1113, %v1108
        %v1118 = vsel %vm1115, %v1114, %v1110
        %v1119 = vsel %vm1115, %v1114, %v1112
        %vm1124 = vcmask 1043608
        %vm1125 = vcmask 1047556
        %vm1126 = vmor %vm1125, %vm1124
        %1127 = vst.msk [vmem:[%s444] sm:$0xff] %vm1126, %v1116
        %vm1128 = vcmask 396288
        %1129 = vst.msk [vmem:[%s444 + $0x8] sm:$0xf] %vm1128, %v1117
        %1130 = vst.msk [vmem:[%s444 + $0xc] sm:$0xff] %vm1126, %v1118
        %1131 = vst.msk [vmem:[%s444 + $0x14] sm:$0xf] %vm1128, %v1119
        %vm1132 = vcmask 552328
        %1133 = vst.msk [vmem:[%s444 + $0x8] sm:$0xf] %vm1132, 0
        %1134 = vst.msk [vmem:[%s444 + $0x14] sm:$0xf] %vm1132, 0
      $region48: #{vae3d_hhdv_forward.4} parent=43 // pred_fallthru
        _
      %p1135 = pneg %p449
      // Predicated region
      $region49: #{vae3d_hhdv_forward.4} parent=43 // pred_check
        _
      $region50: #{vae3d_hhdv_forward.4} parent=43 // pred_check_branch
        %1137 = sbr.rel (%p449) target = $region52
      $region51: #{vae3d_hhdv_forward.4} parent=43 // pred_region
        %1138 = vst [vmem:[%s444] sm:$0xff] 0
        %vm1139 = vcmask 551936
        %1140 = vst.msk [vmem:[%s444 + $0x8] sm:$0xf] %vm1139, 0
        %1141 = vst [vmem:[%s444 + $0xc] sm:$0xff] 0
        %1142 = vst.msk [vmem:[%s444 + $0x14] sm:$0xf] %vm1139, 0
      $region52: #{vae3d_hhdv_forward.4} parent=43 // pred_fallthru
        _
      %p1143 = scmp.lt.s32.totalorder %s21, 1
      %s1144 = scalar_select %p1143, %s21, 1
      %p1145 = scmp.lt.s32.totalorder %s22, 17
      %s1146 = scalar_select %p1145, %s22, 17
      %s1147 = smul.addr %s1146, 6
      %s1148 = smul.addr %s1144, 108
      %s1149 = sadd.s32 %s1147, %s1148
      %s1150 = smul.addr %s1149, 4
      %s1151 = scalar_lea.vmem %s6, %s1150
      // Predicated region
      $region53: #{vae3d_hhdv_forward.4} parent=43 // pred_check
        %p1152 = pneg %p224
      $region54: #{vae3d_hhdv_forward.4} parent=43 // pred_check_branch
        %1154 = sbr.rel (%p1152) target = $region56
      $region55: #{vae3d_hhdv_forward.4} parent=43 // pred_region
        _
      $region56: #{vae3d_hhdv_forward.4} parent=43 // pred_fallthru
        _
    $region44: #{vae3d_hhdv_forward.4} parent=5 // pred_fallthru
      _
    %p1155 = scmp.le.s32.totalorder 2, %s12
    // Predicated region
    $region57: #{vae3d_hhdv_forward.4} parent=5 // pred_check
      %p1156 = pneg %p1155
    $region58: #{vae3d_hhdv_forward.4} parent=5 // pred_check_branch
      %1158 = sbr.rel (%p1156) target = $region60
    $region59: #{vae3d_hhdv_forward.4} parent=5 // pred_region
      %s1159 = ssub.s32 %s12, 2
      // Predicated region
      $region61: #{vae3d_hhdv_forward.4} parent=59 // pred_check
        %p1160 = pneg %p230
      $region62: #{vae3d_hhdv_forward.4} parent=59 // pred_check_branch
        %1162 = sbr.rel (%p1160) target = $region64
      $region63: #{vae3d_hhdv_forward.4} parent=59 // pred_region
        %p1163 = scmp.lt.s32.totalorder %s23, 1
        %s1164 = scalar_select %p1163, %s23, 1
        %p1165 = scmp.lt.s32.totalorder %s24, 17
        %s1166 = scalar_select %p1165, %s24, 17
        %s1167 = smul.addr %s1166, 6
        %s1168 = smul.addr %s1164, 108
        %s1169 = sadd.s32 %s1167, %s1168
        %s1170 = smul.addr %s1169, 4
        %s1171 = scalar_lea.vmem %s6, %s1170
      $region64: #{vae3d_hhdv_forward.4} parent=59 // pred_fallthru
        _
    $region60: #{vae3d_hhdv_forward.4} parent=5 // pred_fallthru
      _
  $region6: #{vae3d_hhdv_forward.4} parent=0 // loop_footer
    %s16 = sadd.s32 1, %s12
  $region7: #{vae3d_hhdv_forward.4} parent=0 // loop_footer_branch
    %11 = sbr.rel target = $region3
  $region8: #{vae3d_hhdv_forward.4} parent=0 // loop_exit
    _

// kernel: vae3d_hhdv_forward.5
$region0: #{vae3d_hhdv_forward.5}
  #allocation0 [shape = 'u32[]', space=smem, size = 0x4, offset = 0x4, fixed_abs, tag = 'smem constant byte address 0x4 - core index']
  #allocation1 [shape = 'u32[72,128]{1,0:T(1,128)}', space=vmem, size = 0x9000, scoped, tag = 'internal scratch']
  #allocation2 [shape = 'bf16[432,286]{1,0:T(8,128)(2,1)}', space=vmem, size = 0x51000, scoped, tag = 'scratch operand']
  %s0 = inlined_call_operand.vmem [shape: bf16[32,432], index: 0, kind: input, shape index: {}]
  %s1 = inlined_call_operand.vmem [shape: f32[32,1], index: 1, kind: input, shape index: {}]
  %s2 = inlined_call_operand.vmem [shape: f32[1,324], index: 2, kind: input, shape index: {}]
  %s3 = inlined_call_operand.vmem [shape: bf16[2,18,16,324], index: 3, kind: input, shape index: {}, may-alias: {3,4,5}]
  %s4 = inlined_call_operand.vmem [shape: bf16[2,18,16,324], index: 4, kind: input, shape index: {}, may-alias: {3,4,5}]
  %s5 = inlined_call_operand.vmem [shape: bf16[2,18,16,324], index: 5, kind: input, shape index: {}, may-alias: {3,4,5}]
  %s6 = inlined_call_operand.vmem [shape: bf16[2,18,32,324], index: 6, kind: output, shape index: {}]
  %s7 = sld [smem:[#allocation0]]
  $region65: #{vae3d_hhdv_forward.5} parent=0
    _
  %s9 = ssub.s32 1, %s7
  %s10 = scalar_select 0, %s9, %s7
  loop: start=0, step=1, limit=38
  $region2: #{vae3d_hhdv_forward.5} parent=0 // loop_pre_header
    _
  $region3: #{vae3d_hhdv_forward.5} parent=0 // loop_header
    %s12 = sphi 0, %s16
    %p13 = scmp.ge.s32.totalorder %s12, 38
    %s19 = sphi 0, %s31
    %s20 = sphi 0, %s27
    %s21 = sphi 0, %s19
    %s22 = sphi 0, %s20
    %s23 = sphi 0, %s21
    %s24 = sphi 0, %s22
    %s32 = sphi 0, %s32
    %s34 = sphi 0, %s32
    %s35 = sphi 0, %s34
    %s49 = sphi 0, %s35
    %s53 = sphi 0, %s53
    %s55 = sphi 0, %s53
    %s56 = sphi 0, %s55
    %s70 = sphi 0, %s56
    %s74 = sphi 0, %s74
    %s76 = sphi 0, %s74
    %s77 = sphi 0, %s76
    %s91 = sphi 0, %s77
    %s109 = sphi 0, %s111
    %s112 = sphi 0, %s109
    %s113 = sphi 0, %s112
    %s129 = sphi 0, %s113
    %s145 = sphi 0, %s147
    %s148 = sphi 0, %s145
    %s149 = sphi 0, %s148
    %s165 = sphi 0, %s149
    %s183 = sphi 0, %s185
    %s186 = sphi 0, %s183
    %s187 = sphi 0, %s186
    %s203 = sphi 0, %s187
    %s211 = sphi 0, %s213
    %s214 = sphi 0, %s211
    %s215 = sphi 0, %s214
    %s231 = sphi 0, %s215
  $region4: #{vae3d_hhdv_forward.5} parent=0 // loop_header_branch
    %15 = sbr.rel (%p13) target = $region8
  $region5: #{vae3d_hhdv_forward.5} parent=0 // loop_body
    %s17 = ssub.s32 %s12, 1
    %s18 = ssub.s32 %s12, 2
    %s25 = sadd.s32 1, %s20
    %p26 = scmp.ge.s32.totalorder %s25, 18
    %s27 = scalar_select %p26, 0, %s25
    %s28 = sadd.s32 1, %s19
    %s29 = scalar_select %p26, %s28, %s19
    %p30 = scmp.ge.s32.totalorder %s29, 2
    %s31 = scalar_select %p30, 0, %s29
    %s33 = sadd.s32 %s32, 1
    %p36 = scmp.eq.s32.totalorder %s12, 35
    %p37 = scmp.ne.s32.totalorder %s32, %s34
    %p38 = scmp.eq.s32.totalorder %s12, 0
    %p39 = por %p37, %p38
    %p40 = scmp.ne.s32.totalorder %s32, %s34
    %p41 = scmp.eq.s32.totalorder %s17, 35
    %p42 = por %p40, %p41
    %p43 = scmp.ne.s32.totalorder %s34, %s35
    %p44 = scmp.eq.s32.totalorder %s17, 0
    %p45 = por %p43, %p44
    %p46 = scmp.ne.s32.totalorder %s34, %s35
    %p47 = scmp.eq.s32.totalorder %s18, 35
    %p48 = por %p46, %p47
    %p50 = scmp.ne.s32.totalorder %s35, %s49
    %p51 = scmp.eq.s32.totalorder %s18, 0
    %p52 = por %p50, %p51
    %s54 = sadd.s32 %s53, 1
    %p57 = scmp.eq.s32.totalorder %s12, 35
    %p58 = scmp.ne.s32.totalorder %s53, %s55
    %p59 = scmp.eq.s32.totalorder %s12, 0
    %p60 = por %p58, %p59
    %p61 = scmp.ne.s32.totalorder %s53, %s55
    %p62 = scmp.eq.s32.totalorder %s17, 35
    %p63 = por %p61, %p62
    %p64 = scmp.ne.s32.totalorder %s55, %s56
    %p65 = scmp.eq.s32.totalorder %s17, 0
    %p66 = por %p64, %p65
    %p67 = scmp.ne.s32.totalorder %s55, %s56
    %p68 = scmp.eq.s32.totalorder %s18, 35
    %p69 = por %p67, %p68
    %p71 = scmp.ne.s32.totalorder %s56, %s70
    %p72 = scmp.eq.s32.totalorder %s18, 0
    %p73 = por %p71, %p72
    %s75 = sadd.s32 %s74, 1
    %p78 = scmp.eq.s32.totalorder %s12, 35
    %p79 = scmp.ne.s32.totalorder %s74, %s76
    %p80 = scmp.eq.s32.totalorder %s12, 0
    %p81 = por %p79, %p80
    %p82 = scmp.ne.s32.totalorder %s74, %s76
    %p83 = scmp.eq.s32.totalorder %s17, 35
    %p84 = por %p82, %p83
    %p85 = scmp.ne.s32.totalorder %s76, %s77
    %p86 = scmp.eq.s32.totalorder %s17, 0
    %p87 = por %p85, %p86
    %p88 = scmp.ne.s32.totalorder %s76, %s77
    %p89 = scmp.eq.s32.totalorder %s18, 35
    %p90 = por %p88, %p89
    %p92 = scmp.ne.s32.totalorder %s77, %s91
    %p93 = scmp.eq.s32.totalorder %s18, 0
    %p94 = por %p92, %p93
    %s95 = ssub.s32 %s20, 1
    %p96 = scmp.gt.s32.totalorder %s95, 0
    %s97 = scalar_select %p96, %s95, 0
    %p98 = scmp.lt.s32.totalorder %s97, 17
    %s99 = scalar_select %p98, %s97, 17
    %s100 = ssub.s32 %s27, 1
    %p101 = scmp.gt.s32.totalorder %s100, 0
    %s102 = scalar_select %p101, %s100, 0
    %p103 = scmp.lt.s32.totalorder %s102, 17
    %s104 = scalar_select %p103, %s102, 17
    %s105 = ssub.s32 %s19, %s31
    %s106 = ssub.s32 %s99, %s104
    %s107 = sor.u32 %s105, %s106
    %p108 = scmp.eq.s32.totalorder %s107, 0
    %s110 = sadd.s32 %s109, 1
    %s111 = scalar_select %p108, %s109, %s110
    %p114 = pneg %p108
    %p115 = scmp.eq.s32.totalorder %s12, 35
    %p116 = por %p114, %p115
    %p117 = scmp.ne.s32.totalorder %s109, %s112
    %p118 = scmp.eq.s32.totalorder %s12, 0
    %p119 = por %p117, %p118
    %p120 = scmp.ne.s32.totalorder %s109, %s112
    %p121 = scmp.eq.s32.totalorder %s17, 35
    %p122 = por %p120, %p121
    %p123 = scmp.ne.s32.totalorder %s112, %s113
    %p124 = scmp.eq.s32.totalorder %s17, 0
    %p125 = por %p123, %p124
    %p126 = scmp.ne.s32.totalorder %s112, %s113
    %p127 = scmp.eq.s32.totalorder %s18, 35
    %p128 = por %p126, %p127
    %p130 = scmp.ne.s32.totalorder %s113, %s129
    %p131 = scmp.eq.s32.totalorder %s18, 0
    %p132 = por %p130, %p131
    %p133 = scmp.gt.s32.totalorder %s20, 0
    %s134 = scalar_select %p133, %s20, 0
    %p135 = scmp.lt.s32.totalorder %s134, 17
    %s136 = scalar_select %p135, %s134, 17
    %p137 = scmp.gt.s32.totalorder %s27, 0
    %s138 = scalar_select %p137, %s27, 0
    %p139 = scmp.lt.s32.totalorder %s138, 17
    %s140 = scalar_select %p139, %s138, 17
    %s141 = ssub.s32 %s19, %s31
    %s142 = ssub.s32 %s136, %s140
    %s143 = sor.u32 %s141, %s142
    %p144 = scmp.eq.s32.totalorder %s143, 0
    %s146 = sadd.s32 %s145, 1
    %s147 = scalar_select %p144, %s145, %s146
    %p150 = pneg %p144
    %p151 = scmp.eq.s32.totalorder %s12, 35
    %p152 = por %p150, %p151
    %p153 = scmp.ne.s32.totalorder %s145, %s148
    %p154 = scmp.eq.s32.totalorder %s12, 0
    %p155 = por %p153, %p154
    %p156 = scmp.ne.s32.totalorder %s145, %s148
    %p157 = scmp.eq.s32.totalorder %s17, 35
    %p158 = por %p156, %p157
    %p159 = scmp.ne.s32.totalorder %s148, %s149
    %p160 = scmp.eq.s32.totalorder %s17, 0
    %p161 = por %p159, %p160
    %p162 = scmp.ne.s32.totalorder %s148, %s149
    %p163 = scmp.eq.s32.totalorder %s18, 35
    %p164 = por %p162, %p163
    %p166 = scmp.ne.s32.totalorder %s149, %s165
    %p167 = scmp.eq.s32.totalorder %s18, 0
    %p168 = por %p166, %p167
    %s169 = sadd.s32 %s20, 1
    %p170 = scmp.gt.s32.totalorder %s169, 0
    %s171 = scalar_select %p170, %s169, 0
    %p172 = scmp.lt.s32.totalorder %s171, 17
    %s173 = scalar_select %p172, %s171, 17
    %s174 = sadd.s32 %s27, 1
    %p175 = scmp.gt.s32.totalorder %s174, 0
    %s176 = scalar_select %p175, %s174, 0
    %p177 = scmp.lt.s32.totalorder %s176, 17
    %s178 = scalar_select %p177, %s176, 17
    %s179 = ssub.s32 %s19, %s31
    %s180 = ssub.s32 %s173, %s178
    %s181 = sor.u32 %s179, %s180
    %p182 = scmp.eq.s32.totalorder %s181, 0
    %s184 = sadd.s32 %s183, 1
    %s185 = scalar_select %p182, %s183, %s184
    %p188 = pneg %p182
    %p189 = scmp.eq.s32.totalorder %s12, 35
    %p190 = por %p188, %p189
    %p191 = scmp.ne.s32.totalorder %s183, %s186
    %p192 = scmp.eq.s32.totalorder %s12, 0
    %p193 = por %p191, %p192
    %p194 = scmp.ne.s32.totalorder %s183, %s186
    %p195 = scmp.eq.s32.totalorder %s17, 35
    %p196 = por %p194, %p195
    %p197 = scmp.ne.s32.totalorder %s186, %s187
    %p198 = scmp.eq.s32.totalorder %s17, 0
    %p199 = por %p197, %p198
    %p200 = scmp.ne.s32.totalorder %s186, %s187
    %p201 = scmp.eq.s32.totalorder %s18, 35
    %p202 = por %p200, %p201
    %p204 = scmp.ne.s32.totalorder %s187, %s203
    %p205 = scmp.eq.s32.totalorder %s18, 0
    %p206 = por %p204, %p205
    %s207 = ssub.s32 %s19, %s31
    %s208 = ssub.s32 %s20, %s27
    %s209 = sor.u32 %s207, %s208
    %p210 = scmp.eq.s32.totalorder %s209, 0
    %s212 = sadd.s32 %s211, 1
    %s213 = scalar_select %p210, %s211, %s212
    %p216 = pneg %p210
    %p217 = scmp.eq.s32.totalorder %s12, 35
    %p218 = por %p216, %p217
    %p219 = scmp.ne.s32.totalorder %s211, %s214
    %p220 = scmp.eq.s32.totalorder %s12, 0
    %p221 = por %p219, %p220
    %p222 = scmp.ne.s32.totalorder %s211, %s214
    %p223 = scmp.eq.s32.totalorder %s17, 35
    %p224 = por %p222, %p223
    %p225 = scmp.ne.s32.totalorder %s214, %s215
    %p226 = scmp.eq.s32.totalorder %s17, 0
    %p227 = por %p225, %p226
    %p228 = scmp.ne.s32.totalorder %s214, %s215
    %p229 = scmp.eq.s32.totalorder %s18, 35
    %p230 = por %p228, %p229
    %p232 = scmp.ne.s32.totalorder %s215, %s231
    %p233 = scmp.eq.s32.totalorder %s18, 0
    %p234 = por %p232, %p233
    %p235 = scmp.le.s32.totalorder 1, %s12
    %p236 = scmp.lt.s32.totalorder %s12, 37
    %p237 = pnand %p235, %p236
    %p238 = pneg %p237
    // Predicated region
    $region9: #{vae3d_hhdv_forward.5} parent=5 // pred_check
      _
    $region10: #{vae3d_hhdv_forward.5} parent=5 // pred_check_branch
      %240 = sbr.rel (%p237) target = $region12
    $region11: #{vae3d_hhdv_forward.5} parent=5 // pred_region
      %s241 = ssub.s32 %s12, 1
      // Predicated region
      $region13: #{vae3d_hhdv_forward.5} parent=11 // pred_check
        %p242 = pneg %p45
      $region14: #{vae3d_hhdv_forward.5} parent=11 // pred_check_branch
        %244 = sbr.rel (%p242) target = $region16
      $region15: #{vae3d_hhdv_forward.5} parent=11 // pred_region
        _
      $region16: #{vae3d_hhdv_forward.5} parent=11 // pred_fallthru
        _
      // Predicated region
      $region17: #{vae3d_hhdv_forward.5} parent=11 // pred_check
        %p245 = pneg %p66
      $region18: #{vae3d_hhdv_forward.5} parent=11 // pred_check_branch
        %247 = sbr.rel (%p245) target = $region20
      $region19: #{vae3d_hhdv_forward.5} parent=11 // pred_region
        _
      $region20: #{vae3d_hhdv_forward.5} parent=11 // pred_fallthru
        _
      // Predicated region
      $region21: #{vae3d_hhdv_forward.5} parent=11 // pred_check
        %p248 = pneg %p87
      $region22: #{vae3d_hhdv_forward.5} parent=11 // pred_check_branch
        %250 = sbr.rel (%p248) target = $region24
      $region23: #{vae3d_hhdv_forward.5} parent=11 // pred_region
        _
      $region24: #{vae3d_hhdv_forward.5} parent=11 // pred_fallthru
        _
    $region12: #{vae3d_hhdv_forward.5} parent=5 // pred_fallthru
      _
    %p251 = scmp.lt.s32.totalorder %s12, 36
    // Predicated region
    $region25: #{vae3d_hhdv_forward.5} parent=5 // pred_check
      %p252 = pneg %p251
    $region26: #{vae3d_hhdv_forward.5} parent=5 // pred_check_branch
      %254 = sbr.rel (%p252) target = $region28
    $region27: #{vae3d_hhdv_forward.5} parent=5 // pred_region
      // Predicated region
      $region29: #{vae3d_hhdv_forward.5} parent=27 // pred_check
        %p255 = pneg %p119
      $region30: #{vae3d_hhdv_forward.5} parent=27 // pred_check_branch
        %257 = sbr.rel (%p255) target = $region32
      $region31: #{vae3d_hhdv_forward.5} parent=27 // pred_region
        %s258 = ssub.s32 %s20, 1
        %p259 = scmp.gt.s32.totalorder %s258, 0
        %s260 = scalar_select %p259, %s258, 0
        %p261 = scmp.lt.s32.totalorder %s260, 17
        %s262 = scalar_select %p261, %s260, 17
        %p263 = scmp.lt.s32.totalorder %s19, 1
        %s264 = scalar_select %p263, %s19, 1
        %p265 = scmp.lt.s32.totalorder %s262, 17
        %s266 = scalar_select %p265, %s262, 17
        %s267 = smul.addr %s266, 6
        %s268 = smul.addr %s264, 108
        %s269 = sadd.s32 %s267, %s268
        %s270 = smul.addr %s269, 4
        %s271 = scalar_lea.vmem %s3, %s270
        %s272 = ssub.s32 %s20, 1
        %p273 = scmp.gt.s32.totalorder %s272, 0
        %s274 = scalar_select %p273, %s272, 0
        %p275 = scmp.lt.s32.totalorder %s274, 17
        %s276 = scalar_select %p275, %s274, 17
      $region32: #{vae3d_hhdv_forward.5} parent=27 // pred_fallthru
        _
      // Predicated region
      $region33: #{vae3d_hhdv_forward.5} parent=27 // pred_check
        %p277 = pneg %p155
      $region34: #{vae3d_hhdv_forward.5} parent=27 // pred_check_branch
        %279 = sbr.rel (%p277) target = $region36
      $region35: #{vae3d_hhdv_forward.5} parent=27 // pred_region
        %p280 = scmp.gt.s32.totalorder %s20, 0
        %s281 = scalar_select %p280, %s20, 0
        %p282 = scmp.lt.s32.totalorder %s281, 17
        %s283 = scalar_select %p282, %s281, 17
        %p284 = scmp.lt.s32.totalorder %s19, 1
        %s285 = scalar_select %p284, %s19, 1
        %p286 = scmp.lt.s32.totalorder %s283, 17
        %s287 = scalar_select %p286, %s283, 17
        %s288 = smul.addr %s287, 6
        %s289 = smul.addr %s285, 108
        %s290 = sadd.s32 %s288, %s289
        %s291 = smul.addr %s290, 4
        %s292 = scalar_lea.vmem %s4, %s291
        %p293 = scmp.gt.s32.totalorder %s20, 0
        %s294 = scalar_select %p293, %s20, 0
        %p295 = scmp.lt.s32.totalorder %s294, 17
        %s296 = scalar_select %p295, %s294, 17
      $region36: #{vae3d_hhdv_forward.5} parent=27 // pred_fallthru
        _
      // Predicated region
      $region37: #{vae3d_hhdv_forward.5} parent=27 // pred_check
        %p297 = pneg %p193
      $region38: #{vae3d_hhdv_forward.5} parent=27 // pred_check_branch
        %299 = sbr.rel (%p297) target = $region40
      $region39: #{vae3d_hhdv_forward.5} parent=27 // pred_region
        %s300 = sadd.s32 %s20, 1
        %p301 = scmp.gt.s32.totalorder %s300, 0
        %s302 = scalar_select %p301, %s300, 0
        %p303 = scmp.lt.s32.totalorder %s302, 17
        %s304 = scalar_select %p303, %s302, 17
        %p305 = scmp.lt.s32.totalorder %s19, 1
        %s306 = scalar_select %p305, %s19, 1
        %p307 = scmp.lt.s32.totalorder %s304, 17
        %s308 = scalar_select %p307, %s304, 17
        %s309 = smul.addr %s308, 6
        %s310 = smul.addr %s306, 108
        %s311 = sadd.s32 %s309, %s310
        %s312 = smul.addr %s311, 4
        %s313 = scalar_lea.vmem %s5, %s312
        %s314 = sadd.s32 %s20, 1
        %p315 = scmp.gt.s32.totalorder %s314, 0
        %s316 = scalar_select %p315, %s314, 0
        %p317 = scmp.lt.s32.totalorder %s316, 17
        %s318 = scalar_select %p317, %s316, 17
      $region40: #{vae3d_hhdv_forward.5} parent=27 // pred_fallthru
        _
    $region28: #{vae3d_hhdv_forward.5} parent=5 // pred_fallthru
      _
    %p319 = scmp.le.s32.totalorder 1, %s12
    %p320 = scmp.lt.s32.totalorder %s12, 37
    %p321 = pnand %p319, %p320
    %p322 = pneg %p321
    // Predicated region
    $region41: #{vae3d_hhdv_forward.5} parent=5 // pred_check
      _
    $region42: #{vae3d_hhdv_forward.5} parent=5 // pred_check_branch
      %324 = sbr.rel (%p321) target = $region44
    $region43: #{vae3d_hhdv_forward.5} parent=5 // pred_region
      %s325 = ssub.s32 %s12, 1
      %p326 = pneg %p45
      %p327 = pneg %p42
      %p328 = pneg %p66
      %p329 = pneg %p63
      %p330 = pneg %p87
      %p331 = pneg %p84
      %s332 = ssub.s32 %s22, 1
      %p333 = scmp.gt.s32.totalorder %s332, 0
      %s334 = scalar_select %p333, %s332, 0
      %p335 = scmp.lt.s32.totalorder %s334, 17
      %s336 = scalar_select %p335, %s334, 17
      %p337 = scmp.lt.s32.totalorder %s21, 1
      %s338 = scalar_select %p337, %s21, 1
      %p339 = scmp.lt.s32.totalorder %s336, 17
      %s340 = scalar_select %p339, %s336, 17
      %s341 = smul.addr %s340, 6
      %s342 = smul.addr %s338, 108
      %s343 = sadd.s32 %s341, %s342
      %s344 = smul.addr %s343, 4
      %s345 = scalar_lea.vmem %s3, %s344
      %p346 = pneg %p125
      %p347 = pneg %p122
      %p348 = scmp.gt.s32.totalorder %s22, 0
      %s349 = scalar_select %p348, %s22, 0
      %p350 = scmp.lt.s32.totalorder %s349, 17
      %s351 = scalar_select %p350, %s349, 17
      %p352 = scmp.lt.s32.totalorder %s21, 1
      %s353 = scalar_select %p352, %s21, 1
      %p354 = scmp.lt.s32.totalorder %s351, 17
      %s355 = scalar_select %p354, %s351, 17
      %s356 = smul.addr %s355, 6
      %s357 = smul.addr %s353, 108
      %s358 = sadd.s32 %s356, %s357
      %s359 = smul.addr %s358, 4
      %s360 = scalar_lea.vmem %s4, %s359
      %p361 = pneg %p161
      %p362 = pneg %p158
      %s363 = sadd.s32 %s22, 1
      %p364 = scmp.gt.s32.totalorder %s363, 0
      %s365 = scalar_select %p364, %s363, 0
      %p366 = scmp.lt.s32.totalorder %s365, 17
      %s367 = scalar_select %p366, %s365, 17
      %p368 = scmp.lt.s32.totalorder %s21, 1
      %s369 = scalar_select %p368, %s21, 1
      %p370 = scmp.lt.s32.totalorder %s367, 17
      %s371 = scalar_select %p370, %s367, 17
      %s372 = smul.addr %s371, 6
      %s373 = smul.addr %s369, 108
      %s374 = sadd.s32 %s372, %s373
      %s375 = smul.addr %s374, 4
      %s376 = scalar_lea.vmem %s5, %s375
      %p377 = pneg %p199
      %p378 = pneg %p196
      %p379 = pneg %p227
      %p380 = pneg %p224
      %p381 = scmp.lt.s32.totalorder %s21, 1
      %s382 = scalar_select %p381, %s21, 1
      %p383 = scmp.lt.s32.totalorder %s22, 17
      %s384 = scalar_select %p383, %s22, 17
      %s385 = smul.addr %s384, 12
      %s386 = smul.addr %s382, 216
      %s387 = sadd.s32 %s385, %s386
      %s388 = smul.addr %s387, 4
      %s389 = scalar_lea.vmem %s6, %s388
      %s390 = ssub.s32 %s22, 1
      %p391 = scmp.gt.s32.totalorder %s390, 0
      %s392 = scalar_select %p391, %s390, 0
      %p393 = scmp.lt.s32.totalorder %s392, 17
      %s394 = scalar_select %p393, %s392, 17
      %p395 = scmp.lt.s32.totalorder %s21, 1
      %s396 = scalar_select %p395, %s21, 1
      %p397 = scmp.lt.s32.totalorder %s394, 17
      %s398 = scalar_select %p397, %s394, 17
      %s399 = smul.addr %s398, 6
      %s400 = smul.addr %s396, 108
      %s401 = sadd.s32 %s399, %s400
      %s402 = smul.addr %s401, 4
      %s403 = scalar_lea.vmem %s3, %s402
      %s404 = ssub.s32 %s22, 1
      %p405 = scmp.gt.s32.totalorder %s404, 0
      %s406 = scalar_select %p405, %s404, 0
      %p407 = scmp.lt.s32.totalorder %s406, 17
      %s408 = scalar_select %p407, %s406, 17
      %p409 = scmp.gt.s32.totalorder %s22, 0
      %s410 = scalar_select %p409, %s22, 0
      %p411 = scmp.lt.s32.totalorder %s410, 17
      %s412 = scalar_select %p411, %s410, 17
      %p413 = scmp.lt.s32.totalorder %s21, 1
      %s414 = scalar_select %p413, %s21, 1
      %p415 = scmp.lt.s32.totalorder %s412, 17
      %s416 = scalar_select %p415, %s412, 17
      %s417 = smul.addr %s416, 6
      %s418 = smul.addr %s414, 108
      %s419 = sadd.s32 %s417, %s418
      %s420 = smul.addr %s419, 4
      %s421 = scalar_lea.vmem %s4, %s420
      %p422 = scmp.gt.s32.totalorder %s22, 0
      %s423 = scalar_select %p422, %s22, 0
      %p424 = scmp.lt.s32.totalorder %s423, 17
      %s425 = scalar_select %p424, %s423, 17
      %s426 = sadd.s32 %s22, 1
      %p427 = scmp.gt.s32.totalorder %s426, 0
      %s428 = scalar_select %p427, %s426, 0
      %p429 = scmp.lt.s32.totalorder %s428, 17
      %s430 = scalar_select %p429, %s428, 17
      %p431 = scmp.lt.s32.totalorder %s21, 1
      %s432 = scalar_select %p431, %s21, 1
      %p433 = scmp.lt.s32.totalorder %s430, 17
      %s434 = scalar_select %p433, %s430, 17
      %s435 = smul.addr %s434, 6
      %s436 = smul.addr %s432, 108
      %s437 = sadd.s32 %s435, %s436
      %s438 = smul.addr %s437, 4
      %s439 = scalar_lea.vmem %s5, %s438
      %s440 = sadd.s32 %s22, 1
      %p441 = scmp.gt.s32.totalorder %s440, 0
      %s442 = scalar_select %p441, %s440, 0
      %p443 = scmp.lt.s32.totalorder %s442, 17
      %s444 = scalar_select %p443, %s442, 17
      %p445 = scmp.lt.s32.totalorder %s21, 1
      %s446 = scalar_select %p445, %s21, 1
      %p447 = scmp.lt.s32.totalorder %s22, 17
      %s448 = scalar_select %p447, %s22, 17
      %s449 = smul.addr %s448, 12
      %s450 = smul.addr %s446, 216
      %s451 = sadd.s32 %s449, %s450
      %s452 = smul.addr %s451, 4
      %s453 = scalar_lea.vmem %s6, %s452
      %p455 = scmp.ge.s32.totalorder %s22, 1
      %p456 = scmp.le.s32.totalorder %s22, 16
      %p457 = pnand %p455, %p456
      %p458 = pneg %p457
      // Predicated region
      $region45: #{vae3d_hhdv_forward.5} parent=43 // pred_check
        _
      $region46: #{vae3d_hhdv_forward.5} parent=43 // pred_check_branch
        %460 = sbr.rel (%p457) target = $region48
      $region47: #{vae3d_hhdv_forward.5} parent=43 // pred_region
        %v461 = vld [vmem:[%s403] sm:$0xff]
        %v462 = vld [vmem:[%s403 + $0x8] sm:$0xf]
        %v463 = vld [vmem:[%s403 + $0xc] sm:$0xff]
        %v464 = vld [vmem:[%s403 + $0x14] sm:$0xf]
        %v465 = vld [vmem:[%s421] sm:$0xff]
        %v466 = vld [vmem:[%s421 + $0x8] sm:$0xf]
        %v467 = vld [vmem:[%s421 + $0xc] sm:$0xff]
        %v468 = vld [vmem:[%s421 + $0x14] sm:$0xf]
        %v469 = vld [vmem:[%s439] sm:$0xff]
        %v470 = vld [vmem:[%s439 + $0x8] sm:$0xf]
        %v471 = vld [vmem:[%s439 + $0xc] sm:$0xff]
        %v472 = vld [vmem:[%s439 + $0x14] sm:$0xf]
        %473 = vst [vmem:[#allocation2] sm:$0xff] %v461
        %vm474 = vcmask 240640
        %475 = vst.msk [vmem:[#allocation2 + $0x8] sm:$0xf] %vm474, %v462
        %476 = vst [vmem:[#allocation2 + $0xc] sm:$0xff] %v463
        %477 = vst.msk [vmem:[#allocation2 + $0x14] sm:$0xf] %vm474, %v464
        %482 = vrot.lane.b32.xlu0 %v461, 127
        %v483 = vpop.permute.xlu0 %482
        %484 = vrot.lane.b32.xlu0 %v462, 127
        %v485 = vpop.permute.xlu0 %484
        %486 = vrot.lane.b32.xlu0 %v463, 127
        %v487 = vpop.permute.xlu0 %486
        %488 = vrot.lane.b32.xlu0 %v464, 127
        %v489 = vpop.permute.xlu0 %488
        %v490 = vrot.slane %v483, 4
        %v491 = vrot.slane %v485, 4
        %v492 = vrot.slane %v487, 4
        %v493 = vrot.slane %v489, 4
        %vm494 = vcmask 1043456
        %v495 = vsel %vm494, %v490, %v491
        %vm496 = vcmask 1039360
        %v497 = vsel %vm496, %v483, %v495
        %v498 = vsel %vm494, %v492, %v493
        %v499 = vsel %vm496, %v487, %v498
        %504 = vst [vmem:[#allocation2 + $0x18] sm:$0xff] %v497
        %505 = vst.msk [vmem:[#allocation2 + $0x20] sm:$0xf] %vm474, %v485
        %506 = vst [vmem:[#allocation2 + $0x24] sm:$0xff] %v499
        %507 = vst.msk [vmem:[#allocation2 + $0x2c] sm:$0xf] %vm474, %v489
        %508 = vrot.lane.b32.xlu0 %v461, 126
        %v509 = vpop.permute.xlu0 %508
        %510 = vrot.lane.b32.xlu0 %v462, 126
        %v511 = vpop.permute.xlu0 %510
        %512 = vrot.lane.b32.xlu0 %v463, 126
        %v513 = vpop.permute.xlu0 %512
        %514 = vrot.lane.b32.xlu0 %v464, 126
        %v515 = vpop.permute.xlu0 %514
        %v516 = vrot.slane %v509, 4
        %v517 = vrot.slane %v511, 4
        %v518 = vrot.slane %v513, 4
        %v519 = vrot.slane %v515, 4
        %v520 = vsel %vm494, %v516, %v517
        %vm521 = vcmask 1031168
        %v522 = vsel %vm521, %v509, %v520
        %v523 = vsel %vm494, %v518, %v519
        %v524 = vsel %vm521, %v513, %v523
        %529 = vst [vmem:[#allocation2 + $0x30] sm:$0xff] %v522
        %530 = vst.msk [vmem:[#allocation2 + $0x38] sm:$0xf] %vm474, %v511
        %531 = vst [vmem:[#allocation2 + $0x3c] sm:$0xff] %v524
        %532 = vst.msk [vmem:[#allocation2 + $0x44] sm:$0xf] %vm474, %v515
        %533 = vrot.lane.b32.xlu0 %v461, 110
        %v534 = vpop.permute.xlu0 %533
        %535 = vrot.lane.b32.xlu0 %v462, 110
        %v536 = vpop.permute.xlu0 %535
        %537 = vrot.lane.b32.xlu0 %v463, 110
        %v538 = vpop.permute.xlu0 %537
        %539 = vrot.lane.b32.xlu0 %v464, 110
        %v540 = vpop.permute.xlu0 %539
        %v541 = vrot.slane %v534, 4
        %v542 = vrot.slane %v536, 4
        %v543 = vrot.slane %v538, 4
        %v544 = vrot.slane %v540, 4
        %v545 = vsel %vm494, %v541, %v542
        %vm546 = vcmask 900096
        %v547 = vsel %vm546, %v534, %v545
        %v548 = vsel %vm494, %v543, %v544
        %v549 = vsel %vm546, %v538, %v548
        %554 = vst [vmem:[#allocation2 + $0x48] sm:$0xff] %v547
        %555 = vst.msk [vmem:[#allocation2 + $0x50] sm:$0xf] %vm474, %v536
        %556 = vst [vmem:[#allocation2 + $0x54] sm:$0xff] %v549
        %557 = vst.msk [vmem:[#allocation2 + $0x5c] sm:$0xf] %vm474, %v540
        %558 = vrot.lane.b32.xlu0 %v461, 109
        %v559 = vpop.permute.xlu0 %558
        %560 = vrot.lane.b32.xlu0 %v462, 109
        %v561 = vpop.permute.xlu0 %560
        %562 = vrot.lane.b32.xlu0 %v463, 109
        %v563 = vpop.permute.xlu0 %562
        %564 = vrot.lane.b32.xlu0 %v464, 109
        %v565 = vpop.permute.xlu0 %564
        %v566 = vrot.slane %v559, 4
        %v567 = vrot.slane %v561, 4
        %v568 = vrot.slane %v563, 4
        %v569 = vrot.slane %v565, 4
        %v570 = vsel %vm494, %v566, %v567
        %vm571 = vcmask 891904
        %v572 = vsel %vm571, %v559, %v570
        %v573 = vsel %vm494, %v568, %v569
        %v574 = vsel %vm571, %v563, %v573
        %579 = vst [vmem:[#allocation2 + $0x60] sm:$0xff] %v572
        %580 = vst.msk [vmem:[#allocation2 + $0x68] sm:$0xf] %vm474, %v561
        %581 = vst [vmem:[#allocation2 + $0x6c] sm:$0xff] %v574
        %582 = vst.msk [vmem:[#allocation2 + $0x74] sm:$0xf] %vm474, %v565
        %583 = vrot.lane.b32.xlu0 %v461, 108
        %v584 = vpop.permute.xlu0 %583
        %585 = vrot.lane.b32.xlu0 %v462, 108
        %v586 = vpop.permute.xlu0 %585
        %587 = vrot.lane.b32.xlu0 %v463, 108
        %v588 = vpop.permute.xlu0 %587
        %589 = vrot.lane.b32.xlu0 %v464, 108
        %v590 = vpop.permute.xlu0 %589
        %v591 = vrot.slane %v584, 4
        %v592 = vrot.slane %v586, 4
        %v593 = vrot.slane %v588, 4
        %v594 = vrot.slane %v590, 4
        %v595 = vsel %vm494, %v591, %v592
        %vm596 = vcmask 883712
        %v597 = vsel %vm596, %v584, %v595
        %v598 = vsel %vm494, %v593, %v594
        %v599 = vsel %vm596, %v588, %v598
        %604 = vst [vmem:[#allocation2 + $0x78] sm:$0xff] %v597
        %605 = vst.msk [vmem:[#allocation2 + $0x80] sm:$0xf] %vm474, %v586
        %606 = vst [vmem:[#allocation2 + $0x84] sm:$0xff] %v599
        %607 = vst.msk [vmem:[#allocation2 + $0x8c] sm:$0xf] %vm474, %v590
        %608 = vrot.lane.b32.xlu0 %v461, 92
        %v609 = vpop.permute.xlu0 %608
        %610 = vrot.lane.b32.xlu0 %v462, 92
        %v611 = vpop.permute.xlu0 %610
        %612 = vrot.lane.b32.xlu0 %v463, 92
        %v613 = vpop.permute.xlu0 %612
        %614 = vrot.lane.b32.xlu0 %v464, 92
        %v615 = vpop.permute.xlu0 %614
        %v616 = vrot.slane %v609, 4
        %v617 = vrot.slane %v611, 4
        %v618 = vrot.slane %v613, 4
        %v619 = vrot.slane %v615, 4
        %v620 = vsel %vm494, %v616, %v617
        %vm621 = vcmask 752640
        %v622 = vsel %vm621, %v609, %v620
        %v623 = vsel %vm494, %v618, %v619
        %v624 = vsel %vm621, %v613, %v623
        %629 = vst [vmem:[#allocation2 + $0x90] sm:$0xff] %v622
        %630 = vst.msk [vmem:[#allocation2 + $0x98] sm:$0xf] %vm474, %v611
        %631 = vst [vmem:[#allocation2 + $0x9c] sm:$0xff] %v624
        %632 = vst.msk [vmem:[#allocation2 + $0xa4] sm:$0xf] %vm474, %v615
        %633 = vrot.lane.b32.xlu0 %v461, 91
        %v634 = vpop.permute.xlu0 %633
        %635 = vrot.lane.b32.xlu0 %v462, 91
        %v636 = vpop.permute.xlu0 %635
        %637 = vrot.lane.b32.xlu0 %v463, 91
        %v638 = vpop.permute.xlu0 %637
        %639 = vrot.lane.b32.xlu0 %v464, 91
        %v640 = vpop.permute.xlu0 %639
        %v641 = vrot.slane %v634, 4
        %v642 = vrot.slane %v636, 4
        %v643 = vrot.slane %v638, 4
        %v644 = vrot.slane %v640, 4
        %v645 = vsel %vm494, %v641, %v642
        %vm646 = vcmask 744448
        %v647 = vsel %vm646, %v634, %v645
        %v648 = vsel %vm494, %v643, %v644
        %v649 = vsel %vm646, %v638, %v648
        %654 = vst [vmem:[#allocation2 + $0xa8] sm:$0xff] %v647
        %655 = vst.msk [vmem:[#allocation2 + $0xb0] sm:$0xf] %vm474, %v636
        %656 = vst [vmem:[#allocation2 + $0xb4] sm:$0xff] %v649
        %657 = vst.msk [vmem:[#allocation2 + $0xbc] sm:$0xf] %vm474, %v640
        %658 = vrot.lane.b32.xlu0 %v461, 90
        %v659 = vpop.permute.xlu0 %658
        %660 = vrot.lane.b32.xlu0 %v462, 90
        %v661 = vpop.permute.xlu0 %660
        %662 = vrot.lane.b32.xlu0 %v463, 90
        %v663 = vpop.permute.xlu0 %662
        %664 = vrot.lane.b32.xlu0 %v464, 90
        %v665 = vpop.permute.xlu0 %664
        %v666 = vrot.slane %v659, 4
        %v667 = vrot.slane %v661, 4
        %v668 = vrot.slane %v663, 4
        %v669 = vrot.slane %v665, 4
        %v670 = vsel %vm494, %v666, %v667
        %vm671 = vcmask 736256
        %v672 = vsel %vm671, %v659, %v670
        %v673 = vsel %vm494, %v668, %v669
        %v674 = vsel %vm671, %v663, %v673
        %679 = vst [vmem:[#allocation2 + $0xc0] sm:$0xff] %v672
        %680 = vst.msk [vmem:[#allocation2 + $0xc8] sm:$0xf] %vm474, %v661
        %681 = vst [vmem:[#allocation2 + $0xcc] sm:$0xff] %v674
        %682 = vst.msk [vmem:[#allocation2 + $0xd4] sm:$0xf] %vm474, %v665
        %683 = vst [vmem:[#allocation2 + $0xd8] sm:$0xff] %v465
        %684 = vst.msk [vmem:[#allocation2 + $0xe0] sm:$0xf] %vm474, %v466
        %685 = vst [vmem:[#allocation2 + $0xe4] sm:$0xff] %v467
        %686 = vst.msk [vmem:[#allocation2 + $0xec] sm:$0xf] %vm474, %v468
        %691 = vrot.lane.b32.xlu0 %v465, 127
        %v692 = vpop.permute.xlu0 %691
        %693 = vrot.lane.b32.xlu0 %v466, 127
        %v694 = vpop.permute.xlu0 %693
        %695 = vrot.lane.b32.xlu0 %v467, 127
        %v696 = vpop.permute.xlu0 %695
        %697 = vrot.lane.b32.xlu0 %v468, 127
        %v698 = vpop.permute.xlu0 %697
        %v699 = vrot.slane %v692, 4
        %v700 = vrot.slane %v694, 4
        %v701 = vrot.slane %v696, 4
        %v702 = vrot.slane %v698, 4
        %v703 = vsel %vm494, %v699, %v700
        %v704 = vsel %vm496, %v692, %v703
        %v705 = vsel %vm494, %v701, %v702
        %v706 = vsel %vm496, %v696, %v705
        %711 = vst [vmem:[#allocation2 + $0xf0] sm:$0xff] %v704
        %712 = vst.msk [vmem:[#allocation2 + $0xf8] sm:$0xf] %vm474, %v694
        %713 = vst [vmem:[#allocation2 + $0xfc] sm:$0xff] %v706
        %714 = vst.msk [vmem:[#allocation2 + $0x104] sm:$0xf] %vm474, %v698
        %715 = vrot.lane.b32.xlu0 %v465, 126
        %v716 = vpop.permute.xlu0 %715
        %717 = vrot.lane.b32.xlu0 %v466, 126
        %v718 = vpop.permute.xlu0 %717
        %719 = vrot.lane.b32.xlu0 %v467, 126
        %v720 = vpop.permute.xlu0 %719
        %721 = vrot.lane.b32.xlu0 %v468, 126
        %v722 = vpop.permute.xlu0 %721
        %v723 = vrot.slane %v716, 4
        %v724 = vrot.slane %v718, 4
        %v725 = vrot.slane %v720, 4
        %v726 = vrot.slane %v722, 4
        %v727 = vsel %vm494, %v723, %v724
        %v728 = vsel %vm521, %v716, %v727
        %v729 = vsel %vm494, %v725, %v726
        %v730 = vsel %vm521, %v720, %v729
        %735 = vst [vmem:[#allocation2 + $0x108] sm:$0xff] %v728
        %736 = vst.msk [vmem:[#allocation2 + $0x110] sm:$0xf] %vm474, %v718
        %737 = vst [vmem:[#allocation2 + $0x114] sm:$0xff] %v730
        %738 = vst.msk [vmem:[#allocation2 + $0x11c] sm:$0xf] %vm474, %v722
        %739 = vrot.lane.b32.xlu0 %v465, 110
        %v740 = vpop.permute.xlu0 %739
        %741 = vrot.lane.b32.xlu0 %v466, 110
        %v742 = vpop.permute.xlu0 %741
        %743 = vrot.lane.b32.xlu0 %v467, 110
        %v744 = vpop.permute.xlu0 %743
        %745 = vrot.lane.b32.xlu0 %v468, 110
        %v746 = vpop.permute.xlu0 %745
        %v747 = vrot.slane %v740, 4
        %v748 = vrot.slane %v742, 4
        %v749 = vrot.slane %v744, 4
        %v750 = vrot.slane %v746, 4
        %v751 = vsel %vm494, %v747, %v748
        %v752 = vsel %vm546, %v740, %v751
        %v753 = vsel %vm494, %v749, %v750
        %v754 = vsel %vm546, %v744, %v753
        %759 = vst [vmem:[#allocation2 + $0x120] sm:$0xff] %v752
        %760 = vst.msk [vmem:[#allocation2 + $0x128] sm:$0xf] %vm474, %v742
        %761 = vst [vmem:[#allocation2 + $0x12c] sm:$0xff] %v754
        %762 = vst.msk [vmem:[#allocation2 + $0x134] sm:$0xf] %vm474, %v746
        %763 = vrot.lane.b32.xlu0 %v465, 109
        %v764 = vpop.permute.xlu0 %763
        %765 = vrot.lane.b32.xlu0 %v466, 109
        %v766 = vpop.permute.xlu0 %765
        %767 = vrot.lane.b32.xlu0 %v467, 109
        %v768 = vpop.permute.xlu0 %767
        %769 = vrot.lane.b32.xlu0 %v468, 109
        %v770 = vpop.permute.xlu0 %769
        %v771 = vrot.slane %v764, 4
        %v772 = vrot.slane %v766, 4
        %v773 = vrot.slane %v768, 4
        %v774 = vrot.slane %v770, 4
        %v775 = vsel %vm494, %v771, %v772
        %v776 = vsel %vm571, %v764, %v775
        %v777 = vsel %vm494, %v773, %v774
        %v778 = vsel %vm571, %v768, %v777
        %783 = vst [vmem:[#allocation2 + $0x138] sm:$0xff] %v776
        %784 = vst.msk [vmem:[#allocation2 + $0x140] sm:$0xf] %vm474, %v766
        %785 = vst [vmem:[#allocation2 + $0x144] sm:$0xff] %v778
        %786 = vst.msk [vmem:[#allocation2 + $0x14c] sm:$0xf] %vm474, %v770
        %787 = vrot.lane.b32.xlu0 %v465, 108
        %v788 = vpop.permute.xlu0 %787
        %789 = vrot.lane.b32.xlu0 %v466, 108
        %v790 = vpop.permute.xlu0 %789
        %791 = vrot.lane.b32.xlu0 %v467, 108
        %v792 = vpop.permute.xlu0 %791
        %793 = vrot.lane.b32.xlu0 %v468, 108
        %v794 = vpop.permute.xlu0 %793
        %v795 = vrot.slane %v788, 4
        %v796 = vrot.slane %v790, 4
        %v797 = vrot.slane %v792, 4
        %v798 = vrot.slane %v794, 4
        %v799 = vsel %vm494, %v795, %v796
        %v800 = vsel %vm596, %v788, %v799
        %v801 = vsel %vm494, %v797, %v798
        %v802 = vsel %vm596, %v792, %v801
        %807 = vst [vmem:[#allocation2 + $0x150] sm:$0xff] %v800
        %808 = vst.msk [vmem:[#allocation2 + $0x158] sm:$0xf] %vm474, %v790
        %809 = vst [vmem:[#allocation2 + $0x15c] sm:$0xff] %v802
        %810 = vst.msk [vmem:[#allocation2 + $0x164] sm:$0xf] %vm474, %v794
        %811 = vrot.lane.b32.xlu0 %v465, 92
        %v812 = vpop.permute.xlu0 %811
        %813 = vrot.lane.b32.xlu0 %v466, 92
        %v814 = vpop.permute.xlu0 %813
        %815 = vrot.lane.b32.xlu0 %v467, 92
        %v816 = vpop.permute.xlu0 %815
        %817 = vrot.lane.b32.xlu0 %v468, 92
        %v818 = vpop.permute.xlu0 %817
        %v819 = vrot.slane %v812, 4
        %v820 = vrot.slane %v814, 4
        %v821 = vrot.slane %v816, 4
        %v822 = vrot.slane %v818, 4
        %v823 = vsel %vm494, %v819, %v820
        %v824 = vsel %vm621, %v812, %v823
        %v825 = vsel %vm494, %v821, %v822
        %v826 = vsel %vm621, %v816, %v825
        %831 = vst [vmem:[#allocation2 + $0x168] sm:$0xff] %v824
        %832 = vst.msk [vmem:[#allocation2 + $0x170] sm:$0xf] %vm474, %v814
        %833 = vst [vmem:[#allocation2 + $0x174] sm:$0xff] %v826
        %834 = vst.msk [vmem:[#allocation2 + $0x17c] sm:$0xf] %vm474, %v818
        %835 = vrot.lane.b32.xlu0 %v465, 91
        %v836 = vpop.permute.xlu0 %835
        %837 = vrot.lane.b32.xlu0 %v466, 91
        %v838 = vpop.permute.xlu0 %837
        %839 = vrot.lane.b32.xlu0 %v467, 91
        %v840 = vpop.permute.xlu0 %839
        %841 = vrot.lane.b32.xlu0 %v468, 91
        %v842 = vpop.permute.xlu0 %841
        %v843 = vrot.slane %v836, 4
        %v844 = vrot.slane %v838, 4
        %v845 = vrot.slane %v840, 4
        %v846 = vrot.slane %v842, 4
        %v847 = vsel %vm494, %v843, %v844
        %v848 = vsel %vm646, %v836, %v847
        %v849 = vsel %vm494, %v845, %v846
        %v850 = vsel %vm646, %v840, %v849
        %855 = vst [vmem:[#allocation2 + $0x180] sm:$0xff] %v848
        %856 = vst.msk [vmem:[#allocation2 + $0x188] sm:$0xf] %vm474, %v838
        %857 = vst [vmem:[#allocation2 + $0x18c] sm:$0xff] %v850
        %858 = vst.msk [vmem:[#allocation2 + $0x194] sm:$0xf] %vm474, %v842
        %859 = vrot.lane.b32.xlu0 %v465, 90
        %v860 = vpop.permute.xlu0 %859
        %861 = vrot.lane.b32.xlu0 %v466, 90
        %v862 = vpop.permute.xlu0 %861
        %863 = vrot.lane.b32.xlu0 %v467, 90
        %v864 = vpop.permute.xlu0 %863
        %865 = vrot.lane.b32.xlu0 %v468, 90
        %v866 = vpop.permute.xlu0 %865
        %v867 = vrot.slane %v860, 4
        %v868 = vrot.slane %v862, 4
        %v869 = vrot.slane %v864, 4
        %v870 = vrot.slane %v866, 4
        %v871 = vsel %vm494, %v867, %v868
        %v872 = vsel %vm671, %v860, %v871
        %v873 = vsel %vm494, %v869, %v870
        %v874 = vsel %vm671, %v864, %v873
        %879 = vst [vmem:[#allocation2 + $0x198] sm:$0xff] %v872
        %880 = vst.msk [vmem:[#allocation2 + $0x1a0] sm:$0xf] %vm474, %v862
        %881 = vst [vmem:[#allocation2 + $0x1a4] sm:$0xff] %v874
        %882 = vst.msk [vmem:[#allocation2 + $0x1ac] sm:$0xf] %vm474, %v866
        %883 = vst [vmem:[#allocation2 + $0x1b0] sm:$0xff] %v469
        %884 = vst.msk [vmem:[#allocation2 + $0x1b8] sm:$0xf] %vm474, %v470
        %885 = vst [vmem:[#allocation2 + $0x1bc] sm:$0xff] %v471
        %886 = vst.msk [vmem:[#allocation2 + $0x1c4] sm:$0xf] %vm474, %v472
        %891 = vrot.lane.b32.xlu0 %v469, 127
        %v892 = vpop.permute.xlu0 %891
        %893 = vrot.lane.b32.xlu0 %v470, 127
        %v894 = vpop.permute.xlu0 %893
        %895 = vrot.lane.b32.xlu0 %v471, 127
        %v896 = vpop.permute.xlu0 %895
        %897 = vrot.lane.b32.xlu0 %v472, 127
        %v898 = vpop.permute.xlu0 %897
        %v899 = vrot.slane %v892, 4
        %v900 = vrot.slane %v894, 4
        %v901 = vrot.slane %v896, 4
        %v902 = vrot.slane %v898, 4
        %v903 = vsel %vm494, %v899, %v900
        %v904 = vsel %vm496, %v892, %v903
        %v905 = vsel %vm494, %v901, %v902
        %v906 = vsel %vm496, %v896, %v905
        %911 = vst [vmem:[#allocation2 + $0x1c8] sm:$0xff] %v904
        %912 = vst.msk [vmem:[#allocation2 + $0x1d0] sm:$0xf] %vm474, %v894
        %913 = vst [vmem:[#allocation2 + $0x1d4] sm:$0xff] %v906
        %914 = vst.msk [vmem:[#allocation2 + $0x1dc] sm:$0xf] %vm474, %v898
        %915 = vrot.lane.b32.xlu0 %v469, 126
        %v916 = vpop.permute.xlu0 %915
        %917 = vrot.lane.b32.xlu0 %v470, 126
        %v918 = vpop.permute.xlu0 %917
        %919 = vrot.lane.b32.xlu0 %v471, 126
        %v920 = vpop.permute.xlu0 %919
        %921 = vrot.lane.b32.xlu0 %v472, 126
        %v922 = vpop.permute.xlu0 %921
        %v923 = vrot.slane %v916, 4
        %v924 = vrot.slane %v918, 4
        %v925 = vrot.slane %v920, 4
        %v926 = vrot.slane %v922, 4
        %v927 = vsel %vm494, %v923, %v924
        %v928 = vsel %vm521, %v916, %v927
        %v929 = vsel %vm494, %v925, %v926
        %v930 = vsel %vm521, %v920, %v929
        %935 = vst [vmem:[#allocation2 + $0x1e0] sm:$0xff] %v928
        %936 = vst.msk [vmem:[#allocation2 + $0x1e8] sm:$0xf] %vm474, %v918
        %937 = vst [vmem:[#allocation2 + $0x1ec] sm:$0xff] %v930
        %938 = vst.msk [vmem:[#allocation2 + $0x1f4] sm:$0xf] %vm474, %v922
        %939 = vrot.lane.b32.xlu0 %v469, 110
        %v940 = vpop.permute.xlu0 %939
        %941 = vrot.lane.b32.xlu0 %v470, 110
        %v942 = vpop.permute.xlu0 %941
        %943 = vrot.lane.b32.xlu0 %v471, 110
        %v944 = vpop.permute.xlu0 %943
        %945 = vrot.lane.b32.xlu0 %v472, 110
        %v946 = vpop.permute.xlu0 %945
        %v947 = vrot.slane %v940, 4
        %v948 = vrot.slane %v942, 4
        %v949 = vrot.slane %v944, 4
        %v950 = vrot.slane %v946, 4
        %v951 = vsel %vm494, %v947, %v948
        %v952 = vsel %vm546, %v940, %v951
        %v953 = vsel %vm494, %v949, %v950
        %v954 = vsel %vm546, %v944, %v953
        %959 = vst [vmem:[#allocation2 + $0x1f8] sm:$0xff] %v952
        %960 = vst.msk [vmem:[#allocation2 + $0x200] sm:$0xf] %vm474, %v942
        %961 = vst [vmem:[#allocation2 + $0x204] sm:$0xff] %v954
        %962 = vst.msk [vmem:[#allocation2 + $0x20c] sm:$0xf] %vm474, %v946
        %963 = vrot.lane.b32.xlu0 %v469, 109
        %v964 = vpop.permute.xlu0 %963
        %965 = vrot.lane.b32.xlu0 %v470, 109
        %v966 = vpop.permute.xlu0 %965
        %967 = vrot.lane.b32.xlu0 %v471, 109
        %v968 = vpop.permute.xlu0 %967
        %969 = vrot.lane.b32.xlu0 %v472, 109
        %v970 = vpop.permute.xlu0 %969
        %v971 = vrot.slane %v964, 4
        %v972 = vrot.slane %v966, 4
        %v973 = vrot.slane %v968, 4
        %v974 = vrot.slane %v970, 4
        %v975 = vsel %vm494, %v971, %v972
        %v976 = vsel %vm571, %v964, %v975
        %v977 = vsel %vm494, %v973, %v974
        %v978 = vsel %vm571, %v968, %v977
        %983 = vst [vmem:[#allocation2 + $0x210] sm:$0xff] %v976
        %984 = vst.msk [vmem:[#allocation2 + $0x218] sm:$0xf] %vm474, %v966
        %985 = vst [vmem:[#allocation2 + $0x21c] sm:$0xff] %v978
        %986 = vst.msk [vmem:[#allocation2 + $0x224] sm:$0xf] %vm474, %v970
        %987 = vrot.lane.b32.xlu0 %v469, 108
        %v988 = vpop.permute.xlu0 %987
        %989 = vrot.lane.b32.xlu0 %v470, 108
        %v990 = vpop.permute.xlu0 %989
        %991 = vrot.lane.b32.xlu0 %v471, 108
        %v992 = vpop.permute.xlu0 %991
        %993 = vrot.lane.b32.xlu0 %v472, 108
        %v994 = vpop.permute.xlu0 %993
        %v995 = vrot.slane %v988, 4
        %v996 = vrot.slane %v990, 4
        %v997 = vrot.slane %v992, 4
        %v998 = vrot.slane %v994, 4
        %v999 = vsel %vm494, %v995, %v996
        %v1000 = vsel %vm596, %v988, %v999
        %v1001 = vsel %vm494, %v997, %v998
        %v1002 = vsel %vm596, %v992, %v1001
        %1007 = vst [vmem:[#allocation2 + $0x228] sm:$0xff] %v1000
        %1008 = vst.msk [vmem:[#allocation2 + $0x230] sm:$0xf] %vm474, %v990
        %1009 = vst [vmem:[#allocation2 + $0x234] sm:$0xff] %v1002
        %1010 = vst.msk [vmem:[#allocation2 + $0x23c] sm:$0xf] %vm474, %v994
        %1011 = vrot.lane.b32.xlu0 %v469, 92
        %v1012 = vpop.permute.xlu0 %1011
        %1013 = vrot.lane.b32.xlu0 %v470, 92
        %v1014 = vpop.permute.xlu0 %1013
        %1015 = vrot.lane.b32.xlu0 %v471, 92
        %v1016 = vpop.permute.xlu0 %1015
        %1017 = vrot.lane.b32.xlu0 %v472, 92
        %v1018 = vpop.permute.xlu0 %1017
        %v1019 = vrot.slane %v1012, 4
        %v1020 = vrot.slane %v1014, 4
        %v1021 = vrot.slane %v1016, 4
        %v1022 = vrot.slane %v1018, 4
        %v1023 = vsel %vm494, %v1019, %v1020
        %v1024 = vsel %vm621, %v1012, %v1023
        %v1025 = vsel %vm494, %v1021, %v1022
        %v1026 = vsel %vm621, %v1016, %v1025
        %1031 = vst [vmem:[#allocation2 + $0x240] sm:$0xff] %v1024
        %1032 = vst.msk [vmem:[#allocation2 + $0x248] sm:$0xf] %vm474, %v1014
        %1033 = vst [vmem:[#allocation2 + $0x24c] sm:$0xff] %v1026
        %1034 = vst.msk [vmem:[#allocation2 + $0x254] sm:$0xf] %vm474, %v1018
        %1035 = vrot.lane.b32.xlu0 %v469, 91
        %v1036 = vpop.permute.xlu0 %1035
        %1037 = vrot.lane.b32.xlu0 %v470, 91
        %v1038 = vpop.permute.xlu0 %1037
        %1039 = vrot.lane.b32.xlu0 %v471, 91
        %v1040 = vpop.permute.xlu0 %1039
        %1041 = vrot.lane.b32.xlu0 %v472, 91
        %v1042 = vpop.permute.xlu0 %1041
        %v1043 = vrot.slane %v1036, 4
        %v1044 = vrot.slane %v1038, 4
        %v1045 = vrot.slane %v1040, 4
        %v1046 = vrot.slane %v1042, 4
        %v1047 = vsel %vm494, %v1043, %v1044
        %v1048 = vsel %vm646, %v1036, %v1047
        %v1049 = vsel %vm494, %v1045, %v1046
        %v1050 = vsel %vm646, %v1040, %v1049
        %1055 = vst [vmem:[#allocation2 + $0x258] sm:$0xff] %v1048
        %1056 = vst.msk [vmem:[#allocation2 + $0x260] sm:$0xf] %vm474, %v1038
        %1057 = vst [vmem:[#allocation2 + $0x264] sm:$0xff] %v1050
        %1058 = vst.msk [vmem:[#allocation2 + $0x26c] sm:$0xf] %vm474, %v1042
        %1059 = vrot.lane.b32.xlu0 %v469, 90
        %v1060 = vpop.permute.xlu0 %1059
        %1061 = vrot.lane.b32.xlu0 %v470, 90
        %v1062 = vpop.permute.xlu0 %1061
        %1063 = vrot.lane.b32.xlu0 %v471, 90
        %v1064 = vpop.permute.xlu0 %1063
        %1065 = vrot.lane.b32.xlu0 %v472, 90
        %v1066 = vpop.permute.xlu0 %1065
        %v1067 = vrot.slane %v1060, 4
        %v1068 = vrot.slane %v1062, 4
        %v1069 = vrot.slane %v1064, 4
        %v1070 = vrot.slane %v1066, 4
        %v1071 = vsel %vm494, %v1067, %v1068
        %v1072 = vsel %vm671, %v1060, %v1071
        %v1073 = vsel %vm494, %v1069, %v1070
        %v1074 = vsel %vm671, %v1064, %v1073
        %1079 = vst [vmem:[#allocation2 + $0x270] sm:$0xff] %v1072
        %1080 = vst.msk [vmem:[#allocation2 + $0x278] sm:$0xf] %vm474, %v1062
        %1081 = vst [vmem:[#allocation2 + $0x27c] sm:$0xff] %v1074
        %1082 = vst.msk [vmem:[#allocation2 + $0x284] sm:$0xf] %vm474, %v1066
        %v1083 = vld [vmem:[%s0] sm:$0xff]
        %v1084 = vld [vmem:[%s0 + $0x8] sm:$0xff]
        %v1085 = vld [vmem:[%s0 + $0x10] sm:$0xff]
        %v1086 = vld [vmem:[%s0 + $0x18] sm:$0xff]
        %v1087 = vld [vmem:[%s0 + $0x20] sm:$0xff]
        %v1088 = vld [vmem:[%s0 + $0x28] sm:$0xff]
        %v1089 = vld [vmem:[%s0 + $0x30] sm:$0xff]
        %v1090 = vld [vmem:[%s0 + $0x38] sm:$0xff]
        %v1091 = vld [vmem:[#allocation2] sm:$0xff]
        %v1092 = vld [vmem:[#allocation2 + $0x8] sm:$0xf]
        %v1093 = vld [vmem:[#allocation2 + $0xc] sm:$0xff]
        %v1094 = vld [vmem:[#allocation2 + $0x14] sm:$0xf]
        %v1095 = vld [vmem:[#allocation2 + $0x18] sm:$0xff]
        %v1096 = vld [vmem:[#allocation2 + $0x20] sm:$0xf]
        %v1097 = vld [vmem:[#allocation2 + $0x24] sm:$0xff]
        %v1098 = vld [vmem:[#allocation2 + $0x2c] sm:$0xf]
        %v1099 = vld [vmem:[#allocation2 + $0x30] sm:$0xff]
        %v1100 = vld [vmem:[#allocation2 + $0x38] sm:$0xf]
        %v1101 = vld [vmem:[#allocation2 + $0x3c] sm:$0xff]
        %v1102 = vld [vmem:[#allocation2 + $0x44] sm:$0xf]
        %v1103 = vld [vmem:[#allocation2 + $0x48] sm:$0xff]
        %v1104 = vld [vmem:[#allocation2 + $0x50] sm:$0xf]
        %v1105 = vld [vmem:[#allocation2 + $0x54] sm:$0xff]
        %v1106 = vld [vmem:[#allocation2 + $0x5c] sm:$0xf]
        %v1107 = vld [vmem:[#allocation2 + $0x60] sm:$0xff]
        %v1108 = vld [vmem:[#allocation2 + $0x68] sm:$0xf]
        %v1109 = vld [vmem:[#allocation2 + $0x6c] sm:$0xff]
        %v1110 = vld [vmem:[#allocation2 + $0x74] sm:$0xf]
        %v1111 = vld [vmem:[#allocation2 + $0x78] sm:$0xff]
        %v1112 = vld [vmem:[#allocation2 + $0x80] sm:$0xf]
        %v1113 = vld [vmem:[#allocation2 + $0x84] sm:$0xff]
        %v1114 = vld [vmem:[#allocation2 + $0x8c] sm:$0xf]
        %v1115 = vld [vmem:[#allocation2 + $0x90] sm:$0xff]
        %v1116 = vld [vmem:[#allocation2 + $0x98] sm:$0xf]
        %v1117 = vld [vmem:[#allocation2 + $0x9c] sm:$0xff]
        %v1118 = vld [vmem:[#allocation2 + $0xa4] sm:$0xf]
        %v1119 = vld [vmem:[#allocation2 + $0xa8] sm:$0xff]
        %v1120 = vld [vmem:[#allocation2 + $0xb0] sm:$0xf]
        %v1121 = vld [vmem:[#allocation2 + $0xb4] sm:$0xff]
        %v1122 = vld [vmem:[#allocation2 + $0xbc] sm:$0xf]
        %v1123 = vld [vmem:[#allocation2 + $0xc0] sm:$0xff]
        %v1124 = vld [vmem:[#allocation2 + $0xc8] sm:$0xf]
        %v1125 = vld [vmem:[#allocation2 + $0xcc] sm:$0xff]
        %v1126 = vld [vmem:[#allocation2 + $0xd4] sm:$0xf]
        %v1127 = vld [vmem:[#allocation2 + $0xd8] sm:$0xff]
        %v1128 = vld [vmem:[#allocation2 + $0xe0] sm:$0xf]
        %v1129 = vld [vmem:[#allocation2 + $0xe4] sm:$0xff]
        %v1130 = vld [vmem:[#allocation2 + $0xec] sm:$0xf]
        %v1131 = vld [vmem:[#allocation2 + $0xf0] sm:$0xff]
        %v1132 = vld [vmem:[#allocation2 + $0xf8] sm:$0xf]
        %v1133 = vld [vmem:[#allocation2 + $0xfc] sm:$0xff]
        %v1134 = vld [vmem:[#allocation2 + $0x104] sm:$0xf]
        %v1135 = vld [vmem:[#allocation2 + $0x108] sm:$0xff]
        %v1136 = vld [vmem:[#allocation2 + $0x110] sm:$0xf]
        %v1137 = vld [vmem:[#allocation2 + $0x114] sm:$0xff]
        %v1138 = vld [vmem:[#allocation2 + $0x11c] sm:$0xf]
        %v1139 = vld [vmem:[#allocation2 + $0x120] sm:$0xff]
        %v1140 = vld [vmem:[#allocation2 + $0x128] sm:$0xf]
        %v1141 = vld [vmem:[#allocation2 + $0x12c] sm:$0xff]
        %v1142 = vld [vmem:[#allocation2 + $0x134] sm:$0xf]
        %v1143 = vld [vmem:[#allocation2 + $0x138] sm:$0xff]
        %v1144 = vld [vmem:[#allocation2 + $0x140] sm:$0xf]
        %v1145 = vld [vmem:[#allocation2 + $0x144] sm:$0xff]
        %v1146 = vld [vmem:[#allocation2 + $0x14c] sm:$0xf]
        %v1147 = vld [vmem:[#allocation2 + $0x150] sm:$0xff]
        %v1148 = vld [vmem:[#allocation2 + $0x158] sm:$0xf]
        %v1149 = vld [vmem:[#allocation2 + $0x15c] sm:$0xff]
        %v1150 = vld [vmem:[#allocation2 + $0x164] sm:$0xf]
        %v1151 = vld [vmem:[#allocation2 + $0x168] sm:$0xff]
        %v1152 = vld [vmem:[#allocation2 + $0x170] sm:$0xf]
        %v1153 = vld [vmem:[#allocation2 + $0x174] sm:$0xff]
        %v1154 = vld [vmem:[#allocation2 + $0x17c] sm:$0xf]
        %v1155 = vld [vmem:[#allocation2 + $0x180] sm:$0xff]
        %v1156 = vld [vmem:[#allocation2 + $0x188] sm:$0xf]
        %v1157 = vld [vmem:[#allocation2 + $0x18c] sm:$0xff]
        %v1158 = vld [vmem:[#allocation2 + $0x194] sm:$0xf]
        %v1159 = vld [vmem:[#allocation2 + $0x198] sm:$0xff]
        %v1160 = vld [vmem:[#allocation2 + $0x1a0] sm:$0xf]
        %v1161 = vld [vmem:[#allocation2 + $0x1a4] sm:$0xff]
        %v1162 = vld [vmem:[#allocation2 + $0x1ac] sm:$0xf]
        %v1163 = vld [vmem:[#allocation2 + $0x1b0] sm:$0xff]
        %v1164 = vld [vmem:[#allocation2 + $0x1b8] sm:$0xf]
        %v1165 = vld [vmem:[#allocation2 + $0x1bc] sm:$0xff]
        %v1166 = vld [vmem:[#allocation2 + $0x1c4] sm:$0xf]
        %v1167 = vld [vmem:[#allocation2 + $0x1c8] sm:$0xff]
        %v1168 = vld [vmem:[#allocation2 + $0x1d0] sm:$0xf]
        %v1169 = vld [vmem:[#allocation2 + $0x1d4] sm:$0xff]
        %v1170 = vld [vmem:[#allocation2 + $0x1dc] sm:$0xf]
        %v1171 = vld [vmem:[#allocation2 + $0x1e0] sm:$0xff]
        %v1172 = vld [vmem:[#allocation2 + $0x1e8] sm:$0xf]
        %v1173 = vld [vmem:[#allocation2 + $0x1ec] sm:$0xff]
        %v1174 = vld [vmem:[#allocation2 + $0x1f4] sm:$0xf]
        %v1175 = vld [vmem:[#allocation2 + $0x1f8] sm:$0xff]
        %v1176 = vld [vmem:[#allocation2 + $0x200] sm:$0xf]
        %v1177 = vld [vmem:[#allocation2 + $0x204] sm:$0xff]
        %v1178 = vld [vmem:[#allocation2 + $0x20c] sm:$0xf]
        %v1179 = vld [vmem:[#allocation2 + $0x210] sm:$0xff]
        %v1180 = vld [vmem:[#allocation2 + $0x218] sm:$0xf]
        %v1181 = vld [vmem:[#allocation2 + $0x21c] sm:$0xff]
        %v1182 = vld [vmem:[#allocation2 + $0x224] sm:$0xf]
        %v1183 = vld [vmem:[#allocation2 + $0x228] sm:$0xff]
        %v1184 = vld [vmem:[#allocation2 + $0x230] sm:$0xf]
        %v1185 = vld [vmem:[#allocation2 + $0x234] sm:$0xff]
        %v1186 = vld [vmem:[#allocation2 + $0x23c] sm:$0xf]
        %v1187 = vld [vmem:[#allocation2 + $0x240] sm:$0xff]
        %v1188 = vld [vmem:[#allocation2 + $0x248] sm:$0xf]
        %v1189 = vld [vmem:[#allocation2 + $0x24c] sm:$0xff]
        %v1190 = vld [vmem:[#allocation2 + $0x254] sm:$0xf]
        %v1191 = vld [vmem:[#allocation2 + $0x258] sm:$0xff]
        %v1192 = vld [vmem:[#allocation2 + $0x260] sm:$0xf]
        %v1193 = vld [vmem:[#allocation2 + $0x264] sm:$0xff]
        %v1194 = vld [vmem:[#allocation2 + $0x26c] sm:$0xf]
        %v1195 = vld [vmem:[#allocation2 + $0x270] sm:$0xff]
        %v1196 = vld [vmem:[#allocation2 + $0x278] sm:$0xf]
        %v1197 = vld [vmem:[#allocation2 + $0x27c] sm:$0xff]
        %v1198 = vld [vmem:[#allocation2 + $0x284] sm:$0xf]
        %v1199 = vld [vmem:[%s1] sm:$0xff]
        %v1200 = vld [vmem:[%s1 + $0x8] sm:$0xff]
        %v1201 = vld [vmem:[%s1 + $0x10] sm:$0xff]
        %v1202 = vld [vmem:[%s1 + $0x18] sm:$0xff]
        %1204 = vset.pattern.permute.xlu0 0
        %1205 = vperm.xlu0 %1204, %v1199
        %v1206 = vpop.permute.xlu0 %1205
        %1209 = vset.pattern.permute.xlu0 0
        %1210 = vperm.xlu0 %1209, %v1200
        %v1211 = vpop.permute.xlu0 %1210
        %1214 = vset.pattern.permute.xlu0 0
        %1215 = vperm.xlu0 %1214, %v1201
        %v1216 = vpop.permute.xlu0 %1215
        %1219 = vset.pattern.permute.xlu0 0
        %1220 = vperm.xlu0 %1219, %v1202
        %v1221 = vpop.permute.xlu0 %1220
        %v1231 = vunpack.c.l.b16 %v1083
        %v1232 = vunpack.c.h.b16 %v1083
        %v1233 = vunpack.c.l.b16 %v1084
        %v1234 = vunpack.c.h.b16 %v1084
        %v1235 = vunpack.c.l.b16 %v1085
        %v1236 = vunpack.c.h.b16 %v1085
        %v1237 = vunpack.c.l.b16 %v1086
        %v1238 = vunpack.c.h.b16 %v1086
        %v1239 = vunpack.c.l.b16 %v1087
        %v1240 = vunpack.c.h.b16 %v1087
        %v1241 = vunpack.c.l.b16 %v1088
        %v1242 = vunpack.c.h.b16 %v1088
        %v1243 = vunpack.c.l.b16 %v1089
        %v1244 = vunpack.c.h.b16 %v1089
        %v1245 = vunpack.c.l.b16 %v1090
        %v1246 = vunpack.c.h.b16 %v1090
        %v1247 = vpack.c.b16 %v1235, %v1231
        %v1248 = vpack.c.b16 %v1236, %v1232
        %v1249 = vpack.c.b16 %v1237, %v1233
        %v1250 = vpack.c.b16 %v1238, %v1234
        %v1251 = vpack.c.b16 %v1243, %v1239
        %v1252 = vpack.c.b16 %v1244, %v1240
        %v1253 = vpack.c.b16 %v1245, %v1241
        %v1254 = vpack.c.b16 %v1246, %v1242
        %v1369 = vunpack.c.l.b16 %v1091
        %v1370 = vunpack.c.h.b16 %v1091
        %v1371 = vunpack.c.l.b16 %v1092
        %v1372 = vunpack.c.l.b16 %v1093
        %v1373 = vunpack.c.h.b16 %v1093
        %v1374 = vunpack.c.l.b16 %v1094
        %v1375 = vunpack.c.l.b16 %v1095
        %v1376 = vunpack.c.h.b16 %v1095
        %v1377 = vunpack.c.l.b16 %v1096
        %v1378 = vunpack.c.l.b16 %v1097
        %v1379 = vunpack.c.h.b16 %v1097
        %v1380 = vunpack.c.l.b16 %v1098
        %v1381 = vunpack.c.l.b16 %v1099
        %v1382 = vunpack.c.h.b16 %v1099
        %v1383 = vunpack.c.l.b16 %v1100
        %v1384 = vunpack.c.l.b16 %v1101
        %v1385 = vunpack.c.h.b16 %v1101
        %v1386 = vunpack.c.l.b16 %v1102
        %v1387 = vunpack.c.l.b16 %v1103
        %v1388 = vunpack.c.h.b16 %v1103
        %v1389 = vunpack.c.l.b16 %v1104
        %v1390 = vunpack.c.l.b16 %v1105
        %v1391 = vunpack.c.h.b16 %v1105
        %v1392 = vunpack.c.l.b16 %v1106
        %v1393 = vunpack.c.l.b16 %v1107
        %v1394 = vunpack.c.h.b16 %v1107
        %v1395 = vunpack.c.l.b16 %v1108
        %v1396 = vunpack.c.l.b16 %v1109
        %v1397 = vunpack.c.h.b16 %v1109
        %v1398 = vunpack.c.l.b16 %v1110
        %v1399 = vunpack.c.l.b16 %v1111
        %v1400 = vunpack.c.h.b16 %v1111
        %v1401 = vunpack.c.l.b16 %v1112
        %v1402 = vunpack.c.l.b16 %v1113
        %v1403 = vunpack.c.h.b16 %v1113
        %v1404 = vunpack.c.l.b16 %v1114
        %v1405 = vunpack.c.l.b16 %v1115
        %v1406 = vunpack.c.h.b16 %v1115
        %v1407 = vunpack.c.l.b16 %v1116
        %v1408 = vunpack.c.l.b16 %v1117
        %v1409 = vunpack.c.h.b16 %v1117
        %v1410 = vunpack.c.l.b16 %v1118
        %v1411 = vunpack.c.l.b16 %v1119
        %v1412 = vunpack.c.h.b16 %v1119
        %v1413 = vunpack.c.l.b16 %v1120
        %v1414 = vunpack.c.l.b16 %v1121
        %v1415 = vunpack.c.h.b16 %v1121
        %v1416 = vunpack.c.l.b16 %v1122
        %v1417 = vunpack.c.l.b16 %v1123
        %v1418 = vunpack.c.h.b16 %v1123
        %v1419 = vunpack.c.l.b16 %v1124
        %v1420 = vunpack.c.l.b16 %v1125
        %v1421 = vunpack.c.h.b16 %v1125
        %v1422 = vunpack.c.l.b16 %v1126
        %v1423 = vunpack.c.l.b16 %v1127
        %v1424 = vunpack.c.h.b16 %v1127
        %v1425 = vunpack.c.l.b16 %v1128
        %v1426 = vunpack.c.l.b16 %v1129
        %v1427 = vunpack.c.h.b16 %v1129
        %v1428 = vunpack.c.l.b16 %v1130
        %v1429 = vunpack.c.l.b16 %v1131
        %v1430 = vunpack.c.h.b16 %v1131
        %v1431 = vunpack.c.l.b16 %v1132
        %v1432 = vunpack.c.l.b16 %v1133
        %v1433 = vunpack.c.h.b16 %v1133
        %v1434 = vunpack.c.l.b16 %v1134
        %v1435 = vunpack.c.l.b16 %v1135
        %v1436 = vunpack.c.h.b16 %v1135
        %v1437 = vunpack.c.l.b16 %v1136
        %v1438 = vunpack.c.l.b16 %v1137
        %v1439 = vunpack.c.h.b16 %v1137
        %v1440 = vunpack.c.l.b16 %v1138
        %v1441 = vunpack.c.l.b16 %v1139
        %v1442 = vunpack.c.h.b16 %v1139
        %v1443 = vunpack.c.l.b16 %v1140
        %v1444 = vunpack.c.l.b16 %v1141
        %v1445 = vunpack.c.h.b16 %v1141
        %v1446 = vunpack.c.l.b16 %v1142
        %v1447 = vunpack.c.l.b16 %v1143
        %v1448 = vunpack.c.h.b16 %v1143
        %v1449 = vunpack.c.l.b16 %v1144
        %v1450 = vunpack.c.l.b16 %v1145
        %v1451 = vunpack.c.h.b16 %v1145
        %v1452 = vunpack.c.l.b16 %v1146
        %v1453 = vunpack.c.l.b16 %v1147
        %v1454 = vunpack.c.h.b16 %v1147
        %v1455 = vunpack.c.l.b16 %v1148
        %v1456 = vunpack.c.l.b16 %v1149
        %v1457 = vunpack.c.h.b16 %v1149
        %v1458 = vunpack.c.l.b16 %v1150
        %v1459 = vunpack.c.l.b16 %v1151
        %v1460 = vunpack.c.h.b16 %v1151
        %v1461 = vunpack.c.l.b16 %v1152
        %v1462 = vunpack.c.l.b16 %v1153
        %v1463 = vunpack.c.h.b16 %v1153
        %v1464 = vunpack.c.l.b16 %v1154
        %v1465 = vunpack.c.l.b16 %v1155
        %v1466 = vunpack.c.h.b16 %v1155
        %v1467 = vunpack.c.l.b16 %v1156
        %v1468 = vunpack.c.l.b16 %v1157
        %v1469 = vunpack.c.h.b16 %v1157
        %v1470 = vunpack.c.l.b16 %v1158
        %v1471 = vunpack.c.l.b16 %v1159
        %v1472 = vunpack.c.h.b16 %v1159
        %v1473 = vunpack.c.l.b16 %v1160
        %v1474 = vunpack.c.l.b16 %v1161
        %v1475 = vunpack.c.h.b16 %v1161
        %v1476 = vunpack.c.l.b16 %v1162
        %v1477 = vunpack.c.l.b16 %v1163
        %v1478 = vunpack.c.h.b16 %v1163
        %v1479 = vunpack.c.l.b16 %v1164
        %v1480 = vunpack.c.l.b16 %v1165
        %v1481 = vunpack.c.h.b16 %v1165
        %v1482 = vunpack.c.l.b16 %v1166
        %v1483 = vunpack.c.l.b16 %v1167
        %v1484 = vunpack.c.h.b16 %v1167
        %v1485 = vunpack.c.l.b16 %v1168
        %v1486 = vunpack.c.l.b16 %v1169
        %v1487 = vunpack.c.h.b16 %v1169
        %v1488 = vunpack.c.l.b16 %v1170
        %v1489 = vunpack.c.l.b16 %v1171
        %v1490 = vunpack.c.h.b16 %v1171
        %v1491 = vunpack.c.l.b16 %v1172
        %v1492 = vunpack.c.l.b16 %v1173
        %v1493 = vunpack.c.h.b16 %v1173
        %v1494 = vunpack.c.l.b16 %v1174
        %v1495 = vunpack.c.l.b16 %v1175
        %v1496 = vunpack.c.h.b16 %v1175
        %v1497 = vunpack.c.l.b16 %v1176
        %v1498 = vunpack.c.l.b16 %v1177
        %v1499 = vunpack.c.h.b16 %v1177
        %v1500 = vunpack.c.l.b16 %v1178
        %v1501 = vunpack.c.l.b16 %v1179
        %v1502 = vunpack.c.h.b16 %v1179
        %v1503 = vunpack.c.l.b16 %v1180
        %v1504 = vunpack.c.l.b16 %v1181
        %v1505 = vunpack.c.h.b16 %v1181
        %v1506 = vunpack.c.l.b16 %v1182
        %v1507 = vunpack.c.l.b16 %v1183
        %v1508 = vunpack.c.h.b16 %v1183
        %v1509 = vunpack.c.l.b16 %v1184
        %v1510 = vunpack.c.l.b16 %v1185
        %v1511 = vunpack.c.h.b16 %v1185
        %v1512 = vunpack.c.l.b16 %v1186
        %v1513 = vunpack.c.l.b16 %v1187
        %v1514 = vunpack.c.h.b16 %v1187
        %v1515 = vunpack.c.l.b16 %v1188
        %v1516 = vunpack.c.l.b16 %v1189
        %v1517 = vunpack.c.h.b16 %v1189
        %v1518 = vunpack.c.l.b16 %v1190
        %v1519 = vunpack.c.l.b16 %v1191
        %v1520 = vunpack.c.h.b16 %v1191
        %v1521 = vunpack.c.l.b16 %v1192
        %v1522 = vunpack.c.l.b16 %v1193
        %v1523 = vunpack.c.h.b16 %v1193
        %v1524 = vunpack.c.l.b16 %v1194
        %v1525 = vunpack.c.l.b16 %v1195
        %v1526 = vunpack.c.h.b16 %v1195
        %v1527 = vunpack.c.l.b16 %v1196
        %v1528 = vunpack.c.l.b16 %v1197
        %v1529 = vunpack.c.h.b16 %v1197
        %v1530 = vunpack.c.l.b16 %v1198
        %v1531 = vpack.c.b16 %v1372, %v1369
        %v1532 = vpack.c.b16 %v1373, %v1370
        %v1533 = vpack.c.b16 %v1374, %v1371
        %v1534 = vpack.c.b16 %v1378, %v1375
        %v1535 = vpack.c.b16 %v1379, %v1376
        %v1536 = vpack.c.b16 %v1380, %v1377
        %v1537 = vpack.c.b16 %v1384, %v1381
        %v1538 = vpack.c.b16 %v1385, %v1382
        %v1539 = vpack.c.b16 %v1386, %v1383
        %v1540 = vpack.c.b16 %v1390, %v1387
        %v1541 = vpack.c.b16 %v1391, %v1388
        %v1542 = vpack.c.b16 %v1392, %v1389
        %v1543 = vpack.c.b16 %v1396, %v1393
        %v1544 = vpack.c.b16 %v1397, %v1394
        %v1545 = vpack.c.b16 %v1398, %v1395
        %v1546 = vpack.c.b16 %v1402, %v1399
        %v1547 = vpack.c.b16 %v1403, %v1400
        %v1548 = vpack.c.b16 %v1404, %v1401
        %v1549 = vpack.c.b16 %v1408, %v1405
        %v1550 = vpack.c.b16 %v1409, %v1406
        %v1551 = vpack.c.b16 %v1410, %v1407
        %v1552 = vpack.c.b16 %v1414, %v1411
        %v1553 = vpack.c.b16 %v1415, %v1412
        %v1554 = vpack.c.b16 %v1416, %v1413
        %v1555 = vpack.c.b16 %v1420, %v1417
        %v1556 = vpack.c.b16 %v1421, %v1418
        %v1557 = vpack.c.b16 %v1422, %v1419
        %v1558 = vpack.c.b16 %v1426, %v1423
        %v1559 = vpack.c.b16 %v1427, %v1424
        %v1560 = vpack.c.b16 %v1428, %v1425
        %v1561 = vpack.c.b16 %v1432, %v1429
        %v1562 = vpack.c.b16 %v1433, %v1430
        %v1563 = vpack.c.b16 %v1434, %v1431
        %v1564 = vpack.c.b16 %v1438, %v1435
        %v1565 = vpack.c.b16 %v1439, %v1436
        %v1566 = vpack.c.b16 %v1440, %v1437
        %v1567 = vpack.c.b16 %v1444, %v1441
        %v1568 = vpack.c.b16 %v1445, %v1442
        %v1569 = vpack.c.b16 %v1446, %v1443
        %v1570 = vpack.c.b16 %v1450, %v1447
        %v1571 = vpack.c.b16 %v1451, %v1448
        %v1572 = vpack.c.b16 %v1452, %v1449
        %v1573 = vpack.c.b16 %v1456, %v1453
        %v1574 = vpack.c.b16 %v1457, %v1454
        %v1575 = vpack.c.b16 %v1458, %v1455
        %v1576 = vpack.c.b16 %v1462, %v1459
        %v1577 = vpack.c.b16 %v1463, %v1460
        %v1578 = vpack.c.b16 %v1464, %v1461
        %v1579 = vpack.c.b16 %v1468, %v1465
        %v1580 = vpack.c.b16 %v1469, %v1466
        %v1581 = vpack.c.b16 %v1470, %v1467
        %v1582 = vpack.c.b16 %v1474, %v1471
        %v1583 = vpack.c.b16 %v1475, %v1472
        %v1584 = vpack.c.b16 %v1476, %v1473
        %v1585 = vpack.c.b16 %v1480, %v1477
        %v1586 = vpack.c.b16 %v1481, %v1478
        %v1587 = vpack.c.b16 %v1482, %v1479
        %v1588 = vpack.c.b16 %v1486, %v1483
        %v1589 = vpack.c.b16 %v1487, %v1484
        %v1590 = vpack.c.b16 %v1488, %v1485
        %v1591 = vpack.c.b16 %v1492, %v1489
        %v1592 = vpack.c.b16 %v1493, %v1490
        %v1593 = vpack.c.b16 %v1494, %v1491
        %v1594 = vpack.c.b16 %v1498, %v1495
        %v1595 = vpack.c.b16 %v1499, %v1496
        %v1596 = vpack.c.b16 %v1500, %v1497
        %v1597 = vpack.c.b16 %v1504, %v1501
        %v1598 = vpack.c.b16 %v1505, %v1502
        %v1599 = vpack.c.b16 %v1506, %v1503
        %v1600 = vpack.c.b16 %v1510, %v1507
        %v1601 = vpack.c.b16 %v1511, %v1508
        %v1602 = vpack.c.b16 %v1512, %v1509
        %v1603 = vpack.c.b16 %v1516, %v1513
        %v1604 = vpack.c.b16 %v1517, %v1514
        %v1605 = vpack.c.b16 %v1518, %v1515
        %v1606 = vpack.c.b16 %v1522, %v1519
        %v1607 = vpack.c.b16 %v1523, %v1520
        %v1608 = vpack.c.b16 %v1524, %v1521
        %v1609 = vpack.c.b16 %v1528, %v1525
        %v1610 = vpack.c.b16 %v1529, %v1526
        %v1611 = vpack.c.b16 %v1530, %v1527
        %vm1693 = vcmask 392192
        %v1695 = vsel %vm1693, %v1250, 0
        %v1698 = vsel %vm1693, %v1254, 0
        %1700 = vmatpush.bf16.msra.mxu0 %v1552
        %1701 = vmatpush.bf16.msra.mxu0 %v1549
        %1702 = vmatpush.bf16.msra.mxu0 %v1546
        %1703 = vmatpush.bf16.msra.mxu0 %v1543
        %1704 = vmatpush.bf16.msra.mxu0 %v1540
        %1705 = vmatpush.bf16.msra.mxu0 %v1537
        %1706 = vmatpush.bf16.msra.mxu0 %v1534
        %1707 = vmatpush.bf16.msra.mxu0 %v1531
        %1708 = vmatmul.bf16.gmra.mxu0 %v1247
        %v1709 = vpop.f32.mrf.mxu0
        %v1710 = vadd.f32 %v1206, %v1709
        %v1711 = vpop.f32.mrf.mxu0
        %v1712 = vadd.f32 %v1211, %v1711
        %1713 = vmatmul.bf16.gmra.mxu0 %v1251
        %v1714 = vpop.f32.mrf.mxu0
        %v1715 = vadd.f32 %v1216, %v1714
        %v1716 = vpop.f32.mrf.mxu0
        %v1717 = vadd.f32 %v1221, %v1716
        %1718 = vdwg.mxu0
        %1719 = vmatpush.bf16.msra.mxu0 %v1576
        %1720 = vmatpush.bf16.msra.mxu0 %v1573
        %1721 = vmatpush.bf16.msra.mxu0 %v1570
        %1722 = vmatpush.bf16.msra.mxu0 %v1567
        %1723 = vmatpush.bf16.msra.mxu0 %v1564
        %1724 = vmatpush.bf16.msra.mxu0 %v1561
        %1725 = vmatpush.bf16.msra.mxu0 %v1558
        %1726 = vmatpush.bf16.msra.mxu0 %v1555
        %1727 = vmatmul.bf16.gmra.mxu0 %v1248
        %v1728 = vpop.f32.mrf.mxu0
        %v1729 = vadd.f32 %v1710, %v1728
        %v1730 = vpop.f32.mrf.mxu0
        %v1731 = vadd.f32 %v1712, %v1730
        %1732 = vmatmul.bf16.gmra.mxu0 %v1252
        %v1733 = vpop.f32.mrf.mxu0
        %v1734 = vadd.f32 %v1715, %v1733
        %v1735 = vpop.f32.mrf.mxu0
        %v1736 = vadd.f32 %v1717, %v1735
        %1737 = vdwg.mxu0
        %1738 = vmatpush.bf16.msra.mxu0 %v1600
        %1739 = vmatpush.bf16.msra.mxu0 %v1597
        %1740 = vmatpush.bf16.msra.mxu0 %v1594
        %1741 = vmatpush.bf16.msra.mxu0 %v1591
        %1742 = vmatpush.bf16.msra.mxu0 %v1588
        %1743 = vmatpush.bf16.msra.mxu0 %v1585
        %1744 = vmatpush.bf16.msra.mxu0 %v1582
        %1745 = vmatpush.bf16.msra.mxu0 %v1579
        %1746 = vmatmul.bf16.gmra.mxu0 %v1249
        %v1747 = vpop.f32.mrf.mxu0
        %v1748 = vadd.f32 %v1729, %v1747
        %v1749 = vpop.f32.mrf.mxu0
        %v1750 = vadd.f32 %v1731, %v1749
        %1751 = vmatmul.bf16.gmra.mxu0 %v1253
        %v1752 = vpop.f32.mrf.mxu0
        %v1753 = vadd.f32 %v1734, %v1752
        %v1754 = vpop.f32.mrf.mxu0
        %v1755 = vadd.f32 %v1736, %v1754
        %1756 = vdwg.mxu0
        %1757 = vmatpush.bf16.msra.mxu0 0
        %1758 = vmatpush.bf16.msra.mxu0 0
        %1759 = vmatpush.bf16.msra.mxu0 0
        %1760 = vmatpush.bf16.msra.mxu0 0
        %1761 = vmatpush.bf16.msra.mxu0 0
        %1762 = vmatpush.bf16.msra.mxu0 %v1609
        %1763 = vmatpush.bf16.msra.mxu0 %v1606
        %1764 = vmatpush.bf16.msra.mxu0 %v1603
        %1765 = vmatmul.bf16.gmra.mxu0 %v1695
        %v1766 = vpop.f32.mrf.mxu0
        %v1767 = vadd.f32 %v1748, %v1766
        %v1768 = vpop.f32.mrf.mxu0
        %v1769 = vadd.f32 %v1750, %v1768
        %1770 = vmatmul.bf16.gmra.mxu0 %v1698
        %v1771 = vpop.f32.mrf.mxu0
        %v1772 = vadd.f32 %v1753, %v1771
        %v1773 = vpop.f32.mrf.mxu0
        %v1774 = vadd.f32 %v1755, %v1773
        %1775 = vdwg.mxu0
        %1776 = vmatpush.bf16.msra.mxu0 %v1553
        %1777 = vmatpush.bf16.msra.mxu0 %v1550
        %1778 = vmatpush.bf16.msra.mxu0 %v1547
        %1779 = vmatpush.bf16.msra.mxu0 %v1544
        %1780 = vmatpush.bf16.msra.mxu0 %v1541
        %1781 = vmatpush.bf16.msra.mxu0 %v1538
        %1782 = vmatpush.bf16.msra.mxu0 %v1535
        %1783 = vmatpush.bf16.msra.mxu0 %v1532
        %1784 = vmatmul.bf16.gmra.mxu0 %v1247
        %v1785 = vpop.f32.mrf.mxu0
        %v1786 = vadd.f32 %v1206, %v1785
        %v1787 = vpop.f32.mrf.mxu0
        %v1788 = vadd.f32 %v1211, %v1787
        %1789 = vmatmul.bf16.gmra.mxu0 %v1251
        %v1790 = vpop.f32.mrf.mxu0
        %v1791 = vadd.f32 %v1216, %v1790
        %v1792 = vpop.f32.mrf.mxu0
        %v1793 = vadd.f32 %v1221, %v1792
        %1794 = vdwg.mxu0
        %1795 = vmatpush.bf16.msra.mxu0 %v1577
        %1796 = vmatpush.bf16.msra.mxu0 %v1574
        %1797 = vmatpush.bf16.msra.mxu0 %v1571
        %1798 = vmatpush.bf16.msra.mxu0 %v1568
        %1799 = vmatpush.bf16.msra.mxu0 %v1565
        %1800 = vmatpush.bf16.msra.mxu0 %v1562
        %1801 = vmatpush.bf16.msra.mxu0 %v1559
        %1802 = vmatpush.bf16.msra.mxu0 %v1556
        %1803 = vmatmul.bf16.gmra.mxu0 %v1248
        %v1804 = vpop.f32.mrf.mxu0
        %v1805 = vadd.f32 %v1786, %v1804
        %v1806 = vpop.f32.mrf.mxu0
        %v1807 = vadd.f32 %v1788, %v1806
        %1808 = vmatmul.bf16.gmra.mxu0 %v1252
        %v1809 = vpop.f32.mrf.mxu0
        %v1810 = vadd.f32 %v1791, %v1809
        %v1811 = vpop.f32.mrf.mxu0
        %v1812 = vadd.f32 %v1793, %v1811
        %1813 = vdwg.mxu0
        %1814 = vmatpush.bf16.msra.mxu0 %v1601
        %1815 = vmatpush.bf16.msra.mxu0 %v1598
        %1816 = vmatpush.bf16.msra.mxu0 %v1595
        %1817 = vmatpush.bf16.msra.mxu0 %v1592
        %1818 = vmatpush.bf16.msra.mxu0 %v1589
        %1819 = vmatpush.bf16.msra.mxu0 %v1586
        %1820 = vmatpush.bf16.msra.mxu0 %v1583
        %1821 = vmatpush.bf16.msra.mxu0 %v1580
        %1822 = vmatmul.bf16.gmra.mxu0 %v1249
        %v1823 = vpop.f32.mrf.mxu0
        %v1824 = vadd.f32 %v1805, %v1823
        %v1825 = vpop.f32.mrf.mxu0
        %v1826 = vadd.f32 %v1807, %v1825
        %1827 = vmatmul.bf16.gmra.mxu0 %v1253
        %v1828 = vpop.f32.mrf.mxu0
        %v1829 = vadd.f32 %v1810, %v1828
        %v1830 = vpop.f32.mrf.mxu0
        %v1831 = vadd.f32 %v1812, %v1830
        %1832 = vdwg.mxu0
        %1833 = vmatpush.bf16.msra.mxu0 0
        %1834 = vmatpush.bf16.msra.mxu0 0
        %1835 = vmatpush.bf16.msra.mxu0 0
        %1836 = vmatpush.bf16.msra.mxu0 0
        %1837 = vmatpush.bf16.msra.mxu0 0
        %1838 = vmatpush.bf16.msra.mxu0 %v1610
        %1839 = vmatpush.bf16.msra.mxu0 %v1607
        %1840 = vmatpush.bf16.msra.mxu0 %v1604
        %1841 = vmatmul.bf16.gmra.mxu0 %v1695
        %v1842 = vpop.f32.mrf.mxu0
        %v1843 = vadd.f32 %v1824, %v1842
        %v1844 = vpop.f32.mrf.mxu0
        %v1845 = vadd.f32 %v1826, %v1844
        %1846 = vmatmul.bf16.gmra.mxu0 %v1698
        %v1847 = vpop.f32.mrf.mxu0
        %v1848 = vadd.f32 %v1829, %v1847
        %v1849 = vpop.f32.mrf.mxu0
        %v1850 = vadd.f32 %v1831, %v1849
        %1851 = vdwg.mxu0
        %1852 = vmatpush.bf16.msra.mxu0 %v1554
        %1853 = vmatpush.bf16.msra.mxu0 %v1551
        %1854 = vmatpush.bf16.msra.mxu0 %v1548
        %1855 = vmatpush.bf16.msra.mxu0 %v1545
        %1856 = vmatpush.bf16.msra.mxu0 %v1542
        %1857 = vmatpush.bf16.msra.mxu0 %v1539
        %1858 = vmatpush.bf16.msra.mxu0 %v1536
        %1859 = vmatpush.bf16.msra.mxu0 %v1533
        %1860 = vmatmul.bf16.gmra.mxu0 %v1247
        %v1861 = vpop.f32.mrf.mxu0
        %v1862 = vadd.f32 %v1206, %v1861
        %v1863 = vpop.f32.mrf.mxu0
        %v1864 = vadd.f32 %v1211, %v1863
        %1865 = vmatmul.bf16.gmra.mxu0 %v1251
        %v1866 = vpop.f32.mrf.mxu0
        %v1867 = vadd.f32 %v1216, %v1866
        %v1868 = vpop.f32.mrf.mxu0
        %v1869 = vadd.f32 %v1221, %v1868
        %1870 = vdwg.mxu0
        %1871 = vmatpush.bf16.msra.mxu0 %v1578
        %1872 = vmatpush.bf16.msra.mxu0 %v1575
        %1873 = vmatpush.bf16.msra.mxu0 %v1572
        %1874 = vmatpush.bf16.msra.mxu0 %v1569
        %1875 = vmatpush.bf16.msra.mxu0 %v1566
        %1876 = vmatpush.bf16.msra.mxu0 %v1563
        %1877 = vmatpush.bf16.msra.mxu0 %v1560
        %1878 = vmatpush.bf16.msra.mxu0 %v1557
        %1879 = vmatmul.bf16.gmra.mxu0 %v1248
        %v1880 = vpop.f32.mrf.mxu0
        %v1881 = vadd.f32 %v1862, %v1880
        %v1882 = vpop.f32.mrf.mxu0
        %v1883 = vadd.f32 %v1864, %v1882
        %1884 = vmatmul.bf16.gmra.mxu0 %v1252
        %v1885 = vpop.f32.mrf.mxu0
        %v1886 = vadd.f32 %v1867, %v1885
        %v1887 = vpop.f32.mrf.mxu0
        %v1888 = vadd.f32 %v1869, %v1887
        %1889 = vdwg.mxu0
        %1890 = vmatpush.bf16.msra.mxu0 %v1602
        %1891 = vmatpush.bf16.msra.mxu0 %v1599
        %1892 = vmatpush.bf16.msra.mxu0 %v1596
        %1893 = vmatpush.bf16.msra.mxu0 %v1593
        %1894 = vmatpush.bf16.msra.mxu0 %v1590
        %1895 = vmatpush.bf16.msra.mxu0 %v1587
        %1896 = vmatpush.bf16.msra.mxu0 %v1584
        %1897 = vmatpush.bf16.msra.mxu0 %v1581
        %1898 = vmatmul.bf16.gmra.mxu0 %v1249
        %v1899 = vpop.f32.mrf.mxu0
        %v1900 = vadd.f32 %v1881, %v1899
        %v1901 = vpop.f32.mrf.mxu0
        %v1902 = vadd.f32 %v1883, %v1901
        %1903 = vmatmul.bf16.gmra.mxu0 %v1253
        %v1904 = vpop.f32.mrf.mxu0
        %v1905 = vadd.f32 %v1886, %v1904
        %v1906 = vpop.f32.mrf.mxu0
        %v1907 = vadd.f32 %v1888, %v1906
        %1908 = vdwg.mxu0
        %1909 = vmatpush.bf16.msra.mxu0 0
        %1910 = vmatpush.bf16.msra.mxu0 0
        %1911 = vmatpush.bf16.msra.mxu0 0
        %1912 = vmatpush.bf16.msra.mxu0 0
        %1913 = vmatpush.bf16.msra.mxu0 0
        %1914 = vmatpush.bf16.msra.mxu0 %v1611
        %1915 = vmatpush.bf16.msra.mxu0 %v1608
        %1916 = vmatpush.bf16.msra.mxu0 %v1605
        %1917 = vmatmul.bf16.gmra.mxu0 %v1695
        %v1918 = vpop.f32.mrf.mxu0
        %v1919 = vadd.f32 %v1900, %v1918
        %v1920 = vpop.f32.mrf.mxu0
        %v1921 = vadd.f32 %v1902, %v1920
        %1922 = vmatmul.bf16.gmra.mxu0 %v1698
        %v1923 = vpop.f32.mrf.mxu0
        %v1924 = vadd.f32 %v1905, %v1923
        %v1925 = vpop.f32.mrf.mxu0
        %v1926 = vadd.f32 %v1907, %v1925
        %1927 = vdwg.mxu0
        %v1928 = vld [vmem:[%s2] sm:$0x7]
        %v1930 = vperm.slane %v1928, 0
        %v1931 = vperm.slane %v1928, 1
        %v1932 = vperm.slane %v1928, 2
        %1933 = vrot.lane.b32.xlu0 %v1930, 109
        %v1934 = vpop.permute.xlu0 %1933
        %1935 = vrot.lane.b32.xlu0 %v1931, 109
        %v1936 = vpop.permute.xlu0 %1935
        %1937 = vrot.lane.b32.xlu0 %v1932, 109
        %v1938 = vpop.permute.xlu0 %1937
        %vm1939 = vcmask 891904
        %v1940 = vsel %vm1939, %v1934, %v1936
        %v1941 = vsel %vm1939, %v1936, %v1938
        %v1945 = vmul.f32 %v1767, %v1940
        %v1946 = vmul.f32 %v1843, %v1941
        %v1947 = vmul.f32 %v1919, %v1938
        %v1948 = vmul.f32 %v1769, %v1940
        %v1949 = vmul.f32 %v1845, %v1941
        %v1950 = vmul.f32 %v1921, %v1938
        %v1951 = vmul.f32 %v1772, %v1940
        %v1952 = vmul.f32 %v1848, %v1941
        %v1953 = vmul.f32 %v1924, %v1938
        %v1954 = vmul.f32 %v1774, %v1940
        %v1955 = vmul.f32 %v1850, %v1941
        %v1956 = vmul.f32 %v1926, %v1938
        %vm1957 = vcmask 150528
        %1958 = vst.msk [vmem:[%s453] sm:$0xf] %vm1957, 0
        %1959 = vst.msk [vmem:[%s453 + $0xc] sm:$0xf] %vm1957, 0
        %1960 = vst.msk [vmem:[%s453 + $0x18] sm:$0xf] %vm1957, 0
        %1961 = vst.msk [vmem:[%s453 + $0x24] sm:$0xf] %vm1957, 0
        %v1962 = vpack.c.bf16 %v1946, %v1945
        %v1963 = vpack.c.bf16 %v1947, %v1947
        %v1964 = vpack.c.bf16 %v1949, %v1948
        %v1965 = vpack.c.bf16 %v1950, %v1950
        %v1966 = vpack.c.bf16 %v1952, %v1951
        %v1967 = vpack.c.bf16 %v1953, %v1953
        %v1968 = vpack.c.bf16 %v1955, %v1954
        %v1969 = vpack.c.bf16 %v1956, %v1956
        %1978 = vrot.lane.b32.xlu0 %v1962, 19
        %v1979 = vpop.permute.xlu0 %1978
        %1980 = vrot.lane.b32.xlu0 %v1963, 19
        %v1981 = vpop.permute.xlu0 %1980
        %1982 = vrot.lane.b32.xlu0 %v1964, 19
        %v1983 = vpop.permute.xlu0 %1982
        %1984 = vrot.lane.b32.xlu0 %v1965, 19
        %v1985 = vpop.permute.xlu0 %1984
        %1986 = vrot.lane.b32.xlu0 %v1966, 19
        %v1987 = vpop.permute.xlu0 %1986
        %1988 = vrot.lane.b32.xlu0 %v1967, 19
        %v1989 = vpop.permute.xlu0 %1988
        %1990 = vrot.lane.b32.xlu0 %v1968, 19
        %v1991 = vpop.permute.xlu0 %1990
        %1992 = vrot.lane.b32.xlu0 %v1969, 19
        %v1993 = vpop.permute.xlu0 %1992
        %v1994 = vrot.slane %v1979, 4
        %v1995 = vrot.slane %v1983, 4
        %v1996 = vrot.slane %v1987, 4
        %v1997 = vrot.slane %v1991, 4
        %vm1998 = vcmask 154624
        %v1999 = vsel %vm1998, %v1994, %v1979
        %v2000 = vsel %vm1998, %v1994, %v1981
        %v2001 = vsel %vm1998, %v1995, %v1983
        %v2002 = vsel %vm1998, %v1995, %v1985
        %v2003 = vsel %vm1998, %v1996, %v1987
        %v2004 = vsel %vm1998, %v1996, %v1989
        %v2005 = vsel %vm1998, %v1997, %v1991
        %v2006 = vsel %vm1998, %v1997, %v1993
        %vm2015 = vcmask 1043608
        %vm2016 = vcmask 1047556
        %vm2017 = vmor %vm2016, %vm2015
        %2018 = vst.msk [vmem:[%s453] sm:$0xff] %vm2017, %v1999
        %vm2019 = vcmask 396288
        %2020 = vst.msk [vmem:[%s453 + $0x8] sm:$0xf] %vm2019, %v2000
        %2021 = vst.msk [vmem:[%s453 + $0xc] sm:$0xff] %vm2017, %v2001
        %2022 = vst.msk [vmem:[%s453 + $0x14] sm:$0xf] %vm2019, %v2002
        %2023 = vst.msk [vmem:[%s453 + $0x18] sm:$0xff] %vm2017, %v2003
        %2024 = vst.msk [vmem:[%s453 + $0x20] sm:$0xf] %vm2019, %v2004
        %2025 = vst.msk [vmem:[%s453 + $0x24] sm:$0xff] %vm2017, %v2005
        %2026 = vst.msk [vmem:[%s453 + $0x2c] sm:$0xf] %vm2019, %v2006
        %vm2027 = vcmask 552328
        %2028 = vst.msk [vmem:[%s453 + $0x8] sm:$0xf] %vm2027, 0
        %2029 = vst.msk [vmem:[%s453 + $0x14] sm:$0xf] %vm2027, 0
        %2030 = vst.msk [vmem:[%s453 + $0x20] sm:$0xf] %vm2027, 0
        %2031 = vst.msk [vmem:[%s453 + $0x2c] sm:$0xf] %vm2027, 0
      $region48: #{vae3d_hhdv_forward.5} parent=43 // pred_fallthru
        _
      %p2032 = pneg %p458
      // Predicated region
      $region49: #{vae3d_hhdv_forward.5} parent=43 // pred_check
        _
      $region50: #{vae3d_hhdv_forward.5} parent=43 // pred_check_branch
        %2034 = sbr.rel (%p458) target = $region52
      $region51: #{vae3d_hhdv_forward.5} parent=43 // pred_region
        %2035 = vst [vmem:[%s453] sm:$0xff] 0
        %vm2036 = vcmask 551936
        %2037 = vst.msk [vmem:[%s453 + $0x8] sm:$0xf] %vm2036, 0
        %2038 = vst [vmem:[%s453 + $0xc] sm:$0xff] 0
        %2039 = vst.msk [vmem:[%s453 + $0x14] sm:$0xf] %vm2036, 0
        %2040 = vst [vmem:[%s453 + $0x18] sm:$0xff] 0
        %2041 = vst.msk [vmem:[%s453 + $0x20] sm:$0xf] %vm2036, 0
        %2042 = vst [vmem:[%s453 + $0x24] sm:$0xff] 0
        %2043 = vst.msk [vmem:[%s453 + $0x2c] sm:$0xf] %vm2036, 0
      $region52: #{vae3d_hhdv_forward.5} parent=43 // pred_fallthru
        _
      %p2044 = scmp.lt.s32.totalorder %s21, 1
      %s2045 = scalar_select %p2044, %s21, 1
      %p2046 = scmp.lt.s32.totalorder %s22, 17
      %s2047 = scalar_select %p2046, %s22, 17
      %s2048 = smul.addr %s2047, 12
      %s2049 = smul.addr %s2045, 216
      %s2050 = sadd.s32 %s2048, %s2049
      %s2051 = smul.addr %s2050, 4
      %s2052 = scalar_lea.vmem %s6, %s2051
      // Predicated region
      $region53: #{vae3d_hhdv_forward.5} parent=43 // pred_check
        %p2053 = pneg %p224
      $region54: #{vae3d_hhdv_forward.5} parent=43 // pred_check_branch
        %2055 = sbr.rel (%p2053) target = $region56
      $region55: #{vae3d_hhdv_forward.5} parent=43 // pred_region
        _
      $region56: #{vae3d_hhdv_forward.5} parent=43 // pred_fallthru
        _
    $region44: #{vae3d_hhdv_forward.5} parent=5 // pred_fallthru
      _
    %p2056 = scmp.le.s32.totalorder 2, %s12
    // Predicated region
    $region57: #{vae3d_hhdv_forward.5} parent=5 // pred_check
      %p2057 = pneg %p2056
    $region58: #{vae3d_hhdv_forward.5} parent=5 // pred_check_branch
      %2059 = sbr.rel (%p2057) target = $region60
    $region59: #{vae3d_hhdv_forward.5} parent=5 // pred_region
      %s2060 = ssub.s32 %s12, 2
      // Predicated region
      $region61: #{vae3d_hhdv_forward.5} parent=59 // pred_check
        %p2061 = pneg %p230
      $region62: #{vae3d_hhdv_forward.5} parent=59 // pred_check_branch
        %2063 = sbr.rel (%p2061) target = $region64
      $region63: #{vae3d_hhdv_forward.5} parent=59 // pred_region
        %p2064 = scmp.lt.s32.totalorder %s23, 1
        %s2065 = scalar_select %p2064, %s23, 1
        %p2066 = scmp.lt.s32.totalorder %s24, 17
        %s2067 = scalar_select %p2066, %s24, 17
        %s2068 = smul.addr %s2067, 12
        %s2069 = smul.addr %s2065, 216
        %s2070 = sadd.s32 %s2068, %s2069
        %s2071 = smul.addr %s2070, 4
        %s2072 = scalar_lea.vmem %s6, %s2071
      $region64: #{vae3d_hhdv_forward.5} parent=59 // pred_fallthru
        _
    $region60: #{vae3d_hhdv_forward.5} parent=5 // pred_fallthru
      _
  $region6: #{vae3d_hhdv_forward.5} parent=0 // loop_footer
    %s16 = sadd.s32 1, %s12
  $region7: #{vae3d_hhdv_forward.5} parent=0 // loop_footer_branch
    %11 = sbr.rel target = $region3
  $region8: #{vae3d_hhdv_forward.5} parent=0 // loop_exit
    _

// kernel: vae3d_hhdv_forward.6
$region0: #{vae3d_hhdv_forward.6}
  #allocation0 [shape = 'u32[]', space=smem, size = 0x4, offset = 0x4, fixed_abs, tag = 'smem constant byte address 0x4 - core index']
  #allocation1 [shape = 'u32[72,128]{1,0:T(1,128)}', space=vmem, size = 0x9000, scoped, tag = 'internal scratch']
  #allocation2 [shape = 'bf16[432,286]{1,0:T(8,128)(2,1)}', space=vmem, size = 0x51000, scoped, tag = 'scratch operand']
  %s0 = inlined_call_operand.vmem [shape: bf16[4,432], index: 0, kind: input, shape index: {}]
  %s1 = inlined_call_operand.vmem [shape: f32[4,1], index: 1, kind: input, shape index: {}]
  %s2 = inlined_call_operand.vmem [shape: f32[1,324], index: 2, kind: input, shape index: {}]
  %s3 = inlined_call_operand.vmem [shape: bf16[2,18,32,324], index: 3, kind: input, shape index: {}, may-alias: {3,4,5}]
  %s4 = inlined_call_operand.vmem [shape: bf16[2,18,32,324], index: 4, kind: input, shape index: {}, may-alias: {3,4,5}]
  %s5 = inlined_call_operand.vmem [shape: bf16[2,18,32,324], index: 5, kind: input, shape index: {}, may-alias: {3,4,5}]
  %s6 = inlined_call_operand.vmem [shape: bf16[2,18,4,324], index: 6, kind: output, shape index: {}]
  %s7 = sld [smem:[#allocation0]]
  $region65: #{vae3d_hhdv_forward.6} parent=0
    _
  %s9 = ssub.s32 1, %s7
  %s10 = scalar_select 0, %s9, %s7
  loop: start=0, step=1, limit=38
  $region2: #{vae3d_hhdv_forward.6} parent=0 // loop_pre_header
    _
  $region3: #{vae3d_hhdv_forward.6} parent=0 // loop_header
    %s12 = sphi 0, %s16
    %p13 = scmp.ge.s32.totalorder %s12, 38
    %s19 = sphi 0, %s31
    %s20 = sphi 0, %s27
    %s21 = sphi 0, %s19
    %s22 = sphi 0, %s20
    %s23 = sphi 0, %s21
    %s24 = sphi 0, %s22
    %s32 = sphi 0, %s32
    %s34 = sphi 0, %s32
    %s35 = sphi 0, %s34
    %s49 = sphi 0, %s35
    %s53 = sphi 0, %s53
    %s55 = sphi 0, %s53
    %s56 = sphi 0, %s55
    %s70 = sphi 0, %s56
    %s74 = sphi 0, %s74
    %s76 = sphi 0, %s74
    %s77 = sphi 0, %s76
    %s91 = sphi 0, %s77
    %s109 = sphi 0, %s111
    %s112 = sphi 0, %s109
    %s113 = sphi 0, %s112
    %s129 = sphi 0, %s113
    %s145 = sphi 0, %s147
    %s148 = sphi 0, %s145
    %s149 = sphi 0, %s148
    %s165 = sphi 0, %s149
    %s183 = sphi 0, %s185
    %s186 = sphi 0, %s183
    %s187 = sphi 0, %s186
    %s203 = sphi 0, %s187
    %s211 = sphi 0, %s213
    %s214 = sphi 0, %s211
    %s215 = sphi 0, %s214
    %s231 = sphi 0, %s215
  $region4: #{vae3d_hhdv_forward.6} parent=0 // loop_header_branch
    %15 = sbr.rel (%p13) target = $region8
  $region5: #{vae3d_hhdv_forward.6} parent=0 // loop_body
    %s17 = ssub.s32 %s12, 1
    %s18 = ssub.s32 %s12, 2
    %s25 = sadd.s32 1, %s20
    %p26 = scmp.ge.s32.totalorder %s25, 18
    %s27 = scalar_select %p26, 0, %s25
    %s28 = sadd.s32 1, %s19
    %s29 = scalar_select %p26, %s28, %s19
    %p30 = scmp.ge.s32.totalorder %s29, 2
    %s31 = scalar_select %p30, 0, %s29
    %s33 = sadd.s32 %s32, 1
    %p36 = scmp.eq.s32.totalorder %s12, 35
    %p37 = scmp.ne.s32.totalorder %s32, %s34
    %p38 = scmp.eq.s32.totalorder %s12, 0
    %p39 = por %p37, %p38
    %p40 = scmp.ne.s32.totalorder %s32, %s34
    %p41 = scmp.eq.s32.totalorder %s17, 35
    %p42 = por %p40, %p41
    %p43 = scmp.ne.s32.totalorder %s34, %s35
    %p44 = scmp.eq.s32.totalorder %s17, 0
    %p45 = por %p43, %p44
    %p46 = scmp.ne.s32.totalorder %s34, %s35
    %p47 = scmp.eq.s32.totalorder %s18, 35
    %p48 = por %p46, %p47
    %p50 = scmp.ne.s32.totalorder %s35, %s49
    %p51 = scmp.eq.s32.totalorder %s18, 0
    %p52 = por %p50, %p51
    %s54 = sadd.s32 %s53, 1
    %p57 = scmp.eq.s32.totalorder %s12, 35
    %p58 = scmp.ne.s32.totalorder %s53, %s55
    %p59 = scmp.eq.s32.totalorder %s12, 0
    %p60 = por %p58, %p59
    %p61 = scmp.ne.s32.totalorder %s53, %s55
    %p62 = scmp.eq.s32.totalorder %s17, 35
    %p63 = por %p61, %p62
    %p64 = scmp.ne.s32.totalorder %s55, %s56
    %p65 = scmp.eq.s32.totalorder %s17, 0
    %p66 = por %p64, %p65
    %p67 = scmp.ne.s32.totalorder %s55, %s56
    %p68 = scmp.eq.s32.totalorder %s18, 35
    %p69 = por %p67, %p68
    %p71 = scmp.ne.s32.totalorder %s56, %s70
    %p72 = scmp.eq.s32.totalorder %s18, 0
    %p73 = por %p71, %p72
    %s75 = sadd.s32 %s74, 1
    %p78 = scmp.eq.s32.totalorder %s12, 35
    %p79 = scmp.ne.s32.totalorder %s74, %s76
    %p80 = scmp.eq.s32.totalorder %s12, 0
    %p81 = por %p79, %p80
    %p82 = scmp.ne.s32.totalorder %s74, %s76
    %p83 = scmp.eq.s32.totalorder %s17, 35
    %p84 = por %p82, %p83
    %p85 = scmp.ne.s32.totalorder %s76, %s77
    %p86 = scmp.eq.s32.totalorder %s17, 0
    %p87 = por %p85, %p86
    %p88 = scmp.ne.s32.totalorder %s76, %s77
    %p89 = scmp.eq.s32.totalorder %s18, 35
    %p90 = por %p88, %p89
    %p92 = scmp.ne.s32.totalorder %s77, %s91
    %p93 = scmp.eq.s32.totalorder %s18, 0
    %p94 = por %p92, %p93
    %s95 = ssub.s32 %s20, 1
    %p96 = scmp.gt.s32.totalorder %s95, 0
    %s97 = scalar_select %p96, %s95, 0
    %p98 = scmp.lt.s32.totalorder %s97, 17
    %s99 = scalar_select %p98, %s97, 17
    %s100 = ssub.s32 %s27, 1
    %p101 = scmp.gt.s32.totalorder %s100, 0
    %s102 = scalar_select %p101, %s100, 0
    %p103 = scmp.lt.s32.totalorder %s102, 17
    %s104 = scalar_select %p103, %s102, 17
    %s105 = ssub.s32 %s19, %s31
    %s106 = ssub.s32 %s99, %s104
    %s107 = sor.u32 %s105, %s106
    %p108 = scmp.eq.s32.totalorder %s107, 0
    %s110 = sadd.s32 %s109, 1
    %s111 = scalar_select %p108, %s109, %s110
    %p114 = pneg %p108
    %p115 = scmp.eq.s32.totalorder %s12, 35
    %p116 = por %p114, %p115
    %p117 = scmp.ne.s32.totalorder %s109, %s112
    %p118 = scmp.eq.s32.totalorder %s12, 0
    %p119 = por %p117, %p118
    %p120 = scmp.ne.s32.totalorder %s109, %s112
    %p121 = scmp.eq.s32.totalorder %s17, 35
    %p122 = por %p120, %p121
    %p123 = scmp.ne.s32.totalorder %s112, %s113
    %p124 = scmp.eq.s32.totalorder %s17, 0
    %p125 = por %p123, %p124
    %p126 = scmp.ne.s32.totalorder %s112, %s113
    %p127 = scmp.eq.s32.totalorder %s18, 35
    %p128 = por %p126, %p127
    %p130 = scmp.ne.s32.totalorder %s113, %s129
    %p131 = scmp.eq.s32.totalorder %s18, 0
    %p132 = por %p130, %p131
    %p133 = scmp.gt.s32.totalorder %s20, 0
    %s134 = scalar_select %p133, %s20, 0
    %p135 = scmp.lt.s32.totalorder %s134, 17
    %s136 = scalar_select %p135, %s134, 17
    %p137 = scmp.gt.s32.totalorder %s27, 0
    %s138 = scalar_select %p137, %s27, 0
    %p139 = scmp.lt.s32.totalorder %s138, 17
    %s140 = scalar_select %p139, %s138, 17
    %s141 = ssub.s32 %s19, %s31
    %s142 = ssub.s32 %s136, %s140
    %s143 = sor.u32 %s141, %s142
    %p144 = scmp.eq.s32.totalorder %s143, 0
    %s146 = sadd.s32 %s145, 1
    %s147 = scalar_select %p144, %s145, %s146
    %p150 = pneg %p144
    %p151 = scmp.eq.s32.totalorder %s12, 35
    %p152 = por %p150, %p151
    %p153 = scmp.ne.s32.totalorder %s145, %s148
    %p154 = scmp.eq.s32.totalorder %s12, 0
    %p155 = por %p153, %p154
    %p156 = scmp.ne.s32.totalorder %s145, %s148
    %p157 = scmp.eq.s32.totalorder %s17, 35
    %p158 = por %p156, %p157
    %p159 = scmp.ne.s32.totalorder %s148, %s149
    %p160 = scmp.eq.s32.totalorder %s17, 0
    %p161 = por %p159, %p160
    %p162 = scmp.ne.s32.totalorder %s148, %s149
    %p163 = scmp.eq.s32.totalorder %s18, 35
    %p164 = por %p162, %p163
    %p166 = scmp.ne.s32.totalorder %s149, %s165
    %p167 = scmp.eq.s32.totalorder %s18, 0
    %p168 = por %p166, %p167
    %s169 = sadd.s32 %s20, 1
    %p170 = scmp.gt.s32.totalorder %s169, 0
    %s171 = scalar_select %p170, %s169, 0
    %p172 = scmp.lt.s32.totalorder %s171, 17
    %s173 = scalar_select %p172, %s171, 17
    %s174 = sadd.s32 %s27, 1
    %p175 = scmp.gt.s32.totalorder %s174, 0
    %s176 = scalar_select %p175, %s174, 0
    %p177 = scmp.lt.s32.totalorder %s176, 17
    %s178 = scalar_select %p177, %s176, 17
    %s179 = ssub.s32 %s19, %s31
    %s180 = ssub.s32 %s173, %s178
    %s181 = sor.u32 %s179, %s180
    %p182 = scmp.eq.s32.totalorder %s181, 0
    %s184 = sadd.s32 %s183, 1
    %s185 = scalar_select %p182, %s183, %s184
    %p188 = pneg %p182
    %p189 = scmp.eq.s32.totalorder %s12, 35
    %p190 = por %p188, %p189
    %p191 = scmp.ne.s32.totalorder %s183, %s186
    %p192 = scmp.eq.s32.totalorder %s12, 0
    %p193 = por %p191, %p192
    %p194 = scmp.ne.s32.totalorder %s183, %s186
    %p195 = scmp.eq.s32.totalorder %s17, 35
    %p196 = por %p194, %p195
    %p197 = scmp.ne.s32.totalorder %s186, %s187
    %p198 = scmp.eq.s32.totalorder %s17, 0
    %p199 = por %p197, %p198
    %p200 = scmp.ne.s32.totalorder %s186, %s187
    %p201 = scmp.eq.s32.totalorder %s18, 35
    %p202 = por %p200, %p201
    %p204 = scmp.ne.s32.totalorder %s187, %s203
    %p205 = scmp.eq.s32.totalorder %s18, 0
    %p206 = por %p204, %p205
    %s207 = ssub.s32 %s19, %s31
    %s208 = ssub.s32 %s20, %s27
    %s209 = sor.u32 %s207, %s208
    %p210 = scmp.eq.s32.totalorder %s209, 0
    %s212 = sadd.s32 %s211, 1
    %s213 = scalar_select %p210, %s211, %s212
    %p216 = pneg %p210
    %p217 = scmp.eq.s32.totalorder %s12, 35
    %p218 = por %p216, %p217
    %p219 = scmp.ne.s32.totalorder %s211, %s214
    %p220 = scmp.eq.s32.totalorder %s12, 0
    %p221 = por %p219, %p220
    %p222 = scmp.ne.s32.totalorder %s211, %s214
    %p223 = scmp.eq.s32.totalorder %s17, 35
    %p224 = por %p222, %p223
    %p225 = scmp.ne.s32.totalorder %s214, %s215
    %p226 = scmp.eq.s32.totalorder %s17, 0
    %p227 = por %p225, %p226
    %p228 = scmp.ne.s32.totalorder %s214, %s215
    %p229 = scmp.eq.s32.totalorder %s18, 35
    %p230 = por %p228, %p229
    %p232 = scmp.ne.s32.totalorder %s215, %s231
    %p233 = scmp.eq.s32.totalorder %s18, 0
    %p234 = por %p232, %p233
    %p235 = scmp.le.s32.totalorder 1, %s12
    %p236 = scmp.lt.s32.totalorder %s12, 37
    %p237 = pnand %p235, %p236
    %p238 = pneg %p237
    // Predicated region
    $region9: #{vae3d_hhdv_forward.6} parent=5 // pred_check
      _
    $region10: #{vae3d_hhdv_forward.6} parent=5 // pred_check_branch
      %240 = sbr.rel (%p237) target = $region12
    $region11: #{vae3d_hhdv_forward.6} parent=5 // pred_region
      %s241 = ssub.s32 %s12, 1
      // Predicated region
      $region13: #{vae3d_hhdv_forward.6} parent=11 // pred_check
        %p242 = pneg %p45
      $region14: #{vae3d_hhdv_forward.6} parent=11 // pred_check_branch
        %244 = sbr.rel (%p242) target = $region16
      $region15: #{vae3d_hhdv_forward.6} parent=11 // pred_region
        _
      $region16: #{vae3d_hhdv_forward.6} parent=11 // pred_fallthru
        _
      // Predicated region
      $region17: #{vae3d_hhdv_forward.6} parent=11 // pred_check
        %p245 = pneg %p66
      $region18: #{vae3d_hhdv_forward.6} parent=11 // pred_check_branch
        %247 = sbr.rel (%p245) target = $region20
      $region19: #{vae3d_hhdv_forward.6} parent=11 // pred_region
        _
      $region20: #{vae3d_hhdv_forward.6} parent=11 // pred_fallthru
        _
      // Predicated region
      $region21: #{vae3d_hhdv_forward.6} parent=11 // pred_check
        %p248 = pneg %p87
      $region22: #{vae3d_hhdv_forward.6} parent=11 // pred_check_branch
        %250 = sbr.rel (%p248) target = $region24
      $region23: #{vae3d_hhdv_forward.6} parent=11 // pred_region
        _
      $region24: #{vae3d_hhdv_forward.6} parent=11 // pred_fallthru
        _
    $region12: #{vae3d_hhdv_forward.6} parent=5 // pred_fallthru
      _
    %p251 = scmp.lt.s32.totalorder %s12, 36
    // Predicated region
    $region25: #{vae3d_hhdv_forward.6} parent=5 // pred_check
      %p252 = pneg %p251
    $region26: #{vae3d_hhdv_forward.6} parent=5 // pred_check_branch
      %254 = sbr.rel (%p252) target = $region28
    $region27: #{vae3d_hhdv_forward.6} parent=5 // pred_region
      // Predicated region
      $region29: #{vae3d_hhdv_forward.6} parent=27 // pred_check
        %p255 = pneg %p119
      $region30: #{vae3d_hhdv_forward.6} parent=27 // pred_check_branch
        %257 = sbr.rel (%p255) target = $region32
      $region31: #{vae3d_hhdv_forward.6} parent=27 // pred_region
        %s258 = ssub.s32 %s20, 1
        %p259 = scmp.gt.s32.totalorder %s258, 0
        %s260 = scalar_select %p259, %s258, 0
        %p261 = scmp.lt.s32.totalorder %s260, 17
        %s262 = scalar_select %p261, %s260, 17
        %p263 = scmp.lt.s32.totalorder %s19, 1
        %s264 = scalar_select %p263, %s19, 1
        %p265 = scmp.lt.s32.totalorder %s262, 17
        %s266 = scalar_select %p265, %s262, 17
        %s267 = smul.addr %s266, 12
        %s268 = smul.addr %s264, 216
        %s269 = sadd.s32 %s267, %s268
        %s270 = smul.addr %s269, 4
        %s271 = scalar_lea.vmem %s3, %s270
        %s272 = ssub.s32 %s20, 1
        %p273 = scmp.gt.s32.totalorder %s272, 0
        %s274 = scalar_select %p273, %s272, 0
        %p275 = scmp.lt.s32.totalorder %s274, 17
        %s276 = scalar_select %p275, %s274, 17
      $region32: #{vae3d_hhdv_forward.6} parent=27 // pred_fallthru
        _
      // Predicated region
      $region33: #{vae3d_hhdv_forward.6} parent=27 // pred_check
        %p277 = pneg %p155
      $region34: #{vae3d_hhdv_forward.6} parent=27 // pred_check_branch
        %279 = sbr.rel (%p277) target = $region36
      $region35: #{vae3d_hhdv_forward.6} parent=27 // pred_region
        %p280 = scmp.gt.s32.totalorder %s20, 0
        %s281 = scalar_select %p280, %s20, 0
        %p282 = scmp.lt.s32.totalorder %s281, 17
        %s283 = scalar_select %p282, %s281, 17
        %p284 = scmp.lt.s32.totalorder %s19, 1
        %s285 = scalar_select %p284, %s19, 1
        %p286 = scmp.lt.s32.totalorder %s283, 17
        %s287 = scalar_select %p286, %s283, 17
        %s288 = smul.addr %s287, 12
        %s289 = smul.addr %s285, 216
        %s290 = sadd.s32 %s288, %s289
        %s291 = smul.addr %s290, 4
        %s292 = scalar_lea.vmem %s4, %s291
        %p293 = scmp.gt.s32.totalorder %s20, 0
        %s294 = scalar_select %p293, %s20, 0
        %p295 = scmp.lt.s32.totalorder %s294, 17
        %s296 = scalar_select %p295, %s294, 17
      $region36: #{vae3d_hhdv_forward.6} parent=27 // pred_fallthru
        _
      // Predicated region
      $region37: #{vae3d_hhdv_forward.6} parent=27 // pred_check
        %p297 = pneg %p193
      $region38: #{vae3d_hhdv_forward.6} parent=27 // pred_check_branch
        %299 = sbr.rel (%p297) target = $region40
      $region39: #{vae3d_hhdv_forward.6} parent=27 // pred_region
        %s300 = sadd.s32 %s20, 1
        %p301 = scmp.gt.s32.totalorder %s300, 0
        %s302 = scalar_select %p301, %s300, 0
        %p303 = scmp.lt.s32.totalorder %s302, 17
        %s304 = scalar_select %p303, %s302, 17
        %p305 = scmp.lt.s32.totalorder %s19, 1
        %s306 = scalar_select %p305, %s19, 1
        %p307 = scmp.lt.s32.totalorder %s304, 17
        %s308 = scalar_select %p307, %s304, 17
        %s309 = smul.addr %s308, 12
        %s310 = smul.addr %s306, 216
        %s311 = sadd.s32 %s309, %s310
        %s312 = smul.addr %s311, 4
        %s313 = scalar_lea.vmem %s5, %s312
        %s314 = sadd.s32 %s20, 1
        %p315 = scmp.gt.s32.totalorder %s314, 0
        %s316 = scalar_select %p315, %s314, 0
        %p317 = scmp.lt.s32.totalorder %s316, 17
        %s318 = scalar_select %p317, %s316, 17
      $region40: #{vae3d_hhdv_forward.6} parent=27 // pred_fallthru
        _
    $region28: #{vae3d_hhdv_forward.6} parent=5 // pred_fallthru
      _
    %p319 = scmp.le.s32.totalorder 1, %s12
    %p320 = scmp.lt.s32.totalorder %s12, 37
    %p321 = pnand %p319, %p320
    %p322 = pneg %p321
    // Predicated region
    $region41: #{vae3d_hhdv_forward.6} parent=5 // pred_check
      _
    $region42: #{vae3d_hhdv_forward.6} parent=5 // pred_check_branch
      %324 = sbr.rel (%p321) target = $region44
    $region43: #{vae3d_hhdv_forward.6} parent=5 // pred_region
      %s325 = ssub.s32 %s12, 1
      %p326 = pneg %p45
      %p327 = pneg %p42
      %p328 = pneg %p66
      %p329 = pneg %p63
      %p330 = pneg %p87
      %p331 = pneg %p84
      %s332 = ssub.s32 %s22, 1
      %p333 = scmp.gt.s32.totalorder %s332, 0
      %s334 = scalar_select %p333, %s332, 0
      %p335 = scmp.lt.s32.totalorder %s334, 17
      %s336 = scalar_select %p335, %s334, 17
      %p337 = scmp.lt.s32.totalorder %s21, 1
      %s338 = scalar_select %p337, %s21, 1
      %p339 = scmp.lt.s32.totalorder %s336, 17
      %s340 = scalar_select %p339, %s336, 17
      %s341 = smul.addr %s340, 12
      %s342 = smul.addr %s338, 216
      %s343 = sadd.s32 %s341, %s342
      %s344 = smul.addr %s343, 4
      %s345 = scalar_lea.vmem %s3, %s344
      %p346 = pneg %p125
      %p347 = pneg %p122
      %p348 = scmp.gt.s32.totalorder %s22, 0
      %s349 = scalar_select %p348, %s22, 0
      %p350 = scmp.lt.s32.totalorder %s349, 17
      %s351 = scalar_select %p350, %s349, 17
      %p352 = scmp.lt.s32.totalorder %s21, 1
      %s353 = scalar_select %p352, %s21, 1
      %p354 = scmp.lt.s32.totalorder %s351, 17
      %s355 = scalar_select %p354, %s351, 17
      %s356 = smul.addr %s355, 12
      %s357 = smul.addr %s353, 216
      %s358 = sadd.s32 %s356, %s357
      %s359 = smul.addr %s358, 4
      %s360 = scalar_lea.vmem %s4, %s359
      %p361 = pneg %p161
      %p362 = pneg %p158
      %s363 = sadd.s32 %s22, 1
      %p364 = scmp.gt.s32.totalorder %s363, 0
      %s365 = scalar_select %p364, %s363, 0
      %p366 = scmp.lt.s32.totalorder %s365, 17
      %s367 = scalar_select %p366, %s365, 17
      %p368 = scmp.lt.s32.totalorder %s21, 1
      %s369 = scalar_select %p368, %s21, 1
      %p370 = scmp.lt.s32.totalorder %s367, 17
      %s371 = scalar_select %p370, %s367, 17
      %s372 = smul.addr %s371, 12
      %s373 = smul.addr %s369, 216
      %s374 = sadd.s32 %s372, %s373
      %s375 = smul.addr %s374, 4
      %s376 = scalar_lea.vmem %s5, %s375
      %p377 = pneg %p199
      %p378 = pneg %p196
      %p379 = pneg %p227
      %p380 = pneg %p224
      %p381 = scmp.lt.s32.totalorder %s21, 1
      %s382 = scalar_select %p381, %s21, 1
      %p383 = scmp.lt.s32.totalorder %s22, 17
      %s384 = scalar_select %p383, %s22, 17
      %s385 = smul.addr %s384, 3
      %s386 = smul.addr %s382, 54
      %s387 = sadd.s32 %s385, %s386
      %s388 = smul.addr %s387, 2
      %s389 = scalar_lea.vmem %s6, %s388
      %s390 = ssub.s32 %s22, 1
      %p391 = scmp.gt.s32.totalorder %s390, 0
      %s392 = scalar_select %p391, %s390, 0
      %p393 = scmp.lt.s32.totalorder %s392, 17
      %s394 = scalar_select %p393, %s392, 17
      %p395 = scmp.lt.s32.totalorder %s21, 1
      %s396 = scalar_select %p395, %s21, 1
      %p397 = scmp.lt.s32.totalorder %s394, 17
      %s398 = scalar_select %p397, %s394, 17
      %s399 = smul.addr %s398, 12
      %s400 = smul.addr %s396, 216
      %s401 = sadd.s32 %s399, %s400
      %s402 = smul.addr %s401, 4
      %s403 = scalar_lea.vmem %s3, %s402
      %s404 = ssub.s32 %s22, 1
      %p405 = scmp.gt.s32.totalorder %s404, 0
      %s406 = scalar_select %p405, %s404, 0
      %p407 = scmp.lt.s32.totalorder %s406, 17
      %s408 = scalar_select %p407, %s406, 17
      %p409 = scmp.gt.s32.totalorder %s22, 0
      %s410 = scalar_select %p409, %s22, 0
      %p411 = scmp.lt.s32.totalorder %s410, 17
      %s412 = scalar_select %p411, %s410, 17
      %p413 = scmp.lt.s32.totalorder %s21, 1
      %s414 = scalar_select %p413, %s21, 1
      %p415 = scmp.lt.s32.totalorder %s412, 17
      %s416 = scalar_select %p415, %s412, 17
      %s417 = smul.addr %s416, 12
      %s418 = smul.addr %s414, 216
      %s419 = sadd.s32 %s417, %s418
      %s420 = smul.addr %s419, 4
      %s421 = scalar_lea.vmem %s4, %s420
      %p422 = scmp.gt.s32.totalorder %s22, 0
      %s423 = scalar_select %p422, %s22, 0
      %p424 = scmp.lt.s32.totalorder %s423, 17
      %s425 = scalar_select %p424, %s423, 17
      %s426 = sadd.s32 %s22, 1
      %p427 = scmp.gt.s32.totalorder %s426, 0
      %s428 = scalar_select %p427, %s426, 0
      %p429 = scmp.lt.s32.totalorder %s428, 17
      %s430 = scalar_select %p429, %s428, 17
      %p431 = scmp.lt.s32.totalorder %s21, 1
      %s432 = scalar_select %p431, %s21, 1
      %p433 = scmp.lt.s32.totalorder %s430, 17
      %s434 = scalar_select %p433, %s430, 17
      %s435 = smul.addr %s434, 12
      %s436 = smul.addr %s432, 216
      %s437 = sadd.s32 %s435, %s436
      %s438 = smul.addr %s437, 4
      %s439 = scalar_lea.vmem %s5, %s438
      %s440 = sadd.s32 %s22, 1
      %p441 = scmp.gt.s32.totalorder %s440, 0
      %s442 = scalar_select %p441, %s440, 0
      %p443 = scmp.lt.s32.totalorder %s442, 17
      %s444 = scalar_select %p443, %s442, 17
      %p445 = scmp.lt.s32.totalorder %s21, 1
      %s446 = scalar_select %p445, %s21, 1
      %p447 = scmp.lt.s32.totalorder %s22, 17
      %s448 = scalar_select %p447, %s22, 17
      %s449 = smul.addr %s448, 3
      %s450 = smul.addr %s446, 54
      %s451 = sadd.s32 %s449, %s450
      %s452 = smul.addr %s451, 2
      %s453 = scalar_lea.vmem %s6, %s452
      %p455 = scmp.ge.s32.totalorder %s22, 1
      %p456 = scmp.le.s32.totalorder %s22, 16
      %p457 = pnand %p455, %p456
      %p458 = pneg %p457
      // Predicated region
      $region45: #{vae3d_hhdv_forward.6} parent=43 // pred_check
        _
      $region46: #{vae3d_hhdv_forward.6} parent=43 // pred_check_branch
        %460 = sbr.rel (%p457) target = $region48
      $region47: #{vae3d_hhdv_forward.6} parent=43 // pred_region
        %v461 = vld [vmem:[%s403] sm:$0xff]
        %v462 = vld [vmem:[%s403 + $0x8] sm:$0xf]
        %v463 = vld [vmem:[%s403 + $0xc] sm:$0xff]
        %v464 = vld [vmem:[%s403 + $0x14] sm:$0xf]
        %v465 = vld [vmem:[%s421] sm:$0xff]
        %v466 = vld [vmem:[%s421 + $0x8] sm:$0xf]
        %v467 = vld [vmem:[%s421 + $0xc] sm:$0xff]
        %v468 = vld [vmem:[%s421 + $0x14] sm:$0xf]
        %v469 = vld [vmem:[%s439] sm:$0xff]
        %v470 = vld [vmem:[%s439 + $0x8] sm:$0xf]
        %v471 = vld [vmem:[%s439 + $0xc] sm:$0xff]
        %v472 = vld [vmem:[%s439 + $0x14] sm:$0xf]
        %473 = vst [vmem:[#allocation2] sm:$0xff] %v461
        %vm474 = vcmask 240640
        %475 = vst.msk [vmem:[#allocation2 + $0x8] sm:$0xf] %vm474, %v462
        %476 = vst [vmem:[#allocation2 + $0xc] sm:$0xff] %v463
        %477 = vst.msk [vmem:[#allocation2 + $0x14] sm:$0xf] %vm474, %v464
        %482 = vrot.lane.b32.xlu0 %v461, 127
        %v483 = vpop.permute.xlu0 %482
        %484 = vrot.lane.b32.xlu0 %v462, 127
        %v485 = vpop.permute.xlu0 %484
        %486 = vrot.lane.b32.xlu0 %v463, 127
        %v487 = vpop.permute.xlu0 %486
        %488 = vrot.lane.b32.xlu0 %v464, 127
        %v489 = vpop.permute.xlu0 %488
        %v490 = vrot.slane %v483, 4
        %v491 = vrot.slane %v485, 4
        %v492 = vrot.slane %v487, 4
        %v493 = vrot.slane %v489, 4
        %vm494 = vcmask 1043456
        %v495 = vsel %vm494, %v490, %v491
        %vm496 = vcmask 1039360
        %v497 = vsel %vm496, %v483, %v495
        %v498 = vsel %vm494, %v492, %v493
        %v499 = vsel %vm496, %v487, %v498
        %504 = vst [vmem:[#allocation2 + $0x18] sm:$0xff] %v497
        %505 = vst.msk [vmem:[#allocation2 + $0x20] sm:$0xf] %vm474, %v485
        %506 = vst [vmem:[#allocation2 + $0x24] sm:$0xff] %v499
        %507 = vst.msk [vmem:[#allocation2 + $0x2c] sm:$0xf] %vm474, %v489
        %508 = vrot.lane.b32.xlu0 %v461, 126
        %v509 = vpop.permute.xlu0 %508
        %510 = vrot.lane.b32.xlu0 %v462, 126
        %v511 = vpop.permute.xlu0 %510
        %512 = vrot.lane.b32.xlu0 %v463, 126
        %v513 = vpop.permute.xlu0 %512
        %514 = vrot.lane.b32.xlu0 %v464, 126
        %v515 = vpop.permute.xlu0 %514
        %v516 = vrot.slane %v509, 4
        %v517 = vrot.slane %v511, 4
        %v518 = vrot.slane %v513, 4
        %v519 = vrot.slane %v515, 4
        %v520 = vsel %vm494, %v516, %v517
        %vm521 = vcmask 1031168
        %v522 = vsel %vm521, %v509, %v520
        %v523 = vsel %vm494, %v518, %v519
        %v524 = vsel %vm521, %v513, %v523
        %529 = vst [vmem:[#allocation2 + $0x30] sm:$0xff] %v522
        %530 = vst.msk [vmem:[#allocation2 + $0x38] sm:$0xf] %vm474, %v511
        %531 = vst [vmem:[#allocation2 + $0x3c] sm:$0xff] %v524
        %532 = vst.msk [vmem:[#allocation2 + $0x44] sm:$0xf] %vm474, %v515
        %533 = vrot.lane.b32.xlu0 %v461, 110
        %v534 = vpop.permute.xlu0 %533
        %535 = vrot.lane.b32.xlu0 %v462, 110
        %v536 = vpop.permute.xlu0 %535
        %537 = vrot.lane.b32.xlu0 %v463, 110
        %v538 = vpop.permute.xlu0 %537
        %539 = vrot.lane.b32.xlu0 %v464, 110
        %v540 = vpop.permute.xlu0 %539
        %v541 = vrot.slane %v534, 4
        %v542 = vrot.slane %v536, 4
        %v543 = vrot.slane %v538, 4
        %v544 = vrot.slane %v540, 4
        %v545 = vsel %vm494, %v541, %v542
        %vm546 = vcmask 900096
        %v547 = vsel %vm546, %v534, %v545
        %v548 = vsel %vm494, %v543, %v544
        %v549 = vsel %vm546, %v538, %v548
        %554 = vst [vmem:[#allocation2 + $0x48] sm:$0xff] %v547
        %555 = vst.msk [vmem:[#allocation2 + $0x50] sm:$0xf] %vm474, %v536
        %556 = vst [vmem:[#allocation2 + $0x54] sm:$0xff] %v549
        %557 = vst.msk [vmem:[#allocation2 + $0x5c] sm:$0xf] %vm474, %v540
        %558 = vrot.lane.b32.xlu0 %v461, 109
        %v559 = vpop.permute.xlu0 %558
        %560 = vrot.lane.b32.xlu0 %v462, 109
        %v561 = vpop.permute.xlu0 %560
        %562 = vrot.lane.b32.xlu0 %v463, 109
        %v563 = vpop.permute.xlu0 %562
        %564 = vrot.lane.b32.xlu0 %v464, 109
        %v565 = vpop.permute.xlu0 %564
        %v566 = vrot.slane %v559, 4
        %v567 = vrot.slane %v561, 4
        %v568 = vrot.slane %v563, 4
        %v569 = vrot.slane %v565, 4
        %v570 = vsel %vm494, %v566, %v567
        %vm571 = vcmask 891904
        %v572 = vsel %vm571, %v559, %v570
        %v573 = vsel %vm494, %v568, %v569
        %v574 = vsel %vm571, %v563, %v573
        %579 = vst [vmem:[#allocation2 + $0x60] sm:$0xff] %v572
        %580 = vst.msk [vmem:[#allocation2 + $0x68] sm:$0xf] %vm474, %v561
        %581 = vst [vmem:[#allocation2 + $0x6c] sm:$0xff] %v574
        %582 = vst.msk [vmem:[#allocation2 + $0x74] sm:$0xf] %vm474, %v565
        %583 = vrot.lane.b32.xlu0 %v461, 108
        %v584 = vpop.permute.xlu0 %583
        %585 = vrot.lane.b32.xlu0 %v462, 108
        %v586 = vpop.permute.xlu0 %585
        %587 = vrot.lane.b32.xlu0 %v463, 108
        %v588 = vpop.permute.xlu0 %587
        %589 = vrot.lane.b32.xlu0 %v464, 108
        %v590 = vpop.permute.xlu0 %589
        %v591 = vrot.slane %v584, 4
        %v592 = vrot.slane %v586, 4
        %v593 = vrot.slane %v588, 4
        %v594 = vrot.slane %v590, 4
        %v595 = vsel %vm494, %v591, %v592
        %vm596 = vcmask 883712
        %v597 = vsel %vm596, %v584, %v595
        %v598 = vsel %vm494, %v593, %v594
        %v599 = vsel %vm596, %v588, %v598
        %604 = vst [vmem:[#allocation2 + $0x78] sm:$0xff] %v597
        %605 = vst.msk [vmem:[#allocation2 + $0x80] sm:$0xf] %vm474, %v586
        %606 = vst [vmem:[#allocation2 + $0x84] sm:$0xff] %v599
        %607 = vst.msk [vmem:[#allocation2 + $0x8c] sm:$0xf] %vm474, %v590
        %608 = vrot.lane.b32.xlu0 %v461, 92
        %v609 = vpop.permute.xlu0 %608
        %610 = vrot.lane.b32.xlu0 %v462, 92
        %v611 = vpop.permute.xlu0 %610
        %612 = vrot.lane.b32.xlu0 %v463, 92
        %v613 = vpop.permute.xlu0 %612
        %614 = vrot.lane.b32.xlu0 %v464, 92
        %v615 = vpop.permute.xlu0 %614
        %v616 = vrot.slane %v609, 4
        %v617 = vrot.slane %v611, 4
        %v618 = vrot.slane %v613, 4
        %v619 = vrot.slane %v615, 4
        %v620 = vsel %vm494, %v616, %v617
        %vm621 = vcmask 752640
        %v622 = vsel %vm621, %v609, %v620
        %v623 = vsel %vm494, %v618, %v619
        %v624 = vsel %vm621, %v613, %v623
        %629 = vst [vmem:[#allocation2 + $0x90] sm:$0xff] %v622
        %630 = vst.msk [vmem:[#allocation2 + $0x98] sm:$0xf] %vm474, %v611
        %631 = vst [vmem:[#allocation2 + $0x9c] sm:$0xff] %v624
        %632 = vst.msk [vmem:[#allocation2 + $0xa4] sm:$0xf] %vm474, %v615
        %633 = vrot.lane.b32.xlu0 %v461, 91
        %v634 = vpop.permute.xlu0 %633
        %635 = vrot.lane.b32.xlu0 %v462, 91
        %v636 = vpop.permute.xlu0 %635
        %637 = vrot.lane.b32.xlu0 %v463, 91
        %v638 = vpop.permute.xlu0 %637
        %639 = vrot.lane.b32.xlu0 %v464, 91
        %v640 = vpop.permute.xlu0 %639
        %v641 = vrot.slane %v634, 4
        %v642 = vrot.slane %v636, 4
        %v643 = vrot.slane %v638, 4
        %v644 = vrot.slane %v640, 4
        %v645 = vsel %vm494, %v641, %v642
        %vm646 = vcmask 744448
        %v647 = vsel %vm646, %v634, %v645
        %v648 = vsel %vm494, %v643, %v644
        %v649 = vsel %vm646, %v638, %v648
        %654 = vst [vmem:[#allocation2 + $0xa8] sm:$0xff] %v647
        %655 = vst.msk [vmem:[#allocation2 + $0xb0] sm:$0xf] %vm474, %v636
        %656 = vst [vmem:[#allocation2 + $0xb4] sm:$0xff] %v649
        %657 = vst.msk [vmem:[#allocation2 + $0xbc] sm:$0xf] %vm474, %v640
        %658 = vrot.lane.b32.xlu0 %v461, 90
        %v659 = vpop.permute.xlu0 %658
        %660 = vrot.lane.b32.xlu0 %v462, 90
        %v661 = vpop.permute.xlu0 %660
        %662 = vrot.lane.b32.xlu0 %v463, 90
        %v663 = vpop.permute.xlu0 %662
        %664 = vrot.lane.b32.xlu0 %v464, 90
        %v665 = vpop.permute.xlu0 %664
        %v666 = vrot.slane %v659, 4
        %v667 = vrot.slane %v661, 4
        %v668 = vrot.slane %v663, 4
        %v669 = vrot.slane %v665, 4
        %v670 = vsel %vm494, %v666, %v667
        %vm671 = vcmask 736256
        %v672 = vsel %vm671, %v659, %v670
        %v673 = vsel %vm494, %v668, %v669
        %v674 = vsel %vm671, %v663, %v673
        %679 = vst [vmem:[#allocation2 + $0xc0] sm:$0xff] %v672
        %680 = vst.msk [vmem:[#allocation2 + $0xc8] sm:$0xf] %vm474, %v661
        %681 = vst [vmem:[#allocation2 + $0xcc] sm:$0xff] %v674
        %682 = vst.msk [vmem:[#allocation2 + $0xd4] sm:$0xf] %vm474, %v665
        %683 = vst [vmem:[#allocation2 + $0xd8] sm:$0xff] %v465
        %684 = vst.msk [vmem:[#allocation2 + $0xe0] sm:$0xf] %vm474, %v466
        %685 = vst [vmem:[#allocation2 + $0xe4] sm:$0xff] %v467
        %686 = vst.msk [vmem:[#allocation2 + $0xec] sm:$0xf] %vm474, %v468
        %691 = vrot.lane.b32.xlu0 %v465, 127
        %v692 = vpop.permute.xlu0 %691
        %693 = vrot.lane.b32.xlu0 %v466, 127
        %v694 = vpop.permute.xlu0 %693
        %695 = vrot.lane.b32.xlu0 %v467, 127
        %v696 = vpop.permute.xlu0 %695
        %697 = vrot.lane.b32.xlu0 %v468, 127
        %v698 = vpop.permute.xlu0 %697
        %v699 = vrot.slane %v692, 4
        %v700 = vrot.slane %v694, 4
        %v701 = vrot.slane %v696, 4
        %v702 = vrot.slane %v698, 4
        %v703 = vsel %vm494, %v699, %v700
        %v704 = vsel %vm496, %v692, %v703
        %v705 = vsel %vm494, %v701, %v702
        %v706 = vsel %vm496, %v696, %v705
        %711 = vst [vmem:[#allocation2 + $0xf0] sm:$0xff] %v704
        %712 = vst.msk [vmem:[#allocation2 + $0xf8] sm:$0xf] %vm474, %v694
        %713 = vst [vmem:[#allocation2 + $0xfc] sm:$0xff] %v706
        %714 = vst.msk [vmem:[#allocation2 + $0x104] sm:$0xf] %vm474, %v698
        %715 = vrot.lane.b32.xlu0 %v465, 126
        %v716 = vpop.permute.xlu0 %715
        %717 = vrot.lane.b32.xlu0 %v466, 126
        %v718 = vpop.permute.xlu0 %717
        %719 = vrot.lane.b32.xlu0 %v467, 126
        %v720 = vpop.permute.xlu0 %719
        %721 = vrot.lane.b32.xlu0 %v468, 126
        %v722 = vpop.permute.xlu0 %721
        %v723 = vrot.slane %v716, 4
        %v724 = vrot.slane %v718, 4
        %v725 = vrot.slane %v720, 4
        %v726 = vrot.slane %v722, 4
        %v727 = vsel %vm494, %v723, %v724
        %v728 = vsel %vm521, %v716, %v727
        %v729 = vsel %vm494, %v725, %v726
        %v730 = vsel %vm521, %v720, %v729
        %735 = vst [vmem:[#allocation2 + $0x108] sm:$0xff] %v728
        %736 = vst.msk [vmem:[#allocation2 + $0x110] sm:$0xf] %vm474, %v718
        %737 = vst [vmem:[#allocation2 + $0x114] sm:$0xff] %v730
        %738 = vst.msk [vmem:[#allocation2 + $0x11c] sm:$0xf] %vm474, %v722
        %739 = vrot.lane.b32.xlu0 %v465, 110
        %v740 = vpop.permute.xlu0 %739
        %741 = vrot.lane.b32.xlu0 %v466, 110
        %v742 = vpop.permute.xlu0 %741
        %743 = vrot.lane.b32.xlu0 %v467, 110
        %v744 = vpop.permute.xlu0 %743
        %745 = vrot.lane.b32.xlu0 %v468, 110
        %v746 = vpop.permute.xlu0 %745
        %v747 = vrot.slane %v740, 4
        %v748 = vrot.slane %v742, 4
        %v749 = vrot.slane %v744, 4
        %v750 = vrot.slane %v746, 4
        %v751 = vsel %vm494, %v747, %v748
        %v752 = vsel %vm546, %v740, %v751
        %v753 = vsel %vm494, %v749, %v750
        %v754 = vsel %vm546, %v744, %v753
        %759 = vst [vmem:[#allocation2 + $0x120] sm:$0xff] %v752
        %760 = vst.msk [vmem:[#allocation2 + $0x128] sm:$0xf] %vm474, %v742
        %761 = vst [vmem:[#allocation2 + $0x12c] sm:$0xff] %v754
        %762 = vst.msk [vmem:[#allocation2 + $0x134] sm:$0xf] %vm474, %v746
        %763 = vrot.lane.b32.xlu0 %v465, 109
        %v764 = vpop.permute.xlu0 %763
        %765 = vrot.lane.b32.xlu0 %v466, 109
        %v766 = vpop.permute.xlu0 %765
        %767 = vrot.lane.b32.xlu0 %v467, 109
        %v768 = vpop.permute.xlu0 %767
        %769 = vrot.lane.b32.xlu0 %v468, 109
        %v770 = vpop.permute.xlu0 %769
        %v771 = vrot.slane %v764, 4
        %v772 = vrot.slane %v766, 4
        %v773 = vrot.slane %v768, 4
        %v774 = vrot.slane %v770, 4
        %v775 = vsel %vm494, %v771, %v772
        %v776 = vsel %vm571, %v764, %v775
        %v777 = vsel %vm494, %v773, %v774
        %v778 = vsel %vm571, %v768, %v777
        %783 = vst [vmem:[#allocation2 + $0x138] sm:$0xff] %v776
        %784 = vst.msk [vmem:[#allocation2 + $0x140] sm:$0xf] %vm474, %v766
        %785 = vst [vmem:[#allocation2 + $0x144] sm:$0xff] %v778
        %786 = vst.msk [vmem:[#allocation2 + $0x14c] sm:$0xf] %vm474, %v770
        %787 = vrot.lane.b32.xlu0 %v465, 108
        %v788 = vpop.permute.xlu0 %787
        %789 = vrot.lane.b32.xlu0 %v466, 108
        %v790 = vpop.permute.xlu0 %789
        %791 = vrot.lane.b32.xlu0 %v467, 108
        %v792 = vpop.permute.xlu0 %791
        %793 = vrot.lane.b32.xlu0 %v468, 108
        %v794 = vpop.permute.xlu0 %793
        %v795 = vrot.slane %v788, 4
        %v796 = vrot.slane %v790, 4
        %v797 = vrot.slane %v792, 4
        %v798 = vrot.slane %v794, 4
        %v799 = vsel %vm494, %v795, %v796
        %v800 = vsel %vm596, %v788, %v799
        %v801 = vsel %vm494, %v797, %v798
        %v802 = vsel %vm596, %v792, %v801
        %807 = vst [vmem:[#allocation2 + $0x150] sm:$0xff] %v800
        %808 = vst.msk [vmem:[#allocation2 + $0x158] sm:$0xf] %vm474, %v790
        %809 = vst [vmem:[#allocation2 + $0x15c] sm:$0xff] %v802
        %810 = vst.msk [vmem:[#allocation2 + $0x164] sm:$0xf] %vm474, %v794
        %811 = vrot.lane.b32.xlu0 %v465, 92
        %v812 = vpop.permute.xlu0 %811
        %813 = vrot.lane.b32.xlu0 %v466, 92
        %v814 = vpop.permute.xlu0 %813
        %815 = vrot.lane.b32.xlu0 %v467, 92
        %v816 = vpop.permute.xlu0 %815
        %817 = vrot.lane.b32.xlu0 %v468, 92
        %v818 = vpop.permute.xlu0 %817
        %v819 = vrot.slane %v812, 4
        %v820 = vrot.slane %v814, 4
        %v821 = vrot.slane %v816, 4
        %v822 = vrot.slane %v818, 4
        %v823 = vsel %vm494, %v819, %v820
        %v824 = vsel %vm621, %v812, %v823
        %v825 = vsel %vm494, %v821, %v822
        %v826 = vsel %vm621, %v816, %v825
        %831 = vst [vmem:[#allocation2 + $0x168] sm:$0xff] %v824
        %832 = vst.msk [vmem:[#allocation2 + $0x170] sm:$0xf] %vm474, %v814
        %833 = vst [vmem:[#allocation2 + $0x174] sm:$0xff] %v826
        %834 = vst.msk [vmem:[#allocation2 + $0x17c] sm:$0xf] %vm474, %v818
        %835 = vrot.lane.b32.xlu0 %v465, 91
        %v836 = vpop.permute.xlu0 %835
        %837 = vrot.lane.b32.xlu0 %v466, 91
        %v838 = vpop.permute.xlu0 %837
        %839 = vrot.lane.b32.xlu0 %v467, 91
        %v840 = vpop.permute.xlu0 %839
        %841 = vrot.lane.b32.xlu0 %v468, 91
        %v842 = vpop.permute.xlu0 %841
        %v843 = vrot.slane %v836, 4
        %v844 = vrot.slane %v838, 4
        %v845 = vrot.slane %v840, 4
        %v846 = vrot.slane %v842, 4
        %v847 = vsel %vm494, %v843, %v844
        %v848 = vsel %vm646, %v836, %v847
        %v849 = vsel %vm494, %v845, %v846
        %v850 = vsel %vm646, %v840, %v849
        %855 = vst [vmem:[#allocation2 + $0x180] sm:$0xff] %v848
        %856 = vst.msk [vmem:[#allocation2 + $0x188] sm:$0xf] %vm474, %v838
        %857 = vst [vmem:[#allocation2 + $0x18c] sm:$0xff] %v850
        %858 = vst.msk [vmem:[#allocation2 + $0x194] sm:$0xf] %vm474, %v842
        %859 = vrot.lane.b32.xlu0 %v465, 90
        %v860 = vpop.permute.xlu0 %859
        %861 = vrot.lane.b32.xlu0 %v466, 90
        %v862 = vpop.permute.xlu0 %861
        %863 = vrot.lane.b32.xlu0 %v467, 90
        %v864 = vpop.permute.xlu0 %863
        %865 = vrot.lane.b32.xlu0 %v468, 90
        %v866 = vpop.permute.xlu0 %865
        %v867 = vrot.slane %v860, 4
        %v868 = vrot.slane %v862, 4
        %v869 = vrot.slane %v864, 4
        %v870 = vrot.slane %v866, 4
        %v871 = vsel %vm494, %v867, %v868
        %v872 = vsel %vm671, %v860, %v871
        %v873 = vsel %vm494, %v869, %v870
        %v874 = vsel %vm671, %v864, %v873
        %879 = vst [vmem:[#allocation2 + $0x198] sm:$0xff] %v872
        %880 = vst.msk [vmem:[#allocation2 + $0x1a0] sm:$0xf] %vm474, %v862
        %881 = vst [vmem:[#allocation2 + $0x1a4] sm:$0xff] %v874
        %882 = vst.msk [vmem:[#allocation2 + $0x1ac] sm:$0xf] %vm474, %v866
        %883 = vst [vmem:[#allocation2 + $0x1b0] sm:$0xff] %v469
        %884 = vst.msk [vmem:[#allocation2 + $0x1b8] sm:$0xf] %vm474, %v470
        %885 = vst [vmem:[#allocation2 + $0x1bc] sm:$0xff] %v471
        %886 = vst.msk [vmem:[#allocation2 + $0x1c4] sm:$0xf] %vm474, %v472
        %891 = vrot.lane.b32.xlu0 %v469, 127
        %v892 = vpop.permute.xlu0 %891
        %893 = vrot.lane.b32.xlu0 %v470, 127
        %v894 = vpop.permute.xlu0 %893
        %895 = vrot.lane.b32.xlu0 %v471, 127
        %v896 = vpop.permute.xlu0 %895
        %897 = vrot.lane.b32.xlu0 %v472, 127
        %v898 = vpop.permute.xlu0 %897
        %v899 = vrot.slane %v892, 4
        %v900 = vrot.slane %v894, 4
        %v901 = vrot.slane %v896, 4
        %v902 = vrot.slane %v898, 4
        %v903 = vsel %vm494, %v899, %v900
        %v904 = vsel %vm496, %v892, %v903
        %v905 = vsel %vm494, %v901, %v902
        %v906 = vsel %vm496, %v896, %v905
        %911 = vst [vmem:[#allocation2 + $0x1c8] sm:$0xff] %v904
        %912 = vst.msk [vmem:[#allocation2 + $0x1d0] sm:$0xf] %vm474, %v894
        %913 = vst [vmem:[#allocation2 + $0x1d4] sm:$0xff] %v906
        %914 = vst.msk [vmem:[#allocation2 + $0x1dc] sm:$0xf] %vm474, %v898
        %915 = vrot.lane.b32.xlu0 %v469, 126
        %v916 = vpop.permute.xlu0 %915
        %917 = vrot.lane.b32.xlu0 %v470, 126
        %v918 = vpop.permute.xlu0 %917
        %919 = vrot.lane.b32.xlu0 %v471, 126
        %v920 = vpop.permute.xlu0 %919
        %921 = vrot.lane.b32.xlu0 %v472, 126
        %v922 = vpop.permute.xlu0 %921
        %v923 = vrot.slane %v916, 4
        %v924 = vrot.slane %v918, 4
        %v925 = vrot.slane %v920, 4
        %v926 = vrot.slane %v922, 4
        %v927 = vsel %vm494, %v923, %v924
        %v928 = vsel %vm521, %v916, %v927
        %v929 = vsel %vm494, %v925, %v926
        %v930 = vsel %vm521, %v920, %v929
        %935 = vst [vmem:[#allocation2 + $0x1e0] sm:$0xff] %v928
        %936 = vst.msk [vmem:[#allocation2 + $0x1e8] sm:$0xf] %vm474, %v918
        %937 = vst [vmem:[#allocation2 + $0x1ec] sm:$0xff] %v930
        %938 = vst.msk [vmem:[#allocation2 + $0x1f4] sm:$0xf] %vm474, %v922
        %939 = vrot.lane.b32.xlu0 %v469, 110
        %v940 = vpop.permute.xlu0 %939
        %941 = vrot.lane.b32.xlu0 %v470, 110
        %v942 = vpop.permute.xlu0 %941
        %943 = vrot.lane.b32.xlu0 %v471, 110
        %v944 = vpop.permute.xlu0 %943
        %945 = vrot.lane.b32.xlu0 %v472, 110
        %v946 = vpop.permute.xlu0 %945
        %v947 = vrot.slane %v940, 4
        %v948 = vrot.slane %v942, 4
        %v949 = vrot.slane %v944, 4
        %v950 = vrot.slane %v946, 4
        %v951 = vsel %vm494, %v947, %v948
        %v952 = vsel %vm546, %v940, %v951
        %v953 = vsel %vm494, %v949, %v950
        %v954 = vsel %vm546, %v944, %v953
        %959 = vst [vmem:[#allocation2 + $0x1f8] sm:$0xff] %v952
        %960 = vst.msk [vmem:[#allocation2 + $0x200] sm:$0xf] %vm474, %v942
        %961 = vst [vmem:[#allocation2 + $0x204] sm:$0xff] %v954
        %962 = vst.msk [vmem:[#allocation2 + $0x20c] sm:$0xf] %vm474, %v946
        %963 = vrot.lane.b32.xlu0 %v469, 109
        %v964 = vpop.permute.xlu0 %963
        %965 = vrot.lane.b32.xlu0 %v470, 109
        %v966 = vpop.permute.xlu0 %965
        %967 = vrot.lane.b32.xlu0 %v471, 109
        %v968 = vpop.permute.xlu0 %967
        %969 = vrot.lane.b32.xlu0 %v472, 109
        %v970 = vpop.permute.xlu0 %969
        %v971 = vrot.slane %v964, 4
        %v972 = vrot.slane %v966, 4
        %v973 = vrot.slane %v968, 4
        %v974 = vrot.slane %v970, 4
        %v975 = vsel %vm494, %v971, %v972
        %v976 = vsel %vm571, %v964, %v975
        %v977 = vsel %vm494, %v973, %v974
        %v978 = vsel %vm571, %v968, %v977
        %983 = vst [vmem:[#allocation2 + $0x210] sm:$0xff] %v976
        %984 = vst.msk [vmem:[#allocation2 + $0x218] sm:$0xf] %vm474, %v966
        %985 = vst [vmem:[#allocation2 + $0x21c] sm:$0xff] %v978
        %986 = vst.msk [vmem:[#allocation2 + $0x224] sm:$0xf] %vm474, %v970
        %987 = vrot.lane.b32.xlu0 %v469, 108
        %v988 = vpop.permute.xlu0 %987
        %989 = vrot.lane.b32.xlu0 %v470, 108
        %v990 = vpop.permute.xlu0 %989
        %991 = vrot.lane.b32.xlu0 %v471, 108
        %v992 = vpop.permute.xlu0 %991
        %993 = vrot.lane.b32.xlu0 %v472, 108
        %v994 = vpop.permute.xlu0 %993
        %v995 = vrot.slane %v988, 4
        %v996 = vrot.slane %v990, 4
        %v997 = vrot.slane %v992, 4
        %v998 = vrot.slane %v994, 4
        %v999 = vsel %vm494, %v995, %v996
        %v1000 = vsel %vm596, %v988, %v999
        %v1001 = vsel %vm494, %v997, %v998
        %v1002 = vsel %vm596, %v992, %v1001
        %1007 = vst [vmem:[#allocation2 + $0x228] sm:$0xff] %v1000
        %1008 = vst.msk [vmem:[#allocation2 + $0x230] sm:$0xf] %vm474, %v990
        %1009 = vst [vmem:[#allocation2 + $0x234] sm:$0xff] %v1002
        %1010 = vst.msk [vmem:[#allocation2 + $0x23c] sm:$0xf] %vm474, %v994
        %1011 = vrot.lane.b32.xlu0 %v469, 92
        %v1012 = vpop.permute.xlu0 %1011
        %1013 = vrot.lane.b32.xlu0 %v470, 92
        %v1014 = vpop.permute.xlu0 %1013
        %1015 = vrot.lane.b32.xlu0 %v471, 92
        %v1016 = vpop.permute.xlu0 %1015
        %1017 = vrot.lane.b32.xlu0 %v472, 92
        %v1018 = vpop.permute.xlu0 %1017
        %v1019 = vrot.slane %v1012, 4
        %v1020 = vrot.slane %v1014, 4
        %v1021 = vrot.slane %v1016, 4
        %v1022 = vrot.slane %v1018, 4
        %v1023 = vsel %vm494, %v1019, %v1020
        %v1024 = vsel %vm621, %v1012, %v1023
        %v1025 = vsel %vm494, %v1021, %v1022
        %v1026 = vsel %vm621, %v1016, %v1025
        %1031 = vst [vmem:[#allocation2 + $0x240] sm:$0xff] %v1024
        %1032 = vst.msk [vmem:[#allocation2 + $0x248] sm:$0xf] %vm474, %v1014
        %1033 = vst [vmem:[#allocation2 + $0x24c] sm:$0xff] %v1026
        %1034 = vst.msk [vmem:[#allocation2 + $0x254] sm:$0xf] %vm474, %v1018
        %1035 = vrot.lane.b32.xlu0 %v469, 91
        %v1036 = vpop.permute.xlu0 %1035
        %1037 = vrot.lane.b32.xlu0 %v470, 91
        %v1038 = vpop.permute.xlu0 %1037
        %1039 = vrot.lane.b32.xlu0 %v471, 91
        %v1040 = vpop.permute.xlu0 %1039
        %1041 = vrot.lane.b32.xlu0 %v472, 91
        %v1042 = vpop.permute.xlu0 %1041
        %v1043 = vrot.slane %v1036, 4
        %v1044 = vrot.slane %v1038, 4
        %v1045 = vrot.slane %v1040, 4
        %v1046 = vrot.slane %v1042, 4
        %v1047 = vsel %vm494, %v1043, %v1044
        %v1048 = vsel %vm646, %v1036, %v1047
        %v1049 = vsel %vm494, %v1045, %v1046
        %v1050 = vsel %vm646, %v1040, %v1049
        %1055 = vst [vmem:[#allocation2 + $0x258] sm:$0xff] %v1048
        %1056 = vst.msk [vmem:[#allocation2 + $0x260] sm:$0xf] %vm474, %v1038
        %1057 = vst [vmem:[#allocation2 + $0x264] sm:$0xff] %v1050
        %1058 = vst.msk [vmem:[#allocation2 + $0x26c] sm:$0xf] %vm474, %v1042
        %1059 = vrot.lane.b32.xlu0 %v469, 90
        %v1060 = vpop.permute.xlu0 %1059
        %1061 = vrot.lane.b32.xlu0 %v470, 90
        %v1062 = vpop.permute.xlu0 %1061
        %1063 = vrot.lane.b32.xlu0 %v471, 90
        %v1064 = vpop.permute.xlu0 %1063
        %1065 = vrot.lane.b32.xlu0 %v472, 90
        %v1066 = vpop.permute.xlu0 %1065
        %v1067 = vrot.slane %v1060, 4
        %v1068 = vrot.slane %v1062, 4
        %v1069 = vrot.slane %v1064, 4
        %v1070 = vrot.slane %v1066, 4
        %v1071 = vsel %vm494, %v1067, %v1068
        %v1072 = vsel %vm671, %v1060, %v1071
        %v1073 = vsel %vm494, %v1069, %v1070
        %v1074 = vsel %vm671, %v1064, %v1073
        %1079 = vst [vmem:[#allocation2 + $0x270] sm:$0xff] %v1072
        %1080 = vst.msk [vmem:[#allocation2 + $0x278] sm:$0xf] %vm474, %v1062
        %1081 = vst [vmem:[#allocation2 + $0x27c] sm:$0xff] %v1074
        %1082 = vst.msk [vmem:[#allocation2 + $0x284] sm:$0xf] %vm474, %v1066
        %v1083 = vld [vmem:[%s0] sm:$0xff]
        %v1084 = vld [vmem:[#allocation2] sm:$0xff]
        %v1085 = vld [vmem:[#allocation2 + $0x8] sm:$0xf]
        %v1086 = vld [vmem:[#allocation2 + $0xc] sm:$0xff]
        %v1087 = vld [vmem:[#allocation2 + $0x14] sm:$0xf]
        %v1088 = vld [vmem:[#allocation2 + $0x18] sm:$0xff]
        %v1089 = vld [vmem:[#allocation2 + $0x20] sm:$0xf]
        %v1090 = vld [vmem:[#allocation2 + $0x24] sm:$0xff]
        %v1091 = vld [vmem:[#allocation2 + $0x2c] sm:$0xf]
        %v1092 = vld [vmem:[#allocation2 + $0x30] sm:$0xff]
        %v1093 = vld [vmem:[#allocation2 + $0x38] sm:$0xf]
        %v1094 = vld [vmem:[#allocation2 + $0x3c] sm:$0xff]
        %v1095 = vld [vmem:[#allocation2 + $0x44] sm:$0xf]
        %v1096 = vld [vmem:[#allocation2 + $0x48] sm:$0xff]
        %v1097 = vld [vmem:[#allocation2 + $0x50] sm:$0xf]
        %v1098 = vld [vmem:[#allocation2 + $0x54] sm:$0xff]
        %v1099 = vld [vmem:[#allocation2 + $0x5c] sm:$0xf]
        %v1100 = vld [vmem:[#allocation2 + $0x60] sm:$0xff]
        %v1101 = vld [vmem:[#allocation2 + $0x68] sm:$0xf]
        %v1102 = vld [vmem:[#allocation2 + $0x6c] sm:$0xff]
        %v1103 = vld [vmem:[#allocation2 + $0x74] sm:$0xf]
        %v1104 = vld [vmem:[#allocation2 + $0x78] sm:$0xff]
        %v1105 = vld [vmem:[#allocation2 + $0x80] sm:$0xf]
        %v1106 = vld [vmem:[#allocation2 + $0x84] sm:$0xff]
        %v1107 = vld [vmem:[#allocation2 + $0x8c] sm:$0xf]
        %v1108 = vld [vmem:[#allocation2 + $0x90] sm:$0xff]
        %v1109 = vld [vmem:[#allocation2 + $0x98] sm:$0xf]
        %v1110 = vld [vmem:[#allocation2 + $0x9c] sm:$0xff]
        %v1111 = vld [vmem:[#allocation2 + $0xa4] sm:$0xf]
        %v1112 = vld [vmem:[#allocation2 + $0xa8] sm:$0xff]
        %v1113 = vld [vmem:[#allocation2 + $0xb0] sm:$0xf]
        %v1114 = vld [vmem:[#allocation2 + $0xb4] sm:$0xff]
        %v1115 = vld [vmem:[#allocation2 + $0xbc] sm:$0xf]
        %v1116 = vld [vmem:[#allocation2 + $0xc0] sm:$0xff]
        %v1117 = vld [vmem:[#allocation2 + $0xc8] sm:$0xf]
        %v1118 = vld [vmem:[#allocation2 + $0xcc] sm:$0xff]
        %v1119 = vld [vmem:[#allocation2 + $0xd4] sm:$0xf]
        %v1120 = vld [vmem:[#allocation2 + $0xd8] sm:$0xff]
        %v1121 = vld [vmem:[#allocation2 + $0xe0] sm:$0xf]
        %v1122 = vld [vmem:[#allocation2 + $0xe4] sm:$0xff]
        %v1123 = vld [vmem:[#allocation2 + $0xec] sm:$0xf]
        %v1124 = vld [vmem:[#allocation2 + $0xf0] sm:$0xff]
        %v1125 = vld [vmem:[#allocation2 + $0xf8] sm:$0xf]
        %v1126 = vld [vmem:[#allocation2 + $0xfc] sm:$0xff]
        %v1127 = vld [vmem:[#allocation2 + $0x104] sm:$0xf]
        %v1128 = vld [vmem:[#allocation2 + $0x108] sm:$0xff]
        %v1129 = vld [vmem:[#allocation2 + $0x110] sm:$0xf]
        %v1130 = vld [vmem:[#allocation2 + $0x114] sm:$0xff]
        %v1131 = vld [vmem:[#allocation2 + $0x11c] sm:$0xf]
        %v1132 = vld [vmem:[#allocation2 + $0x120] sm:$0xff]
        %v1133 = vld [vmem:[#allocation2 + $0x128] sm:$0xf]
        %v1134 = vld [vmem:[#allocation2 + $0x12c] sm:$0xff]
        %v1135 = vld [vmem:[#allocation2 + $0x134] sm:$0xf]
        %v1136 = vld [vmem:[#allocation2 + $0x138] sm:$0xff]
        %v1137 = vld [vmem:[#allocation2 + $0x140] sm:$0xf]
        %v1138 = vld [vmem:[#allocation2 + $0x144] sm:$0xff]
        %v1139 = vld [vmem:[#allocation2 + $0x14c] sm:$0xf]
        %v1140 = vld [vmem:[#allocation2 + $0x150] sm:$0xff]
        %v1141 = vld [vmem:[#allocation2 + $0x158] sm:$0xf]
        %v1142 = vld [vmem:[#allocation2 + $0x15c] sm:$0xff]
        %v1143 = vld [vmem:[#allocation2 + $0x164] sm:$0xf]
        %v1144 = vld [vmem:[#allocation2 + $0x168] sm:$0xff]
        %v1145 = vld [vmem:[#allocation2 + $0x170] sm:$0xf]
        %v1146 = vld [vmem:[#allocation2 + $0x174] sm:$0xff]
        %v1147 = vld [vmem:[#allocation2 + $0x17c] sm:$0xf]
        %v1148 = vld [vmem:[#allocation2 + $0x180] sm:$0xff]
        %v1149 = vld [vmem:[#allocation2 + $0x188] sm:$0xf]
        %v1150 = vld [vmem:[#allocation2 + $0x18c] sm:$0xff]
        %v1151 = vld [vmem:[#allocation2 + $0x194] sm:$0xf]
        %v1152 = vld [vmem:[#allocation2 + $0x198] sm:$0xff]
        %v1153 = vld [vmem:[#allocation2 + $0x1a0] sm:$0xf]
        %v1154 = vld [vmem:[#allocation2 + $0x1a4] sm:$0xff]
        %v1155 = vld [vmem:[#allocation2 + $0x1ac] sm:$0xf]
        %v1156 = vld [vmem:[#allocation2 + $0x1b0] sm:$0xff]
        %v1157 = vld [vmem:[#allocation2 + $0x1b8] sm:$0xf]
        %v1158 = vld [vmem:[#allocation2 + $0x1bc] sm:$0xff]
        %v1159 = vld [vmem:[#allocation2 + $0x1c4] sm:$0xf]
        %v1160 = vld [vmem:[#allocation2 + $0x1c8] sm:$0xff]
        %v1161 = vld [vmem:[#allocation2 + $0x1d0] sm:$0xf]
        %v1162 = vld [vmem:[#allocation2 + $0x1d4] sm:$0xff]
        %v1163 = vld [vmem:[#allocation2 + $0x1dc] sm:$0xf]
        %v1164 = vld [vmem:[#allocation2 + $0x1e0] sm:$0xff]
        %v1165 = vld [vmem:[#allocation2 + $0x1e8] sm:$0xf]
        %v1166 = vld [vmem:[#allocation2 + $0x1ec] sm:$0xff]
        %v1167 = vld [vmem:[#allocation2 + $0x1f4] sm:$0xf]
        %v1168 = vld [vmem:[#allocation2 + $0x1f8] sm:$0xff]
        %v1169 = vld [vmem:[#allocation2 + $0x200] sm:$0xf]
        %v1170 = vld [vmem:[#allocation2 + $0x204] sm:$0xff]
        %v1171 = vld [vmem:[#allocation2 + $0x20c] sm:$0xf]
        %v1172 = vld [vmem:[#allocation2 + $0x210] sm:$0xff]
        %v1173 = vld [vmem:[#allocation2 + $0x218] sm:$0xf]
        %v1174 = vld [vmem:[#allocation2 + $0x21c] sm:$0xff]
        %v1175 = vld [vmem:[#allocation2 + $0x224] sm:$0xf]
        %v1176 = vld [vmem:[#allocation2 + $0x228] sm:$0xff]
        %v1177 = vld [vmem:[#allocation2 + $0x230] sm:$0xf]
        %v1178 = vld [vmem:[#allocation2 + $0x234] sm:$0xff]
        %v1179 = vld [vmem:[#allocation2 + $0x23c] sm:$0xf]
        %v1180 = vld [vmem:[#allocation2 + $0x240] sm:$0xff]
        %v1181 = vld [vmem:[#allocation2 + $0x248] sm:$0xf]
        %v1182 = vld [vmem:[#allocation2 + $0x24c] sm:$0xff]
        %v1183 = vld [vmem:[#allocation2 + $0x254] sm:$0xf]
        %v1184 = vld [vmem:[#allocation2 + $0x258] sm:$0xff]
        %v1185 = vld [vmem:[#allocation2 + $0x260] sm:$0xf]
        %v1186 = vld [vmem:[#allocation2 + $0x264] sm:$0xff]
        %v1187 = vld [vmem:[#allocation2 + $0x26c] sm:$0xf]
        %v1188 = vld [vmem:[#allocation2 + $0x270] sm:$0xff]
        %v1189 = vld [vmem:[#allocation2 + $0x278] sm:$0xf]
        %v1190 = vld [vmem:[#allocation2 + $0x27c] sm:$0xff]
        %v1191 = vld [vmem:[#allocation2 + $0x284] sm:$0xf]
        %v1192 = vld [vmem:[%s1] sm:$0xf]
        %1194 = vset.pattern.permute.xlu0 0
        %1195 = vperm.xlu0 %1194, %v1192
        %v1196 = vpop.permute.xlu0 %1195
        %1199 = vst [vmem:[#allocation1] ss:$4 sm:$0xff] %v1083
        %v1200 = vld.sshfl [vmem:[#allocation1] sm:$0xff pattern:$0x73625140]
        %v1201 = vld.sshfl [vmem:[#allocation1 + $0x8] sm:$0xff pattern:$0x73625140]
        %v1202 = vld.sshfl [vmem:[#allocation1 + $0x10] sm:$0xff pattern:$0x73625140]
        %v1203 = vld.sshfl [vmem:[#allocation1 + $0x18] sm:$0xff pattern:$0x73625140]
        %v1315 = vunpack.c.l.b16 %v1084
        %v1316 = vunpack.c.h.b16 %v1084
        %v1317 = vunpack.c.l.b16 %v1085
        %v1318 = vunpack.c.l.b16 %v1086
        %v1319 = vunpack.c.h.b16 %v1086
        %v1320 = vunpack.c.l.b16 %v1087
        %v1321 = vunpack.c.l.b16 %v1088
        %v1322 = vunpack.c.h.b16 %v1088
        %v1323 = vunpack.c.l.b16 %v1089
        %v1324 = vunpack.c.l.b16 %v1090
        %v1325 = vunpack.c.h.b16 %v1090
        %v1326 = vunpack.c.l.b16 %v1091
        %v1327 = vunpack.c.l.b16 %v1092
        %v1328 = vunpack.c.h.b16 %v1092
        %v1329 = vunpack.c.l.b16 %v1093
        %v1330 = vunpack.c.l.b16 %v1094
        %v1331 = vunpack.c.h.b16 %v1094
        %v1332 = vunpack.c.l.b16 %v1095
        %v1333 = vunpack.c.l.b16 %v1096
        %v1334 = vunpack.c.h.b16 %v1096
        %v1335 = vunpack.c.l.b16 %v1097
        %v1336 = vunpack.c.l.b16 %v1098
        %v1337 = vunpack.c.h.b16 %v1098
        %v1338 = vunpack.c.l.b16 %v1099
        %v1339 = vunpack.c.l.b16 %v1100
        %v1340 = vunpack.c.h.b16 %v1100
        %v1341 = vunpack.c.l.b16 %v1101
        %v1342 = vunpack.c.l.b16 %v1102
        %v1343 = vunpack.c.h.b16 %v1102
        %v1344 = vunpack.c.l.b16 %v1103
        %v1345 = vunpack.c.l.b16 %v1104
        %v1346 = vunpack.c.h.b16 %v1104
        %v1347 = vunpack.c.l.b16 %v1105
        %v1348 = vunpack.c.l.b16 %v1106
        %v1349 = vunpack.c.h.b16 %v1106
        %v1350 = vunpack.c.l.b16 %v1107
        %v1351 = vunpack.c.l.b16 %v1108
        %v1352 = vunpack.c.h.b16 %v1108
        %v1353 = vunpack.c.l.b16 %v1109
        %v1354 = vunpack.c.l.b16 %v1110
        %v1355 = vunpack.c.h.b16 %v1110
        %v1356 = vunpack.c.l.b16 %v1111
        %v1357 = vunpack.c.l.b16 %v1112
        %v1358 = vunpack.c.h.b16 %v1112
        %v1359 = vunpack.c.l.b16 %v1113
        %v1360 = vunpack.c.l.b16 %v1114
        %v1361 = vunpack.c.h.b16 %v1114
        %v1362 = vunpack.c.l.b16 %v1115
        %v1363 = vunpack.c.l.b16 %v1116
        %v1364 = vunpack.c.h.b16 %v1116
        %v1365 = vunpack.c.l.b16 %v1117
        %v1366 = vunpack.c.l.b16 %v1118
        %v1367 = vunpack.c.h.b16 %v1118
        %v1368 = vunpack.c.l.b16 %v1119
        %v1369 = vunpack.c.l.b16 %v1120
        %v1370 = vunpack.c.h.b16 %v1120
        %v1371 = vunpack.c.l.b16 %v1121
        %v1372 = vunpack.c.l.b16 %v1122
        %v1373 = vunpack.c.h.b16 %v1122
        %v1374 = vunpack.c.l.b16 %v1123
        %v1375 = vunpack.c.l.b16 %v1124
        %v1376 = vunpack.c.h.b16 %v1124
        %v1377 = vunpack.c.l.b16 %v1125
        %v1378 = vunpack.c.l.b16 %v1126
        %v1379 = vunpack.c.h.b16 %v1126
        %v1380 = vunpack.c.l.b16 %v1127
        %v1381 = vunpack.c.l.b16 %v1128
        %v1382 = vunpack.c.h.b16 %v1128
        %v1383 = vunpack.c.l.b16 %v1129
        %v1384 = vunpack.c.l.b16 %v1130
        %v1385 = vunpack.c.h.b16 %v1130
        %v1386 = vunpack.c.l.b16 %v1131
        %v1387 = vunpack.c.l.b16 %v1132
        %v1388 = vunpack.c.h.b16 %v1132
        %v1389 = vunpack.c.l.b16 %v1133
        %v1390 = vunpack.c.l.b16 %v1134
        %v1391 = vunpack.c.h.b16 %v1134
        %v1392 = vunpack.c.l.b16 %v1135
        %v1393 = vunpack.c.l.b16 %v1136
        %v1394 = vunpack.c.h.b16 %v1136
        %v1395 = vunpack.c.l.b16 %v1137
        %v1396 = vunpack.c.l.b16 %v1138
        %v1397 = vunpack.c.h.b16 %v1138
        %v1398 = vunpack.c.l.b16 %v1139
        %v1399 = vunpack.c.l.b16 %v1140
        %v1400 = vunpack.c.h.b16 %v1140
        %v1401 = vunpack.c.l.b16 %v1141
        %v1402 = vunpack.c.l.b16 %v1142
        %v1403 = vunpack.c.h.b16 %v1142
        %v1404 = vunpack.c.l.b16 %v1143
        %v1405 = vunpack.c.l.b16 %v1144
        %v1406 = vunpack.c.h.b16 %v1144
        %v1407 = vunpack.c.l.b16 %v1145
        %v1408 = vunpack.c.l.b16 %v1146
        %v1409 = vunpack.c.h.b16 %v1146
        %v1410 = vunpack.c.l.b16 %v1147
        %v1411 = vunpack.c.l.b16 %v1148
        %v1412 = vunpack.c.h.b16 %v1148
        %v1413 = vunpack.c.l.b16 %v1149
        %v1414 = vunpack.c.l.b16 %v1150
        %v1415 = vunpack.c.h.b16 %v1150
        %v1416 = vunpack.c.l.b16 %v1151
        %v1417 = vunpack.c.l.b16 %v1152
        %v1418 = vunpack.c.h.b16 %v1152
        %v1419 = vunpack.c.l.b16 %v1153
        %v1420 = vunpack.c.l.b16 %v1154
        %v1421 = vunpack.c.h.b16 %v1154
        %v1422 = vunpack.c.l.b16 %v1155
        %v1423 = vunpack.c.l.b16 %v1156
        %v1424 = vunpack.c.h.b16 %v1156
        %v1425 = vunpack.c.l.b16 %v1157
        %v1426 = vunpack.c.l.b16 %v1158
        %v1427 = vunpack.c.h.b16 %v1158
        %v1428 = vunpack.c.l.b16 %v1159
        %v1429 = vunpack.c.l.b16 %v1160
        %v1430 = vunpack.c.h.b16 %v1160
        %v1431 = vunpack.c.l.b16 %v1161
        %v1432 = vunpack.c.l.b16 %v1162
        %v1433 = vunpack.c.h.b16 %v1162
        %v1434 = vunpack.c.l.b16 %v1163
        %v1435 = vunpack.c.l.b16 %v1164
        %v1436 = vunpack.c.h.b16 %v1164
        %v1437 = vunpack.c.l.b16 %v1165
        %v1438 = vunpack.c.l.b16 %v1166
        %v1439 = vunpack.c.h.b16 %v1166
        %v1440 = vunpack.c.l.b16 %v1167
        %v1441 = vunpack.c.l.b16 %v1168
        %v1442 = vunpack.c.h.b16 %v1168
        %v1443 = vunpack.c.l.b16 %v1169
        %v1444 = vunpack.c.l.b16 %v1170
        %v1445 = vunpack.c.h.b16 %v1170
        %v1446 = vunpack.c.l.b16 %v1171
        %v1447 = vunpack.c.l.b16 %v1172
        %v1448 = vunpack.c.h.b16 %v1172
        %v1449 = vunpack.c.l.b16 %v1173
        %v1450 = vunpack.c.l.b16 %v1174
        %v1451 = vunpack.c.h.b16 %v1174
        %v1452 = vunpack.c.l.b16 %v1175
        %v1453 = vunpack.c.l.b16 %v1176
        %v1454 = vunpack.c.h.b16 %v1176
        %v1455 = vunpack.c.l.b16 %v1177
        %v1456 = vunpack.c.l.b16 %v1178
        %v1457 = vunpack.c.h.b16 %v1178
        %v1458 = vunpack.c.l.b16 %v1179
        %v1459 = vunpack.c.l.b16 %v1180
        %v1460 = vunpack.c.h.b16 %v1180
        %v1461 = vunpack.c.l.b16 %v1181
        %v1462 = vunpack.c.l.b16 %v1182
        %v1463 = vunpack.c.h.b16 %v1182
        %v1464 = vunpack.c.l.b16 %v1183
        %v1465 = vunpack.c.l.b16 %v1184
        %v1466 = vunpack.c.h.b16 %v1184
        %v1467 = vunpack.c.l.b16 %v1185
        %v1468 = vunpack.c.l.b16 %v1186
        %v1469 = vunpack.c.h.b16 %v1186
        %v1470 = vunpack.c.l.b16 %v1187
        %v1471 = vunpack.c.l.b16 %v1188
        %v1472 = vunpack.c.h.b16 %v1188
        %v1473 = vunpack.c.l.b16 %v1189
        %v1474 = vunpack.c.l.b16 %v1190
        %v1475 = vunpack.c.h.b16 %v1190
        %v1476 = vunpack.c.l.b16 %v1191
        %v1477 = vpack.c.b16 %v1318, %v1315
        %v1478 = vpack.c.b16 %v1319, %v1316
        %v1479 = vpack.c.b16 %v1320, %v1317
        %v1480 = vpack.c.b16 %v1324, %v1321
        %v1481 = vpack.c.b16 %v1325, %v1322
        %v1482 = vpack.c.b16 %v1326, %v1323
        %v1483 = vpack.c.b16 %v1330, %v1327
        %v1484 = vpack.c.b16 %v1331, %v1328
        %v1485 = vpack.c.b16 %v1332, %v1329
        %v1486 = vpack.c.b16 %v1336, %v1333
        %v1487 = vpack.c.b16 %v1337, %v1334
        %v1488 = vpack.c.b16 %v1338, %v1335
        %v1489 = vpack.c.b16 %v1342, %v1339
        %v1490 = vpack.c.b16 %v1343, %v1340
        %v1491 = vpack.c.b16 %v1344, %v1341
        %v1492 = vpack.c.b16 %v1348, %v1345
        %v1493 = vpack.c.b16 %v1349, %v1346
        %v1494 = vpack.c.b16 %v1350, %v1347
        %v1495 = vpack.c.b16 %v1354, %v1351
        %v1496 = vpack.c.b16 %v1355, %v1352
        %v1497 = vpack.c.b16 %v1356, %v1353
        %v1498 = vpack.c.b16 %v1360, %v1357
        %v1499 = vpack.c.b16 %v1361, %v1358
        %v1500 = vpack.c.b16 %v1362, %v1359
        %v1501 = vpack.c.b16 %v1366, %v1363
        %v1502 = vpack.c.b16 %v1367, %v1364
        %v1503 = vpack.c.b16 %v1368, %v1365
        %v1504 = vpack.c.b16 %v1372, %v1369
        %v1505 = vpack.c.b16 %v1373, %v1370
        %v1506 = vpack.c.b16 %v1374, %v1371
        %v1507 = vpack.c.b16 %v1378, %v1375
        %v1508 = vpack.c.b16 %v1379, %v1376
        %v1509 = vpack.c.b16 %v1380, %v1377
        %v1510 = vpack.c.b16 %v1384, %v1381
        %v1511 = vpack.c.b16 %v1385, %v1382
        %v1512 = vpack.c.b16 %v1386, %v1383
        %v1513 = vpack.c.b16 %v1390, %v1387
        %v1514 = vpack.c.b16 %v1391, %v1388
        %v1515 = vpack.c.b16 %v1392, %v1389
        %v1516 = vpack.c.b16 %v1396, %v1393
        %v1517 = vpack.c.b16 %v1397, %v1394
        %v1518 = vpack.c.b16 %v1398, %v1395
        %v1519 = vpack.c.b16 %v1402, %v1399
        %v1520 = vpack.c.b16 %v1403, %v1400
        %v1521 = vpack.c.b16 %v1404, %v1401
        %v1522 = vpack.c.b16 %v1408, %v1405
        %v1523 = vpack.c.b16 %v1409, %v1406
        %v1524 = vpack.c.b16 %v1410, %v1407
        %v1525 = vpack.c.b16 %v1414, %v1411
        %v1526 = vpack.c.b16 %v1415, %v1412
        %v1527 = vpack.c.b16 %v1416, %v1413
        %v1528 = vpack.c.b16 %v1420, %v1417
        %v1529 = vpack.c.b16 %v1421, %v1418
        %v1530 = vpack.c.b16 %v1422, %v1419
        %v1531 = vpack.c.b16 %v1426, %v1423
        %v1532 = vpack.c.b16 %v1427, %v1424
        %v1533 = vpack.c.b16 %v1428, %v1425
        %v1534 = vpack.c.b16 %v1432, %v1429
        %v1535 = vpack.c.b16 %v1433, %v1430
        %v1536 = vpack.c.b16 %v1434, %v1431
        %v1537 = vpack.c.b16 %v1438, %v1435
        %v1538 = vpack.c.b16 %v1439, %v1436
        %v1539 = vpack.c.b16 %v1440, %v1437
        %v1540 = vpack.c.b16 %v1444, %v1441
        %v1541 = vpack.c.b16 %v1445, %v1442
        %v1542 = vpack.c.b16 %v1446, %v1443
        %v1543 = vpack.c.b16 %v1450, %v1447
        %v1544 = vpack.c.b16 %v1451, %v1448
        %v1545 = vpack.c.b16 %v1452, %v1449
        %v1546 = vpack.c.b16 %v1456, %v1453
        %v1547 = vpack.c.b16 %v1457, %v1454
        %v1548 = vpack.c.b16 %v1458, %v1455
        %v1549 = vpack.c.b16 %v1462, %v1459
        %v1550 = vpack.c.b16 %v1463, %v1460
        %v1551 = vpack.c.b16 %v1464, %v1461
        %v1552 = vpack.c.b16 %v1468, %v1465
        %v1553 = vpack.c.b16 %v1469, %v1466
        %v1554 = vpack.c.b16 %v1470, %v1467
        %v1555 = vpack.c.b16 %v1474, %v1471
        %v1556 = vpack.c.b16 %v1475, %v1472
        %v1557 = vpack.c.b16 %v1476, %v1473
        %vm1639 = vcmask 392192
        %v1640 = vsel %vm1639, %v1203, 0
        %1642 = vmatpush.bf16.msra.mxu0 %v1498
        %1643 = vmatpush.bf16.msra.mxu0 %v1495
        %1644 = vmatpush.bf16.msra.mxu0 %v1492
        %1645 = vmatpush.bf16.msra.mxu0 %v1489
        %1646 = vmatpush.bf16.msra.mxu0 %v1486
        %1647 = vmatpush.bf16.msra.mxu0 %v1483
        %1648 = vmatpush.bf16.msra.mxu0 %v1480
        %1649 = vmatpush.bf16.msra.mxu0 %v1477
        %1650 = vmatmul.bf16.gmra.mxu0 %v1200
        %v1651 = vpop.f32.mrf.mxu0
        %v1652 = vadd.f32 %v1196, %v1651
        %v1653 = vpop.f32.mrf.mxu0
        %1654 = vdwg.mxu0
        %1655 = vmatpush.bf16.msra.mxu0 %v1522
        %1656 = vmatpush.bf16.msra.mxu0 %v1519
        %1657 = vmatpush.bf16.msra.mxu0 %v1516
        %1658 = vmatpush.bf16.msra.mxu0 %v1513
        %1659 = vmatpush.bf16.msra.mxu0 %v1510
        %1660 = vmatpush.bf16.msra.mxu0 %v1507
        %1661 = vmatpush.bf16.msra.mxu0 %v1504
        %1662 = vmatpush.bf16.msra.mxu0 %v1501
        %1663 = vmatmul.bf16.gmra.mxu0 %v1201
        %v1664 = vpop.f32.mrf.mxu0
        %v1665 = vadd.f32 %v1652, %v1664
        %v1666 = vpop.f32.mrf.mxu0
        %1667 = vdwg.mxu0
        %1668 = vmatpush.bf16.msra.mxu0 %v1546
        %1669 = vmatpush.bf16.msra.mxu0 %v1543
        %1670 = vmatpush.bf16.msra.mxu0 %v1540
        %1671 = vmatpush.bf16.msra.mxu0 %v1537
        %1672 = vmatpush.bf16.msra.mxu0 %v1534
        %1673 = vmatpush.bf16.msra.mxu0 %v1531
        %1674 = vmatpush.bf16.msra.mxu0 %v1528
        %1675 = vmatpush.bf16.msra.mxu0 %v1525
        %1676 = vmatmul.bf16.gmra.mxu0 %v1202
        %v1677 = vpop.f32.mrf.mxu0
        %v1678 = vadd.f32 %v1665, %v1677
        %v1679 = vpop.f32.mrf.mxu0
        %1680 = vdwg.mxu0
        %1681 = vmatpush.bf16.msra.mxu0 0
        %1682 = vmatpush.bf16.msra.mxu0 0
        %1683 = vmatpush.bf16.msra.mxu0 0
        %1684 = vmatpush.bf16.msra.mxu0 0
        %1685 = vmatpush.bf16.msra.mxu0 0
        %1686 = vmatpush.bf16.msra.mxu0 %v1555
        %1687 = vmatpush.bf16.msra.mxu0 %v1552
        %1688 = vmatpush.bf16.msra.mxu0 %v1549
        %1689 = vmatmul.bf16.gmra.mxu0 %v1640
        %v1690 = vpop.f32.mrf.mxu0
        %v1691 = vadd.f32 %v1678, %v1690
        %v1692 = vpop.f32.mrf.mxu0
        %1693 = vdwg.mxu0
        %1694 = vmatpush.bf16.msra.mxu0 %v1499
        %1695 = vmatpush.bf16.msra.mxu0 %v1496
        %1696 = vmatpush.bf16.msra.mxu0 %v1493
        %1697 = vmatpush.bf16.msra.mxu0 %v1490
        %1698 = vmatpush.bf16.msra.mxu0 %v1487
        %1699 = vmatpush.bf16.msra.mxu0 %v1484
        %1700 = vmatpush.bf16.msra.mxu0 %v1481
        %1701 = vmatpush.bf16.msra.mxu0 %v1478
        %1702 = vmatmul.bf16.gmra.mxu0 %v1200
        %v1703 = vpop.f32.mrf.mxu0
        %v1704 = vadd.f32 %v1196, %v1703
        %v1705 = vpop.f32.mrf.mxu0
        %1706 = vdwg.mxu0
        %1707 = vmatpush.bf16.msra.mxu0 %v1523
        %1708 = vmatpush.bf16.msra.mxu0 %v1520
        %1709 = vmatpush.bf16.msra.mxu0 %v1517
        %1710 = vmatpush.bf16.msra.mxu0 %v1514
        %1711 = vmatpush.bf16.msra.mxu0 %v1511
        %1712 = vmatpush.bf16.msra.mxu0 %v1508
        %1713 = vmatpush.bf16.msra.mxu0 %v1505
        %1714 = vmatpush.bf16.msra.mxu0 %v1502
        %1715 = vmatmul.bf16.gmra.mxu0 %v1201
        %v1716 = vpop.f32.mrf.mxu0
        %v1717 = vadd.f32 %v1704, %v1716
        %v1718 = vpop.f32.mrf.mxu0
        %1719 = vdwg.mxu0
        %1720 = vmatpush.bf16.msra.mxu0 %v1547
        %1721 = vmatpush.bf16.msra.mxu0 %v1544
        %1722 = vmatpush.bf16.msra.mxu0 %v1541
        %1723 = vmatpush.bf16.msra.mxu0 %v1538
        %1724 = vmatpush.bf16.msra.mxu0 %v1535
        %1725 = vmatpush.bf16.msra.mxu0 %v1532
        %1726 = vmatpush.bf16.msra.mxu0 %v1529
        %1727 = vmatpush.bf16.msra.mxu0 %v1526
        %1728 = vmatmul.bf16.gmra.mxu0 %v1202
        %v1729 = vpop.f32.mrf.mxu0
        %v1730 = vadd.f32 %v1717, %v1729
        %v1731 = vpop.f32.mrf.mxu0
        %1732 = vdwg.mxu0
        %1733 = vmatpush.bf16.msra.mxu0 0
        %1734 = vmatpush.bf16.msra.mxu0 0
        %1735 = vmatpush.bf16.msra.mxu0 0
        %1736 = vmatpush.bf16.msra.mxu0 0
        %1737 = vmatpush.bf16.msra.mxu0 0
        %1738 = vmatpush.bf16.msra.mxu0 %v1556
        %1739 = vmatpush.bf16.msra.mxu0 %v1553
        %1740 = vmatpush.bf16.msra.mxu0 %v1550
        %1741 = vmatmul.bf16.gmra.mxu0 %v1640
        %v1742 = vpop.f32.mrf.mxu0
        %v1743 = vadd.f32 %v1730, %v1742
        %v1744 = vpop.f32.mrf.mxu0
        %1745 = vdwg.mxu0
        %1746 = vmatpush.bf16.msra.mxu0 %v1500
        %1747 = vmatpush.bf16.msra.mxu0 %v1497
        %1748 = vmatpush.bf16.msra.mxu0 %v1494
        %1749 = vmatpush.bf16.msra.mxu0 %v1491
        %1750 = vmatpush.bf16.msra.mxu0 %v1488
        %1751 = vmatpush.bf16.msra.mxu0 %v1485
        %1752 = vmatpush.bf16.msra.mxu0 %v1482
        %1753 = vmatpush.bf16.msra.mxu0 %v1479
        %1754 = vmatmul.bf16.gmra.mxu0 %v1200
        %v1755 = vpop.f32.mrf.mxu0
        %v1756 = vadd.f32 %v1196, %v1755
        %v1757 = vpop.f32.mrf.mxu0
        %1758 = vdwg.mxu0
        %1759 = vmatpush.bf16.msra.mxu0 %v1524
        %1760 = vmatpush.bf16.msra.mxu0 %v1521
        %1761 = vmatpush.bf16.msra.mxu0 %v1518
        %1762 = vmatpush.bf16.msra.mxu0 %v1515
        %1763 = vmatpush.bf16.msra.mxu0 %v1512
        %1764 = vmatpush.bf16.msra.mxu0 %v1509
        %1765 = vmatpush.bf16.msra.mxu0 %v1506
        %1766 = vmatpush.bf16.msra.mxu0 %v1503
        %1767 = vmatmul.bf16.gmra.mxu0 %v1201
        %v1768 = vpop.f32.mrf.mxu0
        %v1769 = vadd.f32 %v1756, %v1768
        %v1770 = vpop.f32.mrf.mxu0
        %1771 = vdwg.mxu0
        %1772 = vmatpush.bf16.msra.mxu0 %v1548
        %1773 = vmatpush.bf16.msra.mxu0 %v1545
        %1774 = vmatpush.bf16.msra.mxu0 %v1542
        %1775 = vmatpush.bf16.msra.mxu0 %v1539
        %1776 = vmatpush.bf16.msra.mxu0 %v1536
        %1777 = vmatpush.bf16.msra.mxu0 %v1533
        %1778 = vmatpush.bf16.msra.mxu0 %v1530
        %1779 = vmatpush.bf16.msra.mxu0 %v1527
        %1780 = vmatmul.bf16.gmra.mxu0 %v1202
        %v1781 = vpop.f32.mrf.mxu0
        %v1782 = vadd.f32 %v1769, %v1781
        %v1783 = vpop.f32.mrf.mxu0
        %1784 = vdwg.mxu0
        %1785 = vmatpush.bf16.msra.mxu0 0
        %1786 = vmatpush.bf16.msra.mxu0 0
        %1787 = vmatpush.bf16.msra.mxu0 0
        %1788 = vmatpush.bf16.msra.mxu0 0
        %1789 = vmatpush.bf16.msra.mxu0 0
        %1790 = vmatpush.bf16.msra.mxu0 %v1557
        %1791 = vmatpush.bf16.msra.mxu0 %v1554
        %1792 = vmatpush.bf16.msra.mxu0 %v1551
        %1793 = vmatmul.bf16.gmra.mxu0 %v1640
        %v1794 = vpop.f32.mrf.mxu0
        %v1795 = vadd.f32 %v1782, %v1794
        %v1796 = vpop.f32.mrf.mxu0
        %1797 = vdwg.mxu0
        %v1798 = vld [vmem:[%s2] sm:$0x7]
        %v1800 = vperm.slane %v1798, 0
        %v1801 = vperm.slane %v1798, 1
        %v1802 = vperm.slane %v1798, 2
        %1803 = vrot.lane.b32.xlu0 %v1800, 109
        %v1804 = vpop.permute.xlu0 %1803
        %1805 = vrot.lane.b32.xlu0 %v1801, 109
        %v1806 = vpop.permute.xlu0 %1805
        %1807 = vrot.lane.b32.xlu0 %v1802, 109
        %v1808 = vpop.permute.xlu0 %1807
        %vm1809 = vcmask 891904
        %v1810 = vsel %vm1809, %v1804, %v1806
        %v1811 = vsel %vm1809, %v1806, %v1808
        %v1815 = vmul.f32 %v1691, %v1810
        %v1816 = vmul.f32 %v1743, %v1811
        %v1817 = vmul.f32 %v1795, %v1808
        %vm1818 = vcmask 148480
        %1819 = vst.msk [vmem:[%s453] sm:$0x3] %vm1818, 0
        %v1820 = vpack.c.bf16 %v1816, %v1815
        %v1821 = vpack.c.bf16 %v1817, %v1817
        %v1824 = vrot.slane %v1820, 2
        %v1825 = vrot.slane %v1821, 4
        %v1826 = vrot.slane %v1821, 6
        %vm1827 = vcmask 1041408
        %v1830 = vsel %vm1827, %v1820, %v1824
        %vm1831 = vcmask 1045508
        %v1834 = vsel %vm1831, %v1825, %v1826
        %vm1835 = vcmask 1043456
        %v1836 = vsel %vm1835, %v1830, %v1834
        %1838 = vrot.lane.b32.xlu0 %v1836, 19
        %v1839 = vpop.permute.xlu0 %1838
        %v1840 = vrot.slane %v1839, 6
        %vm1841 = vcmask 154624
        %v1842 = vsel %vm1841, %v1840, %v1839
        %vm1844 = vcmask 1041560
        %vm1845 = vcmask 1043458
        %vm1846 = vmor %vm1845, %vm1844
        %vm1847 = vcmask 398340
        %vm1848 = vmor %vm1847, %vm1846
        %1849 = vst.msk [vmem:[%s453] sm:$0x3f] %vm1848, %v1842
        %vm1850 = vcmask 550280
        %1851 = vst.msk [vmem:[%s453 + $0x4] sm:$0x3] %vm1850, 0
      $region48: #{vae3d_hhdv_forward.6} parent=43 // pred_fallthru
        _
      %p1852 = pneg %p458
      // Predicated region
      $region49: #{vae3d_hhdv_forward.6} parent=43 // pred_check
        _
      $region50: #{vae3d_hhdv_forward.6} parent=43 // pred_check_branch
        %1854 = sbr.rel (%p458) target = $region52
      $region51: #{vae3d_hhdv_forward.6} parent=43 // pred_region
        %vm1855 = vcmask 1041408
        %vm1856 = vcmask 1043458
        %vm1857 = vmor %vm1856, %vm1855
        %vm1858 = vcmask 553988
        %vm1859 = vmor %vm1858, %vm1857
        %1860 = vst.msk [vmem:[%s453] sm:$0x3f] %vm1859, 0
      $region52: #{vae3d_hhdv_forward.6} parent=43 // pred_fallthru
        _
      %p1861 = scmp.lt.s32.totalorder %s21, 1
      %s1862 = scalar_select %p1861, %s21, 1
      %p1863 = scmp.lt.s32.totalorder %s22, 17
      %s1864 = scalar_select %p1863, %s22, 17
      %s1865 = smul.addr %s1864, 3
      %s1866 = smul.addr %s1862, 54
      %s1867 = sadd.s32 %s1865, %s1866
      %s1868 = smul.addr %s1867, 2
      %s1869 = scalar_lea.vmem %s6, %s1868
      // Predicated region
      $region53: #{vae3d_hhdv_forward.6} parent=43 // pred_check
        %p1870 = pneg %p224
      $region54: #{vae3d_hhdv_forward.6} parent=43 // pred_check_branch
        %1872 = sbr.rel (%p1870) target = $region56
      $region55: #{vae3d_hhdv_forward.6} parent=43 // pred_region
        _
      $region56: #{vae3d_hhdv_forward.6} parent=43 // pred_fallthru
        _
    $region44: #{vae3d_hhdv_forward.6} parent=5 // pred_fallthru
      _
    %p1873 = scmp.le.s32.totalorder 2, %s12
    // Predicated region
    $region57: #{vae3d_hhdv_forward.6} parent=5 // pred_check
      %p1874 = pneg %p1873
    $region58: #{vae3d_hhdv_forward.6} parent=5 // pred_check_branch
      %1876 = sbr.rel (%p1874) target = $region60
    $region59: #{vae3d_hhdv_forward.6} parent=5 // pred_region
      %s1877 = ssub.s32 %s12, 2
      // Predicated region
      $region61: #{vae3d_hhdv_forward.6} parent=59 // pred_check
        %p1878 = pneg %p230
      $region62: #{vae3d_hhdv_forward.6} parent=59 // pred_check_branch
        %1880 = sbr.rel (%p1878) target = $region64
      $region63: #{vae3d_hhdv_forward.6} parent=59 // pred_region
        %p1881 = scmp.lt.s32.totalorder %s23, 1
        %s1882 = scalar_select %p1881, %s23, 1
        %p1883 = scmp.lt.s32.totalorder %s24, 17
        %s1884 = scalar_select %p1883, %s24, 17
        %s1885 = smul.addr %s1884, 3
        %s1886 = smul.addr %s1882, 54
        %s1887 = sadd.s32 %s1885, %s1886
        %s1888 = smul.addr %s1887, 2
        %s1889 = scalar_lea.vmem %s6, %s1888
      $region64: #{vae3d_hhdv_forward.6} parent=59 // pred_fallthru
        _
    $region60: #{vae3d_hhdv_forward.6} parent=5 // pred_fallthru
      _
  $region6: #{vae3d_hhdv_forward.6} parent=0 // loop_footer
    %s16 = sadd.s32 1, %s12
  $region7: #{vae3d_hhdv_forward.6} parent=0 // loop_footer_branch
    %11 = sbr.rel target = $region3
  $region8: #{vae3d_hhdv_forward.6} parent=0 // loop_exit
    _

// kernel: vae3d_hhdv_forward.7
$region0: #{vae3d_hhdv_forward.7}
  #allocation0 [shape = 'u32[]', space=smem, size = 0x4, offset = 0x4, fixed_abs, tag = 'smem constant byte address 0x4 - core index']
  #allocation1 [shape = 'u32[72,128]{1,0:T(1,128)}', space=vmem, size = 0x9000, scoped, tag = 'internal scratch']
  %s0 = inlined_call_operand.vmem [shape: f32[2,4,18,324], index: 0, kind: input, shape index: {}]
  %s1 = inlined_call_operand.vmem [shape: f32[2,3,16,286], index: 1, kind: output, shape index: {}]
  %s2 = sld [smem:[#allocation0]]
  $region37: #{vae3d_hhdv_forward.7} parent=0
    _
  %s4 = ssub.s32 1, %s2
  %s5 = scalar_select 0, %s4, %s2
  loop: start=0, step=1, limit=4
  $region2: #{vae3d_hhdv_forward.7} parent=0 // loop_pre_header
    _
  $region3: #{vae3d_hhdv_forward.7} parent=0 // loop_header
    %s7 = sphi 0, %s11
    %p8 = scmp.ge.s32.totalorder %s7, 4
    %s17 = sphi 0, %s19
    %s20 = sphi 0, %s17
    %s21 = sphi 0, %s20
    %s37 = sphi 0, %s21
    %s43 = sphi 0, %s45
    %s46 = sphi 0, %s43
    %s47 = sphi 0, %s46
    %s63 = sphi 0, %s47
  $region4: #{vae3d_hhdv_forward.7} parent=0 // loop_header_branch
    %10 = sbr.rel (%p8) target = $region8
  $region5: #{vae3d_hhdv_forward.7} parent=0 // loop_body
    %s12 = ssub.s32 %s7, 1
    %s13 = ssub.s32 %s7, 2
    %s14 = sadd.s32 %s7, 1
    %s15 = ssub.s32 %s7, %s14
    %p16 = scmp.eq.s32.totalorder %s15, 0
    %s18 = sadd.s32 %s17, 1
    %s19 = scalar_select %p16, %s17, %s18
    %p22 = pneg %p16
    %p23 = scmp.eq.s32.totalorder %s7, 1
    %p24 = por %p22, %p23
    %p25 = scmp.ne.s32.totalorder %s17, %s20
    %p26 = scmp.eq.s32.totalorder %s7, 0
    %p27 = por %p25, %p26
    %p28 = scmp.ne.s32.totalorder %s17, %s20
    %p29 = scmp.eq.s32.totalorder %s12, 1
    %p30 = por %p28, %p29
    %p31 = scmp.ne.s32.totalorder %s20, %s21
    %p32 = scmp.eq.s32.totalorder %s12, 0
    %p33 = por %p31, %p32
    %p34 = scmp.ne.s32.totalorder %s20, %s21
    %p35 = scmp.eq.s32.totalorder %s13, 1
    %p36 = por %p34, %p35
    %p38 = scmp.ne.s32.totalorder %s21, %s37
    %p39 = scmp.eq.s32.totalorder %s13, 0
    %p40 = por %p38, %p39
    %s41 = ssub.s32 %s7, %s14
    %p42 = scmp.eq.s32.totalorder %s41, 0
    %s44 = sadd.s32 %s43, 1
    %s45 = scalar_select %p42, %s43, %s44
    %p48 = pneg %p42
    %p49 = scmp.eq.s32.totalorder %s7, 1
    %p50 = por %p48, %p49
    %p51 = scmp.ne.s32.totalorder %s43, %s46
    %p52 = scmp.eq.s32.totalorder %s7, 0
    %p53 = por %p51, %p52
    %p54 = scmp.ne.s32.totalorder %s43, %s46
    %p55 = scmp.eq.s32.totalorder %s12, 1
    %p56 = por %p54, %p55
    %p57 = scmp.ne.s32.totalorder %s46, %s47
    %p58 = scmp.eq.s32.totalorder %s12, 0
    %p59 = por %p57, %p58
    %p60 = scmp.ne.s32.totalorder %s46, %s47
    %p61 = scmp.eq.s32.totalorder %s13, 1
    %p62 = por %p60, %p61
    %p64 = scmp.ne.s32.totalorder %s47, %s63
    %p65 = scmp.eq.s32.totalorder %s13, 0
    %p66 = por %p64, %p65
    %p67 = scmp.le.s32.totalorder 1, %s7
    %p68 = scmp.lt.s32.totalorder %s7, 3
    %p69 = pnand %p67, %p68
    %p70 = pneg %p69
    // Predicated region
    $region9: #{vae3d_hhdv_forward.7} parent=5 // pred_check
      _
    $region10: #{vae3d_hhdv_forward.7} parent=5 // pred_check_branch
      %72 = sbr.rel (%p69) target = $region12
    $region11: #{vae3d_hhdv_forward.7} parent=5 // pred_region
      %s73 = ssub.s32 %s7, 1
    $region12: #{vae3d_hhdv_forward.7} parent=5 // pred_fallthru
      _
    %p74 = scmp.lt.s32.totalorder %s7, 2
    // Predicated region
    $region13: #{vae3d_hhdv_forward.7} parent=5 // pred_check
      %p75 = pneg %p74
    $region14: #{vae3d_hhdv_forward.7} parent=5 // pred_check_branch
      %77 = sbr.rel (%p75) target = $region16
    $region15: #{vae3d_hhdv_forward.7} parent=5 // pred_region
      // Predicated region
      $region17: #{vae3d_hhdv_forward.7} parent=15 // pred_check
        %p78 = pneg %p27
      $region18: #{vae3d_hhdv_forward.7} parent=15 // pred_check_branch
        %80 = sbr.rel (%p78) target = $region20
      $region19: #{vae3d_hhdv_forward.7} parent=15 // pred_region
        %p81 = scmp.lt.s32.totalorder %s7, 1
        %s82 = scalar_select %p81, %s7, 1
        %s83 = smul.addr %s82, 36
        %s84 = smul.addr %s83, 8
        %s85 = scalar_lea.vmem %s0, %s84
      $region20: #{vae3d_hhdv_forward.7} parent=15 // pred_fallthru
        _
    $region16: #{vae3d_hhdv_forward.7} parent=5 // pred_fallthru
      _
    %p86 = scmp.le.s32.totalorder 1, %s7
    %p87 = scmp.lt.s32.totalorder %s7, 3
    %p88 = pnand %p86, %p87
    %p89 = pneg %p88
    // Predicated region
    $region21: #{vae3d_hhdv_forward.7} parent=5 // pred_check
      _
    $region22: #{vae3d_hhdv_forward.7} parent=5 // pred_check_branch
      %91 = sbr.rel (%p88) target = $region24
    $region23: #{vae3d_hhdv_forward.7} parent=5 // pred_region
      %s92 = ssub.s32 %s7, 1
      %p93 = scmp.lt.s32.totalorder %s12, 1
      %s94 = scalar_select %p93, %s12, 1
      %s95 = smul.addr %s94, 36
      %s96 = smul.addr %s95, 8
      %s97 = scalar_lea.vmem %s0, %s96
      %p98 = pneg %p33
      %p99 = pneg %p30
      %p100 = pneg %p59
      %p101 = pneg %p56
      %p102 = scmp.lt.s32.totalorder %s12, 1
      %s103 = scalar_select %p102, %s12, 1
      %s104 = smul.addr %s103, 18
      %s105 = smul.addr %s104, 8
      %s106 = scalar_lea.vmem %s1, %s105
      %p107 = scmp.lt.s32.totalorder %s12, 1
      %s108 = scalar_select %p107, %s12, 1
      %s109 = smul.addr %s108, 36
      %s110 = smul.addr %s109, 8
      %s111 = scalar_lea.vmem %s0, %s110
      %p112 = scmp.lt.s32.totalorder %s12, 1
      %s113 = scalar_select %p112, %s12, 1
      %s114 = smul.addr %s113, 18
      %s115 = smul.addr %s114, 8
      %s116 = scalar_lea.vmem %s1, %s115
      %v117 = vld [vmem:[%s111] sm:$0xff]
      %v118 = vld [vmem:[%s111 + $0x8] sm:$0xff]
      %v119 = vld [vmem:[%s111 + $0x10] sm:$0xff]
      %v120 = vld [vmem:[%s111 + $0x18] sm:$0xff]
      %v121 = vld [vmem:[%s111 + $0x20] sm:$0xff]
      %v122 = vld [vmem:[%s111 + $0x28] sm:$0xff]
      %v123 = vld [vmem:[%s111 + $0x30] sm:$0x3]
      %v124 = vld [vmem:[%s111 + $0x38] sm:$0x3]
      %v125 = vld [vmem:[%s111 + $0x40] sm:$0x3]
      %v126 = vld [vmem:[%s111 + $0x48] sm:$0xff]
      %v127 = vld [vmem:[%s111 + $0x50] sm:$0xff]
      %v128 = vld [vmem:[%s111 + $0x58] sm:$0xff]
      %v129 = vld [vmem:[%s111 + $0x60] sm:$0xff]
      %v130 = vld [vmem:[%s111 + $0x68] sm:$0xff]
      %v131 = vld [vmem:[%s111 + $0x70] sm:$0xff]
      %v132 = vld [vmem:[%s111 + $0x78] sm:$0x3]
      %v133 = vld [vmem:[%s111 + $0x80] sm:$0x3]
      %v134 = vld [vmem:[%s111 + $0x88] sm:$0x3]
      %v135 = vld [vmem:[%s111 + $0x90] sm:$0xff]
      %v136 = vld [vmem:[%s111 + $0x98] sm:$0xff]
      %v137 = vld [vmem:[%s111 + $0xa0] sm:$0xff]
      %v138 = vld [vmem:[%s111 + $0xa8] sm:$0xff]
      %v139 = vld [vmem:[%s111 + $0xb0] sm:$0xff]
      %v140 = vld [vmem:[%s111 + $0xb8] sm:$0xff]
      %v141 = vld [vmem:[%s111 + $0xc0] sm:$0x3]
      %v142 = vld [vmem:[%s111 + $0xc8] sm:$0x3]
      %v143 = vld [vmem:[%s111 + $0xd0] sm:$0x3]
      %v144 = vld [vmem:[%s111 + $0xd8] sm:$0xff]
      %v145 = vld [vmem:[%s111 + $0xe0] sm:$0xff]
      %v146 = vld [vmem:[%s111 + $0xe8] sm:$0xff]
      %v147 = vld [vmem:[%s111 + $0xf0] sm:$0xff]
      %v148 = vld [vmem:[%s111 + $0xf8] sm:$0xff]
      %v149 = vld [vmem:[%s111 + $0x100] sm:$0xff]
      %v150 = vld [vmem:[%s111 + $0x108] sm:$0x3]
      %v151 = vld [vmem:[%s111 + $0x110] sm:$0x3]
      %v152 = vld [vmem:[%s111 + $0x118] sm:$0x3]
      %vm171 = vcmask 1041408
      %v172 = vrot.slane %v126, 6
      %v173 = vrot.slane %v127, 6
      %v174 = vrot.slane %v128, 6
      %v175 = vrot.slane %v129, 6
      %v176 = vsel %vm171, %v172, %v175
      %v177 = vrot.slane %v130, 6
      %v178 = vsel %vm171, %v173, %v177
      %v179 = vrot.slane %v131, 6
      %v180 = vsel %vm171, %v174, %v179
      %v181 = vrot.slane %v135, 6
      %v182 = vrot.slane %v136, 6
      %v183 = vrot.slane %v137, 6
      %v184 = vrot.slane %v138, 6
      %v185 = vsel %vm171, %v181, %v184
      %v186 = vrot.slane %v139, 6
      %v187 = vsel %vm171, %v182, %v186
      %v188 = vrot.slane %v140, 6
      %v189 = vsel %vm171, %v183, %v188
      %v190 = vrot.slane %v144, 6
      %v191 = vrot.slane %v145, 6
      %v192 = vrot.slane %v146, 6
      %v193 = vrot.slane %v147, 6
      %v194 = vsel %vm171, %v190, %v193
      %v195 = vrot.slane %v148, 6
      %v196 = vsel %vm171, %v191, %v195
      %v197 = vrot.slane %v149, 6
      %v198 = vsel %vm171, %v192, %v197
      %v226 = vsub.f32 %v126, %v172
      %v227 = vsub.f32 %v127, %v173
      %v228 = vsub.f32 %v128, %v174
      %v229 = vsub.f32 %v129, %v176
      %v230 = vsub.f32 %v130, %v178
      %v231 = vsub.f32 %v131, %v180
      %v232 = vsub.f32 %v132, %v175
      %v233 = vsub.f32 %v133, %v177
      %v234 = vsub.f32 %v134, %v179
      %v235 = vsub.f32 %v135, %v181
      %v236 = vsub.f32 %v136, %v182
      %v237 = vsub.f32 %v137, %v183
      %v238 = vsub.f32 %v138, %v185
      %v239 = vsub.f32 %v139, %v187
      %v240 = vsub.f32 %v140, %v189
      %v241 = vsub.f32 %v141, %v184
      %v242 = vsub.f32 %v142, %v186
      %v243 = vsub.f32 %v143, %v188
      %v244 = vsub.f32 %v144, %v190
      %v245 = vsub.f32 %v145, %v191
      %v246 = vsub.f32 %v146, %v192
      %v247 = vsub.f32 %v147, %v194
      %v248 = vsub.f32 %v148, %v196
      %v249 = vsub.f32 %v149, %v198
      %v250 = vsub.f32 %v150, %v193
      %v251 = vsub.f32 %v151, %v195
      %v252 = vsub.f32 %v152, %v197
      %v253 = vmul.f32 %v226, 0.5
      %v254 = vmul.f32 %v227, 0.5
      %v255 = vmul.f32 %v228, 0.5
      %v256 = vmul.f32 %v229, 0.5
      %v257 = vmul.f32 %v230, 0.5
      %v258 = vmul.f32 %v231, 0.5
      %v259 = vmul.f32 %v232, 0.5
      %v260 = vmul.f32 %v233, 0.5
      %v261 = vmul.f32 %v234, 0.5
      %v262 = vmul.f32 %v235, 0.5
      %v263 = vmul.f32 %v236, 0.5
      %v264 = vmul.f32 %v237, 0.5
      %v265 = vmul.f32 %v238, 0.5
      %v266 = vmul.f32 %v239, 0.5
      %v267 = vmul.f32 %v240, 0.5
      %v268 = vmul.f32 %v241, 0.5
      %v269 = vmul.f32 %v242, 0.5
      %v270 = vmul.f32 %v243, 0.5
      %v271 = vmul.f32 %v244, 0.5
      %v272 = vmul.f32 %v245, 0.5
      %v273 = vmul.f32 %v246, 0.5
      %v274 = vmul.f32 %v247, 0.5
      %v275 = vmul.f32 %v248, 0.5
      %v276 = vmul.f32 %v249, 0.5
      %v277 = vmul.f32 %v250, 0.5
      %v278 = vmul.f32 %v251, 0.5
      %v279 = vmul.f32 %v252, 0.5
      %295 = vrot.lane.b32.xlu0 %v117, 36
      %v296 = vpop.permute.xlu0 %295
      %297 = vrot.lane.b32.xlu0 %v118, 36
      %v298 = vpop.permute.xlu0 %297
      %299 = vrot.lane.b32.xlu0 %v119, 36
      %v300 = vpop.permute.xlu0 %299
      %301 = vrot.lane.b32.xlu0 %v120, 36
      %v302 = vpop.permute.xlu0 %301
      %303 = vrot.lane.b32.xlu0 %v121, 36
      %v304 = vpop.permute.xlu0 %303
      %305 = vrot.lane.b32.xlu0 %v122, 36
      %v306 = vpop.permute.xlu0 %305
      %307 = vrot.lane.b32.xlu0 %v123, 36
      %v308 = vpop.permute.xlu0 %307
      %309 = vrot.lane.b32.xlu0 %v124, 36
      %v310 = vpop.permute.xlu0 %309
      %311 = vrot.lane.b32.xlu0 %v125, 36
      %v312 = vpop.permute.xlu0 %311
      %313 = vrot.lane.b32.xlu0 %v135, 36
      %v314 = vpop.permute.xlu0 %313
      %315 = vrot.lane.b32.xlu0 %v136, 36
      %v316 = vpop.permute.xlu0 %315
      %317 = vrot.lane.b32.xlu0 %v137, 36
      %v318 = vpop.permute.xlu0 %317
      %319 = vrot.lane.b32.xlu0 %v138, 36
      %v320 = vpop.permute.xlu0 %319
      %321 = vrot.lane.b32.xlu0 %v139, 36
      %v322 = vpop.permute.xlu0 %321
      %323 = vrot.lane.b32.xlu0 %v140, 36
      %v324 = vpop.permute.xlu0 %323
      %325 = vrot.lane.b32.xlu0 %v141, 36
      %v326 = vpop.permute.xlu0 %325
      %327 = vrot.lane.b32.xlu0 %v142, 36
      %v328 = vpop.permute.xlu0 %327
      %329 = vrot.lane.b32.xlu0 %v143, 36
      %v330 = vpop.permute.xlu0 %329
      %331 = vrot.lane.b32.xlu0 %v144, 36
      %v332 = vpop.permute.xlu0 %331
      %333 = vrot.lane.b32.xlu0 %v145, 36
      %v334 = vpop.permute.xlu0 %333
      %335 = vrot.lane.b32.xlu0 %v146, 36
      %v336 = vpop.permute.xlu0 %335
      %337 = vrot.lane.b32.xlu0 %v147, 36
      %v338 = vpop.permute.xlu0 %337
      %339 = vrot.lane.b32.xlu0 %v148, 36
      %v340 = vpop.permute.xlu0 %339
      %341 = vrot.lane.b32.xlu0 %v149, 36
      %v342 = vpop.permute.xlu0 %341
      %343 = vrot.lane.b32.xlu0 %v150, 36
      %v344 = vpop.permute.xlu0 %343
      %345 = vrot.lane.b32.xlu0 %v151, 36
      %v346 = vpop.permute.xlu0 %345
      %347 = vrot.lane.b32.xlu0 %v152, 36
      %v348 = vpop.permute.xlu0 %347
      %vm349 = vcmask 293888
      %v350 = vsel %vm349, %v296, %v298
      %v351 = vsel %vm349, %v298, %v300
      %v352 = vsel %vm349, %v302, %v304
      %v353 = vsel %vm349, %v304, %v306
      %v354 = vsel %vm349, %v308, %v310
      %v355 = vsel %vm349, %v310, %v312
      %v356 = vsel %vm349, %v314, %v316
      %v357 = vsel %vm349, %v316, %v318
      %v358 = vsel %vm349, %v320, %v322
      %v359 = vsel %vm349, %v322, %v324
      %v360 = vsel %vm349, %v326, %v328
      %v361 = vsel %vm349, %v328, %v330
      %v362 = vsel %vm349, %v332, %v334
      %v363 = vsel %vm349, %v334, %v336
      %v364 = vsel %vm349, %v338, %v340
      %v365 = vsel %vm349, %v340, %v342
      %v366 = vsel %vm349, %v344, %v346
      %v367 = vsel %vm349, %v346, %v348
      %v395 = vsub.f32 %v117, %v296
      %v396 = vsub.f32 %v118, %v350
      %v397 = vsub.f32 %v119, %v351
      %v398 = vsub.f32 %v120, %v302
      %v399 = vsub.f32 %v121, %v352
      %v400 = vsub.f32 %v122, %v353
      %v401 = vsub.f32 %v123, %v308
      %v402 = vsub.f32 %v124, %v354
      %v403 = vsub.f32 %v125, %v355
      %v404 = vsub.f32 %v135, %v314
      %v405 = vsub.f32 %v136, %v356
      %v406 = vsub.f32 %v137, %v357
      %v407 = vsub.f32 %v138, %v320
      %v408 = vsub.f32 %v139, %v358
      %v409 = vsub.f32 %v140, %v359
      %v410 = vsub.f32 %v141, %v326
      %v411 = vsub.f32 %v142, %v360
      %v412 = vsub.f32 %v143, %v361
      %v413 = vsub.f32 %v144, %v332
      %v414 = vsub.f32 %v145, %v362
      %v415 = vsub.f32 %v146, %v363
      %v416 = vsub.f32 %v147, %v338
      %v417 = vsub.f32 %v148, %v364
      %v418 = vsub.f32 %v149, %v365
      %v419 = vsub.f32 %v150, %v344
      %v420 = vsub.f32 %v151, %v366
      %v421 = vsub.f32 %v152, %v367
      %v422 = vmul.f32 %v395, 0.5
      %v423 = vmul.f32 %v396, 0.5
      %v424 = vmul.f32 %v397, 0.5
      %v425 = vmul.f32 %v398, 0.5
      %v426 = vmul.f32 %v399, 0.5
      %v427 = vmul.f32 %v400, 0.5
      %v428 = vmul.f32 %v401, 0.5
      %v429 = vmul.f32 %v402, 0.5
      %v430 = vmul.f32 %v403, 0.5
      %v431 = vmul.f32 %v404, 0.5
      %v432 = vmul.f32 %v405, 0.5
      %v433 = vmul.f32 %v406, 0.5
      %v434 = vmul.f32 %v407, 0.5
      %v435 = vmul.f32 %v408, 0.5
      %v436 = vmul.f32 %v409, 0.5
      %v437 = vmul.f32 %v410, 0.5
      %v438 = vmul.f32 %v411, 0.5
      %v439 = vmul.f32 %v412, 0.5
      %v440 = vmul.f32 %v413, 0.5
      %v441 = vmul.f32 %v414, 0.5
      %v442 = vmul.f32 %v415, 0.5
      %v443 = vmul.f32 %v416, 0.5
      %v444 = vmul.f32 %v417, 0.5
      %v445 = vmul.f32 %v418, 0.5
      %v446 = vmul.f32 %v419, 0.5
      %v447 = vmul.f32 %v420, 0.5
      %v448 = vmul.f32 %v421, 0.5
      %452 = vrot.lane.b32.xlu0 %v117, 2
      %v453 = vpop.permute.xlu0 %452
      %454 = vrot.lane.b32.xlu0 %v118, 2
      %v455 = vpop.permute.xlu0 %454
      %456 = vrot.lane.b32.xlu0 %v119, 2
      %v457 = vpop.permute.xlu0 %456
      %458 = vrot.lane.b32.xlu0 %v120, 2
      %v459 = vpop.permute.xlu0 %458
      %460 = vrot.lane.b32.xlu0 %v121, 2
      %v461 = vpop.permute.xlu0 %460
      %462 = vrot.lane.b32.xlu0 %v122, 2
      %v463 = vpop.permute.xlu0 %462
      %464 = vrot.lane.b32.xlu0 %v123, 2
      %v465 = vpop.permute.xlu0 %464
      %466 = vrot.lane.b32.xlu0 %v124, 2
      %v467 = vpop.permute.xlu0 %466
      %468 = vrot.lane.b32.xlu0 %v125, 2
      %v469 = vpop.permute.xlu0 %468
      %470 = vrot.lane.b32.xlu0 %v126, 2
      %v471 = vpop.permute.xlu0 %470
      %472 = vrot.lane.b32.xlu0 %v127, 2
      %v473 = vpop.permute.xlu0 %472
      %474 = vrot.lane.b32.xlu0 %v128, 2
      %v475 = vpop.permute.xlu0 %474
      %476 = vrot.lane.b32.xlu0 %v129, 2
      %v477 = vpop.permute.xlu0 %476
      %478 = vrot.lane.b32.xlu0 %v130, 2
      %v479 = vpop.permute.xlu0 %478
      %480 = vrot.lane.b32.xlu0 %v131, 2
      %v481 = vpop.permute.xlu0 %480
      %482 = vrot.lane.b32.xlu0 %v132, 2
      %v483 = vpop.permute.xlu0 %482
      %484 = vrot.lane.b32.xlu0 %v133, 2
      %v485 = vpop.permute.xlu0 %484
      %486 = vrot.lane.b32.xlu0 %v134, 2
      %v487 = vpop.permute.xlu0 %486
      %488 = vrot.lane.b32.xlu0 %v144, 2
      %v489 = vpop.permute.xlu0 %488
      %490 = vrot.lane.b32.xlu0 %v145, 2
      %v491 = vpop.permute.xlu0 %490
      %492 = vrot.lane.b32.xlu0 %v146, 2
      %v493 = vpop.permute.xlu0 %492
      %494 = vrot.lane.b32.xlu0 %v147, 2
      %v495 = vpop.permute.xlu0 %494
      %496 = vrot.lane.b32.xlu0 %v148, 2
      %v497 = vpop.permute.xlu0 %496
      %498 = vrot.lane.b32.xlu0 %v149, 2
      %v499 = vpop.permute.xlu0 %498
      %500 = vrot.lane.b32.xlu0 %v150, 2
      %v501 = vpop.permute.xlu0 %500
      %502 = vrot.lane.b32.xlu0 %v151, 2
      %v503 = vpop.permute.xlu0 %502
      %504 = vrot.lane.b32.xlu0 %v152, 2
      %v505 = vpop.permute.xlu0 %504
      %vm506 = vcmask 15360
      %v507 = vsel %vm506, %v453, %v455
      %v508 = vsel %vm506, %v455, %v457
      %v509 = vsel %vm506, %v459, %v461
      %v510 = vsel %vm506, %v461, %v463
      %v511 = vsel %vm506, %v465, %v467
      %v512 = vsel %vm506, %v467, %v469
      %v513 = vsel %vm506, %v471, %v473
      %v514 = vsel %vm506, %v473, %v475
      %v515 = vsel %vm506, %v477, %v479
      %v516 = vsel %vm506, %v479, %v481
      %v517 = vsel %vm506, %v483, %v485
      %v518 = vsel %vm506, %v485, %v487
      %v519 = vsel %vm506, %v489, %v491
      %v520 = vsel %vm506, %v491, %v493
      %v521 = vsel %vm506, %v495, %v497
      %v522 = vsel %vm506, %v497, %v499
      %v523 = vsel %vm506, %v501, %v503
      %v524 = vsel %vm506, %v503, %v505
      %v552 = vsub.f32 %v117, %v453
      %v553 = vsub.f32 %v118, %v507
      %v554 = vsub.f32 %v119, %v508
      %v555 = vsub.f32 %v120, %v459
      %v556 = vsub.f32 %v121, %v509
      %v557 = vsub.f32 %v122, %v510
      %v558 = vsub.f32 %v123, %v465
      %v559 = vsub.f32 %v124, %v511
      %v560 = vsub.f32 %v125, %v512
      %v561 = vsub.f32 %v126, %v471
      %v562 = vsub.f32 %v127, %v513
      %v563 = vsub.f32 %v128, %v514
      %v564 = vsub.f32 %v129, %v477
      %v565 = vsub.f32 %v130, %v515
      %v566 = vsub.f32 %v131, %v516
      %v567 = vsub.f32 %v132, %v483
      %v568 = vsub.f32 %v133, %v517
      %v569 = vsub.f32 %v134, %v518
      %v570 = vsub.f32 %v144, %v489
      %v571 = vsub.f32 %v145, %v519
      %v572 = vsub.f32 %v146, %v520
      %v573 = vsub.f32 %v147, %v495
      %v574 = vsub.f32 %v148, %v521
      %v575 = vsub.f32 %v149, %v522
      %v576 = vsub.f32 %v150, %v501
      %v577 = vsub.f32 %v151, %v523
      %v578 = vsub.f32 %v152, %v524
      %v579 = vmul.f32 %v552, 0.5
      %v580 = vmul.f32 %v553, 0.5
      %v581 = vmul.f32 %v554, 0.5
      %v582 = vmul.f32 %v555, 0.5
      %v583 = vmul.f32 %v556, 0.5
      %v584 = vmul.f32 %v557, 0.5
      %v585 = vmul.f32 %v558, 0.5
      %v586 = vmul.f32 %v559, 0.5
      %v587 = vmul.f32 %v560, 0.5
      %v588 = vmul.f32 %v561, 0.5
      %v589 = vmul.f32 %v562, 0.5
      %v590 = vmul.f32 %v563, 0.5
      %v591 = vmul.f32 %v564, 0.5
      %v592 = vmul.f32 %v565, 0.5
      %v593 = vmul.f32 %v566, 0.5
      %v594 = vmul.f32 %v567, 0.5
      %v595 = vmul.f32 %v568, 0.5
      %v596 = vmul.f32 %v569, 0.5
      %v597 = vmul.f32 %v570, 0.5
      %v598 = vmul.f32 %v571, 0.5
      %v599 = vmul.f32 %v572, 0.5
      %v600 = vmul.f32 %v573, 0.5
      %v601 = vmul.f32 %v574, 0.5
      %v602 = vmul.f32 %v575, 0.5
      %v603 = vmul.f32 %v576, 0.5
      %v604 = vmul.f32 %v577, 0.5
      %v605 = vmul.f32 %v578, 0.5
      %615 = vrot.lane.b32.xlu0 %v588, 17
      %v616 = vpop.permute.xlu0 %615
      %617 = vrot.lane.b32.xlu0 %v589, 17
      %v618 = vpop.permute.xlu0 %617
      %619 = vrot.lane.b32.xlu0 %v590, 17
      %v620 = vpop.permute.xlu0 %619
      %621 = vrot.lane.b32.xlu0 %v591, 17
      %v622 = vpop.permute.xlu0 %621
      %623 = vrot.lane.b32.xlu0 %v592, 17
      %v624 = vpop.permute.xlu0 %623
      %625 = vrot.lane.b32.xlu0 %v593, 17
      %v626 = vpop.permute.xlu0 %625
      %627 = vrot.lane.b32.xlu0 %v594, 17
      %v628 = vpop.permute.xlu0 %627
      %629 = vrot.lane.b32.xlu0 %v595, 17
      %v630 = vpop.permute.xlu0 %629
      %631 = vrot.lane.b32.xlu0 %v596, 17
      %v632 = vpop.permute.xlu0 %631
      %vm633 = vcmask 138240
      %v634 = vsel %vm633, %v616, %v618
      %v635 = vsel %vm633, %v618, %v620
      %v636 = vsel %vm633, %v622, %v624
      %v637 = vsel %vm633, %v624, %v626
      %v638 = vsel %vm633, %v628, %v630
      %v639 = vsel %vm633, %v630, %v632
      %v649 = vsub.f32 %v431, %v616
      %v650 = vsub.f32 %v432, %v634
      %v651 = vsub.f32 %v433, %v635
      %v652 = vsub.f32 %v434, %v622
      %v653 = vsub.f32 %v435, %v636
      %v654 = vsub.f32 %v436, %v637
      %v655 = vsub.f32 %v437, %v628
      %v656 = vsub.f32 %v438, %v638
      %v657 = vsub.f32 %v439, %v639
      %vm667 = vcmask 1046528
      %v668 = vrot.slane %v271, 1
      %v669 = vrot.slane %v274, 1
      %v670 = vsel %vm667, %v668, %v669
      %v671 = vrot.slane %v272, 1
      %v672 = vrot.slane %v275, 1
      %v673 = vsel %vm667, %v671, %v672
      %v674 = vrot.slane %v273, 1
      %v675 = vrot.slane %v276, 1
      %v676 = vsel %vm667, %v674, %v675
      %v677 = vrot.slane %v277, 1
      %v678 = vsel %vm667, %v669, %v677
      %v679 = vrot.slane %v278, 1
      %v680 = vsel %vm667, %v672, %v679
      %v681 = vrot.slane %v279, 1
      %v682 = vsel %vm667, %v675, %v681
      %683 = vrot.lane.b32.xlu0 %v670, 18
      %v684 = vpop.permute.xlu0 %683
      %685 = vrot.lane.b32.xlu0 %v673, 18
      %v686 = vpop.permute.xlu0 %685
      %687 = vrot.lane.b32.xlu0 %v676, 18
      %v688 = vpop.permute.xlu0 %687
      %689 = vrot.lane.b32.xlu0 %v678, 18
      %v690 = vpop.permute.xlu0 %689
      %691 = vrot.lane.b32.xlu0 %v680, 18
      %v692 = vpop.permute.xlu0 %691
      %693 = vrot.lane.b32.xlu0 %v682, 18
      %v694 = vpop.permute.xlu0 %693
      %695 = vrot.lane.b32.xlu0 %v677, 18
      %v696 = vpop.permute.xlu0 %695
      %697 = vrot.lane.b32.xlu0 %v679, 18
      %v698 = vpop.permute.xlu0 %697
      %699 = vrot.lane.b32.xlu0 %v681, 18
      %v700 = vpop.permute.xlu0 %699
      %vm701 = vcmask 146432
      %v702 = vsel %vm701, %v684, %v686
      %v703 = vsel %vm701, %v686, %v688
      %v704 = vsel %vm701, %v690, %v692
      %v705 = vsel %vm701, %v692, %v694
      %v706 = vsel %vm701, %v696, %v698
      %v707 = vsel %vm701, %v698, %v700
      %v717 = vadd.f32 %v649, %v684
      %v718 = vadd.f32 %v650, %v702
      %v719 = vadd.f32 %v651, %v703
      %v720 = vadd.f32 %v652, %v690
      %v721 = vadd.f32 %v653, %v704
      %v722 = vadd.f32 %v654, %v705
      %v723 = vadd.f32 %v655, %v696
      %v724 = vadd.f32 %v656, %v706
      %v725 = vadd.f32 %v657, %v707
      %v735 = vrot.slane %v717, 1
      %v736 = vrot.slane %v720, 1
      %v737 = vsel %vm667, %v735, %v736
      %v738 = vrot.slane %v718, 1
      %v739 = vrot.slane %v721, 1
      %v740 = vsel %vm667, %v738, %v739
      %v741 = vrot.slane %v719, 1
      %v742 = vrot.slane %v722, 1
      %v743 = vsel %vm667, %v741, %v742
      %v744 = vrot.slane %v723, 1
      %v745 = vsel %vm667, %v736, %v744
      %v746 = vrot.slane %v724, 1
      %v747 = vsel %vm667, %v739, %v746
      %v748 = vrot.slane %v725, 1
      %v749 = vsel %vm667, %v742, %v748
      %750 = vrot.lane.b32.xlu0 %v737, 91
      %v751 = vpop.permute.xlu0 %750
      %752 = vrot.lane.b32.xlu0 %v740, 91
      %v753 = vpop.permute.xlu0 %752
      %754 = vrot.lane.b32.xlu0 %v743, 91
      %v755 = vpop.permute.xlu0 %754
      %756 = vrot.lane.b32.xlu0 %v745, 91
      %v757 = vpop.permute.xlu0 %756
      %758 = vrot.lane.b32.xlu0 %v747, 91
      %v759 = vpop.permute.xlu0 %758
      %760 = vrot.lane.b32.xlu0 %v749, 91
      %v761 = vpop.permute.xlu0 %760
      %vm762 = vcmask 744448
      %v763 = vsel %vm762, %v751, %v753
      %v764 = vsel %vm762, %v753, %v755
      %v765 = vsel %vm762, %v757, %v759
      %v766 = vsel %vm762, %v759, %v761
      %773 = vst [vmem:[%s116] sm:$0xff] %v763
      %774 = vst [vmem:[%s116 + $0x8] sm:$0xff] %v764
      %vm775 = vcmask 244736
      %776 = vst.msk [vmem:[%s116 + $0x10] sm:$0xff] %vm775, %v755
      %777 = vst [vmem:[%s116 + $0x18] sm:$0xff] %v765
      %778 = vst [vmem:[%s116 + $0x20] sm:$0xff] %v766
      %779 = vst.msk [vmem:[%s116 + $0x28] sm:$0xff] %vm775, %v761
      %v789 = vrot.slane %v262, 1
      %v790 = vrot.slane %v265, 1
      %v791 = vsel %vm667, %v789, %v790
      %v792 = vrot.slane %v263, 1
      %v793 = vrot.slane %v266, 1
      %v794 = vsel %vm667, %v792, %v793
      %v795 = vrot.slane %v264, 1
      %v796 = vrot.slane %v267, 1
      %v797 = vsel %vm667, %v795, %v796
      %v798 = vrot.slane %v268, 1
      %v799 = vsel %vm667, %v790, %v798
      %v800 = vrot.slane %v269, 1
      %v801 = vsel %vm667, %v793, %v800
      %v802 = vrot.slane %v270, 1
      %v803 = vsel %vm667, %v796, %v802
      %804 = vrot.lane.b32.xlu0 %v791, 1
      %v805 = vpop.permute.xlu0 %804
      %806 = vrot.lane.b32.xlu0 %v794, 1
      %v807 = vpop.permute.xlu0 %806
      %808 = vrot.lane.b32.xlu0 %v797, 1
      %v809 = vpop.permute.xlu0 %808
      %810 = vrot.lane.b32.xlu0 %v799, 1
      %v811 = vpop.permute.xlu0 %810
      %812 = vrot.lane.b32.xlu0 %v801, 1
      %v813 = vpop.permute.xlu0 %812
      %814 = vrot.lane.b32.xlu0 %v803, 1
      %v815 = vpop.permute.xlu0 %814
      %816 = vrot.lane.b32.xlu0 %v798, 1
      %v817 = vpop.permute.xlu0 %816
      %818 = vrot.lane.b32.xlu0 %v800, 1
      %v819 = vpop.permute.xlu0 %818
      %820 = vrot.lane.b32.xlu0 %v802, 1
      %v821 = vpop.permute.xlu0 %820
      %vm822 = vcmask 7168
      %v823 = vsel %vm822, %v805, %v807
      %v824 = vsel %vm822, %v807, %v809
      %v825 = vsel %vm822, %v811, %v813
      %v826 = vsel %vm822, %v813, %v815
      %v827 = vsel %vm822, %v817, %v819
      %v828 = vsel %vm822, %v819, %v821
      %v838 = vsub.f32 %v579, %v805
      %v839 = vsub.f32 %v580, %v823
      %v840 = vsub.f32 %v581, %v824
      %v841 = vsub.f32 %v582, %v811
      %v842 = vsub.f32 %v583, %v825
      %v843 = vsub.f32 %v584, %v826
      %v844 = vsub.f32 %v585, %v817
      %v845 = vsub.f32 %v586, %v827
      %v846 = vsub.f32 %v587, %v828
      %856 = vrot.lane.b32.xlu0 %v440, 111
      %v857 = vpop.permute.xlu0 %856
      %858 = vrot.lane.b32.xlu0 %v441, 111
      %v859 = vpop.permute.xlu0 %858
      %860 = vrot.lane.b32.xlu0 %v442, 111
      %v861 = vpop.permute.xlu0 %860
      %862 = vrot.lane.b32.xlu0 %v443, 111
      %v863 = vpop.permute.xlu0 %862
      %864 = vrot.lane.b32.xlu0 %v444, 111
      %v865 = vpop.permute.xlu0 %864
      %866 = vrot.lane.b32.xlu0 %v445, 111
      %v867 = vpop.permute.xlu0 %866
      %868 = vrot.lane.b32.xlu0 %v446, 111
      %v869 = vpop.permute.xlu0 %868
      %870 = vrot.lane.b32.xlu0 %v447, 111
      %v871 = vpop.permute.xlu0 %870
      %872 = vrot.lane.b32.xlu0 %v448, 111
      %v873 = vpop.permute.xlu0 %872
      %vm874 = vcmask 908288
      %v875 = vsel %vm874, %v857, %v859
      %v876 = vsel %vm874, %v859, %v861
      %v877 = vsel %vm874, %v863, %v865
      %v878 = vsel %vm874, %v865, %v867
      %v879 = vsel %vm874, %v869, %v871
      %v880 = vsel %vm874, %v871, %v873
      %v890 = vadd.f32 %v838, %v875
      %v891 = vadd.f32 %v839, %v876
      %v892 = vadd.f32 %v840, %v861
      %v893 = vadd.f32 %v841, %v877
      %v894 = vadd.f32 %v842, %v878
      %v895 = vadd.f32 %v843, %v867
      %v896 = vadd.f32 %v844, %v879
      %v897 = vadd.f32 %v845, %v880
      %v898 = vadd.f32 %v846, %v873
      %v908 = vrot.slane %v890, 1
      %v909 = vrot.slane %v893, 1
      %v910 = vsel %vm667, %v908, %v909
      %v911 = vrot.slane %v891, 1
      %v912 = vrot.slane %v894, 1
      %v913 = vsel %vm667, %v911, %v912
      %v914 = vrot.slane %v892, 1
      %v915 = vrot.slane %v895, 1
      %v916 = vsel %vm667, %v914, %v915
      %v917 = vrot.slane %v896, 1
      %v918 = vsel %vm667, %v909, %v917
      %v919 = vrot.slane %v897, 1
      %v920 = vsel %vm667, %v912, %v919
      %v921 = vrot.slane %v898, 1
      %v922 = vsel %vm667, %v915, %v921
      %923 = vrot.lane.b32.xlu0 %v910, 108
      %v924 = vpop.permute.xlu0 %923
      %925 = vrot.lane.b32.xlu0 %v913, 108
      %v926 = vpop.permute.xlu0 %925
      %927 = vrot.lane.b32.xlu0 %v916, 108
      %v928 = vpop.permute.xlu0 %927
      %929 = vrot.lane.b32.xlu0 %v918, 108
      %v930 = vpop.permute.xlu0 %929
      %931 = vrot.lane.b32.xlu0 %v920, 108
      %v932 = vpop.permute.xlu0 %931
      %933 = vrot.lane.b32.xlu0 %v922, 108
      %v934 = vpop.permute.xlu0 %933
      %vm935 = vcmask 883712
      %v936 = vsel %vm935, %v924, %v926
      %v937 = vsel %vm935, %v926, %v928
      %v938 = vsel %vm935, %v930, %v932
      %v939 = vsel %vm935, %v932, %v934
      %s946 = scalar_lea.vmem %s116, 48
      %947 = vst [vmem:[%s946] sm:$0xff] %v936
      %948 = vst [vmem:[%s946 + $0x8] sm:$0xff] %v937
      %949 = vst.msk [vmem:[%s946 + $0x10] sm:$0xff] %vm775, %v928
      %950 = vst [vmem:[%s946 + $0x18] sm:$0xff] %v938
      %951 = vst [vmem:[%s946 + $0x20] sm:$0xff] %v939
      %952 = vst.msk [vmem:[%s946 + $0x28] sm:$0xff] %vm775, %v934
      %vm962 = vcmask 1040384
      %v963 = vrot.slane %v422, 7
      %v964 = vrot.slane %v423, 7
      %v965 = vrot.slane %v424, 7
      %v966 = vrot.slane %v425, 7
      %v967 = vsel %vm962, %v963, %v966
      %v968 = vrot.slane %v426, 7
      %v969 = vsel %vm962, %v964, %v968
      %v970 = vrot.slane %v427, 7
      %v971 = vsel %vm962, %v965, %v970
      %v972 = vrot.slane %v428, 7
      %v973 = vsel %vm962, %v966, %v972
      %v974 = vrot.slane %v429, 7
      %v975 = vsel %vm962, %v968, %v974
      %v976 = vrot.slane %v430, 7
      %v977 = vsel %vm962, %v970, %v976
      %978 = vrot.lane.b32.xlu0 %v963, 110
      %v979 = vpop.permute.xlu0 %978
      %980 = vrot.lane.b32.xlu0 %v964, 110
      %v981 = vpop.permute.xlu0 %980
      %982 = vrot.lane.b32.xlu0 %v965, 110
      %v983 = vpop.permute.xlu0 %982
      %984 = vrot.lane.b32.xlu0 %v967, 110
      %v985 = vpop.permute.xlu0 %984
      %986 = vrot.lane.b32.xlu0 %v969, 110
      %v987 = vpop.permute.xlu0 %986
      %988 = vrot.lane.b32.xlu0 %v971, 110
      %v989 = vpop.permute.xlu0 %988
      %990 = vrot.lane.b32.xlu0 %v973, 110
      %v991 = vpop.permute.xlu0 %990
      %992 = vrot.lane.b32.xlu0 %v975, 110
      %v993 = vpop.permute.xlu0 %992
      %994 = vrot.lane.b32.xlu0 %v977, 110
      %v995 = vpop.permute.xlu0 %994
      %vm996 = vcmask 900096
      %v997 = vsel %vm996, %v979, %v981
      %v998 = vsel %vm996, %v981, %v983
      %v999 = vsel %vm996, %v985, %v987
      %v1000 = vsel %vm996, %v987, %v989
      %v1001 = vsel %vm996, %v991, %v993
      %v1002 = vsel %vm996, %v993, %v995
      %v1012 = vsub.f32 %v253, %v997
      %v1013 = vsub.f32 %v254, %v998
      %v1014 = vsub.f32 %v255, %v983
      %v1015 = vsub.f32 %v256, %v999
      %v1016 = vsub.f32 %v257, %v1000
      %v1017 = vsub.f32 %v258, %v989
      %v1018 = vsub.f32 %v259, %v1001
      %v1019 = vsub.f32 %v260, %v1002
      %v1020 = vsub.f32 %v261, %v995
      %v1030 = vrot.slane %v597, 7
      %v1031 = vrot.slane %v598, 7
      %v1032 = vrot.slane %v599, 7
      %v1033 = vrot.slane %v600, 7
      %v1034 = vsel %vm962, %v1030, %v1033
      %v1035 = vrot.slane %v601, 7
      %v1036 = vsel %vm962, %v1031, %v1035
      %v1037 = vrot.slane %v602, 7
      %v1038 = vsel %vm962, %v1032, %v1037
      %v1039 = vrot.slane %v603, 7
      %v1040 = vsel %vm962, %v1033, %v1039
      %v1041 = vrot.slane %v604, 7
      %v1042 = vsel %vm962, %v1035, %v1041
      %v1043 = vrot.slane %v605, 7
      %v1044 = vsel %vm962, %v1037, %v1043
      %1045 = vrot.lane.b32.xlu0 %v1030, 127
      %v1046 = vpop.permute.xlu0 %1045
      %1047 = vrot.lane.b32.xlu0 %v1031, 127
      %v1048 = vpop.permute.xlu0 %1047
      %1049 = vrot.lane.b32.xlu0 %v1032, 127
      %v1050 = vpop.permute.xlu0 %1049
      %1051 = vrot.lane.b32.xlu0 %v1034, 127
      %v1052 = vpop.permute.xlu0 %1051
      %1053 = vrot.lane.b32.xlu0 %v1036, 127
      %v1054 = vpop.permute.xlu0 %1053
      %1055 = vrot.lane.b32.xlu0 %v1038, 127
      %v1056 = vpop.permute.xlu0 %1055
      %1057 = vrot.lane.b32.xlu0 %v1040, 127
      %v1058 = vpop.permute.xlu0 %1057
      %1059 = vrot.lane.b32.xlu0 %v1042, 127
      %v1060 = vpop.permute.xlu0 %1059
      %1061 = vrot.lane.b32.xlu0 %v1044, 127
      %v1062 = vpop.permute.xlu0 %1061
      %vm1063 = vcmask 1039360
      %v1064 = vsel %vm1063, %v1046, %v1048
      %v1065 = vsel %vm1063, %v1048, %v1050
      %v1066 = vsel %vm1063, %v1052, %v1054
      %v1067 = vsel %vm1063, %v1054, %v1056
      %v1068 = vsel %vm1063, %v1058, %v1060
      %v1069 = vsel %vm1063, %v1060, %v1062
      %v1079 = vadd.f32 %v1012, %v1064
      %v1080 = vadd.f32 %v1013, %v1065
      %v1081 = vadd.f32 %v1014, %v1050
      %v1082 = vadd.f32 %v1015, %v1066
      %v1083 = vadd.f32 %v1016, %v1067
      %v1084 = vadd.f32 %v1017, %v1056
      %v1085 = vadd.f32 %v1018, %v1068
      %v1086 = vadd.f32 %v1019, %v1069
      %v1087 = vadd.f32 %v1020, %v1062
      %vm1097 = vcmask 1045504
      %v1098 = vrot.slane %v1079, 2
      %v1099 = vrot.slane %v1082, 2
      %v1100 = vsel %vm1097, %v1098, %v1099
      %v1101 = vrot.slane %v1080, 2
      %v1102 = vrot.slane %v1083, 2
      %v1103 = vsel %vm1097, %v1101, %v1102
      %v1104 = vrot.slane %v1081, 2
      %v1105 = vrot.slane %v1084, 2
      %v1106 = vsel %vm1097, %v1104, %v1105
      %v1107 = vrot.slane %v1085, 2
      %v1108 = vsel %vm1097, %v1099, %v1107
      %v1109 = vrot.slane %v1086, 2
      %v1110 = vsel %vm1097, %v1102, %v1109
      %v1111 = vrot.slane %v1087, 2
      %v1112 = vsel %vm1097, %v1105, %v1111
      %1113 = vrot.lane.b32.xlu0 %v1100, 109
      %v1114 = vpop.permute.xlu0 %1113
      %1115 = vrot.lane.b32.xlu0 %v1103, 109
      %v1116 = vpop.permute.xlu0 %1115
      %1117 = vrot.lane.b32.xlu0 %v1106, 109
      %v1118 = vpop.permute.xlu0 %1117
      %1119 = vrot.lane.b32.xlu0 %v1108, 109
      %v1120 = vpop.permute.xlu0 %1119
      %1121 = vrot.lane.b32.xlu0 %v1110, 109
      %v1122 = vpop.permute.xlu0 %1121
      %1123 = vrot.lane.b32.xlu0 %v1112, 109
      %v1124 = vpop.permute.xlu0 %1123
      %vm1125 = vcmask 891904
      %v1126 = vsel %vm1125, %v1114, %v1116
      %v1127 = vsel %vm1125, %v1116, %v1118
      %v1128 = vsel %vm1125, %v1120, %v1122
      %v1129 = vsel %vm1125, %v1122, %v1124
      %s1136 = scalar_lea.vmem %s116, 96
      %1137 = vst [vmem:[%s1136] sm:$0xff] %v1126
      %1138 = vst [vmem:[%s1136 + $0x8] sm:$0xff] %v1127
      %1139 = vst.msk [vmem:[%s1136 + $0x10] sm:$0xff] %vm775, %v1118
      %1140 = vst [vmem:[%s1136 + $0x18] sm:$0xff] %v1128
      %1141 = vst [vmem:[%s1136 + $0x20] sm:$0xff] %v1129
      %1142 = vst.msk [vmem:[%s1136 + $0x28] sm:$0xff] %vm775, %v1124
      %p1143 = scmp.lt.s32.totalorder %s12, 1
      %s1144 = scalar_select %p1143, %s12, 1
      %s1145 = smul.addr %s1144, 18
      %s1146 = smul.addr %s1145, 8
      %s1147 = scalar_lea.vmem %s1, %s1146
      // Predicated region
      $region25: #{vae3d_hhdv_forward.7} parent=23 // pred_check
        %p1148 = pneg %p56
      $region26: #{vae3d_hhdv_forward.7} parent=23 // pred_check_branch
        %1150 = sbr.rel (%p1148) target = $region28
      $region27: #{vae3d_hhdv_forward.7} parent=23 // pred_region
        _
      $region28: #{vae3d_hhdv_forward.7} parent=23 // pred_fallthru
        _
    $region24: #{vae3d_hhdv_forward.7} parent=5 // pred_fallthru
      _
    %p1151 = scmp.le.s32.totalorder 2, %s7
    // Predicated region
    $region29: #{vae3d_hhdv_forward.7} parent=5 // pred_check
      %p1152 = pneg %p1151
    $region30: #{vae3d_hhdv_forward.7} parent=5 // pred_check_branch
      %1154 = sbr.rel (%p1152) target = $region32
    $region31: #{vae3d_hhdv_forward.7} parent=5 // pred_region
      %s1155 = ssub.s32 %s7, 2
      // Predicated region
      $region33: #{vae3d_hhdv_forward.7} parent=31 // pred_check
        %p1156 = pneg %p62
      $region34: #{vae3d_hhdv_forward.7} parent=31 // pred_check_branch
        %1158 = sbr.rel (%p1156) target = $region36
      $region35: #{vae3d_hhdv_forward.7} parent=31 // pred_region
        %p1159 = scmp.lt.s32.totalorder %s13, 1
        %s1160 = scalar_select %p1159, %s13, 1
        %s1161 = smul.addr %s1160, 18
        %s1162 = smul.addr %s1161, 8
        %s1163 = scalar_lea.vmem %s1, %s1162
      $region36: #{vae3d_hhdv_forward.7} parent=31 // pred_fallthru
        _
    $region32: #{vae3d_hhdv_forward.7} parent=5 // pred_fallthru
      _
  $region6: #{vae3d_hhdv_forward.7} parent=0 // loop_footer
    %s11 = sadd.s32 1, %s7
  $region7: #{vae3d_hhdv_forward.7} parent=0 // loop_footer_branch
    %6 = sbr.rel target = $region3
  $region8: #{vae3d_hhdv_forward.7} parent=0 // loop_exit
    _

</llo_original>
